<compile_context>
chip_gen: v7x
topology: tpu7x:2x2x1
jax: 0.10.0
libtpu: 0.0.40
codegen_flags: <defaults>
</compile_context>

<pallas_src>
import jax
import jax.numpy as jnp
from jax import lax
from jax.experimental import pallas as pl
from jax.experimental.pallas import tpu as pltpu


def _prelu(v, alpha_row):
    return jnp.where(v >= 0, v, v * alpha_row)


# -----------------------------------------------------------------------------
# Pallas kernel: whole SEM_B3 forward for one batch element per grid step.
# -----------------------------------------------------------------------------
def sem_b3_kernel(x_ref,
                  w1_ref, p1_ref,
                  wa_ref, wb_ref, pdw_ref,
                  wr3_ref, pr3_ref, w11_ref, pbn_ref,
                  o_ref,
                  spadx, spadt, spadc, col1, col2):
    H = x_ref.shape[1]
    W = x_ref.shape[2]
    C = x_ref.shape[3]            # nIn
    C2 = w1_ref.shape[1]          # nIn // 2
    HW = H * W
    f32 = jnp.float32
    bf16 = jnp.bfloat16

    # ---- cheap per-step border clear (interiors fully overwritten below).
    #      Keeps each grid step self-contained -> batch axis can be "parallel". ----
    def zero_border(buf, p):
        Hp, Wp, Cb = buf.shape
        buf[0:p, :, :] = jnp.zeros((p, Wp, Cb), f32)
        buf[Hp - p:Hp, :, :] = jnp.zeros((p, Wp, Cb), f32)
        buf[p:Hp - p, 0:p, :] = jnp.zeros((Hp - 2 * p, p, Cb), f32)
        buf[p:Hp - p, Wp - p:Wp, :] = jnp.zeros((Hp - 2 * p, p, Cb), f32)

    zero_border(spadx, 1)
    zero_border(spadt, 2)
    zero_border(spadc, 1)

    # ---- in-kernel zero-pad of the input (x is DMA'd from HBM only once) ----
    x_img = x_ref[0]                              # (H, W, C)
    spadx[1:1 + H, 1:1 + W, :] = x_img

    # ---- conv3x3: C -> C2 as a single im2col matmul (+ folded BN, PReLU) ----
    for k in range(9):
        dy, dx = k // 3, k % 3
        col1[:, k * C:(k + 1) * C] = spadx[dy:dy + H, dx:dx + W, :].reshape(HW, C)
    acc = jnp.dot(col1[...].astype(bf16), w1_ref[...].astype(bf16),
                  preferred_element_type=f32)     # (HW, C2)
    t = _prelu(acc + p1_ref[0:1, :], p1_ref[1:2, :])

    # ---- merged depthwise branches (left+mid: dil=1, right: dil=2) ----
    # Single padded buffer with the image at offset 2; the dilation-1 taps read at
    # offset 1+d, the dilation-2 taps at offset 2*d.  Channel masking is baked into
    # the packed weights (wa zero on right channels, wb zero on left/mid channels).
    spadt[2:2 + H, 2:2 + W, :] = t.reshape(H, W, C2)
    wa = wa_ref[...]                              # (9, C2)
    wb = wb_ref[...]                              # (9, C2)
    dw = jnp.zeros((HW, C2), f32)
    for k in range(9):
        dy, dx = k // 3, k % 3
        win1 = spadt[1 + dy:1 + dy + H, 1 + dx:1 + dx + W, :].reshape(HW, C2)
        win2 = spadt[2 * dy:2 * dy + H, 2 * dx:2 * dx + W, :].reshape(HW, C2)
        dw = dw + win1 * wa[k:k + 1, :] + win2 * wb[k:k + 1, :]
    dw = _prelu(dw + pdw_ref[0:1, :], pdw_ref[1:2, :])          # (HW, C2) = concat(l,m,r)

    # ---- conv3x3_resume.conv3x3: C2 -> C2 as a single im2col matmul (+ BN, PReLU) ----
    spadc[1:1 + H, 1:1 + W, :] = dw.reshape(H, W, C2)           # one dense concat store
    for k in range(9):
        dy, dx = k // 3, k % 3
        col2[:, k * C2:(k + 1) * C2] = spadc[dy:dy + H, dx:dx + W, :].reshape(HW, C2)
    acc2 = jnp.dot(col2[...].astype(bf16), wr3_ref[...].astype(bf16),
                   preferred_element_type=f32)                  # (HW, C2)
    s = _prelu(acc2 + pr3_ref[0:1, :], pr3_ref[1:2, :])

    # ---- conv3x3_resume.conv1x1_resume: C2 -> C (no BN/act) ----
    y = jnp.dot(s.astype(bf16), w11_ref[...].astype(bf16),
                preferred_element_type=f32)                     # (HW, C)

    # ---- residual add + bn_relu_1 (BN + PReLU) ----
    z = y + x_img.reshape(HW, C)
    z = z * pbn_ref[0:1, :] + pbn_ref[1:2, :]
    out = _prelu(z, pbn_ref[2:3, :])
    o_ref[0] = out.reshape(H, W, C)


# -----------------------------------------------------------------------------
# Wrapper
# -----------------------------------------------------------------------------
def sem_b3_forward(x, kp):
    """x: (B, H, W, C) float32 NHWC. kp: packed/folded kernel params."""
    B, H, W, C = x.shape
    C2 = C // 2

    weights = [kp["w1"], kp["p1"], kp["wa"], kp["wb"], kp["pdw"],
               kp["wr3"], kp["pr3"], kp["w11"], kp["pbn"]]

    def full_spec(a):
        nd = a.ndim
        return pl.BlockSpec(a.shape, lambda b, _nd=nd: (0,) * _nd)

    in_specs = [pl.BlockSpec((1, H, W, C), lambda b: (b, 0, 0, 0))] + \
               [full_spec(a) for a in weights]
    out_spec = pl.BlockSpec((1, H, W, C), lambda b: (b, 0, 0, 0))

    return pl.pallas_call(
        sem_b3_kernel,
        out_shape=jax.ShapeDtypeStruct((B, H, W, C), jnp.float32),
        grid_spec=pltpu.PrefetchScalarGridSpec(
            num_scalar_prefetch=0,
            grid=(B,),
            in_specs=in_specs,
            out_specs=out_spec,
            scratch_shapes=[
                pltpu.VMEM((H + 2, W + 2, C), jnp.float32),    # padded input (pad 1)
                pltpu.VMEM((H + 4, W + 4, C2), jnp.float32),   # padded t, shared dw buffer
                pltpu.VMEM((H + 2, W + 2, C2), jnp.float32),   # padded concat, resume conv
                pltpu.VMEM((H * W, 9 * C), jnp.float32),       # im2col columns, conv3x3
                pltpu.VMEM((H * W, 9 * C2), jnp.float32),      # im2col columns, resume conv
            ]),
        compiler_params=pltpu.CompilerParams(
            dimension_semantics=("parallel",)),                 # batch items independent
    )(x, *weights)


# -----------------------------------------------------------------------------
# Deterministic parameter init (shapes from SEM_B3.__init__), BN folding, packing
# -----------------------------------------------------------------------------
def init_params(key, C):
    C2, Cg = C // 2, C // 6
    eps = 1e-3
    keys = iter(jax.random.split(key, 40))

    def conv_w(shape):
        return 0.1 * jax.random.normal(next(keys), shape, jnp.float32)

    def bn(n):
        gamma = 1.0 + 0.1 * jax.random.normal(next(keys), (n,), jnp.float32)
        beta = 0.1 * jax.random.normal(next(keys), (n,), jnp.float32)
        mean = 0.1 * jax.random.normal(next(keys), (n,), jnp.float32)
        var = jax.random.uniform(next(keys), (n,), jnp.float32, 0.5, 1.5)
        return gamma, beta, mean, var

    def prelu_a(n):
        return jnp.full((n,), 0.25, jnp.float32)   # torch PReLU default init

    raw = {"eps": eps}
    raw["conv3x3_w"] = conv_w((3, 3, C, C2))            # HWIO
    raw["conv3x3_bn"] = bn(C2)
    raw["conv3x3_a"] = prelu_a(C2)
    for name in ("dleft", "dmid", "dright"):
        raw[f"{name}_w"] = conv_w((3, 3, Cg))            # depthwise per-channel
        raw[f"{name}_bn"] = bn(Cg)
        raw[f"{name}_a"] = prelu_a(Cg)
    raw["r3_w"] = conv_w((3, 3, C2, C2))
    raw["r3_bn"] = bn(C2)
    raw["r3_a"] = prelu_a(C2)
    raw["r1_w"] = conv_w((1, 1, C2, C))
    raw["bn1"] = bn(C)
    raw["bn1_a"] = prelu_a(C)
    return raw


def _fold_bn(w, bn, eps):
    gamma, beta, mean, var = bn
    scale = gamma / jnp.sqrt(var + eps)
    return w * scale, beta - mean * scale


def pack_kernel_params(raw):
    eps = raw["eps"]
    C = raw["conv3x3_w"].shape[2]
    C2 = raw["conv3x3_w"].shape[3]
    Cg = raw["dleft_w"].shape[2]

    w1f, b1 = _fold_bn(raw["conv3x3_w"], raw["conv3x3_bn"], eps)
    wlf, bl = _fold_bn(raw["dleft_w"], raw["dleft_bn"], eps)
    wmf, bm = _fold_bn(raw["dmid_w"], raw["dmid_bn"], eps)
    wrf, br = _fold_bn(raw["dright_w"], raw["dright_bn"], eps)
    wr3f, br3 = _fold_bn(raw["r3_w"], raw["r3_bn"], eps)

    g, b, m, v = raw["bn1"]
    scale1 = g / jnp.sqrt(v + eps)
    shift1 = b - m * scale1

    # Channel-masked depthwise weights: wa applies at dilation-1 tap offsets (left+mid
    # channels live in lanes [0, 2*Cg)), wb at dilation-2 tap offsets (right channels
    # in lanes [2*Cg, C2)).  Bias / PReLU alpha packed over all C2 channels.
    zg = jnp.zeros((9, Cg), jnp.float32)
    wl9, wm9, wr9 = (wlf.reshape(9, Cg), wmf.reshape(9, Cg), wrf.reshape(9, Cg))
    wa = jnp.concatenate([wl9, wm9, zg], axis=1)
    wb = jnp.concatenate([zg, zg, wr9], axis=1)
    pdw = jnp.stack([
        jnp.concatenate([bl, bm, br]),
        jnp.concatenate([raw["dleft_a"], raw["dmid_a"], raw["dright_a"]]),
    ])

    return {
        "w1": w1f.reshape(9 * C, C2),                 # im2col layout (9*C, C2)
        "p1": jnp.stack([b1, raw["conv3x3_a"]]),
        "wa": wa, "wb": wb, "pdw": pdw,
        "wr3": wr3f.reshape(9 * C2, C2),              # im2col layout (9*C2, C2)
        "pr3": jnp.stack([br3, raw["r3_a"]]),
        "w11": raw["r1_w"].reshape(C2, C),
        "pbn": jnp.stack([scale1, shift1, raw["bn1_a"]]),
    }


# -----------------------------------------------------------------------------
# Pure-JAX reference (mirrors the PyTorch forward, inference-mode BN, f32 precision)
# -----------------------------------------------------------------------------
def _conv(x, w, pad, dil=1, groups=1):
    return lax.conv_general_dilated(
        x, w, window_strides=(1, 1),
        padding=[(pad, pad), (pad, pad)],
        rhs_dilation=(dil, dil),
        dimension_numbers=("NHWC", "HWIO", "NHWC"),
        feature_group_count=groups,
        precision=lax.Precision.HIGHEST)


def _bn_prelu(x, bn, alpha, eps):
    g, b, m, v = bn
    y = (x - m) / jnp.sqrt(v + eps) * g + b
    return jnp.where(y >= 0, y, y * alpha)


def ref_forward(x, raw):
    eps = raw["eps"]
    Cg = raw["dleft_w"].shape[2]
    t = _bn_prelu(_conv(x, raw["conv3x3_w"], 1), raw["conv3x3_bn"],
                  raw["conv3x3_a"], eps)
    x1, x2, x3 = t[..., :Cg], t[..., Cg:2 * Cg], t[..., 2 * Cg:]
    l = _bn_prelu(_conv(x1, raw["dleft_w"].reshape(3, 3, 1, Cg), 1, 1, Cg),
                  raw["dleft_bn"], raw["dleft_a"], eps)
    m_ = _bn_prelu(_conv(x2, raw["dmid_w"].reshape(3, 3, 1, Cg), 1, 1, Cg),
                   raw["dmid_bn"], raw["dmid_a"], eps)
    r = _bn_prelu(_conv(x3, raw["dright_w"].reshape(3, 3, 1, Cg), 2, 2, Cg),
                  raw["dright_bn"], raw["dright_a"], eps)
    cat = jnp.concatenate([l, m_, r], axis=-1)
    s = _bn_prelu(_conv(cat, raw["r3_w"], 1), raw["r3_bn"], raw["r3_a"], eps)
    y = _conv(s, raw["r1_w"], 0)
    return _bn_prelu(y + x, raw["bn1"], raw["bn1_a"], eps)


if __name__ == "__main__":
    key = jax.random.PRNGKey(0)
    kx, kparam = jax.random.split(key)

    # nIn must be divisible by 6 for SEM_B3; small shapes: B=2, C=12, H=W=16
    B, C, H, W = 2, 12, 16, 16
    x_nchw = jax.random.normal(kx, (B, C, H, W), jnp.float32)   # PyTorch NCHW input
    x = jnp.transpose(x_nchw, (0, 2, 3, 1))                     # -> NHWC for the kernel

    raw = init_params(kparam, C)
    kp = pack_kernel_params(raw)

    out = sem_b3_forward(x, kp)
    out = jax.block_until_ready(out)

    ref = ref_forward(x, raw)
    abs_err = jnp.abs(out - ref)
    max_err = float(jnp.max(abs_err))
    mean_err = float(jnp.mean(abs_err))
    # Kernel matmuls use bf16 operands (f32 accumulate) vs. the f32 HIGHEST-precision
    # reference, so a few-1e-3 max error is expected from rounding alone; a structural
    # bug produces O(0.5..2) errors, so these bounds still discriminate sharply.
    if max_err > 5e-2 or mean_err > 5e-3:
        raise AssertionError(
            f"kernel mismatch vs reference: max abs err {max_err}, mean {mean_err}")
    print("KERNEL_OK")
</pallas_src>

<mosaic_0001>
module attributes {stable_mosaic.version = 11 : i64} {
  func.func @sem_b3_kernel(%arg0: i32, %arg1: memref<1x16x16x12xf32, #tpu.memory_space<vmem>>, %arg2: memref<108x6xf32, #tpu.memory_space<vmem>>, %arg3: memref<2x6xf32, #tpu.memory_space<vmem>>, %arg4: memref<9x6xf32, #tpu.memory_space<vmem>>, %arg5: memref<9x6xf32, #tpu.memory_space<vmem>>, %arg6: memref<2x6xf32, #tpu.memory_space<vmem>>, %arg7: memref<54x6xf32, #tpu.memory_space<vmem>>, %arg8: memref<2x6xf32, #tpu.memory_space<vmem>>, %arg9: memref<6x12xf32, #tpu.memory_space<vmem>>, %arg10: memref<3x12xf32, #tpu.memory_space<vmem>>, %arg11: memref<1x16x16x12xf32, #tpu.memory_space<vmem>>, %arg12: memref<18x18x12xf32, #tpu.memory_space<vmem>>, %arg13: memref<20x20x6xf32, #tpu.memory_space<vmem>>, %arg14: memref<18x18x6xf32, #tpu.memory_space<vmem>>, %arg15: memref<256x108xf32, #tpu.memory_space<vmem>>, %arg16: memref<256x54xf32, #tpu.memory_space<vmem>>) attributes {dimension_semantics = [#tpu.dimension_semantics<parallel>], iteration_bounds = array<i64: 2>, scalar_prefetch = 0 : i64, scratch_operands = 5 : i64, tpu.core_type = #tpu.core_type<tc>, window_params = [{transform_indices = @transform_0, window_bounds = array<i64: 1, 16, 16, 12>}, {pipeline_mode = #tpu.pipeline_mode<synchronous>, transform_indices = @transform_1, window_bounds = array<i64: 108, 6>}, {pipeline_mode = #tpu.pipeline_mode<synchronous>, transform_indices = @transform_2, window_bounds = array<i64: 2, 6>}, {pipeline_mode = #tpu.pipeline_mode<synchronous>, transform_indices = @transform_3, window_bounds = array<i64: 9, 6>}, {pipeline_mode = #tpu.pipeline_mode<synchronous>, transform_indices = @transform_4, window_bounds = array<i64: 9, 6>}, {pipeline_mode = #tpu.pipeline_mode<synchronous>, transform_indices = @transform_5, window_bounds = array<i64: 2, 6>}, {pipeline_mode = #tpu.pipeline_mode<synchronous>, transform_indices = @transform_6, window_bounds = array<i64: 54, 6>}, {pipeline_mode = #tpu.pipeline_mode<synchronous>, transform_indices = @transform_7, window_bounds = array<i64: 2, 6>}, {pipeline_mode = #tpu.pipeline_mode<synchronous>, transform_indices = @transform_8, window_bounds = array<i64: 6, 12>}, {pipeline_mode = #tpu.pipeline_mode<synchronous>, transform_indices = @transform_9, window_bounds = array<i64: 3, 12>}, {transform_indices = @transform_10, window_bounds = array<i64: 1, 16, 16, 12>}]} {
    %cst = arith.constant 0.000000e+00 : f32
    %0 = vector.broadcast %cst : f32 to vector<1x18x12xf32>
    %c0 = arith.constant 0 : index
    %c0_0 = arith.constant 0 : index
    %c0_1 = arith.constant 0 : index
    %1 = vector.load %arg12[%c0, %c0_0, %c0_1] : memref<18x18x12xf32, #tpu.memory_space<vmem>>, vector<1x18x12xf32>
    tpu.vector_store %arg12[%c0, %c0_0, %c0_1], %0 {strides = array<i32>} : memref<18x18x12xf32, #tpu.memory_space<vmem>>, vector<1x18x12xf32>,
    %cst_2 = arith.constant 0.000000e+00 : f32
    %2 = vector.broadcast %cst_2 : f32 to vector<1x18x12xf32>
    %c17 = arith.constant 17 : index
    %c0_3 = arith.constant 0 : index
    %c0_4 = arith.constant 0 : index
    %3 = vector.load %arg12[%c17, %c0_3, %c0_4] : memref<18x18x12xf32, #tpu.memory_space<vmem>>, vector<1x18x12xf32>
    tpu.vector_store %arg12[%c17, %c0_3, %c0_4], %2 {strides = array<i32>} : memref<18x18x12xf32, #tpu.memory_space<vmem>>, vector<1x18x12xf32>,
    %cst_5 = arith.constant 0.000000e+00 : f32
    %4 = vector.broadcast %cst_5 : f32 to vector<16x1x12xf32>
    %c1 = arith.constant 1 : index
    %c0_6 = arith.constant 0 : index
    %c0_7 = arith.constant 0 : index
    %5 = vector.load %arg12[%c1, %c0_6, %c0_7] : memref<18x18x12xf32, #tpu.memory_space<vmem>>, vector<16x1x12xf32>
    tpu.vector_store %arg12[%c1, %c0_6, %c0_7], %4 {strides = array<i32>} : memref<18x18x12xf32, #tpu.memory_space<vmem>>, vector<16x1x12xf32>,
    %cst_8 = arith.constant 0.000000e+00 : f32
    %6 = vector.broadcast %cst_8 : f32 to vector<16x1x12xf32>
    %c1_9 = arith.constant 1 : index
    %c17_10 = arith.constant 17 : index
    %c0_11 = arith.constant 0 : index
    %7 = vector.load %arg12[%c1_9, %c17_10, %c0_11] : memref<18x18x12xf32, #tpu.memory_space<vmem>>, vector<16x1x12xf32>
    tpu.vector_store %arg12[%c1_9, %c17_10, %c0_11], %6 {strides = array<i32>} : memref<18x18x12xf32, #tpu.memory_space<vmem>>, vector<16x1x12xf32>,
    %cst_12 = arith.constant 0.000000e+00 : f32
    %8 = vector.broadcast %cst_12 : f32 to vector<2x20x6xf32>
    %c0_13 = arith.constant 0 : index
    %c0_14 = arith.constant 0 : index
    %c0_15 = arith.constant 0 : index
    %9 = vector.load %arg13[%c0_13, %c0_14, %c0_15] : memref<20x20x6xf32, #tpu.memory_space<vmem>>, vector<2x20x6xf32>
    tpu.vector_store %arg13[%c0_13, %c0_14, %c0_15], %8 {strides = array<i32>} : memref<20x20x6xf32, #tpu.memory_space<vmem>>, vector<2x20x6xf32>,
    %cst_16 = arith.constant 0.000000e+00 : f32
    %10 = vector.broadcast %cst_16 : f32 to vector<2x20x6xf32>
    %c18 = arith.constant 18 : index
    %c0_17 = arith.constant 0 : index
    %c0_18 = arith.constant 0 : index
    %11 = vector.load %arg13[%c18, %c0_17, %c0_18] : memref<20x20x6xf32, #tpu.memory_space<vmem>>, vector<2x20x6xf32>
    tpu.vector_store %arg13[%c18, %c0_17, %c0_18], %10 {strides = array<i32>} : memref<20x20x6xf32, #tpu.memory_space<vmem>>, vector<2x20x6xf32>,
    %cst_19 = arith.constant 0.000000e+00 : f32
    %12 = vector.broadcast %cst_19 : f32 to vector<16x2x6xf32>
    %c2 = arith.constant 2 : index
    %c0_20 = arith.constant 0 : index
    %c0_21 = arith.constant 0 : index
    %13 = vector.load %arg13[%c2, %c0_20, %c0_21] : memref<20x20x6xf32, #tpu.memory_space<vmem>>, vector<16x2x6xf32>
    tpu.vector_store %arg13[%c2, %c0_20, %c0_21], %12 {strides = array<i32>} : memref<20x20x6xf32, #tpu.memory_space<vmem>>, vector<16x2x6xf32>,
    %cst_22 = arith.constant 0.000000e+00 : f32
    %14 = vector.broadcast %cst_22 : f32 to vector<16x2x6xf32>
    %c2_23 = arith.constant 2 : index
    %c18_24 = arith.constant 18 : index
    %c0_25 = arith.constant 0 : index
    %15 = vector.load %arg13[%c2_23, %c18_24, %c0_25] : memref<20x20x6xf32, #tpu.memory_space<vmem>>, vector<16x2x6xf32>
    tpu.vector_store %arg13[%c2_23, %c18_24, %c0_25], %14 {strides = array<i32>} : memref<20x20x6xf32, #tpu.memory_space<vmem>>, vector<16x2x6xf32>,
    %cst_26 = arith.constant 0.000000e+00 : f32
    %16 = vector.broadcast %cst_26 : f32 to vector<1x18x6xf32>
    %c0_27 = arith.constant 0 : index
    %c0_28 = arith.constant 0 : index
    %c0_29 = arith.constant 0 : index
    %17 = vector.load %arg14[%c0_27, %c0_28, %c0_29] : memref<18x18x6xf32, #tpu.memory_space<vmem>>, vector<1x18x6xf32>
    tpu.vector_store %arg14[%c0_27, %c0_28, %c0_29], %16 {strides = array<i32>} : memref<18x18x6xf32, #tpu.memory_space<vmem>>, vector<1x18x6xf32>,
    %cst_30 = arith.constant 0.000000e+00 : f32
    %18 = vector.broadcast %cst_30 : f32 to vector<1x18x6xf32>
    %c17_31 = arith.constant 17 : index
    %c0_32 = arith.constant 0 : index
    %c0_33 = arith.constant 0 : index
    %19 = vector.load %arg14[%c17_31, %c0_32, %c0_33] : memref<18x18x6xf32, #tpu.memory_space<vmem>>, vector<1x18x6xf32>
    tpu.vector_store %arg14[%c17_31, %c0_32, %c0_33], %18 {strides = array<i32>} : memref<18x18x6xf32, #tpu.memory_space<vmem>>, vector<1x18x6xf32>,
    %cst_34 = arith.constant 0.000000e+00 : f32
    %20 = vector.broadcast %cst_34 : f32 to vector<16x1x6xf32>
    %c1_35 = arith.constant 1 : index
    %c0_36 = arith.constant 0 : index
    %c0_37 = arith.constant 0 : index
    %21 = vector.load %arg14[%c1_35, %c0_36, %c0_37] : memref<18x18x6xf32, #tpu.memory_space<vmem>>, vector<16x1x6xf32>
    tpu.vector_store %arg14[%c1_35, %c0_36, %c0_37], %20 {strides = array<i32>} : memref<18x18x6xf32, #tpu.memory_space<vmem>>, vector<16x1x6xf32>,
    %cst_38 = arith.constant 0.000000e+00 : f32
    %22 = vector.broadcast %cst_38 : f32 to vector<16x1x6xf32>
    %c1_39 = arith.constant 1 : index
    %c17_40 = arith.constant 17 : index
    %c0_41 = arith.constant 0 : index
    %23 = vector.load %arg14[%c1_39, %c17_40, %c0_41] : memref<18x18x6xf32, #tpu.memory_space<vmem>>, vector<16x1x6xf32>
    tpu.vector_store %arg14[%c1_39, %c17_40, %c0_41], %22 {strides = array<i32>} : memref<18x18x6xf32, #tpu.memory_space<vmem>>, vector<16x1x6xf32>,
    %c0_42 = arith.constant 0 : index
    %c0_43 = arith.constant 0 : index
    %c0_44 = arith.constant 0 : index
    %c0_45 = arith.constant 0 : index
    %24 = vector.load %arg1[%c0_42, %c0_43, %c0_44, %c0_45] : memref<1x16x16x12xf32, #tpu.memory_space<vmem>>, vector<1x16x16x12xf32>
    %25 = vector.shape_cast %24 : vector<1x16x16x12xf32> to vector<16x16x12xf32>
    %c1_46 = arith.constant 1 : index
    %c1_47 = arith.constant 1 : index
    %c0_48 = arith.constant 0 : index
    %26 = vector.load %arg12[%c1_46, %c1_47, %c0_48] : memref<18x18x12xf32, #tpu.memory_space<vmem>>, vector<16x16x12xf32>
    tpu.vector_store %arg12[%c1_46, %c1_47, %c0_48], %25 {strides = array<i32>} : memref<18x18x12xf32, #tpu.memory_space<vmem>>, vector<16x16x12xf32>,
    %c0_49 = arith.constant 0 : index
    %c0_50 = arith.constant 0 : index
    %c0_51 = arith.constant 0 : index
    %27 = vector.load %arg12[%c0_49, %c0_50, %c0_51] : memref<18x18x12xf32, #tpu.memory_space<vmem>>, vector<16x16x12xf32>
    %28 = vector.shape_cast %27 : vector<16x16x12xf32> to vector<256x12xf32>
    %c0_52 = arith.constant 0 : index
    %c0_53 = arith.constant 0 : index
    %29 = vector.load %arg15[%c0_52, %c0_53] : memref<256x108xf32, #tpu.memory_space<vmem>>, vector<256x12xf32>
    tpu.vector_store %arg15[%c0_52, %c0_53], %28 {strides = array<i32>} : memref<256x108xf32, #tpu.memory_space<vmem>>, vector<256x12xf32>,
    %c0_54 = arith.constant 0 : index
    %c1_55 = arith.constant 1 : index
    %c0_56 = arith.constant 0 : index
    %30 = vector.load %arg12[%c0_54, %c1_55, %c0_56] : memref<18x18x12xf32, #tpu.memory_space<vmem>>, vector<16x16x12xf32>
    %31 = vector.shape_cast %30 : vector<16x16x12xf32> to vector<256x12xf32>
    %c0_57 = arith.constant 0 : index
    %c12 = arith.constant 12 : index
    %32 = vector.load %arg15[%c0_57, %c12] : memref<256x108xf32, #tpu.memory_space<vmem>>, vector<256x12xf32>
    tpu.vector_store %arg15[%c0_57, %c12], %31 {strides = array<i32>} : memref<256x108xf32, #tpu.memory_space<vmem>>, vector<256x12xf32>,
    %c0_58 = arith.constant 0 : index
    %c2_59 = arith.constant 2 : index
    %c0_60 = arith.constant 0 : index
    %33 = vector.load %arg12[%c0_58, %c2_59, %c0_60] : memref<18x18x12xf32, #tpu.memory_space<vmem>>, vector<16x16x12xf32>
    %34 = vector.shape_cast %33 : vector<16x16x12xf32> to vector<256x12xf32>
    %c0_61 = arith.constant 0 : index
    %c24 = arith.constant 24 : index
    %35 = vector.load %arg15[%c0_61, %c24] : memref<256x108xf32, #tpu.memory_space<vmem>>, vector<256x12xf32>
    tpu.vector_store %arg15[%c0_61, %c24], %34 {strides = array<i32>} : memref<256x108xf32, #tpu.memory_space<vmem>>, vector<256x12xf32>,
    %c1_62 = arith.constant 1 : index
    %c0_63 = arith.constant 0 : index
    %c0_64 = arith.constant 0 : index
    %36 = vector.load %arg12[%c1_62, %c0_63, %c0_64] : memref<18x18x12xf32, #tpu.memory_space<vmem>>, vector<16x16x12xf32>
    %37 = vector.shape_cast %36 : vector<16x16x12xf32> to vector<256x12xf32>
    %c0_65 = arith.constant 0 : index
    %c36 = arith.constant 36 : index
    %38 = vector.load %arg15[%c0_65, %c36] : memref<256x108xf32, #tpu.memory_space<vmem>>, vector<256x12xf32>
    tpu.vector_store %arg15[%c0_65, %c36], %37 {strides = array<i32>} : memref<256x108xf32, #tpu.memory_space<vmem>>, vector<256x12xf32>,
    %c1_66 = arith.constant 1 : index
    %c1_67 = arith.constant 1 : index
    %c0_68 = arith.constant 0 : index
    %39 = vector.load %arg12[%c1_66, %c1_67, %c0_68] : memref<18x18x12xf32, #tpu.memory_space<vmem>>, vector<16x16x12xf32>
    %40 = vector.shape_cast %39 : vector<16x16x12xf32> to vector<256x12xf32>
    %c0_69 = arith.constant 0 : index
    %c48 = arith.constant 48 : index
    %41 = vector.load %arg15[%c0_69, %c48] : memref<256x108xf32, #tpu.memory_space<vmem>>, vector<256x12xf32>
    tpu.vector_store %arg15[%c0_69, %c48], %40 {strides = array<i32>} : memref<256x108xf32, #tpu.memory_space<vmem>>, vector<256x12xf32>,
    %c1_70 = arith.constant 1 : index
    %c2_71 = arith.constant 2 : index
    %c0_72 = arith.constant 0 : index
    %42 = vector.load %arg12[%c1_70, %c2_71, %c0_72] : memref<18x18x12xf32, #tpu.memory_space<vmem>>, vector<16x16x12xf32>
    %43 = vector.shape_cast %42 : vector<16x16x12xf32> to vector<256x12xf32>
    %c0_73 = arith.constant 0 : index
    %c60 = arith.constant 60 : index
    %44 = vector.load %arg15[%c0_73, %c60] : memref<256x108xf32, #tpu.memory_space<vmem>>, vector<256x12xf32>
    tpu.vector_store %arg15[%c0_73, %c60], %43 {strides = array<i32>} : memref<256x108xf32, #tpu.memory_space<vmem>>, vector<256x12xf32>,
    %c2_74 = arith.constant 2 : index
    %c0_75 = arith.constant 0 : index
    %c0_76 = arith.constant 0 : index
    %45 = vector.load %arg12[%c2_74, %c0_75, %c0_76] : memref<18x18x12xf32, #tpu.memory_space<vmem>>, vector<16x16x12xf32>
    %46 = vector.shape_cast %45 : vector<16x16x12xf32> to vector<256x12xf32>
    %c0_77 = arith.constant 0 : index
    %c72 = arith.constant 72 : index
    %47 = vector.load %arg15[%c0_77, %c72] : memref<256x108xf32, #tpu.memory_space<vmem>>, vector<256x12xf32>
    tpu.vector_store %arg15[%c0_77, %c72], %46 {strides = array<i32>} : memref<256x108xf32, #tpu.memory_space<vmem>>, vector<256x12xf32>,
    %c2_78 = arith.constant 2 : index
    %c1_79 = arith.constant 1 : index
    %c0_80 = arith.constant 0 : index
    %48 = vector.load %arg12[%c2_78, %c1_79, %c0_80] : memref<18x18x12xf32, #tpu.memory_space<vmem>>, vector<16x16x12xf32>
    %49 = vector.shape_cast %48 : vector<16x16x12xf32> to vector<256x12xf32>
    %c0_81 = arith.constant 0 : index
    %c84 = arith.constant 84 : index
    %50 = vector.load %arg15[%c0_81, %c84] : memref<256x108xf32, #tpu.memory_space<vmem>>, vector<256x12xf32>
    tpu.vector_store %arg15[%c0_81, %c84], %49 {strides = array<i32>} : memref<256x108xf32, #tpu.memory_space<vmem>>, vector<256x12xf32>,
    %c2_82 = arith.constant 2 : index
    %c2_83 = arith.constant 2 : index
    %c0_84 = arith.constant 0 : index
    %51 = vector.load %arg12[%c2_82, %c2_83, %c0_84] : memref<18x18x12xf32, #tpu.memory_space<vmem>>, vector<16x16x12xf32>
    %52 = vector.shape_cast %51 : vector<16x16x12xf32> to vector<256x12xf32>
    %c0_85 = arith.constant 0 : index
    %c96 = arith.constant 96 : index
    %53 = vector.load %arg15[%c0_85, %c96] : memref<256x108xf32, #tpu.memory_space<vmem>>, vector<256x12xf32>
    tpu.vector_store %arg15[%c0_85, %c96], %52 {strides = array<i32>} : memref<256x108xf32, #tpu.memory_space<vmem>>, vector<256x12xf32>,
    %c0_86 = arith.constant 0 : index
    %c0_87 = arith.constant 0 : index
    %54 = vector.load %arg15[%c0_86, %c0_87] : memref<256x108xf32, #tpu.memory_space<vmem>>, vector<256x108xf32>
    %55 = arith.truncf %54 : vector<256x108xf32> to vector<256x108xbf16>
    %c0_88 = arith.constant 0 : index
    %c0_89 = arith.constant 0 : index
    %56 = vector.load %arg2[%c0_88, %c0_89] : memref<108x6xf32, #tpu.memory_space<vmem>>, vector<108x6xf32>
    %57 = arith.truncf %56 : vector<108x6xf32> to vector<108x6xbf16>
    %cst_90 = arith.constant dense<0.000000e+00> : vector<256x6xf32>
    %58 = tpu.matmul %55, %57, %cst_90 {dimension_numbers = #tpu.dot_dimension_numbers<[1], [0], [0], [1], [0, 0, 1, 1], [], []>} : vector<256x108xbf16>, vector<108x6xbf16>, vector<256x6xf32> -> vector<256x6xf32>
    %c0_91 = arith.constant 0 : index
    %c0_92 = arith.constant 0 : index
    %59 = vector.load %arg3[%c0_91, %c0_92] : memref<2x6xf32, #tpu.memory_space<vmem>>, vector<1x6xf32>
    %60 = vector.broadcast %59 : vector<1x6xf32> to vector<256x6xf32>
    %61 = arith.addf %58, %60 : vector<256x6xf32>
    %c1_93 = arith.constant 1 : index
    %c0_94 = arith.constant 0 : index
    %62 = vector.load %arg3[%c1_93, %c0_94] : memref<2x6xf32, #tpu.memory_space<vmem>>, vector<1x6xf32>
    %cst_95 = arith.constant 0.000000e+00 : f32
    %63 = vector.broadcast %cst_95 : f32 to vector<256x6xf32>
    %64 = arith.cmpf oge, %61, %63 : vector<256x6xf32>
    %65 = vector.broadcast %62 : vector<1x6xf32> to vector<256x6xf32>
    %66 = arith.mulf %61, %65 : vector<256x6xf32>
    %67 = arith.select %64, %61, %66 : vector<256x6xi1>, vector<256x6xf32>
    %68 = vector.shape_cast %67 : vector<256x6xf32> to vector<16x16x6xf32>
    %c2_96 = arith.constant 2 : index
    %c2_97 = arith.constant 2 : index
    %c0_98 = arith.constant 0 : index
    %69 = vector.load %arg13[%c2_96, %c2_97, %c0_98] : memref<20x20x6xf32, #tpu.memory_space<vmem>>, vector<16x16x6xf32>
    tpu.vector_store %arg13[%c2_96, %c2_97, %c0_98], %68 {strides = array<i32>} : memref<20x20x6xf32, #tpu.memory_space<vmem>>, vector<16x16x6xf32>,
    %c0_99 = arith.constant 0 : index
    %c0_100 = arith.constant 0 : index
    %70 = vector.load %arg4[%c0_99, %c0_100] : memref<9x6xf32, #tpu.memory_space<vmem>>, vector<9x6xf32>
    %c0_101 = arith.constant 0 : index
    %c0_102 = arith.constant 0 : index
    %71 = vector.load %arg5[%c0_101, %c0_102] : memref<9x6xf32, #tpu.memory_space<vmem>>, vector<9x6xf32>
    %cst_103 = arith.constant 0.000000e+00 : f32
    %72 = vector.broadcast %cst_103 : f32 to vector<256x6xf32>
    %c1_104 = arith.constant 1 : index
    %c1_105 = arith.constant 1 : index
    %c0_106 = arith.constant 0 : index
    %73 = vector.load %arg13[%c1_104, %c1_105, %c0_106] : memref<20x20x6xf32, #tpu.memory_space<vmem>>, vector<16x16x6xf32>
    %74 = vector.shape_cast %73 : vector<16x16x6xf32> to vector<256x6xf32>
    %c0_107 = arith.constant 0 : index
    %c0_108 = arith.constant 0 : index
    %c0_109 = arith.constant 0 : index
    %75 = vector.load %arg13[%c0_107, %c0_108, %c0_109] : memref<20x20x6xf32, #tpu.memory_space<vmem>>, vector<16x16x6xf32>
    %76 = vector.shape_cast %75 : vector<16x16x6xf32> to vector<256x6xf32>
    %77 = vector.extract_strided_slice %70 {offsets = [0, 0], sizes = [1, 6], strides = [1, 1]} : vector<9x6xf32> to vector<1x6xf32>
    %78 = vector.broadcast %77 : vector<1x6xf32> to vector<256x6xf32>
    %79 = arith.mulf %74, %78 : vector<256x6xf32>
    %80 = arith.addf %72, %79 : vector<256x6xf32>
    %81 = vector.extract_strided_slice %71 {offsets = [0, 0], sizes = [1, 6], strides = [1, 1]} : vector<9x6xf32> to vector<1x6xf32>
    %82 = vector.broadcast %81 : vector<1x6xf32> to vector<256x6xf32>
    %83 = arith.mulf %76, %82 : vector<256x6xf32>
    %84 = arith.addf %80, %83 : vector<256x6xf32>
    %c1_110 = arith.constant 1 : index
    %c2_111 = arith.constant 2 : index
    %c0_112 = arith.constant 0 : index
    %85 = vector.load %arg13[%c1_110, %c2_111, %c0_112] : memref<20x20x6xf32, #tpu.memory_space<vmem>>, vector<16x16x6xf32>
    %86 = vector.shape_cast %85 : vector<16x16x6xf32> to vector<256x6xf32>
    %c0_113 = arith.constant 0 : index
    %c2_114 = arith.constant 2 : index
    %c0_115 = arith.constant 0 : index
    %87 = vector.load %arg13[%c0_113, %c2_114, %c0_115] : memref<20x20x6xf32, #tpu.memory_space<vmem>>, vector<16x16x6xf32>
    %88 = vector.shape_cast %87 : vector<16x16x6xf32> to vector<256x6xf32>
    %89 = vector.extract_strided_slice %70 {offsets = [1, 0], sizes = [1, 6], strides = [1, 1]} : vector<9x6xf32> to vector<1x6xf32>
    %90 = vector.broadcast %89 : vector<1x6xf32> to vector<256x6xf32>
    %91 = arith.mulf %86, %90 : vector<256x6xf32>
    %92 = arith.addf %84, %91 : vector<256x6xf32>
    %93 = vector.extract_strided_slice %71 {offsets = [1, 0], sizes = [1, 6], strides = [1, 1]} : vector<9x6xf32> to vector<1x6xf32>
    %94 = vector.broadcast %93 : vector<1x6xf32> to vector<256x6xf32>
    %95 = arith.mulf %88, %94 : vector<256x6xf32>
    %96 = arith.addf %92, %95 : vector<256x6xf32>
    %c1_116 = arith.constant 1 : index
    %c3 = arith.constant 3 : index
    %c0_117 = arith.constant 0 : index
    %97 = vector.load %arg13[%c1_116, %c3, %c0_117] : memref<20x20x6xf32, #tpu.memory_space<vmem>>, vector<16x16x6xf32>
    %98 = vector.shape_cast %97 : vector<16x16x6xf32> to vector<256x6xf32>
    %c0_118 = arith.constant 0 : index
    %c4 = arith.constant 4 : index
    %c0_119 = arith.constant 0 : index
    %99 = vector.load %arg13[%c0_118, %c4, %c0_119] : memref<20x20x6xf32, #tpu.memory_space<vmem>>, vector<16x16x6xf32>
    %100 = vector.shape_cast %99 : vector<16x16x6xf32> to vector<256x6xf32>
    %101 = vector.extract_strided_slice %70 {offsets = [2, 0], sizes = [1, 6], strides = [1, 1]} : vector<9x6xf32> to vector<1x6xf32>
    %102 = vector.broadcast %101 : vector<1x6xf32> to vector<256x6xf32>
    %103 = arith.mulf %98, %102 : vector<256x6xf32>
    %104 = arith.addf %96, %103 : vector<256x6xf32>
    %105 = vector.extract_strided_slice %71 {offsets = [2, 0], sizes = [1, 6], strides = [1, 1]} : vector<9x6xf32> to vector<1x6xf32>
    %106 = vector.broadcast %105 : vector<1x6xf32> to vector<256x6xf32>
    %107 = arith.mulf %100, %106 : vector<256x6xf32>
    %108 = arith.addf %104, %107 : vector<256x6xf32>
    %c2_120 = arith.constant 2 : index
    %c1_121 = arith.constant 1 : index
    %c0_122 = arith.constant 0 : index
    %109 = vector.load %arg13[%c2_120, %c1_121, %c0_122] : memref<20x20x6xf32, #tpu.memory_space<vmem>>, vector<16x16x6xf32>
    %110 = vector.shape_cast %109 : vector<16x16x6xf32> to vector<256x6xf32>
    %c2_123 = arith.constant 2 : index
    %c0_124 = arith.constant 0 : index
    %c0_125 = arith.constant 0 : index
    %111 = vector.load %arg13[%c2_123, %c0_124, %c0_125] : memref<20x20x6xf32, #tpu.memory_space<vmem>>, vector<16x16x6xf32>
    %112 = vector.shape_cast %111 : vector<16x16x6xf32> to vector<256x6xf32>
    %113 = vector.extract_strided_slice %70 {offsets = [3, 0], sizes = [1, 6], strides = [1, 1]} : vector<9x6xf32> to vector<1x6xf32>
    %114 = vector.broadcast %113 : vector<1x6xf32> to vector<256x6xf32>
    %115 = arith.mulf %110, %114 : vector<256x6xf32>
    %116 = arith.addf %108, %115 : vector<256x6xf32>
    %117 = vector.extract_strided_slice %71 {offsets = [3, 0], sizes = [1, 6], strides = [1, 1]} : vector<9x6xf32> to vector<1x6xf32>
    %118 = vector.broadcast %117 : vector<1x6xf32> to vector<256x6xf32>
    %119 = arith.mulf %112, %118 : vector<256x6xf32>
    %120 = arith.addf %116, %119 : vector<256x6xf32>
    %c2_126 = arith.constant 2 : index
    %c2_127 = arith.constant 2 : index
    %c0_128 = arith.constant 0 : index
    %121 = vector.load %arg13[%c2_126, %c2_127, %c0_128] : memref<20x20x6xf32, #tpu.memory_space<vmem>>, vector<16x16x6xf32>
    %122 = vector.shape_cast %121 : vector<16x16x6xf32> to vector<256x6xf32>
    %c2_129 = arith.constant 2 : index
    %c2_130 = arith.constant 2 : index
    %c0_131 = arith.constant 0 : index
    %123 = vector.load %arg13[%c2_129, %c2_130, %c0_131] : memref<20x20x6xf32, #tpu.memory_space<vmem>>, vector<16x16x6xf32>
    %124 = vector.shape_cast %123 : vector<16x16x6xf32> to vector<256x6xf32>
    %125 = vector.extract_strided_slice %70 {offsets = [4, 0], sizes = [1, 6], strides = [1, 1]} : vector<9x6xf32> to vector<1x6xf32>
    %126 = vector.broadcast %125 : vector<1x6xf32> to vector<256x6xf32>
    %127 = arith.mulf %122, %126 : vector<256x6xf32>
    %128 = arith.addf %120, %127 : vector<256x6xf32>
    %129 = vector.extract_strided_slice %71 {offsets = [4, 0], sizes = [1, 6], strides = [1, 1]} : vector<9x6xf32> to vector<1x6xf32>
    %130 = vector.broadcast %129 : vector<1x6xf32> to vector<256x6xf32>
    %131 = arith.mulf %124, %130 : vector<256x6xf32>
    %132 = arith.addf %128, %131 : vector<256x6xf32>
    %c2_132 = arith.constant 2 : index
    %c3_133 = arith.constant 3 : index
    %c0_134 = arith.constant 0 : index
    %133 = vector.load %arg13[%c2_132, %c3_133, %c0_134] : memref<20x20x6xf32, #tpu.memory_space<vmem>>, vector<16x16x6xf32>
    %134 = vector.shape_cast %133 : vector<16x16x6xf32> to vector<256x6xf32>
    %c2_135 = arith.constant 2 : index
    %c4_136 = arith.constant 4 : index
    %c0_137 = arith.constant 0 : index
    %135 = vector.load %arg13[%c2_135, %c4_136, %c0_137] : memref<20x20x6xf32, #tpu.memory_space<vmem>>, vector<16x16x6xf32>
    %136 = vector.shape_cast %135 : vector<16x16x6xf32> to vector<256x6xf32>
    %137 = vector.extract_strided_slice %70 {offsets = [5, 0], sizes = [1, 6], strides = [1, 1]} : vector<9x6xf32> to vector<1x6xf32>
    %138 = vector.broadcast %137 : vector<1x6xf32> to vector<256x6xf32>
    %139 = arith.mulf %134, %138 : vector<256x6xf32>
    %140 = arith.addf %132, %139 : vector<256x6xf32>
    %141 = vector.extract_strided_slice %71 {offsets = [5, 0], sizes = [1, 6], strides = [1, 1]} : vector<9x6xf32> to vector<1x6xf32>
    %142 = vector.broadcast %141 : vector<1x6xf32> to vector<256x6xf32>
    %143 = arith.mulf %136, %142 : vector<256x6xf32>
    %144 = arith.addf %140, %143 : vector<256x6xf32>
    %c3_138 = arith.constant 3 : index
    %c1_139 = arith.constant 1 : index
    %c0_140 = arith.constant 0 : index
    %145 = vector.load %arg13[%c3_138, %c1_139, %c0_140] : memref<20x20x6xf32, #tpu.memory_space<vmem>>, vector<16x16x6xf32>
    %146 = vector.shape_cast %145 : vector<16x16x6xf32> to vector<256x6xf32>
    %c4_141 = arith.constant 4 : index
    %c0_142 = arith.constant 0 : index
    %c0_143 = arith.constant 0 : index
    %147 = vector.load %arg13[%c4_141, %c0_142, %c0_143] : memref<20x20x6xf32, #tpu.memory_space<vmem>>, vector<16x16x6xf32>
    %148 = vector.shape_cast %147 : vector<16x16x6xf32> to vector<256x6xf32>
    %149 = vector.extract_strided_slice %70 {offsets = [6, 0], sizes = [1, 6], strides = [1, 1]} : vector<9x6xf32> to vector<1x6xf32>
    %150 = vector.broadcast %149 : vector<1x6xf32> to vector<256x6xf32>
    %151 = arith.mulf %146, %150 : vector<256x6xf32>
    %152 = arith.addf %144, %151 : vector<256x6xf32>
    %153 = vector.extract_strided_slice %71 {offsets = [6, 0], sizes = [1, 6], strides = [1, 1]} : vector<9x6xf32> to vector<1x6xf32>
    %154 = vector.broadcast %153 : vector<1x6xf32> to vector<256x6xf32>
    %155 = arith.mulf %148, %154 : vector<256x6xf32>
    %156 = arith.addf %152, %155 : vector<256x6xf32>
    %c3_144 = arith.constant 3 : index
    %c2_145 = arith.constant 2 : index
    %c0_146 = arith.constant 0 : index
    %157 = vector.load %arg13[%c3_144, %c2_145, %c0_146] : memref<20x20x6xf32, #tpu.memory_space<vmem>>, vector<16x16x6xf32>
    %158 = vector.shape_cast %157 : vector<16x16x6xf32> to vector<256x6xf32>
    %c4_147 = arith.constant 4 : index
    %c2_148 = arith.constant 2 : index
    %c0_149 = arith.constant 0 : index
    %159 = vector.load %arg13[%c4_147, %c2_148, %c0_149] : memref<20x20x6xf32, #tpu.memory_space<vmem>>, vector<16x16x6xf32>
    %160 = vector.shape_cast %159 : vector<16x16x6xf32> to vector<256x6xf32>
    %161 = vector.extract_strided_slice %70 {offsets = [7, 0], sizes = [1, 6], strides = [1, 1]} : vector<9x6xf32> to vector<1x6xf32>
    %162 = vector.broadcast %161 : vector<1x6xf32> to vector<256x6xf32>
    %163 = arith.mulf %158, %162 : vector<256x6xf32>
    %164 = arith.addf %156, %163 : vector<256x6xf32>
    %165 = vector.extract_strided_slice %71 {offsets = [7, 0], sizes = [1, 6], strides = [1, 1]} : vector<9x6xf32> to vector<1x6xf32>
    %166 = vector.broadcast %165 : vector<1x6xf32> to vector<256x6xf32>
    %167 = arith.mulf %160, %166 : vector<256x6xf32>
    %168 = arith.addf %164, %167 : vector<256x6xf32>
    %c3_150 = arith.constant 3 : index
    %c3_151 = arith.constant 3 : index
    %c0_152 = arith.constant 0 : index
    %169 = vector.load %arg13[%c3_150, %c3_151, %c0_152] : memref<20x20x6xf32, #tpu.memory_space<vmem>>, vector<16x16x6xf32>
    %170 = vector.shape_cast %169 : vector<16x16x6xf32> to vector<256x6xf32>
    %c4_153 = arith.constant 4 : index
    %c4_154 = arith.constant 4 : index
    %c0_155 = arith.constant 0 : index
    %171 = vector.load %arg13[%c4_153, %c4_154, %c0_155] : memref<20x20x6xf32, #tpu.memory_space<vmem>>, vector<16x16x6xf32>
    %172 = vector.shape_cast %171 : vector<16x16x6xf32> to vector<256x6xf32>
    %173 = vector.extract_strided_slice %70 {offsets = [8, 0], sizes = [1, 6], strides = [1, 1]} : vector<9x6xf32> to vector<1x6xf32>
    %174 = vector.broadcast %173 : vector<1x6xf32> to vector<256x6xf32>
    %175 = arith.mulf %170, %174 : vector<256x6xf32>
    %176 = arith.addf %168, %175 : vector<256x6xf32>
    %177 = vector.extract_strided_slice %71 {offsets = [8, 0], sizes = [1, 6], strides = [1, 1]} : vector<9x6xf32> to vector<1x6xf32>
    %178 = vector.broadcast %177 : vector<1x6xf32> to vector<256x6xf32>
    %179 = arith.mulf %172, %178 : vector<256x6xf32>
    %180 = arith.addf %176, %179 : vector<256x6xf32>
    %c0_156 = arith.constant 0 : index
    %c0_157 = arith.constant 0 : index
    %181 = vector.load %arg6[%c0_156, %c0_157] : memref<2x6xf32, #tpu.memory_space<vmem>>, vector<1x6xf32>
    %182 = vector.broadcast %181 : vector<1x6xf32> to vector<256x6xf32>
    %183 = arith.addf %180, %182 : vector<256x6xf32>
    %c1_158 = arith.constant 1 : index
    %c0_159 = arith.constant 0 : index
    %184 = vector.load %arg6[%c1_158, %c0_159] : memref<2x6xf32, #tpu.memory_space<vmem>>, vector<1x6xf32>
    %cst_160 = arith.constant 0.000000e+00 : f32
    %185 = vector.broadcast %cst_160 : f32 to vector<256x6xf32>
    %186 = arith.cmpf oge, %183, %185 : vector<256x6xf32>
    %187 = vector.broadcast %184 : vector<1x6xf32> to vector<256x6xf32>
    %188 = arith.mulf %183, %187 : vector<256x6xf32>
    %189 = arith.select %186, %183, %188 : vector<256x6xi1>, vector<256x6xf32>
    %190 = vector.shape_cast %189 : vector<256x6xf32> to vector<16x16x6xf32>
    %c1_161 = arith.constant 1 : index
    %c1_162 = arith.constant 1 : index
    %c0_163 = arith.constant 0 : index
    %191 = vector.load %arg14[%c1_161, %c1_162, %c0_163] : memref<18x18x6xf32, #tpu.memory_space<vmem>>, vector<16x16x6xf32>
    tpu.vector_store %arg14[%c1_161, %c1_162, %c0_163], %190 {strides = array<i32>} : memref<18x18x6xf32, #tpu.memory_space<vmem>>, vector<16x16x6xf32>,
    %c0_164 = arith.constant 0 : index
    %c0_165 = arith.constant 0 : index
    %c0_166 = arith.constant 0 : index
    %192 = vector.load %arg14[%c0_164, %c0_165, %c0_166] : memref<18x18x6xf32, #tpu.memory_space<vmem>>, vector<16x16x6xf32>
    %193 = vector.shape_cast %192 : vector<16x16x6xf32> to vector<256x6xf32>
    %c0_167 = arith.constant 0 : index
    %c0_168 = arith.constant 0 : index
    %194 = vector.load %arg16[%c0_167, %c0_168] : memref<256x54xf32, #tpu.memory_space<vmem>>, vector<256x6xf32>
    tpu.vector_store %arg16[%c0_167, %c0_168], %193 {strides = array<i32>} : memref<256x54xf32, #tpu.memory_space<vmem>>, vector<256x6xf32>,
    %c0_169 = arith.constant 0 : index
    %c1_170 = arith.constant 1 : index
    %c0_171 = arith.constant 0 : index
    %195 = vector.load %arg14[%c0_169, %c1_170, %c0_171] : memref<18x18x6xf32, #tpu.memory_space<vmem>>, vector<16x16x6xf32>
    %196 = vector.shape_cast %195 : vector<16x16x6xf32> to vector<256x6xf32>
    %c0_172 = arith.constant 0 : index
    %c6 = arith.constant 6 : index
    %197 = vector.load %arg16[%c0_172, %c6] : memref<256x54xf32, #tpu.memory_space<vmem>>, vector<256x6xf32>
    tpu.vector_store %arg16[%c0_172, %c6], %196 {strides = array<i32>} : memref<256x54xf32, #tpu.memory_space<vmem>>, vector<256x6xf32>,
    %c0_173 = arith.constant 0 : index
    %c2_174 = arith.constant 2 : index
    %c0_175 = arith.constant 0 : index
    %198 = vector.load %arg14[%c0_173, %c2_174, %c0_175] : memref<18x18x6xf32, #tpu.memory_space<vmem>>, vector<16x16x6xf32>
    %199 = vector.shape_cast %198 : vector<16x16x6xf32> to vector<256x6xf32>
    %c0_176 = arith.constant 0 : index
    %c12_177 = arith.constant 12 : index
    %200 = vector.load %arg16[%c0_176, %c12_177] : memref<256x54xf32, #tpu.memory_space<vmem>>, vector<256x6xf32>
    tpu.vector_store %arg16[%c0_176, %c12_177], %199 {strides = array<i32>} : memref<256x54xf32, #tpu.memory_space<vmem>>, vector<256x6xf32>,
    %c1_178 = arith.constant 1 : index
    %c0_179 = arith.constant 0 : index
    %c0_180 = arith.constant 0 : index
    %201 = vector.load %arg14[%c1_178, %c0_179, %c0_180] : memref<18x18x6xf32, #tpu.memory_space<vmem>>, vector<16x16x6xf32>
    %202 = vector.shape_cast %201 : vector<16x16x6xf32> to vector<256x6xf32>
    %c0_181 = arith.constant 0 : index
    %c18_182 = arith.constant 18 : index
    %203 = vector.load %arg16[%c0_181, %c18_182] : memref<256x54xf32, #tpu.memory_space<vmem>>, vector<256x6xf32>
    tpu.vector_store %arg16[%c0_181, %c18_182], %202 {strides = array<i32>} : memref<256x54xf32, #tpu.memory_space<vmem>>, vector<256x6xf32>,
    %c1_183 = arith.constant 1 : index
    %c1_184 = arith.constant 1 : index
    %c0_185 = arith.constant 0 : index
    %204 = vector.load %arg14[%c1_183, %c1_184, %c0_185] : memref<18x18x6xf32, #tpu.memory_space<vmem>>, vector<16x16x6xf32>
    %205 = vector.shape_cast %204 : vector<16x16x6xf32> to vector<256x6xf32>
    %c0_186 = arith.constant 0 : index
    %c24_187 = arith.constant 24 : index
    %206 = vector.load %arg16[%c0_186, %c24_187] : memref<256x54xf32, #tpu.memory_space<vmem>>, vector<256x6xf32>
    tpu.vector_store %arg16[%c0_186, %c24_187], %205 {strides = array<i32>} : memref<256x54xf32, #tpu.memory_space<vmem>>, vector<256x6xf32>,
    %c1_188 = arith.constant 1 : index
    %c2_189 = arith.constant 2 : index
    %c0_190 = arith.constant 0 : index
    %207 = vector.load %arg14[%c1_188, %c2_189, %c0_190] : memref<18x18x6xf32, #tpu.memory_space<vmem>>, vector<16x16x6xf32>
    %208 = vector.shape_cast %207 : vector<16x16x6xf32> to vector<256x6xf32>
    %c0_191 = arith.constant 0 : index
    %c30 = arith.constant 30 : index
    %209 = vector.load %arg16[%c0_191, %c30] : memref<256x54xf32, #tpu.memory_space<vmem>>, vector<256x6xf32>
    tpu.vector_store %arg16[%c0_191, %c30], %208 {strides = array<i32>} : memref<256x54xf32, #tpu.memory_space<vmem>>, vector<256x6xf32>,
    %c2_192 = arith.constant 2 : index
    %c0_193 = arith.constant 0 : index
    %c0_194 = arith.constant 0 : index
    %210 = vector.load %arg14[%c2_192, %c0_193, %c0_194] : memref<18x18x6xf32, #tpu.memory_space<vmem>>, vector<16x16x6xf32>
    %211 = vector.shape_cast %210 : vector<16x16x6xf32> to vector<256x6xf32>
    %c0_195 = arith.constant 0 : index
    %c36_196 = arith.constant 36 : index
    %212 = vector.load %arg16[%c0_195, %c36_196] : memref<256x54xf32, #tpu.memory_space<vmem>>, vector<256x6xf32>
    tpu.vector_store %arg16[%c0_195, %c36_196], %211 {strides = array<i32>} : memref<256x54xf32, #tpu.memory_space<vmem>>, vector<256x6xf32>,
    %c2_197 = arith.constant 2 : index
    %c1_198 = arith.constant 1 : index
    %c0_199 = arith.constant 0 : index
    %213 = vector.load %arg14[%c2_197, %c1_198, %c0_199] : memref<18x18x6xf32, #tpu.memory_space<vmem>>, vector<16x16x6xf32>
    %214 = vector.shape_cast %213 : vector<16x16x6xf32> to vector<256x6xf32>
    %c0_200 = arith.constant 0 : index
    %c42 = arith.constant 42 : index
    %215 = vector.load %arg16[%c0_200, %c42] : memref<256x54xf32, #tpu.memory_space<vmem>>, vector<256x6xf32>
    tpu.vector_store %arg16[%c0_200, %c42], %214 {strides = array<i32>} : memref<256x54xf32, #tpu.memory_space<vmem>>, vector<256x6xf32>,
    %c2_201 = arith.constant 2 : index
    %c2_202 = arith.constant 2 : index
    %c0_203 = arith.constant 0 : index
    %216 = vector.load %arg14[%c2_201, %c2_202, %c0_203] : memref<18x18x6xf32, #tpu.memory_space<vmem>>, vector<16x16x6xf32>
    %217 = vector.shape_cast %216 : vector<16x16x6xf32> to vector<256x6xf32>
    %c0_204 = arith.constant 0 : index
    %c48_205 = arith.constant 48 : index
    %218 = vector.load %arg16[%c0_204, %c48_205] : memref<256x54xf32, #tpu.memory_space<vmem>>, vector<256x6xf32>
    tpu.vector_store %arg16[%c0_204, %c48_205], %217 {strides = array<i32>} : memref<256x54xf32, #tpu.memory_space<vmem>>, vector<256x6xf32>,
    %c0_206 = arith.constant 0 : index
    %c0_207 = arith.constant 0 : index
    %219 = vector.load %arg16[%c0_206, %c0_207] : memref<256x54xf32, #tpu.memory_space<vmem>>, vector<256x54xf32>
    %220 = arith.truncf %219 : vector<256x54xf32> to vector<256x54xbf16>
    %c0_208 = arith.constant 0 : index
    %c0_209 = arith.constant 0 : index
    %221 = vector.load %arg7[%c0_208, %c0_209] : memref<54x6xf32, #tpu.memory_space<vmem>>, vector<54x6xf32>
    %222 = arith.truncf %221 : vector<54x6xf32> to vector<54x6xbf16>
    %cst_210 = arith.constant dense<0.000000e+00> : vector<256x6xf32>
    %223 = tpu.matmul %220, %222, %cst_210 {dimension_numbers = #tpu.dot_dimension_numbers<[1], [0], [0], [1], [0, 0, 1, 1], [], []>} : vector<256x54xbf16>, vector<54x6xbf16>, vector<256x6xf32> -> vector<256x6xf32>
    %c0_211 = arith.constant 0 : index
    %c0_212 = arith.constant 0 : index
    %224 = vector.load %arg8[%c0_211, %c0_212] : memref<2x6xf32, #tpu.memory_space<vmem>>, vector<1x6xf32>
    %225 = vector.broadcast %224 : vector<1x6xf32> to vector<256x6xf32>
    %226 = arith.addf %223, %225 : vector<256x6xf32>
    %c1_213 = arith.constant 1 : index
    %c0_214 = arith.constant 0 : index
    %227 = vector.load %arg8[%c1_213, %c0_214] : memref<2x6xf32, #tpu.memory_space<vmem>>, vector<1x6xf32>
    %cst_215 = arith.constant 0.000000e+00 : f32
    %228 = vector.broadcast %cst_215 : f32 to vector<256x6xf32>
    %229 = arith.cmpf oge, %226, %228 : vector<256x6xf32>
    %230 = vector.broadcast %227 : vector<1x6xf32> to vector<256x6xf32>
    %231 = arith.mulf %226, %230 : vector<256x6xf32>
    %232 = arith.select %229, %226, %231 : vector<256x6xi1>, vector<256x6xf32>
    %233 = arith.truncf %232 : vector<256x6xf32> to vector<256x6xbf16>
    %c0_216 = arith.constant 0 : index
    %c0_217 = arith.constant 0 : index
    %234 = vector.load %arg9[%c0_216, %c0_217] : memref<6x12xf32, #tpu.memory_space<vmem>>, vector<6x12xf32>
    %235 = arith.truncf %234 : vector<6x12xf32> to vector<6x12xbf16>
    %cst_218 = arith.constant dense<0.000000e+00> : vector<256x12xf32>
    %236 = tpu.matmul %233, %235, %cst_218 {dimension_numbers = #tpu.dot_dimension_numbers<[1], [0], [0], [1], [0, 0, 1, 1], [], []>} : vector<256x6xbf16>, vector<6x12xbf16>, vector<256x12xf32> -> vector<256x12xf32>
    %237 = vector.shape_cast %25 : vector<16x16x12xf32> to vector<256x12xf32>
    %238 = arith.addf %236, %237 : vector<256x12xf32>
    %c0_219 = arith.constant 0 : index
    %c0_220 = arith.constant 0 : index
    %239 = vector.load %arg10[%c0_219, %c0_220] : memref<3x12xf32, #tpu.memory_space<vmem>>, vector<1x12xf32>
    %240 = vector.broadcast %239 : vector<1x12xf32> to vector<256x12xf32>
    %241 = arith.mulf %238, %240 : vector<256x12xf32>
    %c1_221 = arith.constant 1 : index
    %c0_222 = arith.constant 0 : index
    %242 = vector.load %arg10[%c1_221, %c0_222] : memref<3x12xf32, #tpu.memory_space<vmem>>, vector<1x12xf32>
    %243 = vector.broadcast %242 : vector<1x12xf32> to vector<256x12xf32>
    %244 = arith.addf %241, %243 : vector<256x12xf32>
    %c2_223 = arith.constant 2 : index
    %c0_224 = arith.constant 0 : index
    %245 = vector.load %arg10[%c2_223, %c0_224] : memref<3x12xf32, #tpu.memory_space<vmem>>, vector<1x12xf32>
    %cst_225 = arith.constant 0.000000e+00 : f32
    %246 = vector.broadcast %cst_225 : f32 to vector<256x12xf32>
    %247 = arith.cmpf oge, %244, %246 : vector<256x12xf32>
    %248 = vector.broadcast %245 : vector<1x12xf32> to vector<256x12xf32>
    %249 = arith.mulf %244, %248 : vector<256x12xf32>
    %250 = arith.select %247, %244, %249 : vector<256x12xi1>, vector<256x12xf32>
    %251 = vector.shape_cast %250 : vector<256x12xf32> to vector<16x16x12xf32>
    %c0_226 = arith.constant 0 : index
    %c0_227 = arith.constant 0 : index
    %c0_228 = arith.constant 0 : index
    %c0_229 = arith.constant 0 : index
    %252 = vector.load %arg11[%c0_226, %c0_227, %c0_228, %c0_229] : memref<1x16x16x12xf32, #tpu.memory_space<vmem>>, vector<1x16x16x12xf32>
    %253 = vector.shape_cast %252 : vector<1x16x16x12xf32> to vector<16x16x12xf32>
    %254 = vector.shape_cast %251 : vector<16x16x12xf32> to vector<1x16x16x12xf32>
    tpu.vector_store %arg11[%c0_226, %c0_227, %c0_228, %c0_229], %254 {strides = array<i32>} : memref<1x16x16x12xf32, #tpu.memory_space<vmem>>, vector<1x16x16x12xf32>,
    return
  }
  func.func @transform_0(%arg0: i32) -> (i32, i32, i32, i32) {
    %c0_i32 = arith.constant 0 : i32
    %c0_i32_0 = arith.constant 0 : i32
    %c0_i32_1 = arith.constant 0 : i32
    %c0_i32_2 = arith.constant 0 : i32
    return %arg0, %c0_i32, %c0_i32_0, %c0_i32_1 : i32, i32, i32, i32
  }
  func.func @transform_1(%arg0: i32) -> (i32, i32) {
    %c0_i32 = arith.constant 0 : i32
    %c0_i32_0 = arith.constant 0 : i32
    %c0_i32_1 = arith.constant 0 : i32
    return %c0_i32, %c0_i32_0 : i32, i32
  }
  func.func @transform_2(%arg0: i32) -> (i32, i32) {
    %c0_i32 = arith.constant 0 : i32
    %c0_i32_0 = arith.constant 0 : i32
    %c0_i32_1 = arith.constant 0 : i32
    return %c0_i32, %c0_i32_0 : i32, i32
  }
  func.func @transform_3(%arg0: i32) -> (i32, i32) {
    %c0_i32 = arith.constant 0 : i32
    %c0_i32_0 = arith.constant 0 : i32
    %c0_i32_1 = arith.constant 0 : i32
    return %c0_i32, %c0_i32_0 : i32, i32
  }
  func.func @transform_4(%arg0: i32) -> (i32, i32) {
    %c0_i32 = arith.constant 0 : i32
    %c0_i32_0 = arith.constant 0 : i32
    %c0_i32_1 = arith.constant 0 : i32
    return %c0_i32, %c0_i32_0 : i32, i32
  }
  func.func @transform_5(%arg0: i32) -> (i32, i32) {
    %c0_i32 = arith.constant 0 : i32
    %c0_i32_0 = arith.constant 0 : i32
    %c0_i32_1 = arith.constant 0 : i32
    return %c0_i32, %c0_i32_0 : i32, i32
  }
  func.func @transform_6(%arg0: i32) -> (i32, i32) {
    %c0_i32 = arith.constant 0 : i32
    %c0_i32_0 = arith.constant 0 : i32
    %c0_i32_1 = arith.constant 0 : i32
    return %c0_i32, %c0_i32_0 : i32, i32
  }
  func.func @transform_7(%arg0: i32) -> (i32, i32) {
    %c0_i32 = arith.constant 0 : i32
    %c0_i32_0 = arith.constant 0 : i32
    %c0_i32_1 = arith.constant 0 : i32
    return %c0_i32, %c0_i32_0 : i32, i32
  }
  func.func @transform_8(%arg0: i32) -> (i32, i32) {
    %c0_i32 = arith.constant 0 : i32
    %c0_i32_0 = arith.constant 0 : i32
    %c0_i32_1 = arith.constant 0 : i32
    return %c0_i32, %c0_i32_0 : i32, i32
  }
  func.func @transform_9(%arg0: i32) -> (i32, i32) {
    %c0_i32 = arith.constant 0 : i32
    %c0_i32_0 = arith.constant 0 : i32
    %c0_i32_1 = arith.constant 0 : i32
    return %c0_i32, %c0_i32_0 : i32, i32
  }
  func.func @transform_10(%arg0: i32) -> (i32, i32, i32, i32) {
    %c0_i32 = arith.constant 0 : i32
    %c0_i32_0 = arith.constant 0 : i32
    %c0_i32_1 = arith.constant 0 : i32
    %c0_i32_2 = arith.constant 0 : i32
    return %arg0, %c0_i32, %c0_i32_0, %c0_i32_1 : i32, i32, i32, i32
  }
}

</mosaic_0001>

<llo_original>
// kernel: tpu_custom_call.1
$region0: #{tpu_custom_call.1}
  #allocation0 [shape = 'u32[]', space=smem, size = 0x4, offset = 0x4, fixed_abs, tag = 'smem constant byte address 0x4 - core index']
  #allocation1 [shape = 'u32[144,128]{1,0:T(1,128)}', space=vmem, size = 0x12000, scoped, tag = 'internal scratch']
  #allocation2 [shape = 'f32[18,18,12]{2,1,0:T(8,128)}', space=vmem, size = 0x36000, scoped, tag = 'scratch operand']
  #allocation3 [shape = 'f32[20,20,6]{2,1,0:T(8,128)}', space=vmem, size = 0x3c000, scoped, tag = 'scratch operand']
  #allocation4 [shape = 'f32[18,18,6]{2,1,0:T(8,128)}', space=vmem, size = 0x36000, scoped, tag = 'scratch operand']
  #allocation5 [shape = 'f32[256,108]{1,0:T(8,128)}', space=vmem, size = 0x20000, scoped, tag = 'scratch operand']
  #allocation6 [shape = 'f32[256,54]{1,0:T(8,128)}', space=vmem, size = 0x20000, scoped, tag = 'scratch operand']
  %s0 = inlined_call_operand.vmem [shape: f32[2,16,16,12], index: 0, kind: input, shape index: {}]
  %s1 = inlined_call_operand.vmem [shape: f32[108,6], index: 1, kind: input, shape index: {}]
  %s2 = inlined_call_operand.vmem [shape: f32[2,6], index: 2, kind: input, shape index: {}]
  %s3 = inlined_call_operand.vmem [shape: f32[9,6], index: 3, kind: input, shape index: {}]
  %s4 = inlined_call_operand.vmem [shape: f32[9,6], index: 4, kind: input, shape index: {}]
  %s5 = inlined_call_operand.vmem [shape: f32[2,6], index: 5, kind: input, shape index: {}]
  %s6 = inlined_call_operand.vmem [shape: f32[54,6], index: 6, kind: input, shape index: {}]
  %s7 = inlined_call_operand.vmem [shape: f32[2,6], index: 7, kind: input, shape index: {}]
  %s8 = inlined_call_operand.vmem [shape: f32[6,12], index: 8, kind: input, shape index: {}]
  %s9 = inlined_call_operand.vmem [shape: f32[3,12], index: 9, kind: input, shape index: {}]
  %s10 = inlined_call_operand.vmem [shape: f32[2,16,16,12], index: 10, kind: output, shape index: {}]
  %s11 = sld [smem:[#allocation0]]
  $region73: #{tpu_custom_call.1} parent=0
    _
  %s13 = ssub.s32 1, %s11
  %s14 = scalar_select 0, %s13, %s11
  loop: start=0, step=1, limit=4
  $region2: #{tpu_custom_call.1} parent=0 // loop_pre_header
    _
  $region3: #{tpu_custom_call.1} parent=0 // loop_header
    %s16 = sphi 0, %s20
    %p17 = scmp.ge.s32.totalorder %s16, 4
    %s26 = sphi 0, %s28
    %s29 = sphi 0, %s26
    %s30 = sphi 0, %s29
    %s46 = sphi 0, %s30
    %s50 = sphi 0, %s50
    %s52 = sphi 0, %s50
    %s53 = sphi 0, %s52
    %s67 = sphi 0, %s53
    %s71 = sphi 0, %s71
    %s73 = sphi 0, %s71
    %s74 = sphi 0, %s73
    %s88 = sphi 0, %s74
    %s92 = sphi 0, %s92
    %s94 = sphi 0, %s92
    %s95 = sphi 0, %s94
    %s109 = sphi 0, %s95
    %s113 = sphi 0, %s113
    %s115 = sphi 0, %s113
    %s116 = sphi 0, %s115
    %s130 = sphi 0, %s116
    %s134 = sphi 0, %s134
    %s136 = sphi 0, %s134
    %s137 = sphi 0, %s136
    %s151 = sphi 0, %s137
    %s155 = sphi 0, %s155
    %s157 = sphi 0, %s155
    %s158 = sphi 0, %s157
    %s172 = sphi 0, %s158
    %s176 = sphi 0, %s176
    %s178 = sphi 0, %s176
    %s179 = sphi 0, %s178
    %s193 = sphi 0, %s179
    %s197 = sphi 0, %s197
    %s199 = sphi 0, %s197
    %s200 = sphi 0, %s199
    %s214 = sphi 0, %s200
    %s218 = sphi 0, %s218
    %s220 = sphi 0, %s218
    %s221 = sphi 0, %s220
    %s235 = sphi 0, %s221
    %s241 = sphi 0, %s243
    %s244 = sphi 0, %s241
    %s245 = sphi 0, %s244
    %s261 = sphi 0, %s245
  $region4: #{tpu_custom_call.1} parent=0 // loop_header_branch
    %19 = sbr.rel (%p17) target = $region8
  $region5: #{tpu_custom_call.1} parent=0 // loop_body
    %s21 = ssub.s32 %s16, 1
    %s22 = ssub.s32 %s16, 2
    %s23 = sadd.s32 %s16, 1
    %s24 = ssub.s32 %s16, %s23
    %p25 = scmp.eq.s32.totalorder %s24, 0
    %s27 = sadd.s32 %s26, 1
    %s28 = scalar_select %p25, %s26, %s27
    %p31 = pneg %p25
    %p32 = scmp.eq.s32.totalorder %s16, 1
    %p33 = por %p31, %p32
    %p34 = scmp.ne.s32.totalorder %s26, %s29
    %p35 = scmp.eq.s32.totalorder %s16, 0
    %p36 = por %p34, %p35
    %p37 = scmp.ne.s32.totalorder %s26, %s29
    %p38 = scmp.eq.s32.totalorder %s21, 1
    %p39 = por %p37, %p38
    %p40 = scmp.ne.s32.totalorder %s29, %s30
    %p41 = scmp.eq.s32.totalorder %s21, 0
    %p42 = por %p40, %p41
    %p43 = scmp.ne.s32.totalorder %s29, %s30
    %p44 = scmp.eq.s32.totalorder %s22, 1
    %p45 = por %p43, %p44
    %p47 = scmp.ne.s32.totalorder %s30, %s46
    %p48 = scmp.eq.s32.totalorder %s22, 0
    %p49 = por %p47, %p48
    %s51 = sadd.s32 %s50, 1
    %p54 = scmp.eq.s32.totalorder %s16, 1
    %p55 = scmp.ne.s32.totalorder %s50, %s52
    %p56 = scmp.eq.s32.totalorder %s16, 0
    %p57 = por %p55, %p56
    %p58 = scmp.ne.s32.totalorder %s50, %s52
    %p59 = scmp.eq.s32.totalorder %s21, 1
    %p60 = por %p58, %p59
    %p61 = scmp.ne.s32.totalorder %s52, %s53
    %p62 = scmp.eq.s32.totalorder %s21, 0
    %p63 = por %p61, %p62
    %p64 = scmp.ne.s32.totalorder %s52, %s53
    %p65 = scmp.eq.s32.totalorder %s22, 1
    %p66 = por %p64, %p65
    %p68 = scmp.ne.s32.totalorder %s53, %s67
    %p69 = scmp.eq.s32.totalorder %s22, 0
    %p70 = por %p68, %p69
    %s72 = sadd.s32 %s71, 1
    %p75 = scmp.eq.s32.totalorder %s16, 1
    %p76 = scmp.ne.s32.totalorder %s71, %s73
    %p77 = scmp.eq.s32.totalorder %s16, 0
    %p78 = por %p76, %p77
    %p79 = scmp.ne.s32.totalorder %s71, %s73
    %p80 = scmp.eq.s32.totalorder %s21, 1
    %p81 = por %p79, %p80
    %p82 = scmp.ne.s32.totalorder %s73, %s74
    %p83 = scmp.eq.s32.totalorder %s21, 0
    %p84 = por %p82, %p83
    %p85 = scmp.ne.s32.totalorder %s73, %s74
    %p86 = scmp.eq.s32.totalorder %s22, 1
    %p87 = por %p85, %p86
    %p89 = scmp.ne.s32.totalorder %s74, %s88
    %p90 = scmp.eq.s32.totalorder %s22, 0
    %p91 = por %p89, %p90
    %s93 = sadd.s32 %s92, 1
    %p96 = scmp.eq.s32.totalorder %s16, 1
    %p97 = scmp.ne.s32.totalorder %s92, %s94
    %p98 = scmp.eq.s32.totalorder %s16, 0
    %p99 = por %p97, %p98
    %p100 = scmp.ne.s32.totalorder %s92, %s94
    %p101 = scmp.eq.s32.totalorder %s21, 1
    %p102 = por %p100, %p101
    %p103 = scmp.ne.s32.totalorder %s94, %s95
    %p104 = scmp.eq.s32.totalorder %s21, 0
    %p105 = por %p103, %p104
    %p106 = scmp.ne.s32.totalorder %s94, %s95
    %p107 = scmp.eq.s32.totalorder %s22, 1
    %p108 = por %p106, %p107
    %p110 = scmp.ne.s32.totalorder %s95, %s109
    %p111 = scmp.eq.s32.totalorder %s22, 0
    %p112 = por %p110, %p111
    %s114 = sadd.s32 %s113, 1
    %p117 = scmp.eq.s32.totalorder %s16, 1
    %p118 = scmp.ne.s32.totalorder %s113, %s115
    %p119 = scmp.eq.s32.totalorder %s16, 0
    %p120 = por %p118, %p119
    %p121 = scmp.ne.s32.totalorder %s113, %s115
    %p122 = scmp.eq.s32.totalorder %s21, 1
    %p123 = por %p121, %p122
    %p124 = scmp.ne.s32.totalorder %s115, %s116
    %p125 = scmp.eq.s32.totalorder %s21, 0
    %p126 = por %p124, %p125
    %p127 = scmp.ne.s32.totalorder %s115, %s116
    %p128 = scmp.eq.s32.totalorder %s22, 1
    %p129 = por %p127, %p128
    %p131 = scmp.ne.s32.totalorder %s116, %s130
    %p132 = scmp.eq.s32.totalorder %s22, 0
    %p133 = por %p131, %p132
    %s135 = sadd.s32 %s134, 1
    %p138 = scmp.eq.s32.totalorder %s16, 1
    %p139 = scmp.ne.s32.totalorder %s134, %s136
    %p140 = scmp.eq.s32.totalorder %s16, 0
    %p141 = por %p139, %p140
    %p142 = scmp.ne.s32.totalorder %s134, %s136
    %p143 = scmp.eq.s32.totalorder %s21, 1
    %p144 = por %p142, %p143
    %p145 = scmp.ne.s32.totalorder %s136, %s137
    %p146 = scmp.eq.s32.totalorder %s21, 0
    %p147 = por %p145, %p146
    %p148 = scmp.ne.s32.totalorder %s136, %s137
    %p149 = scmp.eq.s32.totalorder %s22, 1
    %p150 = por %p148, %p149
    %p152 = scmp.ne.s32.totalorder %s137, %s151
    %p153 = scmp.eq.s32.totalorder %s22, 0
    %p154 = por %p152, %p153
    %s156 = sadd.s32 %s155, 1
    %p159 = scmp.eq.s32.totalorder %s16, 1
    %p160 = scmp.ne.s32.totalorder %s155, %s157
    %p161 = scmp.eq.s32.totalorder %s16, 0
    %p162 = por %p160, %p161
    %p163 = scmp.ne.s32.totalorder %s155, %s157
    %p164 = scmp.eq.s32.totalorder %s21, 1
    %p165 = por %p163, %p164
    %p166 = scmp.ne.s32.totalorder %s157, %s158
    %p167 = scmp.eq.s32.totalorder %s21, 0
    %p168 = por %p166, %p167
    %p169 = scmp.ne.s32.totalorder %s157, %s158
    %p170 = scmp.eq.s32.totalorder %s22, 1
    %p171 = por %p169, %p170
    %p173 = scmp.ne.s32.totalorder %s158, %s172
    %p174 = scmp.eq.s32.totalorder %s22, 0
    %p175 = por %p173, %p174
    %s177 = sadd.s32 %s176, 1
    %p180 = scmp.eq.s32.totalorder %s16, 1
    %p181 = scmp.ne.s32.totalorder %s176, %s178
    %p182 = scmp.eq.s32.totalorder %s16, 0
    %p183 = por %p181, %p182
    %p184 = scmp.ne.s32.totalorder %s176, %s178
    %p185 = scmp.eq.s32.totalorder %s21, 1
    %p186 = por %p184, %p185
    %p187 = scmp.ne.s32.totalorder %s178, %s179
    %p188 = scmp.eq.s32.totalorder %s21, 0
    %p189 = por %p187, %p188
    %p190 = scmp.ne.s32.totalorder %s178, %s179
    %p191 = scmp.eq.s32.totalorder %s22, 1
    %p192 = por %p190, %p191
    %p194 = scmp.ne.s32.totalorder %s179, %s193
    %p195 = scmp.eq.s32.totalorder %s22, 0
    %p196 = por %p194, %p195
    %s198 = sadd.s32 %s197, 1
    %p201 = scmp.eq.s32.totalorder %s16, 1
    %p202 = scmp.ne.s32.totalorder %s197, %s199
    %p203 = scmp.eq.s32.totalorder %s16, 0
    %p204 = por %p202, %p203
    %p205 = scmp.ne.s32.totalorder %s197, %s199
    %p206 = scmp.eq.s32.totalorder %s21, 1
    %p207 = por %p205, %p206
    %p208 = scmp.ne.s32.totalorder %s199, %s200
    %p209 = scmp.eq.s32.totalorder %s21, 0
    %p210 = por %p208, %p209
    %p211 = scmp.ne.s32.totalorder %s199, %s200
    %p212 = scmp.eq.s32.totalorder %s22, 1
    %p213 = por %p211, %p212
    %p215 = scmp.ne.s32.totalorder %s200, %s214
    %p216 = scmp.eq.s32.totalorder %s22, 0
    %p217 = por %p215, %p216
    %s219 = sadd.s32 %s218, 1
    %p222 = scmp.eq.s32.totalorder %s16, 1
    %p223 = scmp.ne.s32.totalorder %s218, %s220
    %p224 = scmp.eq.s32.totalorder %s16, 0
    %p225 = por %p223, %p224
    %p226 = scmp.ne.s32.totalorder %s218, %s220
    %p227 = scmp.eq.s32.totalorder %s21, 1
    %p228 = por %p226, %p227
    %p229 = scmp.ne.s32.totalorder %s220, %s221
    %p230 = scmp.eq.s32.totalorder %s21, 0
    %p231 = por %p229, %p230
    %p232 = scmp.ne.s32.totalorder %s220, %s221
    %p233 = scmp.eq.s32.totalorder %s22, 1
    %p234 = por %p232, %p233
    %p236 = scmp.ne.s32.totalorder %s221, %s235
    %p237 = scmp.eq.s32.totalorder %s22, 0
    %p238 = por %p236, %p237
    %s239 = ssub.s32 %s16, %s23
    %p240 = scmp.eq.s32.totalorder %s239, 0
    %s242 = sadd.s32 %s241, 1
    %s243 = scalar_select %p240, %s241, %s242
    %p246 = pneg %p240
    %p247 = scmp.eq.s32.totalorder %s16, 1
    %p248 = por %p246, %p247
    %p249 = scmp.ne.s32.totalorder %s241, %s244
    %p250 = scmp.eq.s32.totalorder %s16, 0
    %p251 = por %p249, %p250
    %p252 = scmp.ne.s32.totalorder %s241, %s244
    %p253 = scmp.eq.s32.totalorder %s21, 1
    %p254 = por %p252, %p253
    %p255 = scmp.ne.s32.totalorder %s244, %s245
    %p256 = scmp.eq.s32.totalorder %s21, 0
    %p257 = por %p255, %p256
    %p258 = scmp.ne.s32.totalorder %s244, %s245
    %p259 = scmp.eq.s32.totalorder %s22, 1
    %p260 = por %p258, %p259
    %p262 = scmp.ne.s32.totalorder %s245, %s261
    %p263 = scmp.eq.s32.totalorder %s22, 0
    %p264 = por %p262, %p263
    %p265 = scmp.le.s32.totalorder 1, %s16
    %p266 = scmp.lt.s32.totalorder %s16, 3
    %p267 = pnand %p265, %p266
    %p268 = pneg %p267
    // Predicated region
    $region9: #{tpu_custom_call.1} parent=5 // pred_check
      _
    $region10: #{tpu_custom_call.1} parent=5 // pred_check_branch
      %270 = sbr.rel (%p267) target = $region12
    $region11: #{tpu_custom_call.1} parent=5 // pred_region
      %s271 = ssub.s32 %s16, 1
      // Predicated region
      $region13: #{tpu_custom_call.1} parent=11 // pred_check
        %p272 = pneg %p63
      $region14: #{tpu_custom_call.1} parent=11 // pred_check_branch
        %274 = sbr.rel (%p272) target = $region16
      $region15: #{tpu_custom_call.1} parent=11 // pred_region
        _
      $region16: #{tpu_custom_call.1} parent=11 // pred_fallthru
        _
      // Predicated region
      $region17: #{tpu_custom_call.1} parent=11 // pred_check
        %p275 = pneg %p84
      $region18: #{tpu_custom_call.1} parent=11 // pred_check_branch
        %277 = sbr.rel (%p275) target = $region20
      $region19: #{tpu_custom_call.1} parent=11 // pred_region
        _
      $region20: #{tpu_custom_call.1} parent=11 // pred_fallthru
        _
      // Predicated region
      $region21: #{tpu_custom_call.1} parent=11 // pred_check
        %p278 = pneg %p105
      $region22: #{tpu_custom_call.1} parent=11 // pred_check_branch
        %280 = sbr.rel (%p278) target = $region24
      $region23: #{tpu_custom_call.1} parent=11 // pred_region
        _
      $region24: #{tpu_custom_call.1} parent=11 // pred_fallthru
        _
      // Predicated region
      $region25: #{tpu_custom_call.1} parent=11 // pred_check
        %p281 = pneg %p126
      $region26: #{tpu_custom_call.1} parent=11 // pred_check_branch
        %283 = sbr.rel (%p281) target = $region28
      $region27: #{tpu_custom_call.1} parent=11 // pred_region
        _
      $region28: #{tpu_custom_call.1} parent=11 // pred_fallthru
        _
      // Predicated region
      $region29: #{tpu_custom_call.1} parent=11 // pred_check
        %p284 = pneg %p147
      $region30: #{tpu_custom_call.1} parent=11 // pred_check_branch
        %286 = sbr.rel (%p284) target = $region32
      $region31: #{tpu_custom_call.1} parent=11 // pred_region
        _
      $region32: #{tpu_custom_call.1} parent=11 // pred_fallthru
        _
      // Predicated region
      $region33: #{tpu_custom_call.1} parent=11 // pred_check
        %p287 = pneg %p168
      $region34: #{tpu_custom_call.1} parent=11 // pred_check_branch
        %289 = sbr.rel (%p287) target = $region36
      $region35: #{tpu_custom_call.1} parent=11 // pred_region
        _
      $region36: #{tpu_custom_call.1} parent=11 // pred_fallthru
        _
      // Predicated region
      $region37: #{tpu_custom_call.1} parent=11 // pred_check
        %p290 = pneg %p189
      $region38: #{tpu_custom_call.1} parent=11 // pred_check_branch
        %292 = sbr.rel (%p290) target = $region40
      $region39: #{tpu_custom_call.1} parent=11 // pred_region
        _
      $region40: #{tpu_custom_call.1} parent=11 // pred_fallthru
        _
      // Predicated region
      $region41: #{tpu_custom_call.1} parent=11 // pred_check
        %p293 = pneg %p210
      $region42: #{tpu_custom_call.1} parent=11 // pred_check_branch
        %295 = sbr.rel (%p293) target = $region44
      $region43: #{tpu_custom_call.1} parent=11 // pred_region
        _
      $region44: #{tpu_custom_call.1} parent=11 // pred_fallthru
        _
      // Predicated region
      $region45: #{tpu_custom_call.1} parent=11 // pred_check
        %p296 = pneg %p231
      $region46: #{tpu_custom_call.1} parent=11 // pred_check_branch
        %298 = sbr.rel (%p296) target = $region48
      $region47: #{tpu_custom_call.1} parent=11 // pred_region
        _
      $region48: #{tpu_custom_call.1} parent=11 // pred_fallthru
        _
    $region12: #{tpu_custom_call.1} parent=5 // pred_fallthru
      _
    %p299 = scmp.lt.s32.totalorder %s16, 2
    // Predicated region
    $region49: #{tpu_custom_call.1} parent=5 // pred_check
      %p300 = pneg %p299
    $region50: #{tpu_custom_call.1} parent=5 // pred_check_branch
      %302 = sbr.rel (%p300) target = $region52
    $region51: #{tpu_custom_call.1} parent=5 // pred_region
      // Predicated region
      $region53: #{tpu_custom_call.1} parent=51 // pred_check
        %p303 = pneg %p36
      $region54: #{tpu_custom_call.1} parent=51 // pred_check_branch
        %305 = sbr.rel (%p303) target = $region56
      $region55: #{tpu_custom_call.1} parent=51 // pred_region
        %p306 = scmp.lt.s32.totalorder %s16, 1
        %s307 = scalar_select %p306, %s16, 1
        %s308 = smul.addr %s307, 32
        %s309 = smul.addr %s308, 8
        %s310 = scalar_lea.vmem %s0, %s309
      $region56: #{tpu_custom_call.1} parent=51 // pred_fallthru
        _
    $region52: #{tpu_custom_call.1} parent=5 // pred_fallthru
      _
    %p311 = scmp.le.s32.totalorder 1, %s16
    %p312 = scmp.lt.s32.totalorder %s16, 3
    %p313 = pnand %p311, %p312
    %p314 = pneg %p313
    // Predicated region
    $region57: #{tpu_custom_call.1} parent=5 // pred_check
      _
    $region58: #{tpu_custom_call.1} parent=5 // pred_check_branch
      %316 = sbr.rel (%p313) target = $region60
    $region59: #{tpu_custom_call.1} parent=5 // pred_region
      %s317 = ssub.s32 %s16, 1
      %p318 = scmp.lt.s32.totalorder %s21, 1
      %s319 = scalar_select %p318, %s21, 1
      %s320 = smul.addr %s319, 32
      %s321 = smul.addr %s320, 8
      %s322 = scalar_lea.vmem %s0, %s321
      %p323 = pneg %p42
      %p324 = pneg %p39
      %p325 = pneg %p63
      %p326 = pneg %p60
      %p327 = pneg %p84
      %p328 = pneg %p81
      %p329 = pneg %p105
      %p330 = pneg %p102
      %p331 = pneg %p126
      %p332 = pneg %p123
      %p333 = pneg %p147
      %p334 = pneg %p144
      %p335 = pneg %p168
      %p336 = pneg %p165
      %p337 = pneg %p189
      %p338 = pneg %p186
      %p339 = pneg %p210
      %p340 = pneg %p207
      %p341 = pneg %p231
      %p342 = pneg %p228
      %p343 = pneg %p257
      %p344 = pneg %p254
      %p345 = scmp.lt.s32.totalorder %s21, 1
      %s346 = scalar_select %p345, %s21, 1
      %s347 = smul.addr %s346, 32
      %s348 = smul.addr %s347, 8
      %s349 = scalar_lea.vmem %s10, %s348
      %p350 = scmp.lt.s32.totalorder %s21, 1
      %s351 = scalar_select %p350, %s21, 1
      %s352 = smul.addr %s351, 32
      %s353 = smul.addr %s352, 8
      %s354 = scalar_lea.vmem %s0, %s353
      %p355 = scmp.lt.s32.totalorder %s21, 1
      %s356 = scalar_select %p355, %s21, 1
      %s357 = smul.addr %s356, 32
      %s358 = smul.addr %s357, 8
      %s359 = scalar_lea.vmem %s10, %s358
      %vm361 = vcmask 97280
      %362 = vst.msk [vmem:[#allocation2] sm:$0xff] %vm361, 0.0
      %363 = vst.msk [vmem:[#allocation2 + $0x8] sm:$0xff] %vm361, 0.0
      %vm364 = vcmask 91136
      %365 = vst.msk [vmem:[#allocation2 + $0x10] sm:$0x3] %vm364, 0.0
      %s366 = scalar_lea.vmem [#allocation2], 408
      %367 = vst.msk [vmem:[%s366] sm:$0xff] %vm361, 0.0
      %368 = vst.msk [vmem:[%s366 + $0x8] sm:$0xff] %vm361, 0.0
      %369 = vst.msk [vmem:[%s366 + $0x10] sm:$0x3] %vm364, 0.0
      %s370 = scalar_lea.vmem [#allocation2], 24
      %vm371 = vcmask 90112
      %372 = vst.msk [vmem:[%s370] sm:$0x1] %vm371, 0.0
      %373 = vst.msk [vmem:[%s370 + $0x18] sm:$0x1] %vm371, 0.0
      %374 = vst.msk [vmem:[%s370 + $0x30] sm:$0x1] %vm371, 0.0
      %375 = vst.msk [vmem:[%s370 + $0x48] sm:$0x1] %vm371, 0.0
      %376 = vst.msk [vmem:[%s370 + $0x60] sm:$0x1] %vm371, 0.0
      %377 = vst.msk [vmem:[%s370 + $0x78] sm:$0x1] %vm371, 0.0
      %378 = vst.msk [vmem:[%s370 + $0x90] sm:$0x1] %vm371, 0.0
      %379 = vst.msk [vmem:[%s370 + $0xa8] sm:$0x1] %vm371, 0.0
      %380 = vst.msk [vmem:[%s370 + $0xc0] sm:$0x1] %vm371, 0.0
      %381 = vst.msk [vmem:[%s370 + $0xd8] sm:$0x1] %vm371, 0.0
      %382 = vst.msk [vmem:[%s370 + $0xf0] sm:$0x1] %vm371, 0.0
      %383 = vst.msk [vmem:[%s370 + $0x108] sm:$0x1] %vm371, 0.0
      %384 = vst.msk [vmem:[%s370 + $0x120] sm:$0x1] %vm371, 0.0
      %385 = vst.msk [vmem:[%s370 + $0x138] sm:$0x1] %vm371, 0.0
      %386 = vst.msk [vmem:[%s370 + $0x150] sm:$0x1] %vm371, 0.0
      %387 = vst.msk [vmem:[%s370 + $0x168] sm:$0x1] %vm371, 0.0
      %388 = vst.msk [vmem:[%s370 + $0x11] sm:$0x1] %vm371, 0.0
      %389 = vst.msk [vmem:[%s370 + $0x29] sm:$0x1] %vm371, 0.0
      %390 = vst.msk [vmem:[%s370 + $0x41] sm:$0x1] %vm371, 0.0
      %391 = vst.msk [vmem:[%s370 + $0x59] sm:$0x1] %vm371, 0.0
      %392 = vst.msk [vmem:[%s370 + $0x71] sm:$0x1] %vm371, 0.0
      %393 = vst.msk [vmem:[%s370 + $0x89] sm:$0x1] %vm371, 0.0
      %394 = vst.msk [vmem:[%s370 + $0xa1] sm:$0x1] %vm371, 0.0
      %395 = vst.msk [vmem:[%s370 + $0xb9] sm:$0x1] %vm371, 0.0
      %396 = vst.msk [vmem:[%s370 + $0xd1] sm:$0x1] %vm371, 0.0
      %397 = vst.msk [vmem:[%s370 + $0xe9] sm:$0x1] %vm371, 0.0
      %398 = vst.msk [vmem:[%s370 + $0x101] sm:$0x1] %vm371, 0.0
      %399 = vst.msk [vmem:[%s370 + $0x119] sm:$0x1] %vm371, 0.0
      %400 = vst.msk [vmem:[%s370 + $0x131] sm:$0x1] %vm371, 0.0
      %401 = vst.msk [vmem:[%s370 + $0x149] sm:$0x1] %vm371, 0.0
      %402 = vst.msk [vmem:[%s370 + $0x161] sm:$0x1] %vm371, 0.0
      %403 = vst.msk [vmem:[%s370 + $0x179] sm:$0x1] %vm371, 0.0
      %vm404 = vcmask 48128
      %405 = vst.msk [vmem:[#allocation3] sm:$0xff] %vm404, 0.0
      %406 = vst.msk [vmem:[#allocation3 + $0x8] sm:$0xff] %vm404, 0.0
      %vm407 = vcmask 44032
      %408 = vst.msk [vmem:[#allocation3 + $0x10] sm:$0xf] %vm407, 0.0
      %409 = vst.msk [vmem:[#allocation3 + $0x18] sm:$0xff] %vm404, 0.0
      %410 = vst.msk [vmem:[#allocation3 + $0x20] sm:$0xff] %vm404, 0.0
      %411 = vst.msk [vmem:[#allocation3 + $0x28] sm:$0xf] %vm407, 0.0
      %s412 = scalar_lea.vmem [#allocation3], 432
      %413 = vst.msk [vmem:[%s412] sm:$0xff] %vm404, 0.0
      %414 = vst.msk [vmem:[%s412 + $0x8] sm:$0xff] %vm404, 0.0
      %415 = vst.msk [vmem:[%s412 + $0x10] sm:$0xf] %vm407, 0.0
      %416 = vst.msk [vmem:[%s412 + $0x18] sm:$0xff] %vm404, 0.0
      %417 = vst.msk [vmem:[%s412 + $0x20] sm:$0xff] %vm404, 0.0
      %418 = vst.msk [vmem:[%s412 + $0x28] sm:$0xf] %vm407, 0.0
      %s419 = scalar_lea.vmem [#allocation3], 48
      %vm420 = vcmask 41984
      %421 = vst.msk [vmem:[%s419] sm:$0x3] %vm420, 0.0
      %422 = vst.msk [vmem:[%s419 + $0x18] sm:$0x3] %vm420, 0.0
      %423 = vst.msk [vmem:[%s419 + $0x30] sm:$0x3] %vm420, 0.0
      %424 = vst.msk [vmem:[%s419 + $0x48] sm:$0x3] %vm420, 0.0
      %425 = vst.msk [vmem:[%s419 + $0x60] sm:$0x3] %vm420, 0.0
      %426 = vst.msk [vmem:[%s419 + $0x78] sm:$0x3] %vm420, 0.0
      %427 = vst.msk [vmem:[%s419 + $0x90] sm:$0x3] %vm420, 0.0
      %428 = vst.msk [vmem:[%s419 + $0xa8] sm:$0x3] %vm420, 0.0
      %429 = vst.msk [vmem:[%s419 + $0xc0] sm:$0x3] %vm420, 0.0
      %430 = vst.msk [vmem:[%s419 + $0xd8] sm:$0x3] %vm420, 0.0
      %431 = vst.msk [vmem:[%s419 + $0xf0] sm:$0x3] %vm420, 0.0
      %432 = vst.msk [vmem:[%s419 + $0x108] sm:$0x3] %vm420, 0.0
      %433 = vst.msk [vmem:[%s419 + $0x120] sm:$0x3] %vm420, 0.0
      %434 = vst.msk [vmem:[%s419 + $0x138] sm:$0x3] %vm420, 0.0
      %435 = vst.msk [vmem:[%s419 + $0x150] sm:$0x3] %vm420, 0.0
      %436 = vst.msk [vmem:[%s419 + $0x168] sm:$0x3] %vm420, 0.0
      %437 = vst.msk [vmem:[%s419 + $0x12] sm:$0x3] %vm420, 0.0
      %438 = vst.msk [vmem:[%s419 + $0x2a] sm:$0x3] %vm420, 0.0
      %439 = vst.msk [vmem:[%s419 + $0x42] sm:$0x3] %vm420, 0.0
      %440 = vst.msk [vmem:[%s419 + $0x5a] sm:$0x3] %vm420, 0.0
      %441 = vst.msk [vmem:[%s419 + $0x72] sm:$0x3] %vm420, 0.0
      %442 = vst.msk [vmem:[%s419 + $0x8a] sm:$0x3] %vm420, 0.0
      %443 = vst.msk [vmem:[%s419 + $0xa2] sm:$0x3] %vm420, 0.0
      %444 = vst.msk [vmem:[%s419 + $0xba] sm:$0x3] %vm420, 0.0
      %445 = vst.msk [vmem:[%s419 + $0xd2] sm:$0x3] %vm420, 0.0
      %446 = vst.msk [vmem:[%s419 + $0xea] sm:$0x3] %vm420, 0.0
      %447 = vst.msk [vmem:[%s419 + $0x102] sm:$0x3] %vm420, 0.0
      %448 = vst.msk [vmem:[%s419 + $0x11a] sm:$0x3] %vm420, 0.0
      %449 = vst.msk [vmem:[%s419 + $0x132] sm:$0x3] %vm420, 0.0
      %450 = vst.msk [vmem:[%s419 + $0x14a] sm:$0x3] %vm420, 0.0
      %451 = vst.msk [vmem:[%s419 + $0x162] sm:$0x3] %vm420, 0.0
      %452 = vst.msk [vmem:[%s419 + $0x17a] sm:$0x3] %vm420, 0.0
      %453 = vst.msk [vmem:[#allocation4] sm:$0xff] %vm404, 0.0
      %454 = vst.msk [vmem:[#allocation4 + $0x8] sm:$0xff] %vm404, 0.0
      %455 = vst.msk [vmem:[#allocation4 + $0x10] sm:$0x3] %vm420, 0.0
      %s456 = scalar_lea.vmem [#allocation4], 408
      %457 = vst.msk [vmem:[%s456] sm:$0xff] %vm404, 0.0
      %458 = vst.msk [vmem:[%s456 + $0x8] sm:$0xff] %vm404, 0.0
      %459 = vst.msk [vmem:[%s456 + $0x10] sm:$0x3] %vm420, 0.0
      %s460 = scalar_lea.vmem [#allocation4], 24
      %vm461 = vcmask 40960
      %462 = vst.msk [vmem:[%s460] sm:$0x1] %vm461, 0.0
      %463 = vst.msk [vmem:[%s460 + $0x18] sm:$0x1] %vm461, 0.0
      %464 = vst.msk [vmem:[%s460 + $0x30] sm:$0x1] %vm461, 0.0
      %465 = vst.msk [vmem:[%s460 + $0x48] sm:$0x1] %vm461, 0.0
      %466 = vst.msk [vmem:[%s460 + $0x60] sm:$0x1] %vm461, 0.0
      %467 = vst.msk [vmem:[%s460 + $0x78] sm:$0x1] %vm461, 0.0
      %468 = vst.msk [vmem:[%s460 + $0x90] sm:$0x1] %vm461, 0.0
      %469 = vst.msk [vmem:[%s460 + $0xa8] sm:$0x1] %vm461, 0.0
      %470 = vst.msk [vmem:[%s460 + $0xc0] sm:$0x1] %vm461, 0.0
      %471 = vst.msk [vmem:[%s460 + $0xd8] sm:$0x1] %vm461, 0.0
      %472 = vst.msk [vmem:[%s460 + $0xf0] sm:$0x1] %vm461, 0.0
      %473 = vst.msk [vmem:[%s460 + $0x108] sm:$0x1] %vm461, 0.0
      %474 = vst.msk [vmem:[%s460 + $0x120] sm:$0x1] %vm461, 0.0
      %475 = vst.msk [vmem:[%s460 + $0x138] sm:$0x1] %vm461, 0.0
      %476 = vst.msk [vmem:[%s460 + $0x150] sm:$0x1] %vm461, 0.0
      %477 = vst.msk [vmem:[%s460 + $0x168] sm:$0x1] %vm461, 0.0
      %478 = vst.msk [vmem:[%s460 + $0x11] sm:$0x1] %vm461, 0.0
      %479 = vst.msk [vmem:[%s460 + $0x29] sm:$0x1] %vm461, 0.0
      %480 = vst.msk [vmem:[%s460 + $0x41] sm:$0x1] %vm461, 0.0
      %481 = vst.msk [vmem:[%s460 + $0x59] sm:$0x1] %vm461, 0.0
      %482 = vst.msk [vmem:[%s460 + $0x71] sm:$0x1] %vm461, 0.0
      %483 = vst.msk [vmem:[%s460 + $0x89] sm:$0x1] %vm461, 0.0
      %484 = vst.msk [vmem:[%s460 + $0xa1] sm:$0x1] %vm461, 0.0
      %485 = vst.msk [vmem:[%s460 + $0xb9] sm:$0x1] %vm461, 0.0
      %486 = vst.msk [vmem:[%s460 + $0xd1] sm:$0x1] %vm461, 0.0
      %487 = vst.msk [vmem:[%s460 + $0xe9] sm:$0x1] %vm461, 0.0
      %488 = vst.msk [vmem:[%s460 + $0x101] sm:$0x1] %vm461, 0.0
      %489 = vst.msk [vmem:[%s460 + $0x119] sm:$0x1] %vm461, 0.0
      %490 = vst.msk [vmem:[%s460 + $0x131] sm:$0x1] %vm461, 0.0
      %491 = vst.msk [vmem:[%s460 + $0x149] sm:$0x1] %vm461, 0.0
      %492 = vst.msk [vmem:[%s460 + $0x161] sm:$0x1] %vm461, 0.0
      %493 = vst.msk [vmem:[%s460 + $0x179] sm:$0x1] %vm461, 0.0
      %v494 = vld [vmem:[%s354] sm:$0xff]
      %v495 = vld [vmem:[%s354 + $0x8] sm:$0xff]
      %v496 = vld [vmem:[%s354 + $0x10] sm:$0xff]
      %v497 = vld [vmem:[%s354 + $0x18] sm:$0xff]
      %v498 = vld [vmem:[%s354 + $0x20] sm:$0xff]
      %v499 = vld [vmem:[%s354 + $0x28] sm:$0xff]
      %v500 = vld [vmem:[%s354 + $0x30] sm:$0xff]
      %v501 = vld [vmem:[%s354 + $0x38] sm:$0xff]
      %v502 = vld [vmem:[%s354 + $0x40] sm:$0xff]
      %v503 = vld [vmem:[%s354 + $0x48] sm:$0xff]
      %v504 = vld [vmem:[%s354 + $0x50] sm:$0xff]
      %v505 = vld [vmem:[%s354 + $0x58] sm:$0xff]
      %v506 = vld [vmem:[%s354 + $0x60] sm:$0xff]
      %v507 = vld [vmem:[%s354 + $0x68] sm:$0xff]
      %v508 = vld [vmem:[%s354 + $0x70] sm:$0xff]
      %v509 = vld [vmem:[%s354 + $0x78] sm:$0xff]
      %v510 = vld [vmem:[%s354 + $0x80] sm:$0xff]
      %v511 = vld [vmem:[%s354 + $0x88] sm:$0xff]
      %v512 = vld [vmem:[%s354 + $0x90] sm:$0xff]
      %v513 = vld [vmem:[%s354 + $0x98] sm:$0xff]
      %v514 = vld [vmem:[%s354 + $0xa0] sm:$0xff]
      %v515 = vld [vmem:[%s354 + $0xa8] sm:$0xff]
      %v516 = vld [vmem:[%s354 + $0xb0] sm:$0xff]
      %v517 = vld [vmem:[%s354 + $0xb8] sm:$0xff]
      %v518 = vld [vmem:[%s354 + $0xc0] sm:$0xff]
      %v519 = vld [vmem:[%s354 + $0xc8] sm:$0xff]
      %v520 = vld [vmem:[%s354 + $0xd0] sm:$0xff]
      %v521 = vld [vmem:[%s354 + $0xd8] sm:$0xff]
      %v522 = vld [vmem:[%s354 + $0xe0] sm:$0xff]
      %v523 = vld [vmem:[%s354 + $0xe8] sm:$0xff]
      %v524 = vld [vmem:[%s354 + $0xf0] sm:$0xff]
      %v525 = vld [vmem:[%s354 + $0xf8] sm:$0xff]
      %526 = vst.msk [vmem:[%s370 + $0x1] sm:$0xff] %vm361, %v494
      %527 = vst.msk [vmem:[%s370 + $0x9] sm:$0xff] %vm361, %v495
      %528 = vst.msk [vmem:[%s370 + $0x19] sm:$0xff] %vm361, %v496
      %529 = vst.msk [vmem:[%s370 + $0x21] sm:$0xff] %vm361, %v497
      %530 = vst.msk [vmem:[%s370 + $0x31] sm:$0xff] %vm361, %v498
      %531 = vst.msk [vmem:[%s370 + $0x39] sm:$0xff] %vm361, %v499
      %532 = vst.msk [vmem:[%s370 + $0x49] sm:$0xff] %vm361, %v500
      %533 = vst.msk [vmem:[%s370 + $0x51] sm:$0xff] %vm361, %v501
      %534 = vst.msk [vmem:[%s370 + $0x61] sm:$0xff] %vm361, %v502
      %535 = vst.msk [vmem:[%s370 + $0x69] sm:$0xff] %vm361, %v503
      %536 = vst.msk [vmem:[%s370 + $0x79] sm:$0xff] %vm361, %v504
      %537 = vst.msk [vmem:[%s370 + $0x81] sm:$0xff] %vm361, %v505
      %538 = vst.msk [vmem:[%s370 + $0x91] sm:$0xff] %vm361, %v506
      %539 = vst.msk [vmem:[%s370 + $0x99] sm:$0xff] %vm361, %v507
      %540 = vst.msk [vmem:[%s370 + $0xa9] sm:$0xff] %vm361, %v508
      %541 = vst.msk [vmem:[%s370 + $0xb1] sm:$0xff] %vm361, %v509
      %542 = vst.msk [vmem:[%s370 + $0xc1] sm:$0xff] %vm361, %v510
      %543 = vst.msk [vmem:[%s370 + $0xc9] sm:$0xff] %vm361, %v511
      %544 = vst.msk [vmem:[%s370 + $0xd9] sm:$0xff] %vm361, %v512
      %545 = vst.msk [vmem:[%s370 + $0xe1] sm:$0xff] %vm361, %v513
      %546 = vst.msk [vmem:[%s370 + $0xf1] sm:$0xff] %vm361, %v514
      %547 = vst.msk [vmem:[%s370 + $0xf9] sm:$0xff] %vm361, %v515
      %548 = vst.msk [vmem:[%s370 + $0x109] sm:$0xff] %vm361, %v516
      %549 = vst.msk [vmem:[%s370 + $0x111] sm:$0xff] %vm361, %v517
      %550 = vst.msk [vmem:[%s370 + $0x121] sm:$0xff] %vm361, %v518
      %551 = vst.msk [vmem:[%s370 + $0x129] sm:$0xff] %vm361, %v519
      %552 = vst.msk [vmem:[%s370 + $0x139] sm:$0xff] %vm361, %v520
      %553 = vst.msk [vmem:[%s370 + $0x141] sm:$0xff] %vm361, %v521
      %554 = vst.msk [vmem:[%s370 + $0x151] sm:$0xff] %vm361, %v522
      %555 = vst.msk [vmem:[%s370 + $0x159] sm:$0xff] %vm361, %v523
      %556 = vst.msk [vmem:[%s370 + $0x169] sm:$0xff] %vm361, %v524
      %557 = vst.msk [vmem:[%s370 + $0x171] sm:$0xff] %vm361, %v525
      %v558 = vld [vmem:[#allocation2] sm:$0xff]
      %v559 = vld [vmem:[#allocation2 + $0x8] sm:$0xff]
      %v560 = vld [vmem:[#allocation2 + $0x18] sm:$0xff]
      %v561 = vld [vmem:[#allocation2 + $0x20] sm:$0xff]
      %v562 = vld [vmem:[#allocation2 + $0x30] sm:$0xff]
      %v563 = vld [vmem:[#allocation2 + $0x38] sm:$0xff]
      %v564 = vld [vmem:[#allocation2 + $0x48] sm:$0xff]
      %v565 = vld [vmem:[#allocation2 + $0x50] sm:$0xff]
      %v566 = vld [vmem:[#allocation2 + $0x60] sm:$0xff]
      %v567 = vld [vmem:[#allocation2 + $0x68] sm:$0xff]
      %v568 = vld [vmem:[#allocation2 + $0x78] sm:$0xff]
      %v569 = vld [vmem:[#allocation2 + $0x80] sm:$0xff]
      %v570 = vld [vmem:[#allocation2 + $0x90] sm:$0xff]
      %v571 = vld [vmem:[#allocation2 + $0x98] sm:$0xff]
      %v572 = vld [vmem:[#allocation2 + $0xa8] sm:$0xff]
      %v573 = vld [vmem:[#allocation2 + $0xb0] sm:$0xff]
      %v574 = vld [vmem:[#allocation2 + $0xc0] sm:$0xff]
      %v575 = vld [vmem:[#allocation2 + $0xc8] sm:$0xff]
      %v576 = vld [vmem:[#allocation2 + $0xd8] sm:$0xff]
      %v577 = vld [vmem:[#allocation2 + $0xe0] sm:$0xff]
      %v578 = vld [vmem:[#allocation2 + $0xf0] sm:$0xff]
      %v579 = vld [vmem:[#allocation2 + $0xf8] sm:$0xff]
      %v580 = vld [vmem:[#allocation2 + $0x108] sm:$0xff]
      %v581 = vld [vmem:[#allocation2 + $0x110] sm:$0xff]
      %v582 = vld [vmem:[#allocation2 + $0x120] sm:$0xff]
      %v583 = vld [vmem:[#allocation2 + $0x128] sm:$0xff]
      %v584 = vld [vmem:[#allocation2 + $0x138] sm:$0xff]
      %v585 = vld [vmem:[#allocation2 + $0x140] sm:$0xff]
      %v586 = vld [vmem:[#allocation2 + $0x150] sm:$0xff]
      %v587 = vld [vmem:[#allocation2 + $0x158] sm:$0xff]
      %v588 = vld [vmem:[#allocation2 + $0x168] sm:$0xff]
      %v589 = vld [vmem:[#allocation2 + $0x170] sm:$0xff]
      %590 = vst.msk [vmem:[#allocation5] sm:$0xff] %vm361, %v558
      %591 = vst.msk [vmem:[#allocation5 + $0x8] sm:$0xff] %vm361, %v559
      %592 = vst.msk [vmem:[#allocation5 + $0x10] sm:$0xff] %vm361, %v560
      %593 = vst.msk [vmem:[#allocation5 + $0x18] sm:$0xff] %vm361, %v561
      %594 = vst.msk [vmem:[#allocation5 + $0x20] sm:$0xff] %vm361, %v562
      %595 = vst.msk [vmem:[#allocation5 + $0x28] sm:$0xff] %vm361, %v563
      %596 = vst.msk [vmem:[#allocation5 + $0x30] sm:$0xff] %vm361, %v564
      %597 = vst.msk [vmem:[#allocation5 + $0x38] sm:$0xff] %vm361, %v565
      %598 = vst.msk [vmem:[#allocation5 + $0x40] sm:$0xff] %vm361, %v566
      %599 = vst.msk [vmem:[#allocation5 + $0x48] sm:$0xff] %vm361, %v567
      %600 = vst.msk [vmem:[#allocation5 + $0x50] sm:$0xff] %vm361, %v568
      %601 = vst.msk [vmem:[#allocation5 + $0x58] sm:$0xff] %vm361, %v569
      %602 = vst.msk [vmem:[#allocation5 + $0x60] sm:$0xff] %vm361, %v570
      %603 = vst.msk [vmem:[#allocation5 + $0x68] sm:$0xff] %vm361, %v571
      %604 = vst.msk [vmem:[#allocation5 + $0x70] sm:$0xff] %vm361, %v572
      %605 = vst.msk [vmem:[#allocation5 + $0x78] sm:$0xff] %vm361, %v573
      %606 = vst.msk [vmem:[#allocation5 + $0x80] sm:$0xff] %vm361, %v574
      %607 = vst.msk [vmem:[#allocation5 + $0x88] sm:$0xff] %vm361, %v575
      %608 = vst.msk [vmem:[#allocation5 + $0x90] sm:$0xff] %vm361, %v576
      %609 = vst.msk [vmem:[#allocation5 + $0x98] sm:$0xff] %vm361, %v577
      %610 = vst.msk [vmem:[#allocation5 + $0xa0] sm:$0xff] %vm361, %v578
      %611 = vst.msk [vmem:[#allocation5 + $0xa8] sm:$0xff] %vm361, %v579
      %612 = vst.msk [vmem:[#allocation5 + $0xb0] sm:$0xff] %vm361, %v580
      %613 = vst.msk [vmem:[#allocation5 + $0xb8] sm:$0xff] %vm361, %v581
      %614 = vst.msk [vmem:[#allocation5 + $0xc0] sm:$0xff] %vm361, %v582
      %615 = vst.msk [vmem:[#allocation5 + $0xc8] sm:$0xff] %vm361, %v583
      %616 = vst.msk [vmem:[#allocation5 + $0xd0] sm:$0xff] %vm361, %v584
      %617 = vst.msk [vmem:[#allocation5 + $0xd8] sm:$0xff] %vm361, %v585
      %618 = vst.msk [vmem:[#allocation5 + $0xe0] sm:$0xff] %vm361, %v586
      %619 = vst.msk [vmem:[#allocation5 + $0xe8] sm:$0xff] %vm361, %v587
      %620 = vst.msk [vmem:[#allocation5 + $0xf0] sm:$0xff] %vm361, %v588
      %621 = vst.msk [vmem:[#allocation5 + $0xf8] sm:$0xff] %vm361, %v589
      %v622 = vld [vmem:[#allocation2 + $0x1] sm:$0xff]
      %v623 = vld [vmem:[#allocation2 + $0x9] sm:$0xff]
      %v624 = vld [vmem:[#allocation2 + $0x19] sm:$0xff]
      %v625 = vld [vmem:[#allocation2 + $0x21] sm:$0xff]
      %v626 = vld [vmem:[#allocation2 + $0x31] sm:$0xff]
      %v627 = vld [vmem:[#allocation2 + $0x39] sm:$0xff]
      %v628 = vld [vmem:[#allocation2 + $0x49] sm:$0xff]
      %v629 = vld [vmem:[#allocation2 + $0x51] sm:$0xff]
      %v630 = vld [vmem:[#allocation2 + $0x61] sm:$0xff]
      %v631 = vld [vmem:[#allocation2 + $0x69] sm:$0xff]
      %v632 = vld [vmem:[#allocation2 + $0x79] sm:$0xff]
      %v633 = vld [vmem:[#allocation2 + $0x81] sm:$0xff]
      %v634 = vld [vmem:[#allocation2 + $0x91] sm:$0xff]
      %v635 = vld [vmem:[#allocation2 + $0x99] sm:$0xff]
      %v636 = vld [vmem:[#allocation2 + $0xa9] sm:$0xff]
      %v637 = vld [vmem:[#allocation2 + $0xb1] sm:$0xff]
      %v638 = vld [vmem:[#allocation2 + $0xc1] sm:$0xff]
      %v639 = vld [vmem:[#allocation2 + $0xc9] sm:$0xff]
      %v640 = vld [vmem:[#allocation2 + $0xd9] sm:$0xff]
      %v641 = vld [vmem:[#allocation2 + $0xe1] sm:$0xff]
      %v642 = vld [vmem:[#allocation2 + $0xf1] sm:$0xff]
      %v643 = vld [vmem:[#allocation2 + $0xf9] sm:$0xff]
      %v644 = vld [vmem:[#allocation2 + $0x109] sm:$0xff]
      %v645 = vld [vmem:[#allocation2 + $0x111] sm:$0xff]
      %v646 = vld [vmem:[#allocation2 + $0x121] sm:$0xff]
      %v647 = vld [vmem:[#allocation2 + $0x129] sm:$0xff]
      %v648 = vld [vmem:[#allocation2 + $0x139] sm:$0xff]
      %v649 = vld [vmem:[#allocation2 + $0x141] sm:$0xff]
      %v650 = vld [vmem:[#allocation2 + $0x151] sm:$0xff]
      %v651 = vld [vmem:[#allocation2 + $0x159] sm:$0xff]
      %v652 = vld [vmem:[#allocation2 + $0x169] sm:$0xff]
      %v653 = vld [vmem:[#allocation2 + $0x171] sm:$0xff]
      %686 = vrot.lane.b32.xlu0 %v622, 12
      %v687 = vpop.permute.xlu0 %686
      %688 = vrot.lane.b32.xlu0 %v623, 12
      %v689 = vpop.permute.xlu0 %688
      %690 = vrot.lane.b32.xlu0 %v624, 12
      %v691 = vpop.permute.xlu0 %690
      %692 = vrot.lane.b32.xlu0 %v625, 12
      %v693 = vpop.permute.xlu0 %692
      %694 = vrot.lane.b32.xlu0 %v626, 12
      %v695 = vpop.permute.xlu0 %694
      %696 = vrot.lane.b32.xlu0 %v627, 12
      %v697 = vpop.permute.xlu0 %696
      %698 = vrot.lane.b32.xlu0 %v628, 12
      %v699 = vpop.permute.xlu0 %698
      %700 = vrot.lane.b32.xlu0 %v629, 12
      %v701 = vpop.permute.xlu0 %700
      %702 = vrot.lane.b32.xlu0 %v630, 12
      %v703 = vpop.permute.xlu0 %702
      %704 = vrot.lane.b32.xlu0 %v631, 12
      %v705 = vpop.permute.xlu0 %704
      %706 = vrot.lane.b32.xlu0 %v632, 12
      %v707 = vpop.permute.xlu0 %706
      %708 = vrot.lane.b32.xlu0 %v633, 12
      %v709 = vpop.permute.xlu0 %708
      %710 = vrot.lane.b32.xlu0 %v634, 12
      %v711 = vpop.permute.xlu0 %710
      %712 = vrot.lane.b32.xlu0 %v635, 12
      %v713 = vpop.permute.xlu0 %712
      %714 = vrot.lane.b32.xlu0 %v636, 12
      %v715 = vpop.permute.xlu0 %714
      %716 = vrot.lane.b32.xlu0 %v637, 12
      %v717 = vpop.permute.xlu0 %716
      %718 = vrot.lane.b32.xlu0 %v638, 12
      %v719 = vpop.permute.xlu0 %718
      %720 = vrot.lane.b32.xlu0 %v639, 12
      %v721 = vpop.permute.xlu0 %720
      %722 = vrot.lane.b32.xlu0 %v640, 12
      %v723 = vpop.permute.xlu0 %722
      %724 = vrot.lane.b32.xlu0 %v641, 12
      %v725 = vpop.permute.xlu0 %724
      %726 = vrot.lane.b32.xlu0 %v642, 12
      %v727 = vpop.permute.xlu0 %726
      %728 = vrot.lane.b32.xlu0 %v643, 12
      %v729 = vpop.permute.xlu0 %728
      %730 = vrot.lane.b32.xlu0 %v644, 12
      %v731 = vpop.permute.xlu0 %730
      %732 = vrot.lane.b32.xlu0 %v645, 12
      %v733 = vpop.permute.xlu0 %732
      %734 = vrot.lane.b32.xlu0 %v646, 12
      %v735 = vpop.permute.xlu0 %734
      %736 = vrot.lane.b32.xlu0 %v647, 12
      %v737 = vpop.permute.xlu0 %736
      %738 = vrot.lane.b32.xlu0 %v648, 12
      %v739 = vpop.permute.xlu0 %738
      %740 = vrot.lane.b32.xlu0 %v649, 12
      %v741 = vpop.permute.xlu0 %740
      %742 = vrot.lane.b32.xlu0 %v650, 12
      %v743 = vpop.permute.xlu0 %742
      %744 = vrot.lane.b32.xlu0 %v651, 12
      %v745 = vpop.permute.xlu0 %744
      %746 = vrot.lane.b32.xlu0 %v652, 12
      %v747 = vpop.permute.xlu0 %746
      %748 = vrot.lane.b32.xlu0 %v653, 12
      %v749 = vpop.permute.xlu0 %748
      %vm782 = vcmask 195680
      %783 = vst.msk [vmem:[#allocation5] sm:$0xff] %vm782, %v687
      %784 = vst.msk [vmem:[#allocation5 + $0x8] sm:$0xff] %vm782, %v689
      %785 = vst.msk [vmem:[#allocation5 + $0x10] sm:$0xff] %vm782, %v691
      %786 = vst.msk [vmem:[#allocation5 + $0x18] sm:$0xff] %vm782, %v693
      %787 = vst.msk [vmem:[#allocation5 + $0x20] sm:$0xff] %vm782, %v695
      %788 = vst.msk [vmem:[#allocation5 + $0x28] sm:$0xff] %vm782, %v697
      %789 = vst.msk [vmem:[#allocation5 + $0x30] sm:$0xff] %vm782, %v699
      %790 = vst.msk [vmem:[#allocation5 + $0x38] sm:$0xff] %vm782, %v701
      %791 = vst.msk [vmem:[#allocation5 + $0x40] sm:$0xff] %vm782, %v703
      %792 = vst.msk [vmem:[#allocation5 + $0x48] sm:$0xff] %vm782, %v705
      %793 = vst.msk [vmem:[#allocation5 + $0x50] sm:$0xff] %vm782, %v707
      %794 = vst.msk [vmem:[#allocation5 + $0x58] sm:$0xff] %vm782, %v709
      %795 = vst.msk [vmem:[#allocation5 + $0x60] sm:$0xff] %vm782, %v711
      %796 = vst.msk [vmem:[#allocation5 + $0x68] sm:$0xff] %vm782, %v713
      %797 = vst.msk [vmem:[#allocation5 + $0x70] sm:$0xff] %vm782, %v715
      %798 = vst.msk [vmem:[#allocation5 + $0x78] sm:$0xff] %vm782, %v717
      %799 = vst.msk [vmem:[#allocation5 + $0x80] sm:$0xff] %vm782, %v719
      %800 = vst.msk [vmem:[#allocation5 + $0x88] sm:$0xff] %vm782, %v721
      %801 = vst.msk [vmem:[#allocation5 + $0x90] sm:$0xff] %vm782, %v723
      %802 = vst.msk [vmem:[#allocation5 + $0x98] sm:$0xff] %vm782, %v725
      %803 = vst.msk [vmem:[#allocation5 + $0xa0] sm:$0xff] %vm782, %v727
      %804 = vst.msk [vmem:[#allocation5 + $0xa8] sm:$0xff] %vm782, %v729
      %805 = vst.msk [vmem:[#allocation5 + $0xb0] sm:$0xff] %vm782, %v731
      %806 = vst.msk [vmem:[#allocation5 + $0xb8] sm:$0xff] %vm782, %v733
      %807 = vst.msk [vmem:[#allocation5 + $0xc0] sm:$0xff] %vm782, %v735
      %808 = vst.msk [vmem:[#allocation5 + $0xc8] sm:$0xff] %vm782, %v737
      %809 = vst.msk [vmem:[#allocation5 + $0xd0] sm:$0xff] %vm782, %v739
      %810 = vst.msk [vmem:[#allocation5 + $0xd8] sm:$0xff] %vm782, %v741
      %811 = vst.msk [vmem:[#allocation5 + $0xe0] sm:$0xff] %vm782, %v743
      %812 = vst.msk [vmem:[#allocation5 + $0xe8] sm:$0xff] %vm782, %v745
      %813 = vst.msk [vmem:[#allocation5 + $0xf0] sm:$0xff] %vm782, %v747
      %814 = vst.msk [vmem:[#allocation5 + $0xf8] sm:$0xff] %vm782, %v749
      %v815 = vld [vmem:[#allocation2 + $0x2] sm:$0xff]
      %v816 = vld [vmem:[#allocation2 + $0xa] sm:$0xff]
      %v817 = vld [vmem:[#allocation2 + $0x1a] sm:$0xff]
      %v818 = vld [vmem:[#allocation2 + $0x22] sm:$0xff]
      %v819 = vld [vmem:[#allocation2 + $0x32] sm:$0xff]
      %v820 = vld [vmem:[#allocation2 + $0x3a] sm:$0xff]
      %v821 = vld [vmem:[#allocation2 + $0x4a] sm:$0xff]
      %v822 = vld [vmem:[#allocation2 + $0x52] sm:$0xff]
      %v823 = vld [vmem:[#allocation2 + $0x62] sm:$0xff]
      %v824 = vld [vmem:[#allocation2 + $0x6a] sm:$0xff]
      %v825 = vld [vmem:[#allocation2 + $0x7a] sm:$0xff]
      %v826 = vld [vmem:[#allocation2 + $0x82] sm:$0xff]
      %v827 = vld [vmem:[#allocation2 + $0x92] sm:$0xff]
      %v828 = vld [vmem:[#allocation2 + $0x9a] sm:$0xff]
      %v829 = vld [vmem:[#allocation2 + $0xaa] sm:$0xff]
      %v830 = vld [vmem:[#allocation2 + $0xb2] sm:$0xff]
      %v831 = vld [vmem:[#allocation2 + $0xc2] sm:$0xff]
      %v832 = vld [vmem:[#allocation2 + $0xca] sm:$0xff]
      %v833 = vld [vmem:[#allocation2 + $0xda] sm:$0xff]
      %v834 = vld [vmem:[#allocation2 + $0xe2] sm:$0xff]
      %v835 = vld [vmem:[#allocation2 + $0xf2] sm:$0xff]
      %v836 = vld [vmem:[#allocation2 + $0xfa] sm:$0xff]
      %v837 = vld [vmem:[#allocation2 + $0x10a] sm:$0xff]
      %v838 = vld [vmem:[#allocation2 + $0x112] sm:$0xff]
      %v839 = vld [vmem:[#allocation2 + $0x122] sm:$0xff]
      %v840 = vld [vmem:[#allocation2 + $0x12a] sm:$0xff]
      %v841 = vld [vmem:[#allocation2 + $0x13a] sm:$0xff]
      %v842 = vld [vmem:[#allocation2 + $0x142] sm:$0xff]
      %v843 = vld [vmem:[#allocation2 + $0x152] sm:$0xff]
      %v844 = vld [vmem:[#allocation2 + $0x15a] sm:$0xff]
      %v845 = vld [vmem:[#allocation2 + $0x16a] sm:$0xff]
      %v846 = vld [vmem:[#allocation2 + $0x172] sm:$0xff]
      %879 = vrot.lane.b32.xlu0 %v815, 24
      %v880 = vpop.permute.xlu0 %879
      %881 = vrot.lane.b32.xlu0 %v816, 24
      %v882 = vpop.permute.xlu0 %881
      %883 = vrot.lane.b32.xlu0 %v817, 24
      %v884 = vpop.permute.xlu0 %883
      %885 = vrot.lane.b32.xlu0 %v818, 24
      %v886 = vpop.permute.xlu0 %885
      %887 = vrot.lane.b32.xlu0 %v819, 24
      %v888 = vpop.permute.xlu0 %887
      %889 = vrot.lane.b32.xlu0 %v820, 24
      %v890 = vpop.permute.xlu0 %889
      %891 = vrot.lane.b32.xlu0 %v821, 24
      %v892 = vpop.permute.xlu0 %891
      %893 = vrot.lane.b32.xlu0 %v822, 24
      %v894 = vpop.permute.xlu0 %893
      %895 = vrot.lane.b32.xlu0 %v823, 24
      %v896 = vpop.permute.xlu0 %895
      %897 = vrot.lane.b32.xlu0 %v824, 24
      %v898 = vpop.permute.xlu0 %897
      %899 = vrot.lane.b32.xlu0 %v825, 24
      %v900 = vpop.permute.xlu0 %899
      %901 = vrot.lane.b32.xlu0 %v826, 24
      %v902 = vpop.permute.xlu0 %901
      %903 = vrot.lane.b32.xlu0 %v827, 24
      %v904 = vpop.permute.xlu0 %903
      %905 = vrot.lane.b32.xlu0 %v828, 24
      %v906 = vpop.permute.xlu0 %905
      %907 = vrot.lane.b32.xlu0 %v829, 24
      %v908 = vpop.permute.xlu0 %907
      %909 = vrot.lane.b32.xlu0 %v830, 24
      %v910 = vpop.permute.xlu0 %909
      %911 = vrot.lane.b32.xlu0 %v831, 24
      %v912 = vpop.permute.xlu0 %911
      %913 = vrot.lane.b32.xlu0 %v832, 24
      %v914 = vpop.permute.xlu0 %913
      %915 = vrot.lane.b32.xlu0 %v833, 24
      %v916 = vpop.permute.xlu0 %915
      %917 = vrot.lane.b32.xlu0 %v834, 24
      %v918 = vpop.permute.xlu0 %917
      %919 = vrot.lane.b32.xlu0 %v835, 24
      %v920 = vpop.permute.xlu0 %919
      %921 = vrot.lane.b32.xlu0 %v836, 24
      %v922 = vpop.permute.xlu0 %921
      %923 = vrot.lane.b32.xlu0 %v837, 24
      %v924 = vpop.permute.xlu0 %923
      %925 = vrot.lane.b32.xlu0 %v838, 24
      %v926 = vpop.permute.xlu0 %925
      %927 = vrot.lane.b32.xlu0 %v839, 24
      %v928 = vpop.permute.xlu0 %927
      %929 = vrot.lane.b32.xlu0 %v840, 24
      %v930 = vpop.permute.xlu0 %929
      %931 = vrot.lane.b32.xlu0 %v841, 24
      %v932 = vpop.permute.xlu0 %931
      %933 = vrot.lane.b32.xlu0 %v842, 24
      %v934 = vpop.permute.xlu0 %933
      %935 = vrot.lane.b32.xlu0 %v843, 24
      %v936 = vpop.permute.xlu0 %935
      %937 = vrot.lane.b32.xlu0 %v844, 24
      %v938 = vpop.permute.xlu0 %937
      %939 = vrot.lane.b32.xlu0 %v845, 24
      %v940 = vpop.permute.xlu0 %939
      %941 = vrot.lane.b32.xlu0 %v846, 24
      %v942 = vpop.permute.xlu0 %941
      %vm975 = vcmask 294080
      %976 = vst.msk [vmem:[#allocation5] sm:$0xff] %vm975, %v880
      %977 = vst.msk [vmem:[#allocation5 + $0x8] sm:$0xff] %vm975, %v882
      %978 = vst.msk [vmem:[#allocation5 + $0x10] sm:$0xff] %vm975, %v884
      %979 = vst.msk [vmem:[#allocation5 + $0x18] sm:$0xff] %vm975, %v886
      %980 = vst.msk [vmem:[#allocation5 + $0x20] sm:$0xff] %vm975, %v888
      %981 = vst.msk [vmem:[#allocation5 + $0x28] sm:$0xff] %vm975, %v890
      %982 = vst.msk [vmem:[#allocation5 + $0x30] sm:$0xff] %vm975, %v892
      %983 = vst.msk [vmem:[#allocation5 + $0x38] sm:$0xff] %vm975, %v894
      %984 = vst.msk [vmem:[#allocation5 + $0x40] sm:$0xff] %vm975, %v896
      %985 = vst.msk [vmem:[#allocation5 + $0x48] sm:$0xff] %vm975, %v898
      %986 = vst.msk [vmem:[#allocation5 + $0x50] sm:$0xff] %vm975, %v900
      %987 = vst.msk [vmem:[#allocation5 + $0x58] sm:$0xff] %vm975, %v902
      %988 = vst.msk [vmem:[#allocation5 + $0x60] sm:$0xff] %vm975, %v904
      %989 = vst.msk [vmem:[#allocation5 + $0x68] sm:$0xff] %vm975, %v906
      %990 = vst.msk [vmem:[#allocation5 + $0x70] sm:$0xff] %vm975, %v908
      %991 = vst.msk [vmem:[#allocation5 + $0x78] sm:$0xff] %vm975, %v910
      %992 = vst.msk [vmem:[#allocation5 + $0x80] sm:$0xff] %vm975, %v912
      %993 = vst.msk [vmem:[#allocation5 + $0x88] sm:$0xff] %vm975, %v914
      %994 = vst.msk [vmem:[#allocation5 + $0x90] sm:$0xff] %vm975, %v916
      %995 = vst.msk [vmem:[#allocation5 + $0x98] sm:$0xff] %vm975, %v918
      %996 = vst.msk [vmem:[#allocation5 + $0xa0] sm:$0xff] %vm975, %v920
      %997 = vst.msk [vmem:[#allocation5 + $0xa8] sm:$0xff] %vm975, %v922
      %998 = vst.msk [vmem:[#allocation5 + $0xb0] sm:$0xff] %vm975, %v924
      %999 = vst.msk [vmem:[#allocation5 + $0xb8] sm:$0xff] %vm975, %v926
      %1000 = vst.msk [vmem:[#allocation5 + $0xc0] sm:$0xff] %vm975, %v928
      %1001 = vst.msk [vmem:[#allocation5 + $0xc8] sm:$0xff] %vm975, %v930
      %1002 = vst.msk [vmem:[#allocation5 + $0xd0] sm:$0xff] %vm975, %v932
      %1003 = vst.msk [vmem:[#allocation5 + $0xd8] sm:$0xff] %vm975, %v934
      %1004 = vst.msk [vmem:[#allocation5 + $0xe0] sm:$0xff] %vm975, %v936
      %1005 = vst.msk [vmem:[#allocation5 + $0xe8] sm:$0xff] %vm975, %v938
      %1006 = vst.msk [vmem:[#allocation5 + $0xf0] sm:$0xff] %vm975, %v940
      %1007 = vst.msk [vmem:[#allocation5 + $0xf8] sm:$0xff] %vm975, %v942
      %v1008 = vld [vmem:[%s370] sm:$0xff]
      %v1009 = vld [vmem:[%s370 + $0x8] sm:$0xff]
      %v1010 = vld [vmem:[%s370 + $0x18] sm:$0xff]
      %v1011 = vld [vmem:[%s370 + $0x20] sm:$0xff]
      %v1012 = vld [vmem:[%s370 + $0x30] sm:$0xff]
      %v1013 = vld [vmem:[%s370 + $0x38] sm:$0xff]
      %v1014 = vld [vmem:[%s370 + $0x48] sm:$0xff]
      %v1015 = vld [vmem:[%s370 + $0x50] sm:$0xff]
      %v1016 = vld [vmem:[%s370 + $0x60] sm:$0xff]
      %v1017 = vld [vmem:[%s370 + $0x68] sm:$0xff]
      %v1018 = vld [vmem:[%s370 + $0x78] sm:$0xff]
      %v1019 = vld [vmem:[%s370 + $0x80] sm:$0xff]
      %v1020 = vld [vmem:[%s370 + $0x90] sm:$0xff]
      %v1021 = vld [vmem:[%s370 + $0x98] sm:$0xff]
      %v1022 = vld [vmem:[%s370 + $0xa8] sm:$0xff]
      %v1023 = vld [vmem:[%s370 + $0xb0] sm:$0xff]
      %v1024 = vld [vmem:[%s370 + $0xc0] sm:$0xff]
      %v1025 = vld [vmem:[%s370 + $0xc8] sm:$0xff]
      %v1026 = vld [vmem:[%s370 + $0xd8] sm:$0xff]
      %v1027 = vld [vmem:[%s370 + $0xe0] sm:$0xff]
      %v1028 = vld [vmem:[%s370 + $0xf0] sm:$0xff]
      %v1029 = vld [vmem:[%s370 + $0xf8] sm:$0xff]
      %v1030 = vld [vmem:[%s370 + $0x108] sm:$0xff]
      %v1031 = vld [vmem:[%s370 + $0x110] sm:$0xff]
      %v1032 = vld [vmem:[%s370 + $0x120] sm:$0xff]
      %v1033 = vld [vmem:[%s370 + $0x128] sm:$0xff]
      %v1034 = vld [vmem:[%s370 + $0x138] sm:$0xff]
      %v1035 = vld [vmem:[%s370 + $0x140] sm:$0xff]
      %v1036 = vld [vmem:[%s370 + $0x150] sm:$0xff]
      %v1037 = vld [vmem:[%s370 + $0x158] sm:$0xff]
      %v1038 = vld [vmem:[%s370 + $0x168] sm:$0xff]
      %v1039 = vld [vmem:[%s370 + $0x170] sm:$0xff]
      %1072 = vrot.lane.b32.xlu0 %v1008, 36
      %v1073 = vpop.permute.xlu0 %1072
      %1074 = vrot.lane.b32.xlu0 %v1009, 36
      %v1075 = vpop.permute.xlu0 %1074
      %1076 = vrot.lane.b32.xlu0 %v1010, 36
      %v1077 = vpop.permute.xlu0 %1076
      %1078 = vrot.lane.b32.xlu0 %v1011, 36
      %v1079 = vpop.permute.xlu0 %1078
      %1080 = vrot.lane.b32.xlu0 %v1012, 36
      %v1081 = vpop.permute.xlu0 %1080
      %1082 = vrot.lane.b32.xlu0 %v1013, 36
      %v1083 = vpop.permute.xlu0 %1082
      %1084 = vrot.lane.b32.xlu0 %v1014, 36
      %v1085 = vpop.permute.xlu0 %1084
      %1086 = vrot.lane.b32.xlu0 %v1015, 36
      %v1087 = vpop.permute.xlu0 %1086
      %1088 = vrot.lane.b32.xlu0 %v1016, 36
      %v1089 = vpop.permute.xlu0 %1088
      %1090 = vrot.lane.b32.xlu0 %v1017, 36
      %v1091 = vpop.permute.xlu0 %1090
      %1092 = vrot.lane.b32.xlu0 %v1018, 36
      %v1093 = vpop.permute.xlu0 %1092
      %1094 = vrot.lane.b32.xlu0 %v1019, 36
      %v1095 = vpop.permute.xlu0 %1094
      %1096 = vrot.lane.b32.xlu0 %v1020, 36
      %v1097 = vpop.permute.xlu0 %1096
      %1098 = vrot.lane.b32.xlu0 %v1021, 36
      %v1099 = vpop.permute.xlu0 %1098
      %1100 = vrot.lane.b32.xlu0 %v1022, 36
      %v1101 = vpop.permute.xlu0 %1100
      %1102 = vrot.lane.b32.xlu0 %v1023, 36
      %v1103 = vpop.permute.xlu0 %1102
      %1104 = vrot.lane.b32.xlu0 %v1024, 36
      %v1105 = vpop.permute.xlu0 %1104
      %1106 = vrot.lane.b32.xlu0 %v1025, 36
      %v1107 = vpop.permute.xlu0 %1106
      %1108 = vrot.lane.b32.xlu0 %v1026, 36
      %v1109 = vpop.permute.xlu0 %1108
      %1110 = vrot.lane.b32.xlu0 %v1027, 36
      %v1111 = vpop.permute.xlu0 %1110
      %1112 = vrot.lane.b32.xlu0 %v1028, 36
      %v1113 = vpop.permute.xlu0 %1112
      %1114 = vrot.lane.b32.xlu0 %v1029, 36
      %v1115 = vpop.permute.xlu0 %1114
      %1116 = vrot.lane.b32.xlu0 %v1030, 36
      %v1117 = vpop.permute.xlu0 %1116
      %1118 = vrot.lane.b32.xlu0 %v1031, 36
      %v1119 = vpop.permute.xlu0 %1118
      %1120 = vrot.lane.b32.xlu0 %v1032, 36
      %v1121 = vpop.permute.xlu0 %1120
      %1122 = vrot.lane.b32.xlu0 %v1033, 36
      %v1123 = vpop.permute.xlu0 %1122
      %1124 = vrot.lane.b32.xlu0 %v1034, 36
      %v1125 = vpop.permute.xlu0 %1124
      %1126 = vrot.lane.b32.xlu0 %v1035, 36
      %v1127 = vpop.permute.xlu0 %1126
      %1128 = vrot.lane.b32.xlu0 %v1036, 36
      %v1129 = vpop.permute.xlu0 %1128
      %1130 = vrot.lane.b32.xlu0 %v1037, 36
      %v1131 = vpop.permute.xlu0 %1130
      %1132 = vrot.lane.b32.xlu0 %v1038, 36
      %v1133 = vpop.permute.xlu0 %1132
      %1134 = vrot.lane.b32.xlu0 %v1039, 36
      %v1135 = vpop.permute.xlu0 %1134
      %vm1168 = vcmask 392480
      %1169 = vst.msk [vmem:[#allocation5] sm:$0xff] %vm1168, %v1073
      %1170 = vst.msk [vmem:[#allocation5 + $0x8] sm:$0xff] %vm1168, %v1075
      %1171 = vst.msk [vmem:[#allocation5 + $0x10] sm:$0xff] %vm1168, %v1077
      %1172 = vst.msk [vmem:[#allocation5 + $0x18] sm:$0xff] %vm1168, %v1079
      %1173 = vst.msk [vmem:[#allocation5 + $0x20] sm:$0xff] %vm1168, %v1081
      %1174 = vst.msk [vmem:[#allocation5 + $0x28] sm:$0xff] %vm1168, %v1083
      %1175 = vst.msk [vmem:[#allocation5 + $0x30] sm:$0xff] %vm1168, %v1085
      %1176 = vst.msk [vmem:[#allocation5 + $0x38] sm:$0xff] %vm1168, %v1087
      %1177 = vst.msk [vmem:[#allocation5 + $0x40] sm:$0xff] %vm1168, %v1089
      %1178 = vst.msk [vmem:[#allocation5 + $0x48] sm:$0xff] %vm1168, %v1091
      %1179 = vst.msk [vmem:[#allocation5 + $0x50] sm:$0xff] %vm1168, %v1093
      %1180 = vst.msk [vmem:[#allocation5 + $0x58] sm:$0xff] %vm1168, %v1095
      %1181 = vst.msk [vmem:[#allocation5 + $0x60] sm:$0xff] %vm1168, %v1097
      %1182 = vst.msk [vmem:[#allocation5 + $0x68] sm:$0xff] %vm1168, %v1099
      %1183 = vst.msk [vmem:[#allocation5 + $0x70] sm:$0xff] %vm1168, %v1101
      %1184 = vst.msk [vmem:[#allocation5 + $0x78] sm:$0xff] %vm1168, %v1103
      %1185 = vst.msk [vmem:[#allocation5 + $0x80] sm:$0xff] %vm1168, %v1105
      %1186 = vst.msk [vmem:[#allocation5 + $0x88] sm:$0xff] %vm1168, %v1107
      %1187 = vst.msk [vmem:[#allocation5 + $0x90] sm:$0xff] %vm1168, %v1109
      %1188 = vst.msk [vmem:[#allocation5 + $0x98] sm:$0xff] %vm1168, %v1111
      %1189 = vst.msk [vmem:[#allocation5 + $0xa0] sm:$0xff] %vm1168, %v1113
      %1190 = vst.msk [vmem:[#allocation5 + $0xa8] sm:$0xff] %vm1168, %v1115
      %1191 = vst.msk [vmem:[#allocation5 + $0xb0] sm:$0xff] %vm1168, %v1117
      %1192 = vst.msk [vmem:[#allocation5 + $0xb8] sm:$0xff] %vm1168, %v1119
      %1193 = vst.msk [vmem:[#allocation5 + $0xc0] sm:$0xff] %vm1168, %v1121
      %1194 = vst.msk [vmem:[#allocation5 + $0xc8] sm:$0xff] %vm1168, %v1123
      %1195 = vst.msk [vmem:[#allocation5 + $0xd0] sm:$0xff] %vm1168, %v1125
      %1196 = vst.msk [vmem:[#allocation5 + $0xd8] sm:$0xff] %vm1168, %v1127
      %1197 = vst.msk [vmem:[#allocation5 + $0xe0] sm:$0xff] %vm1168, %v1129
      %1198 = vst.msk [vmem:[#allocation5 + $0xe8] sm:$0xff] %vm1168, %v1131
      %1199 = vst.msk [vmem:[#allocation5 + $0xf0] sm:$0xff] %vm1168, %v1133
      %1200 = vst.msk [vmem:[#allocation5 + $0xf8] sm:$0xff] %vm1168, %v1135
      %v1201 = vld [vmem:[%s370 + $0x1] sm:$0xff]
      %v1202 = vld [vmem:[%s370 + $0x9] sm:$0xff]
      %v1203 = vld [vmem:[%s370 + $0x19] sm:$0xff]
      %v1204 = vld [vmem:[%s370 + $0x21] sm:$0xff]
      %v1205 = vld [vmem:[%s370 + $0x31] sm:$0xff]
      %v1206 = vld [vmem:[%s370 + $0x39] sm:$0xff]
      %v1207 = vld [vmem:[%s370 + $0x49] sm:$0xff]
      %v1208 = vld [vmem:[%s370 + $0x51] sm:$0xff]
      %v1209 = vld [vmem:[%s370 + $0x61] sm:$0xff]
      %v1210 = vld [vmem:[%s370 + $0x69] sm:$0xff]
      %v1211 = vld [vmem:[%s370 + $0x79] sm:$0xff]
      %v1212 = vld [vmem:[%s370 + $0x81] sm:$0xff]
      %v1213 = vld [vmem:[%s370 + $0x91] sm:$0xff]
      %v1214 = vld [vmem:[%s370 + $0x99] sm:$0xff]
      %v1215 = vld [vmem:[%s370 + $0xa9] sm:$0xff]
      %v1216 = vld [vmem:[%s370 + $0xb1] sm:$0xff]
      %v1217 = vld [vmem:[%s370 + $0xc1] sm:$0xff]
      %v1218 = vld [vmem:[%s370 + $0xc9] sm:$0xff]
      %v1219 = vld [vmem:[%s370 + $0xd9] sm:$0xff]
      %v1220 = vld [vmem:[%s370 + $0xe1] sm:$0xff]
      %v1221 = vld [vmem:[%s370 + $0xf1] sm:$0xff]
      %v1222 = vld [vmem:[%s370 + $0xf9] sm:$0xff]
      %v1223 = vld [vmem:[%s370 + $0x109] sm:$0xff]
      %v1224 = vld [vmem:[%s370 + $0x111] sm:$0xff]
      %v1225 = vld [vmem:[%s370 + $0x121] sm:$0xff]
      %v1226 = vld [vmem:[%s370 + $0x129] sm:$0xff]
      %v1227 = vld [vmem:[%s370 + $0x139] sm:$0xff]
      %v1228 = vld [vmem:[%s370 + $0x141] sm:$0xff]
      %v1229 = vld [vmem:[%s370 + $0x151] sm:$0xff]
      %v1230 = vld [vmem:[%s370 + $0x159] sm:$0xff]
      %v1231 = vld [vmem:[%s370 + $0x169] sm:$0xff]
      %v1232 = vld [vmem:[%s370 + $0x171] sm:$0xff]
      %1265 = vrot.lane.b32.xlu0 %v1201, 48
      %v1266 = vpop.permute.xlu0 %1265
      %1267 = vrot.lane.b32.xlu0 %v1202, 48
      %v1268 = vpop.permute.xlu0 %1267
      %1269 = vrot.lane.b32.xlu0 %v1203, 48
      %v1270 = vpop.permute.xlu0 %1269
      %1271 = vrot.lane.b32.xlu0 %v1204, 48
      %v1272 = vpop.permute.xlu0 %1271
      %1273 = vrot.lane.b32.xlu0 %v1205, 48
      %v1274 = vpop.permute.xlu0 %1273
      %1275 = vrot.lane.b32.xlu0 %v1206, 48
      %v1276 = vpop.permute.xlu0 %1275
      %1277 = vrot.lane.b32.xlu0 %v1207, 48
      %v1278 = vpop.permute.xlu0 %1277
      %1279 = vrot.lane.b32.xlu0 %v1208, 48
      %v1280 = vpop.permute.xlu0 %1279
      %1281 = vrot.lane.b32.xlu0 %v1209, 48
      %v1282 = vpop.permute.xlu0 %1281
      %1283 = vrot.lane.b32.xlu0 %v1210, 48
      %v1284 = vpop.permute.xlu0 %1283
      %1285 = vrot.lane.b32.xlu0 %v1211, 48
      %v1286 = vpop.permute.xlu0 %1285
      %1287 = vrot.lane.b32.xlu0 %v1212, 48
      %v1288 = vpop.permute.xlu0 %1287
      %1289 = vrot.lane.b32.xlu0 %v1213, 48
      %v1290 = vpop.permute.xlu0 %1289
      %1291 = vrot.lane.b32.xlu0 %v1214, 48
      %v1292 = vpop.permute.xlu0 %1291
      %1293 = vrot.lane.b32.xlu0 %v1215, 48
      %v1294 = vpop.permute.xlu0 %1293
      %1295 = vrot.lane.b32.xlu0 %v1216, 48
      %v1296 = vpop.permute.xlu0 %1295
      %1297 = vrot.lane.b32.xlu0 %v1217, 48
      %v1298 = vpop.permute.xlu0 %1297
      %1299 = vrot.lane.b32.xlu0 %v1218, 48
      %v1300 = vpop.permute.xlu0 %1299
      %1301 = vrot.lane.b32.xlu0 %v1219, 48
      %v1302 = vpop.permute.xlu0 %1301
      %1303 = vrot.lane.b32.xlu0 %v1220, 48
      %v1304 = vpop.permute.xlu0 %1303
      %1305 = vrot.lane.b32.xlu0 %v1221, 48
      %v1306 = vpop.permute.xlu0 %1305
      %1307 = vrot.lane.b32.xlu0 %v1222, 48
      %v1308 = vpop.permute.xlu0 %1307
      %1309 = vrot.lane.b32.xlu0 %v1223, 48
      %v1310 = vpop.permute.xlu0 %1309
      %1311 = vrot.lane.b32.xlu0 %v1224, 48
      %v1312 = vpop.permute.xlu0 %1311
      %1313 = vrot.lane.b32.xlu0 %v1225, 48
      %v1314 = vpop.permute.xlu0 %1313
      %1315 = vrot.lane.b32.xlu0 %v1226, 48
      %v1316 = vpop.permute.xlu0 %1315
      %1317 = vrot.lane.b32.xlu0 %v1227, 48
      %v1318 = vpop.permute.xlu0 %1317
      %1319 = vrot.lane.b32.xlu0 %v1228, 48
      %v1320 = vpop.permute.xlu0 %1319
      %1321 = vrot.lane.b32.xlu0 %v1229, 48
      %v1322 = vpop.permute.xlu0 %1321
      %1323 = vrot.lane.b32.xlu0 %v1230, 48
      %v1324 = vpop.permute.xlu0 %1323
      %1325 = vrot.lane.b32.xlu0 %v1231, 48
      %v1326 = vpop.permute.xlu0 %1325
      %1327 = vrot.lane.b32.xlu0 %v1232, 48
      %v1328 = vpop.permute.xlu0 %1327
      %vm1361 = vcmask 490880
      %1362 = vst.msk [vmem:[#allocation5] sm:$0xff] %vm1361, %v1266
      %1363 = vst.msk [vmem:[#allocation5 + $0x8] sm:$0xff] %vm1361, %v1268
      %1364 = vst.msk [vmem:[#allocation5 + $0x10] sm:$0xff] %vm1361, %v1270
      %1365 = vst.msk [vmem:[#allocation5 + $0x18] sm:$0xff] %vm1361, %v1272
      %1366 = vst.msk [vmem:[#allocation5 + $0x20] sm:$0xff] %vm1361, %v1274
      %1367 = vst.msk [vmem:[#allocation5 + $0x28] sm:$0xff] %vm1361, %v1276
      %1368 = vst.msk [vmem:[#allocation5 + $0x30] sm:$0xff] %vm1361, %v1278
      %1369 = vst.msk [vmem:[#allocation5 + $0x38] sm:$0xff] %vm1361, %v1280
      %1370 = vst.msk [vmem:[#allocation5 + $0x40] sm:$0xff] %vm1361, %v1282
      %1371 = vst.msk [vmem:[#allocation5 + $0x48] sm:$0xff] %vm1361, %v1284
      %1372 = vst.msk [vmem:[#allocation5 + $0x50] sm:$0xff] %vm1361, %v1286
      %1373 = vst.msk [vmem:[#allocation5 + $0x58] sm:$0xff] %vm1361, %v1288
      %1374 = vst.msk [vmem:[#allocation5 + $0x60] sm:$0xff] %vm1361, %v1290
      %1375 = vst.msk [vmem:[#allocation5 + $0x68] sm:$0xff] %vm1361, %v1292
      %1376 = vst.msk [vmem:[#allocation5 + $0x70] sm:$0xff] %vm1361, %v1294
      %1377 = vst.msk [vmem:[#allocation5 + $0x78] sm:$0xff] %vm1361, %v1296
      %1378 = vst.msk [vmem:[#allocation5 + $0x80] sm:$0xff] %vm1361, %v1298
      %1379 = vst.msk [vmem:[#allocation5 + $0x88] sm:$0xff] %vm1361, %v1300
      %1380 = vst.msk [vmem:[#allocation5 + $0x90] sm:$0xff] %vm1361, %v1302
      %1381 = vst.msk [vmem:[#allocation5 + $0x98] sm:$0xff] %vm1361, %v1304
      %1382 = vst.msk [vmem:[#allocation5 + $0xa0] sm:$0xff] %vm1361, %v1306
      %1383 = vst.msk [vmem:[#allocation5 + $0xa8] sm:$0xff] %vm1361, %v1308
      %1384 = vst.msk [vmem:[#allocation5 + $0xb0] sm:$0xff] %vm1361, %v1310
      %1385 = vst.msk [vmem:[#allocation5 + $0xb8] sm:$0xff] %vm1361, %v1312
      %1386 = vst.msk [vmem:[#allocation5 + $0xc0] sm:$0xff] %vm1361, %v1314
      %1387 = vst.msk [vmem:[#allocation5 + $0xc8] sm:$0xff] %vm1361, %v1316
      %1388 = vst.msk [vmem:[#allocation5 + $0xd0] sm:$0xff] %vm1361, %v1318
      %1389 = vst.msk [vmem:[#allocation5 + $0xd8] sm:$0xff] %vm1361, %v1320
      %1390 = vst.msk [vmem:[#allocation5 + $0xe0] sm:$0xff] %vm1361, %v1322
      %1391 = vst.msk [vmem:[#allocation5 + $0xe8] sm:$0xff] %vm1361, %v1324
      %1392 = vst.msk [vmem:[#allocation5 + $0xf0] sm:$0xff] %vm1361, %v1326
      %1393 = vst.msk [vmem:[#allocation5 + $0xf8] sm:$0xff] %vm1361, %v1328
      %v1394 = vld [vmem:[%s370 + $0x2] sm:$0xff]
      %v1395 = vld [vmem:[%s370 + $0xa] sm:$0xff]
      %v1396 = vld [vmem:[%s370 + $0x1a] sm:$0xff]
      %v1397 = vld [vmem:[%s370 + $0x22] sm:$0xff]
      %v1398 = vld [vmem:[%s370 + $0x32] sm:$0xff]
      %v1399 = vld [vmem:[%s370 + $0x3a] sm:$0xff]
      %v1400 = vld [vmem:[%s370 + $0x4a] sm:$0xff]
      %v1401 = vld [vmem:[%s370 + $0x52] sm:$0xff]
      %v1402 = vld [vmem:[%s370 + $0x62] sm:$0xff]
      %v1403 = vld [vmem:[%s370 + $0x6a] sm:$0xff]
      %v1404 = vld [vmem:[%s370 + $0x7a] sm:$0xff]
      %v1405 = vld [vmem:[%s370 + $0x82] sm:$0xff]
      %v1406 = vld [vmem:[%s370 + $0x92] sm:$0xff]
      %v1407 = vld [vmem:[%s370 + $0x9a] sm:$0xff]
      %v1408 = vld [vmem:[%s370 + $0xaa] sm:$0xff]
      %v1409 = vld [vmem:[%s370 + $0xb2] sm:$0xff]
      %v1410 = vld [vmem:[%s370 + $0xc2] sm:$0xff]
      %v1411 = vld [vmem:[%s370 + $0xca] sm:$0xff]
      %v1412 = vld [vmem:[%s370 + $0xda] sm:$0xff]
      %v1413 = vld [vmem:[%s370 + $0xe2] sm:$0xff]
      %v1414 = vld [vmem:[%s370 + $0xf2] sm:$0xff]
      %v1415 = vld [vmem:[%s370 + $0xfa] sm:$0xff]
      %v1416 = vld [vmem:[%s370 + $0x10a] sm:$0xff]
      %v1417 = vld [vmem:[%s370 + $0x112] sm:$0xff]
      %v1418 = vld [vmem:[%s370 + $0x122] sm:$0xff]
      %v1419 = vld [vmem:[%s370 + $0x12a] sm:$0xff]
      %v1420 = vld [vmem:[%s370 + $0x13a] sm:$0xff]
      %v1421 = vld [vmem:[%s370 + $0x142] sm:$0xff]
      %v1422 = vld [vmem:[%s370 + $0x152] sm:$0xff]
      %v1423 = vld [vmem:[%s370 + $0x15a] sm:$0xff]
      %v1424 = vld [vmem:[%s370 + $0x16a] sm:$0xff]
      %v1425 = vld [vmem:[%s370 + $0x172] sm:$0xff]
      %1458 = vrot.lane.b32.xlu0 %v1394, 60
      %v1459 = vpop.permute.xlu0 %1458
      %1460 = vrot.lane.b32.xlu0 %v1395, 60
      %v1461 = vpop.permute.xlu0 %1460
      %1462 = vrot.lane.b32.xlu0 %v1396, 60
      %v1463 = vpop.permute.xlu0 %1462
      %1464 = vrot.lane.b32.xlu0 %v1397, 60
      %v1465 = vpop.permute.xlu0 %1464
      %1466 = vrot.lane.b32.xlu0 %v1398, 60
      %v1467 = vpop.permute.xlu0 %1466
      %1468 = vrot.lane.b32.xlu0 %v1399, 60
      %v1469 = vpop.permute.xlu0 %1468
      %1470 = vrot.lane.b32.xlu0 %v1400, 60
      %v1471 = vpop.permute.xlu0 %1470
      %1472 = vrot.lane.b32.xlu0 %v1401, 60
      %v1473 = vpop.permute.xlu0 %1472
      %1474 = vrot.lane.b32.xlu0 %v1402, 60
      %v1475 = vpop.permute.xlu0 %1474
      %1476 = vrot.lane.b32.xlu0 %v1403, 60
      %v1477 = vpop.permute.xlu0 %1476
      %1478 = vrot.lane.b32.xlu0 %v1404, 60
      %v1479 = vpop.permute.xlu0 %1478
      %1480 = vrot.lane.b32.xlu0 %v1405, 60
      %v1481 = vpop.permute.xlu0 %1480
      %1482 = vrot.lane.b32.xlu0 %v1406, 60
      %v1483 = vpop.permute.xlu0 %1482
      %1484 = vrot.lane.b32.xlu0 %v1407, 60
      %v1485 = vpop.permute.xlu0 %1484
      %1486 = vrot.lane.b32.xlu0 %v1408, 60
      %v1487 = vpop.permute.xlu0 %1486
      %1488 = vrot.lane.b32.xlu0 %v1409, 60
      %v1489 = vpop.permute.xlu0 %1488
      %1490 = vrot.lane.b32.xlu0 %v1410, 60
      %v1491 = vpop.permute.xlu0 %1490
      %1492 = vrot.lane.b32.xlu0 %v1411, 60
      %v1493 = vpop.permute.xlu0 %1492
      %1494 = vrot.lane.b32.xlu0 %v1412, 60
      %v1495 = vpop.permute.xlu0 %1494
      %1496 = vrot.lane.b32.xlu0 %v1413, 60
      %v1497 = vpop.permute.xlu0 %1496
      %1498 = vrot.lane.b32.xlu0 %v1414, 60
      %v1499 = vpop.permute.xlu0 %1498
      %1500 = vrot.lane.b32.xlu0 %v1415, 60
      %v1501 = vpop.permute.xlu0 %1500
      %1502 = vrot.lane.b32.xlu0 %v1416, 60
      %v1503 = vpop.permute.xlu0 %1502
      %1504 = vrot.lane.b32.xlu0 %v1417, 60
      %v1505 = vpop.permute.xlu0 %1504
      %1506 = vrot.lane.b32.xlu0 %v1418, 60
      %v1507 = vpop.permute.xlu0 %1506
      %1508 = vrot.lane.b32.xlu0 %v1419, 60
      %v1509 = vpop.permute.xlu0 %1508
      %1510 = vrot.lane.b32.xlu0 %v1420, 60
      %v1511 = vpop.permute.xlu0 %1510
      %1512 = vrot.lane.b32.xlu0 %v1421, 60
      %v1513 = vpop.permute.xlu0 %1512
      %1514 = vrot.lane.b32.xlu0 %v1422, 60
      %v1515 = vpop.permute.xlu0 %1514
      %1516 = vrot.lane.b32.xlu0 %v1423, 60
      %v1517 = vpop.permute.xlu0 %1516
      %1518 = vrot.lane.b32.xlu0 %v1424, 60
      %v1519 = vpop.permute.xlu0 %1518
      %1520 = vrot.lane.b32.xlu0 %v1425, 60
      %v1521 = vpop.permute.xlu0 %1520
      %vm1554 = vcmask 589280
      %1555 = vst.msk [vmem:[#allocation5] sm:$0xff] %vm1554, %v1459
      %1556 = vst.msk [vmem:[#allocation5 + $0x8] sm:$0xff] %vm1554, %v1461
      %1557 = vst.msk [vmem:[#allocation5 + $0x10] sm:$0xff] %vm1554, %v1463
      %1558 = vst.msk [vmem:[#allocation5 + $0x18] sm:$0xff] %vm1554, %v1465
      %1559 = vst.msk [vmem:[#allocation5 + $0x20] sm:$0xff] %vm1554, %v1467
      %1560 = vst.msk [vmem:[#allocation5 + $0x28] sm:$0xff] %vm1554, %v1469
      %1561 = vst.msk [vmem:[#allocation5 + $0x30] sm:$0xff] %vm1554, %v1471
      %1562 = vst.msk [vmem:[#allocation5 + $0x38] sm:$0xff] %vm1554, %v1473
      %1563 = vst.msk [vmem:[#allocation5 + $0x40] sm:$0xff] %vm1554, %v1475
      %1564 = vst.msk [vmem:[#allocation5 + $0x48] sm:$0xff] %vm1554, %v1477
      %1565 = vst.msk [vmem:[#allocation5 + $0x50] sm:$0xff] %vm1554, %v1479
      %1566 = vst.msk [vmem:[#allocation5 + $0x58] sm:$0xff] %vm1554, %v1481
      %1567 = vst.msk [vmem:[#allocation5 + $0x60] sm:$0xff] %vm1554, %v1483
      %1568 = vst.msk [vmem:[#allocation5 + $0x68] sm:$0xff] %vm1554, %v1485
      %1569 = vst.msk [vmem:[#allocation5 + $0x70] sm:$0xff] %vm1554, %v1487
      %1570 = vst.msk [vmem:[#allocation5 + $0x78] sm:$0xff] %vm1554, %v1489
      %1571 = vst.msk [vmem:[#allocation5 + $0x80] sm:$0xff] %vm1554, %v1491
      %1572 = vst.msk [vmem:[#allocation5 + $0x88] sm:$0xff] %vm1554, %v1493
      %1573 = vst.msk [vmem:[#allocation5 + $0x90] sm:$0xff] %vm1554, %v1495
      %1574 = vst.msk [vmem:[#allocation5 + $0x98] sm:$0xff] %vm1554, %v1497
      %1575 = vst.msk [vmem:[#allocation5 + $0xa0] sm:$0xff] %vm1554, %v1499
      %1576 = vst.msk [vmem:[#allocation5 + $0xa8] sm:$0xff] %vm1554, %v1501
      %1577 = vst.msk [vmem:[#allocation5 + $0xb0] sm:$0xff] %vm1554, %v1503
      %1578 = vst.msk [vmem:[#allocation5 + $0xb8] sm:$0xff] %vm1554, %v1505
      %1579 = vst.msk [vmem:[#allocation5 + $0xc0] sm:$0xff] %vm1554, %v1507
      %1580 = vst.msk [vmem:[#allocation5 + $0xc8] sm:$0xff] %vm1554, %v1509
      %1581 = vst.msk [vmem:[#allocation5 + $0xd0] sm:$0xff] %vm1554, %v1511
      %1582 = vst.msk [vmem:[#allocation5 + $0xd8] sm:$0xff] %vm1554, %v1513
      %1583 = vst.msk [vmem:[#allocation5 + $0xe0] sm:$0xff] %vm1554, %v1515
      %1584 = vst.msk [vmem:[#allocation5 + $0xe8] sm:$0xff] %vm1554, %v1517
      %1585 = vst.msk [vmem:[#allocation5 + $0xf0] sm:$0xff] %vm1554, %v1519
      %1586 = vst.msk [vmem:[#allocation5 + $0xf8] sm:$0xff] %vm1554, %v1521
      %s1587 = scalar_lea.vmem [#allocation2], 48
      %v1588 = vld [vmem:[%s1587] sm:$0xff]
      %v1589 = vld [vmem:[%s1587 + $0x8] sm:$0xff]
      %v1590 = vld [vmem:[%s1587 + $0x18] sm:$0xff]
      %v1591 = vld [vmem:[%s1587 + $0x20] sm:$0xff]
      %v1592 = vld [vmem:[%s1587 + $0x30] sm:$0xff]
      %v1593 = vld [vmem:[%s1587 + $0x38] sm:$0xff]
      %v1594 = vld [vmem:[%s1587 + $0x48] sm:$0xff]
      %v1595 = vld [vmem:[%s1587 + $0x50] sm:$0xff]
      %v1596 = vld [vmem:[%s1587 + $0x60] sm:$0xff]
      %v1597 = vld [vmem:[%s1587 + $0x68] sm:$0xff]
      %v1598 = vld [vmem:[%s1587 + $0x78] sm:$0xff]
      %v1599 = vld [vmem:[%s1587 + $0x80] sm:$0xff]
      %v1600 = vld [vmem:[%s1587 + $0x90] sm:$0xff]
      %v1601 = vld [vmem:[%s1587 + $0x98] sm:$0xff]
      %v1602 = vld [vmem:[%s1587 + $0xa8] sm:$0xff]
      %v1603 = vld [vmem:[%s1587 + $0xb0] sm:$0xff]
      %v1604 = vld [vmem:[%s1587 + $0xc0] sm:$0xff]
      %v1605 = vld [vmem:[%s1587 + $0xc8] sm:$0xff]
      %v1606 = vld [vmem:[%s1587 + $0xd8] sm:$0xff]
      %v1607 = vld [vmem:[%s1587 + $0xe0] sm:$0xff]
      %v1608 = vld [vmem:[%s1587 + $0xf0] sm:$0xff]
      %v1609 = vld [vmem:[%s1587 + $0xf8] sm:$0xff]
      %v1610 = vld [vmem:[%s1587 + $0x108] sm:$0xff]
      %v1611 = vld [vmem:[%s1587 + $0x110] sm:$0xff]
      %v1612 = vld [vmem:[%s1587 + $0x120] sm:$0xff]
      %v1613 = vld [vmem:[%s1587 + $0x128] sm:$0xff]
      %v1614 = vld [vmem:[%s1587 + $0x138] sm:$0xff]
      %v1615 = vld [vmem:[%s1587 + $0x140] sm:$0xff]
      %v1616 = vld [vmem:[%s1587 + $0x150] sm:$0xff]
      %v1617 = vld [vmem:[%s1587 + $0x158] sm:$0xff]
      %v1618 = vld [vmem:[%s1587 + $0x168] sm:$0xff]
      %v1619 = vld [vmem:[%s1587 + $0x170] sm:$0xff]
      %1652 = vrot.lane.b32.xlu0 %v1588, 72
      %v1653 = vpop.permute.xlu0 %1652
      %1654 = vrot.lane.b32.xlu0 %v1589, 72
      %v1655 = vpop.permute.xlu0 %1654
      %1656 = vrot.lane.b32.xlu0 %v1590, 72
      %v1657 = vpop.permute.xlu0 %1656
      %1658 = vrot.lane.b32.xlu0 %v1591, 72
      %v1659 = vpop.permute.xlu0 %1658
      %1660 = vrot.lane.b32.xlu0 %v1592, 72
      %v1661 = vpop.permute.xlu0 %1660
      %1662 = vrot.lane.b32.xlu0 %v1593, 72
      %v1663 = vpop.permute.xlu0 %1662
      %1664 = vrot.lane.b32.xlu0 %v1594, 72
      %v1665 = vpop.permute.xlu0 %1664
      %1666 = vrot.lane.b32.xlu0 %v1595, 72
      %v1667 = vpop.permute.xlu0 %1666
      %1668 = vrot.lane.b32.xlu0 %v1596, 72
      %v1669 = vpop.permute.xlu0 %1668
      %1670 = vrot.lane.b32.xlu0 %v1597, 72
      %v1671 = vpop.permute.xlu0 %1670
      %1672 = vrot.lane.b32.xlu0 %v1598, 72
      %v1673 = vpop.permute.xlu0 %1672
      %1674 = vrot.lane.b32.xlu0 %v1599, 72
      %v1675 = vpop.permute.xlu0 %1674
      %1676 = vrot.lane.b32.xlu0 %v1600, 72
      %v1677 = vpop.permute.xlu0 %1676
      %1678 = vrot.lane.b32.xlu0 %v1601, 72
      %v1679 = vpop.permute.xlu0 %1678
      %1680 = vrot.lane.b32.xlu0 %v1602, 72
      %v1681 = vpop.permute.xlu0 %1680
      %1682 = vrot.lane.b32.xlu0 %v1603, 72
      %v1683 = vpop.permute.xlu0 %1682
      %1684 = vrot.lane.b32.xlu0 %v1604, 72
      %v1685 = vpop.permute.xlu0 %1684
      %1686 = vrot.lane.b32.xlu0 %v1605, 72
      %v1687 = vpop.permute.xlu0 %1686
      %1688 = vrot.lane.b32.xlu0 %v1606, 72
      %v1689 = vpop.permute.xlu0 %1688
      %1690 = vrot.lane.b32.xlu0 %v1607, 72
      %v1691 = vpop.permute.xlu0 %1690
      %1692 = vrot.lane.b32.xlu0 %v1608, 72
      %v1693 = vpop.permute.xlu0 %1692
      %1694 = vrot.lane.b32.xlu0 %v1609, 72
      %v1695 = vpop.permute.xlu0 %1694
      %1696 = vrot.lane.b32.xlu0 %v1610, 72
      %v1697 = vpop.permute.xlu0 %1696
      %1698 = vrot.lane.b32.xlu0 %v1611, 72
      %v1699 = vpop.permute.xlu0 %1698
      %1700 = vrot.lane.b32.xlu0 %v1612, 72
      %v1701 = vpop.permute.xlu0 %1700
      %1702 = vrot.lane.b32.xlu0 %v1613, 72
      %v1703 = vpop.permute.xlu0 %1702
      %1704 = vrot.lane.b32.xlu0 %v1614, 72
      %v1705 = vpop.permute.xlu0 %1704
      %1706 = vrot.lane.b32.xlu0 %v1615, 72
      %v1707 = vpop.permute.xlu0 %1706
      %1708 = vrot.lane.b32.xlu0 %v1616, 72
      %v1709 = vpop.permute.xlu0 %1708
      %1710 = vrot.lane.b32.xlu0 %v1617, 72
      %v1711 = vpop.permute.xlu0 %1710
      %1712 = vrot.lane.b32.xlu0 %v1618, 72
      %v1713 = vpop.permute.xlu0 %1712
      %1714 = vrot.lane.b32.xlu0 %v1619, 72
      %v1715 = vpop.permute.xlu0 %1714
      %vm1748 = vcmask 687680
      %1749 = vst.msk [vmem:[#allocation5] sm:$0xff] %vm1748, %v1653
      %1750 = vst.msk [vmem:[#allocation5 + $0x8] sm:$0xff] %vm1748, %v1655
      %1751 = vst.msk [vmem:[#allocation5 + $0x10] sm:$0xff] %vm1748, %v1657
      %1752 = vst.msk [vmem:[#allocation5 + $0x18] sm:$0xff] %vm1748, %v1659
      %1753 = vst.msk [vmem:[#allocation5 + $0x20] sm:$0xff] %vm1748, %v1661
      %1754 = vst.msk [vmem:[#allocation5 + $0x28] sm:$0xff] %vm1748, %v1663
      %1755 = vst.msk [vmem:[#allocation5 + $0x30] sm:$0xff] %vm1748, %v1665
      %1756 = vst.msk [vmem:[#allocation5 + $0x38] sm:$0xff] %vm1748, %v1667
      %1757 = vst.msk [vmem:[#allocation5 + $0x40] sm:$0xff] %vm1748, %v1669
      %1758 = vst.msk [vmem:[#allocation5 + $0x48] sm:$0xff] %vm1748, %v1671
      %1759 = vst.msk [vmem:[#allocation5 + $0x50] sm:$0xff] %vm1748, %v1673
      %1760 = vst.msk [vmem:[#allocation5 + $0x58] sm:$0xff] %vm1748, %v1675
      %1761 = vst.msk [vmem:[#allocation5 + $0x60] sm:$0xff] %vm1748, %v1677
      %1762 = vst.msk [vmem:[#allocation5 + $0x68] sm:$0xff] %vm1748, %v1679
      %1763 = vst.msk [vmem:[#allocation5 + $0x70] sm:$0xff] %vm1748, %v1681
      %1764 = vst.msk [vmem:[#allocation5 + $0x78] sm:$0xff] %vm1748, %v1683
      %1765 = vst.msk [vmem:[#allocation5 + $0x80] sm:$0xff] %vm1748, %v1685
      %1766 = vst.msk [vmem:[#allocation5 + $0x88] sm:$0xff] %vm1748, %v1687
      %1767 = vst.msk [vmem:[#allocation5 + $0x90] sm:$0xff] %vm1748, %v1689
      %1768 = vst.msk [vmem:[#allocation5 + $0x98] sm:$0xff] %vm1748, %v1691
      %1769 = vst.msk [vmem:[#allocation5 + $0xa0] sm:$0xff] %vm1748, %v1693
      %1770 = vst.msk [vmem:[#allocation5 + $0xa8] sm:$0xff] %vm1748, %v1695
      %1771 = vst.msk [vmem:[#allocation5 + $0xb0] sm:$0xff] %vm1748, %v1697
      %1772 = vst.msk [vmem:[#allocation5 + $0xb8] sm:$0xff] %vm1748, %v1699
      %1773 = vst.msk [vmem:[#allocation5 + $0xc0] sm:$0xff] %vm1748, %v1701
      %1774 = vst.msk [vmem:[#allocation5 + $0xc8] sm:$0xff] %vm1748, %v1703
      %1775 = vst.msk [vmem:[#allocation5 + $0xd0] sm:$0xff] %vm1748, %v1705
      %1776 = vst.msk [vmem:[#allocation5 + $0xd8] sm:$0xff] %vm1748, %v1707
      %1777 = vst.msk [vmem:[#allocation5 + $0xe0] sm:$0xff] %vm1748, %v1709
      %1778 = vst.msk [vmem:[#allocation5 + $0xe8] sm:$0xff] %vm1748, %v1711
      %1779 = vst.msk [vmem:[#allocation5 + $0xf0] sm:$0xff] %vm1748, %v1713
      %1780 = vst.msk [vmem:[#allocation5 + $0xf8] sm:$0xff] %vm1748, %v1715
      %v1781 = vld [vmem:[%s1587 + $0x1] sm:$0xff]
      %v1782 = vld [vmem:[%s1587 + $0x9] sm:$0xff]
      %v1783 = vld [vmem:[%s1587 + $0x19] sm:$0xff]
      %v1784 = vld [vmem:[%s1587 + $0x21] sm:$0xff]
      %v1785 = vld [vmem:[%s1587 + $0x31] sm:$0xff]
      %v1786 = vld [vmem:[%s1587 + $0x39] sm:$0xff]
      %v1787 = vld [vmem:[%s1587 + $0x49] sm:$0xff]
      %v1788 = vld [vmem:[%s1587 + $0x51] sm:$0xff]
      %v1789 = vld [vmem:[%s1587 + $0x61] sm:$0xff]
      %v1790 = vld [vmem:[%s1587 + $0x69] sm:$0xff]
      %v1791 = vld [vmem:[%s1587 + $0x79] sm:$0xff]
      %v1792 = vld [vmem:[%s1587 + $0x81] sm:$0xff]
      %v1793 = vld [vmem:[%s1587 + $0x91] sm:$0xff]
      %v1794 = vld [vmem:[%s1587 + $0x99] sm:$0xff]
      %v1795 = vld [vmem:[%s1587 + $0xa9] sm:$0xff]
      %v1796 = vld [vmem:[%s1587 + $0xb1] sm:$0xff]
      %v1797 = vld [vmem:[%s1587 + $0xc1] sm:$0xff]
      %v1798 = vld [vmem:[%s1587 + $0xc9] sm:$0xff]
      %v1799 = vld [vmem:[%s1587 + $0xd9] sm:$0xff]
      %v1800 = vld [vmem:[%s1587 + $0xe1] sm:$0xff]
      %v1801 = vld [vmem:[%s1587 + $0xf1] sm:$0xff]
      %v1802 = vld [vmem:[%s1587 + $0xf9] sm:$0xff]
      %v1803 = vld [vmem:[%s1587 + $0x109] sm:$0xff]
      %v1804 = vld [vmem:[%s1587 + $0x111] sm:$0xff]
      %v1805 = vld [vmem:[%s1587 + $0x121] sm:$0xff]
      %v1806 = vld [vmem:[%s1587 + $0x129] sm:$0xff]
      %v1807 = vld [vmem:[%s1587 + $0x139] sm:$0xff]
      %v1808 = vld [vmem:[%s1587 + $0x141] sm:$0xff]
      %v1809 = vld [vmem:[%s1587 + $0x151] sm:$0xff]
      %v1810 = vld [vmem:[%s1587 + $0x159] sm:$0xff]
      %v1811 = vld [vmem:[%s1587 + $0x169] sm:$0xff]
      %v1812 = vld [vmem:[%s1587 + $0x171] sm:$0xff]
      %1845 = vrot.lane.b32.xlu0 %v1781, 84
      %v1846 = vpop.permute.xlu0 %1845
      %1847 = vrot.lane.b32.xlu0 %v1782, 84
      %v1848 = vpop.permute.xlu0 %1847
      %1849 = vrot.lane.b32.xlu0 %v1783, 84
      %v1850 = vpop.permute.xlu0 %1849
      %1851 = vrot.lane.b32.xlu0 %v1784, 84
      %v1852 = vpop.permute.xlu0 %1851
      %1853 = vrot.lane.b32.xlu0 %v1785, 84
      %v1854 = vpop.permute.xlu0 %1853
      %1855 = vrot.lane.b32.xlu0 %v1786, 84
      %v1856 = vpop.permute.xlu0 %1855
      %1857 = vrot.lane.b32.xlu0 %v1787, 84
      %v1858 = vpop.permute.xlu0 %1857
      %1859 = vrot.lane.b32.xlu0 %v1788, 84
      %v1860 = vpop.permute.xlu0 %1859
      %1861 = vrot.lane.b32.xlu0 %v1789, 84
      %v1862 = vpop.permute.xlu0 %1861
      %1863 = vrot.lane.b32.xlu0 %v1790, 84
      %v1864 = vpop.permute.xlu0 %1863
      %1865 = vrot.lane.b32.xlu0 %v1791, 84
      %v1866 = vpop.permute.xlu0 %1865
      %1867 = vrot.lane.b32.xlu0 %v1792, 84
      %v1868 = vpop.permute.xlu0 %1867
      %1869 = vrot.lane.b32.xlu0 %v1793, 84
      %v1870 = vpop.permute.xlu0 %1869
      %1871 = vrot.lane.b32.xlu0 %v1794, 84
      %v1872 = vpop.permute.xlu0 %1871
      %1873 = vrot.lane.b32.xlu0 %v1795, 84
      %v1874 = vpop.permute.xlu0 %1873
      %1875 = vrot.lane.b32.xlu0 %v1796, 84
      %v1876 = vpop.permute.xlu0 %1875
      %1877 = vrot.lane.b32.xlu0 %v1797, 84
      %v1878 = vpop.permute.xlu0 %1877
      %1879 = vrot.lane.b32.xlu0 %v1798, 84
      %v1880 = vpop.permute.xlu0 %1879
      %1881 = vrot.lane.b32.xlu0 %v1799, 84
      %v1882 = vpop.permute.xlu0 %1881
      %1883 = vrot.lane.b32.xlu0 %v1800, 84
      %v1884 = vpop.permute.xlu0 %1883
      %1885 = vrot.lane.b32.xlu0 %v1801, 84
      %v1886 = vpop.permute.xlu0 %1885
      %1887 = vrot.lane.b32.xlu0 %v1802, 84
      %v1888 = vpop.permute.xlu0 %1887
      %1889 = vrot.lane.b32.xlu0 %v1803, 84
      %v1890 = vpop.permute.xlu0 %1889
      %1891 = vrot.lane.b32.xlu0 %v1804, 84
      %v1892 = vpop.permute.xlu0 %1891
      %1893 = vrot.lane.b32.xlu0 %v1805, 84
      %v1894 = vpop.permute.xlu0 %1893
      %1895 = vrot.lane.b32.xlu0 %v1806, 84
      %v1896 = vpop.permute.xlu0 %1895
      %1897 = vrot.lane.b32.xlu0 %v1807, 84
      %v1898 = vpop.permute.xlu0 %1897
      %1899 = vrot.lane.b32.xlu0 %v1808, 84
      %v1900 = vpop.permute.xlu0 %1899
      %1901 = vrot.lane.b32.xlu0 %v1809, 84
      %v1902 = vpop.permute.xlu0 %1901
      %1903 = vrot.lane.b32.xlu0 %v1810, 84
      %v1904 = vpop.permute.xlu0 %1903
      %1905 = vrot.lane.b32.xlu0 %v1811, 84
      %v1906 = vpop.permute.xlu0 %1905
      %1907 = vrot.lane.b32.xlu0 %v1812, 84
      %v1908 = vpop.permute.xlu0 %1907
      %vm1941 = vcmask 786080
      %1942 = vst.msk [vmem:[#allocation5] sm:$0xff] %vm1941, %v1846
      %1943 = vst.msk [vmem:[#allocation5 + $0x8] sm:$0xff] %vm1941, %v1848
      %1944 = vst.msk [vmem:[#allocation5 + $0x10] sm:$0xff] %vm1941, %v1850
      %1945 = vst.msk [vmem:[#allocation5 + $0x18] sm:$0xff] %vm1941, %v1852
      %1946 = vst.msk [vmem:[#allocation5 + $0x20] sm:$0xff] %vm1941, %v1854
      %1947 = vst.msk [vmem:[#allocation5 + $0x28] sm:$0xff] %vm1941, %v1856
      %1948 = vst.msk [vmem:[#allocation5 + $0x30] sm:$0xff] %vm1941, %v1858
      %1949 = vst.msk [vmem:[#allocation5 + $0x38] sm:$0xff] %vm1941, %v1860
      %1950 = vst.msk [vmem:[#allocation5 + $0x40] sm:$0xff] %vm1941, %v1862
      %1951 = vst.msk [vmem:[#allocation5 + $0x48] sm:$0xff] %vm1941, %v1864
      %1952 = vst.msk [vmem:[#allocation5 + $0x50] sm:$0xff] %vm1941, %v1866
      %1953 = vst.msk [vmem:[#allocation5 + $0x58] sm:$0xff] %vm1941, %v1868
      %1954 = vst.msk [vmem:[#allocation5 + $0x60] sm:$0xff] %vm1941, %v1870
      %1955 = vst.msk [vmem:[#allocation5 + $0x68] sm:$0xff] %vm1941, %v1872
      %1956 = vst.msk [vmem:[#allocation5 + $0x70] sm:$0xff] %vm1941, %v1874
      %1957 = vst.msk [vmem:[#allocation5 + $0x78] sm:$0xff] %vm1941, %v1876
      %1958 = vst.msk [vmem:[#allocation5 + $0x80] sm:$0xff] %vm1941, %v1878
      %1959 = vst.msk [vmem:[#allocation5 + $0x88] sm:$0xff] %vm1941, %v1880
      %1960 = vst.msk [vmem:[#allocation5 + $0x90] sm:$0xff] %vm1941, %v1882
      %1961 = vst.msk [vmem:[#allocation5 + $0x98] sm:$0xff] %vm1941, %v1884
      %1962 = vst.msk [vmem:[#allocation5 + $0xa0] sm:$0xff] %vm1941, %v1886
      %1963 = vst.msk [vmem:[#allocation5 + $0xa8] sm:$0xff] %vm1941, %v1888
      %1964 = vst.msk [vmem:[#allocation5 + $0xb0] sm:$0xff] %vm1941, %v1890
      %1965 = vst.msk [vmem:[#allocation5 + $0xb8] sm:$0xff] %vm1941, %v1892
      %1966 = vst.msk [vmem:[#allocation5 + $0xc0] sm:$0xff] %vm1941, %v1894
      %1967 = vst.msk [vmem:[#allocation5 + $0xc8] sm:$0xff] %vm1941, %v1896
      %1968 = vst.msk [vmem:[#allocation5 + $0xd0] sm:$0xff] %vm1941, %v1898
      %1969 = vst.msk [vmem:[#allocation5 + $0xd8] sm:$0xff] %vm1941, %v1900
      %1970 = vst.msk [vmem:[#allocation5 + $0xe0] sm:$0xff] %vm1941, %v1902
      %1971 = vst.msk [vmem:[#allocation5 + $0xe8] sm:$0xff] %vm1941, %v1904
      %1972 = vst.msk [vmem:[#allocation5 + $0xf0] sm:$0xff] %vm1941, %v1906
      %1973 = vst.msk [vmem:[#allocation5 + $0xf8] sm:$0xff] %vm1941, %v1908
      %v1974 = vld [vmem:[%s1587 + $0x2] sm:$0xff]
      %v1975 = vld [vmem:[%s1587 + $0xa] sm:$0xff]
      %v1976 = vld [vmem:[%s1587 + $0x1a] sm:$0xff]
      %v1977 = vld [vmem:[%s1587 + $0x22] sm:$0xff]
      %v1978 = vld [vmem:[%s1587 + $0x32] sm:$0xff]
      %v1979 = vld [vmem:[%s1587 + $0x3a] sm:$0xff]
      %v1980 = vld [vmem:[%s1587 + $0x4a] sm:$0xff]
      %v1981 = vld [vmem:[%s1587 + $0x52] sm:$0xff]
      %v1982 = vld [vmem:[%s1587 + $0x62] sm:$0xff]
      %v1983 = vld [vmem:[%s1587 + $0x6a] sm:$0xff]
      %v1984 = vld [vmem:[%s1587 + $0x7a] sm:$0xff]
      %v1985 = vld [vmem:[%s1587 + $0x82] sm:$0xff]
      %v1986 = vld [vmem:[%s1587 + $0x92] sm:$0xff]
      %v1987 = vld [vmem:[%s1587 + $0x9a] sm:$0xff]
      %v1988 = vld [vmem:[%s1587 + $0xaa] sm:$0xff]
      %v1989 = vld [vmem:[%s1587 + $0xb2] sm:$0xff]
      %v1990 = vld [vmem:[%s1587 + $0xc2] sm:$0xff]
      %v1991 = vld [vmem:[%s1587 + $0xca] sm:$0xff]
      %v1992 = vld [vmem:[%s1587 + $0xda] sm:$0xff]
      %v1993 = vld [vmem:[%s1587 + $0xe2] sm:$0xff]
      %v1994 = vld [vmem:[%s1587 + $0xf2] sm:$0xff]
      %v1995 = vld [vmem:[%s1587 + $0xfa] sm:$0xff]
      %v1996 = vld [vmem:[%s1587 + $0x10a] sm:$0xff]
      %v1997 = vld [vmem:[%s1587 + $0x112] sm:$0xff]
      %v1998 = vld [vmem:[%s1587 + $0x122] sm:$0xff]
      %v1999 = vld [vmem:[%s1587 + $0x12a] sm:$0xff]
      %v2000 = vld [vmem:[%s1587 + $0x13a] sm:$0xff]
      %v2001 = vld [vmem:[%s1587 + $0x142] sm:$0xff]
      %v2002 = vld [vmem:[%s1587 + $0x152] sm:$0xff]
      %v2003 = vld [vmem:[%s1587 + $0x15a] sm:$0xff]
      %v2004 = vld [vmem:[%s1587 + $0x16a] sm:$0xff]
      %v2005 = vld [vmem:[%s1587 + $0x172] sm:$0xff]
      %2038 = vrot.lane.b32.xlu0 %v1974, 96
      %v2039 = vpop.permute.xlu0 %2038
      %2040 = vrot.lane.b32.xlu0 %v1975, 96
      %v2041 = vpop.permute.xlu0 %2040
      %2042 = vrot.lane.b32.xlu0 %v1976, 96
      %v2043 = vpop.permute.xlu0 %2042
      %2044 = vrot.lane.b32.xlu0 %v1977, 96
      %v2045 = vpop.permute.xlu0 %2044
      %2046 = vrot.lane.b32.xlu0 %v1978, 96
      %v2047 = vpop.permute.xlu0 %2046
      %2048 = vrot.lane.b32.xlu0 %v1979, 96
      %v2049 = vpop.permute.xlu0 %2048
      %2050 = vrot.lane.b32.xlu0 %v1980, 96
      %v2051 = vpop.permute.xlu0 %2050
      %2052 = vrot.lane.b32.xlu0 %v1981, 96
      %v2053 = vpop.permute.xlu0 %2052
      %2054 = vrot.lane.b32.xlu0 %v1982, 96
      %v2055 = vpop.permute.xlu0 %2054
      %2056 = vrot.lane.b32.xlu0 %v1983, 96
      %v2057 = vpop.permute.xlu0 %2056
      %2058 = vrot.lane.b32.xlu0 %v1984, 96
      %v2059 = vpop.permute.xlu0 %2058
      %2060 = vrot.lane.b32.xlu0 %v1985, 96
      %v2061 = vpop.permute.xlu0 %2060
      %2062 = vrot.lane.b32.xlu0 %v1986, 96
      %v2063 = vpop.permute.xlu0 %2062
      %2064 = vrot.lane.b32.xlu0 %v1987, 96
      %v2065 = vpop.permute.xlu0 %2064
      %2066 = vrot.lane.b32.xlu0 %v1988, 96
      %v2067 = vpop.permute.xlu0 %2066
      %2068 = vrot.lane.b32.xlu0 %v1989, 96
      %v2069 = vpop.permute.xlu0 %2068
      %2070 = vrot.lane.b32.xlu0 %v1990, 96
      %v2071 = vpop.permute.xlu0 %2070
      %2072 = vrot.lane.b32.xlu0 %v1991, 96
      %v2073 = vpop.permute.xlu0 %2072
      %2074 = vrot.lane.b32.xlu0 %v1992, 96
      %v2075 = vpop.permute.xlu0 %2074
      %2076 = vrot.lane.b32.xlu0 %v1993, 96
      %v2077 = vpop.permute.xlu0 %2076
      %2078 = vrot.lane.b32.xlu0 %v1994, 96
      %v2079 = vpop.permute.xlu0 %2078
      %2080 = vrot.lane.b32.xlu0 %v1995, 96
      %v2081 = vpop.permute.xlu0 %2080
      %2082 = vrot.lane.b32.xlu0 %v1996, 96
      %v2083 = vpop.permute.xlu0 %2082
      %2084 = vrot.lane.b32.xlu0 %v1997, 96
      %v2085 = vpop.permute.xlu0 %2084
      %2086 = vrot.lane.b32.xlu0 %v1998, 96
      %v2087 = vpop.permute.xlu0 %2086
      %2088 = vrot.lane.b32.xlu0 %v1999, 96
      %v2089 = vpop.permute.xlu0 %2088
      %2090 = vrot.lane.b32.xlu0 %v2000, 96
      %v2091 = vpop.permute.xlu0 %2090
      %2092 = vrot.lane.b32.xlu0 %v2001, 96
      %v2093 = vpop.permute.xlu0 %2092
      %2094 = vrot.lane.b32.xlu0 %v2002, 96
      %v2095 = vpop.permute.xlu0 %2094
      %2096 = vrot.lane.b32.xlu0 %v2003, 96
      %v2097 = vpop.permute.xlu0 %2096
      %2098 = vrot.lane.b32.xlu0 %v2004, 96
      %v2099 = vpop.permute.xlu0 %2098
      %2100 = vrot.lane.b32.xlu0 %v2005, 96
      %v2101 = vpop.permute.xlu0 %2100
      %vm2134 = vcmask 884480
      %2135 = vst.msk [vmem:[#allocation5] sm:$0xff] %vm2134, %v2039
      %2136 = vst.msk [vmem:[#allocation5 + $0x8] sm:$0xff] %vm2134, %v2041
      %2137 = vst.msk [vmem:[#allocation5 + $0x10] sm:$0xff] %vm2134, %v2043
      %2138 = vst.msk [vmem:[#allocation5 + $0x18] sm:$0xff] %vm2134, %v2045
      %2139 = vst.msk [vmem:[#allocation5 + $0x20] sm:$0xff] %vm2134, %v2047
      %2140 = vst.msk [vmem:[#allocation5 + $0x28] sm:$0xff] %vm2134, %v2049
      %2141 = vst.msk [vmem:[#allocation5 + $0x30] sm:$0xff] %vm2134, %v2051
      %2142 = vst.msk [vmem:[#allocation5 + $0x38] sm:$0xff] %vm2134, %v2053
      %2143 = vst.msk [vmem:[#allocation5 + $0x40] sm:$0xff] %vm2134, %v2055
      %2144 = vst.msk [vmem:[#allocation5 + $0x48] sm:$0xff] %vm2134, %v2057
      %2145 = vst.msk [vmem:[#allocation5 + $0x50] sm:$0xff] %vm2134, %v2059
      %2146 = vst.msk [vmem:[#allocation5 + $0x58] sm:$0xff] %vm2134, %v2061
      %2147 = vst.msk [vmem:[#allocation5 + $0x60] sm:$0xff] %vm2134, %v2063
      %2148 = vst.msk [vmem:[#allocation5 + $0x68] sm:$0xff] %vm2134, %v2065
      %2149 = vst.msk [vmem:[#allocation5 + $0x70] sm:$0xff] %vm2134, %v2067
      %2150 = vst.msk [vmem:[#allocation5 + $0x78] sm:$0xff] %vm2134, %v2069
      %2151 = vst.msk [vmem:[#allocation5 + $0x80] sm:$0xff] %vm2134, %v2071
      %2152 = vst.msk [vmem:[#allocation5 + $0x88] sm:$0xff] %vm2134, %v2073
      %2153 = vst.msk [vmem:[#allocation5 + $0x90] sm:$0xff] %vm2134, %v2075
      %2154 = vst.msk [vmem:[#allocation5 + $0x98] sm:$0xff] %vm2134, %v2077
      %2155 = vst.msk [vmem:[#allocation5 + $0xa0] sm:$0xff] %vm2134, %v2079
      %2156 = vst.msk [vmem:[#allocation5 + $0xa8] sm:$0xff] %vm2134, %v2081
      %2157 = vst.msk [vmem:[#allocation5 + $0xb0] sm:$0xff] %vm2134, %v2083
      %2158 = vst.msk [vmem:[#allocation5 + $0xb8] sm:$0xff] %vm2134, %v2085
      %2159 = vst.msk [vmem:[#allocation5 + $0xc0] sm:$0xff] %vm2134, %v2087
      %2160 = vst.msk [vmem:[#allocation5 + $0xc8] sm:$0xff] %vm2134, %v2089
      %2161 = vst.msk [vmem:[#allocation5 + $0xd0] sm:$0xff] %vm2134, %v2091
      %2162 = vst.msk [vmem:[#allocation5 + $0xd8] sm:$0xff] %vm2134, %v2093
      %2163 = vst.msk [vmem:[#allocation5 + $0xe0] sm:$0xff] %vm2134, %v2095
      %2164 = vst.msk [vmem:[#allocation5 + $0xe8] sm:$0xff] %vm2134, %v2097
      %2165 = vst.msk [vmem:[#allocation5 + $0xf0] sm:$0xff] %vm2134, %v2099
      %2166 = vst.msk [vmem:[#allocation5 + $0xf8] sm:$0xff] %vm2134, %v2101
      %v2167 = vld [vmem:[#allocation5] sm:$0xff]
      %v2168 = vld [vmem:[#allocation5 + $0x8] sm:$0xff]
      %v2169 = vld [vmem:[#allocation5 + $0x10] sm:$0xff]
      %v2170 = vld [vmem:[#allocation5 + $0x18] sm:$0xff]
      %v2171 = vld [vmem:[#allocation5 + $0x20] sm:$0xff]
      %v2172 = vld [vmem:[#allocation5 + $0x28] sm:$0xff]
      %v2173 = vld [vmem:[#allocation5 + $0x30] sm:$0xff]
      %v2174 = vld [vmem:[#allocation5 + $0x38] sm:$0xff]
      %v2175 = vld [vmem:[#allocation5 + $0x40] sm:$0xff]
      %v2176 = vld [vmem:[#allocation5 + $0x48] sm:$0xff]
      %v2177 = vld [vmem:[#allocation5 + $0x50] sm:$0xff]
      %v2178 = vld [vmem:[#allocation5 + $0x58] sm:$0xff]
      %v2179 = vld [vmem:[#allocation5 + $0x60] sm:$0xff]
      %v2180 = vld [vmem:[#allocation5 + $0x68] sm:$0xff]
      %v2181 = vld [vmem:[#allocation5 + $0x70] sm:$0xff]
      %v2182 = vld [vmem:[#allocation5 + $0x78] sm:$0xff]
      %v2183 = vld [vmem:[#allocation5 + $0x80] sm:$0xff]
      %v2184 = vld [vmem:[#allocation5 + $0x88] sm:$0xff]
      %v2185 = vld [vmem:[#allocation5 + $0x90] sm:$0xff]
      %v2186 = vld [vmem:[#allocation5 + $0x98] sm:$0xff]
      %v2187 = vld [vmem:[#allocation5 + $0xa0] sm:$0xff]
      %v2188 = vld [vmem:[#allocation5 + $0xa8] sm:$0xff]
      %v2189 = vld [vmem:[#allocation5 + $0xb0] sm:$0xff]
      %v2190 = vld [vmem:[#allocation5 + $0xb8] sm:$0xff]
      %v2191 = vld [vmem:[#allocation5 + $0xc0] sm:$0xff]
      %v2192 = vld [vmem:[#allocation5 + $0xc8] sm:$0xff]
      %v2193 = vld [vmem:[#allocation5 + $0xd0] sm:$0xff]
      %v2194 = vld [vmem:[#allocation5 + $0xd8] sm:$0xff]
      %v2195 = vld [vmem:[#allocation5 + $0xe0] sm:$0xff]
      %v2196 = vld [vmem:[#allocation5 + $0xe8] sm:$0xff]
      %v2197 = vld [vmem:[#allocation5 + $0xf0] sm:$0xff]
      %v2198 = vld [vmem:[#allocation5 + $0xf8] sm:$0xff]
      %v2199 = vpack.c.bf16 %v2168, %v2167
      %v2200 = vpack.c.bf16 %v2170, %v2169
      %v2201 = vpack.c.bf16 %v2172, %v2171
      %v2202 = vpack.c.bf16 %v2174, %v2173
      %v2203 = vpack.c.bf16 %v2176, %v2175
      %v2204 = vpack.c.bf16 %v2178, %v2177
      %v2205 = vpack.c.bf16 %v2180, %v2179
      %v2206 = vpack.c.bf16 %v2182, %v2181
      %v2207 = vpack.c.bf16 %v2184, %v2183
      %v2208 = vpack.c.bf16 %v2186, %v2185
      %v2209 = vpack.c.bf16 %v2188, %v2187
      %v2210 = vpack.c.bf16 %v2190, %v2189
      %v2211 = vpack.c.bf16 %v2192, %v2191
      %v2212 = vpack.c.bf16 %v2194, %v2193
      %v2213 = vpack.c.bf16 %v2196, %v2195
      %v2214 = vpack.c.bf16 %v2198, %v2197
      %v2215 = vld [vmem:[%s1] sm:$0xff]
      %v2216 = vld [vmem:[%s1 + $0x8] sm:$0xff]
      %v2217 = vld [vmem:[%s1 + $0x10] sm:$0xff]
      %v2218 = vld [vmem:[%s1 + $0x18] sm:$0xff]
      %v2219 = vld [vmem:[%s1 + $0x20] sm:$0xff]
      %v2220 = vld [vmem:[%s1 + $0x28] sm:$0xff]
      %v2221 = vld [vmem:[%s1 + $0x30] sm:$0xff]
      %v2222 = vld [vmem:[%s1 + $0x38] sm:$0xff]
      %v2223 = vld [vmem:[%s1 + $0x40] sm:$0xff]
      %v2224 = vld [vmem:[%s1 + $0x48] sm:$0xff]
      %v2225 = vld [vmem:[%s1 + $0x50] sm:$0xff]
      %v2226 = vld [vmem:[%s1 + $0x58] sm:$0xff]
      %v2227 = vld [vmem:[%s1 + $0x60] sm:$0xff]
      %v2228 = vld [vmem:[%s1 + $0x68] sm:$0xf]
      %v2229 = vpack.c.bf16 %v2216, %v2215
      %v2230 = vpack.c.bf16 %v2218, %v2217
      %v2231 = vpack.c.bf16 %v2220, %v2219
      %v2232 = vpack.c.bf16 %v2222, %v2221
      %v2233 = vpack.c.bf16 %v2224, %v2223
      %v2234 = vpack.c.bf16 %v2226, %v2225
      %v2235 = vpack.c.bf16 %v2228, %v2227
      %v2236 = vld [vmem:[%s2] sm:$0x1]
      %v2237 = vlaneseq
      %v2238 = vshrl.u32 %v2237, 7
      %v2239 = vsub.s32 0, %v2238
      %v2240 = vrot.slane %v2236, %v2239
      %vm2241 = vcmask 883712
      %v2243 = vsel %vm2241, %v2199, 0
      %v2246 = vsel %vm2241, %v2200, 0
      %v2249 = vsel %vm2241, %v2201, 0
      %v2252 = vsel %vm2241, %v2202, 0
      %v2255 = vsel %vm2241, %v2203, 0
      %v2258 = vsel %vm2241, %v2204, 0
      %v2261 = vsel %vm2241, %v2205, 0
      %v2264 = vsel %vm2241, %v2206, 0
      %v2267 = vsel %vm2241, %v2207, 0
      %v2270 = vsel %vm2241, %v2208, 0
      %v2273 = vsel %vm2241, %v2209, 0
      %v2276 = vsel %vm2241, %v2210, 0
      %v2279 = vsel %vm2241, %v2211, 0
      %v2282 = vsel %vm2241, %v2212, 0
      %v2285 = vsel %vm2241, %v2213, 0
      %v2288 = vsel %vm2241, %v2214, 0
      %vm2290 = vcmask 1045504
      %v2292 = vsel %vm2290, %v2235, 0
      %2294 = vmatprep.subr.bf16.mxu0 0
      %2295 = vmatpush1.bf16.msra.mxu0 %v2229
      %2296 = vmatprep.subr.bf16.mxu0 0
      %2297 = vmatpush1.bf16.msra.mxu0 %v2230
      %2298 = vmatprep.subr.bf16.mxu0 0
      %2299 = vmatpush1.bf16.msra.mxu0 %v2231
      %2300 = vmatprep.subr.bf16.mxu0 0
      %2301 = vmatpush1.bf16.msra.mxu0 %v2232
      %2302 = vmatprep.subr.bf16.mxu0 0
      %2303 = vmatpush1.bf16.msra.mxu0 %v2233
      %2304 = vmatprep.subr.bf16.mxu0 0
      %2305 = vmatpush1.bf16.msra.mxu0 %v2234
      %2306 = vmatprep.subr.bf16.mxu0 0
      %2307 = vmatpush1.bf16.msra.mxu0 %v2292
      %2308 = vmatprep.subr.bf16.mxu0 0
      %2309 = vmatpush1.bf16.msra.mxu0 0
      %2310 = vmatprep.subr.bf16.mxu0 0
      %2311 = vmatpush1.bf16.msra.mxu0 0
      %2312 = vmatprep.subr.bf16.mxu0 0
      %2313 = vmatpush1.bf16.msra.mxu0 0
      %2314 = vmatprep.subr.bf16.mxu0 0
      %2315 = vmatpush1.bf16.msra.mxu0 0
      %2316 = vmatprep.subr.bf16.mxu0 0
      %2317 = vmatpush1.bf16.msra.mxu0 0
      %2318 = vmatprep.subr.bf16.mxu0 0
      %2319 = vmatpush1.bf16.msra.mxu0 0
      %2320 = vmatprep.subr.bf16.mxu0 0
      %2321 = vmatpush1.bf16.msra.mxu0 0
      %2322 = vmatprep.subr.bf16.mxu0 0
      %2323 = vmatpush1.bf16.msra.mxu0 0
      %2324 = vmatprep.subr.bf16.mxu0 0
      %2325 = vmatpush1.bf16.msra.mxu0 0
      %2326 = vmatprep.mubr.bf16.mxu0 0
      %2327 = vmatmul.mubr.bf16.gmra.mrb[0].mxu0 %v2243
      %v2328 = vpop.f32.mrb[0].mxu0
      %v2329 = vadd.f32 %v2240, %v2328
      %v2330 = vpop.f32.mrb[0].mxu0
      %v2331 = vpop.f32.mrb[0].mxu0
      %v2332 = vadd.f32 %v2240, %v2331
      %v2333 = vpop.f32.mrb[0].mxu0
      %2334 = vmatprep.mubr.bf16.mxu0 0
      %2335 = vmatmul.mubr.bf16.gmra.mrb[0].mxu0 %v2246
      %v2336 = vpop.f32.mrb[0].mxu0
      %v2337 = vadd.f32 %v2240, %v2336
      %v2338 = vpop.f32.mrb[0].mxu0
      %v2339 = vpop.f32.mrb[0].mxu0
      %v2340 = vadd.f32 %v2240, %v2339
      %v2341 = vpop.f32.mrb[0].mxu0
      %2342 = vmatprep.mubr.bf16.mxu0 0
      %2343 = vmatmul.mubr.bf16.gmra.mrb[0].mxu0 %v2249
      %v2344 = vpop.f32.mrb[0].mxu0
      %v2345 = vadd.f32 %v2240, %v2344
      %v2346 = vpop.f32.mrb[0].mxu0
      %v2347 = vpop.f32.mrb[0].mxu0
      %v2348 = vadd.f32 %v2240, %v2347
      %v2349 = vpop.f32.mrb[0].mxu0
      %2350 = vmatprep.mubr.bf16.mxu0 0
      %2351 = vmatmul.mubr.bf16.gmra.mrb[0].mxu0 %v2252
      %v2352 = vpop.f32.mrb[0].mxu0
      %v2353 = vadd.f32 %v2240, %v2352
      %v2354 = vpop.f32.mrb[0].mxu0
      %v2355 = vpop.f32.mrb[0].mxu0
      %v2356 = vadd.f32 %v2240, %v2355
      %v2357 = vpop.f32.mrb[0].mxu0
      %2358 = vmatprep.mubr.bf16.mxu0 0
      %2359 = vmatmul.mubr.bf16.gmra.mrb[0].mxu0 %v2255
      %v2360 = vpop.f32.mrb[0].mxu0
      %v2361 = vadd.f32 %v2240, %v2360
      %v2362 = vpop.f32.mrb[0].mxu0
      %v2363 = vpop.f32.mrb[0].mxu0
      %v2364 = vadd.f32 %v2240, %v2363
      %v2365 = vpop.f32.mrb[0].mxu0
      %2366 = vmatprep.mubr.bf16.mxu0 0
      %2367 = vmatmul.mubr.bf16.gmra.mrb[0].mxu0 %v2258
      %v2368 = vpop.f32.mrb[0].mxu0
      %v2369 = vadd.f32 %v2240, %v2368
      %v2370 = vpop.f32.mrb[0].mxu0
      %v2371 = vpop.f32.mrb[0].mxu0
      %v2372 = vadd.f32 %v2240, %v2371
      %v2373 = vpop.f32.mrb[0].mxu0
      %2374 = vmatprep.mubr.bf16.mxu0 0
      %2375 = vmatmul.mubr.bf16.gmra.mrb[0].mxu0 %v2261
      %v2376 = vpop.f32.mrb[0].mxu0
      %v2377 = vadd.f32 %v2240, %v2376
      %v2378 = vpop.f32.mrb[0].mxu0
      %v2379 = vpop.f32.mrb[0].mxu0
      %v2380 = vadd.f32 %v2240, %v2379
      %v2381 = vpop.f32.mrb[0].mxu0
      %2382 = vmatprep.mubr.bf16.mxu0 0
      %2383 = vmatmul.mubr.bf16.gmra.mrb[0].mxu0 %v2264
      %v2384 = vpop.f32.mrb[0].mxu0
      %v2385 = vadd.f32 %v2240, %v2384
      %v2386 = vpop.f32.mrb[0].mxu0
      %v2387 = vpop.f32.mrb[0].mxu0
      %v2388 = vadd.f32 %v2240, %v2387
      %v2389 = vpop.f32.mrb[0].mxu0
      %2390 = vmatprep.mubr.bf16.mxu0 0
      %2391 = vmatmul.mubr.bf16.gmra.mrb[0].mxu0 %v2267
      %v2392 = vpop.f32.mrb[0].mxu0
      %v2393 = vadd.f32 %v2240, %v2392
      %v2394 = vpop.f32.mrb[0].mxu0
      %v2395 = vpop.f32.mrb[0].mxu0
      %v2396 = vadd.f32 %v2240, %v2395
      %v2397 = vpop.f32.mrb[0].mxu0
      %2398 = vmatprep.mubr.bf16.mxu0 0
      %2399 = vmatmul.mubr.bf16.gmra.mrb[0].mxu0 %v2270
      %v2400 = vpop.f32.mrb[0].mxu0
      %v2401 = vadd.f32 %v2240, %v2400
      %v2402 = vpop.f32.mrb[0].mxu0
      %v2403 = vpop.f32.mrb[0].mxu0
      %v2404 = vadd.f32 %v2240, %v2403
      %v2405 = vpop.f32.mrb[0].mxu0
      %2406 = vmatprep.mubr.bf16.mxu0 0
      %2407 = vmatmul.mubr.bf16.gmra.mrb[0].mxu0 %v2273
      %v2408 = vpop.f32.mrb[0].mxu0
      %v2409 = vadd.f32 %v2240, %v2408
      %v2410 = vpop.f32.mrb[0].mxu0
      %v2411 = vpop.f32.mrb[0].mxu0
      %v2412 = vadd.f32 %v2240, %v2411
      %v2413 = vpop.f32.mrb[0].mxu0
      %2414 = vmatprep.mubr.bf16.mxu0 0
      %2415 = vmatmul.mubr.bf16.gmra.mrb[0].mxu0 %v2276
      %v2416 = vpop.f32.mrb[0].mxu0
      %v2417 = vadd.f32 %v2240, %v2416
      %v2418 = vpop.f32.mrb[0].mxu0
      %v2419 = vpop.f32.mrb[0].mxu0
      %v2420 = vadd.f32 %v2240, %v2419
      %v2421 = vpop.f32.mrb[0].mxu0
      %2422 = vmatprep.mubr.bf16.mxu0 0
      %2423 = vmatmul.mubr.bf16.gmra.mrb[0].mxu0 %v2279
      %v2424 = vpop.f32.mrb[0].mxu0
      %v2425 = vadd.f32 %v2240, %v2424
      %v2426 = vpop.f32.mrb[0].mxu0
      %v2427 = vpop.f32.mrb[0].mxu0
      %v2428 = vadd.f32 %v2240, %v2427
      %v2429 = vpop.f32.mrb[0].mxu0
      %2430 = vmatprep.mubr.bf16.mxu0 0
      %2431 = vmatmul.mubr.bf16.gmra.mrb[0].mxu0 %v2282
      %v2432 = vpop.f32.mrb[0].mxu0
      %v2433 = vadd.f32 %v2240, %v2432
      %v2434 = vpop.f32.mrb[0].mxu0
      %v2435 = vpop.f32.mrb[0].mxu0
      %v2436 = vadd.f32 %v2240, %v2435
      %v2437 = vpop.f32.mrb[0].mxu0
      %2438 = vmatprep.mubr.bf16.mxu0 0
      %2439 = vmatmul.mubr.bf16.gmra.mrb[0].mxu0 %v2285
      %v2440 = vpop.f32.mrb[0].mxu0
      %v2441 = vadd.f32 %v2240, %v2440
      %v2442 = vpop.f32.mrb[0].mxu0
      %v2443 = vpop.f32.mrb[0].mxu0
      %v2444 = vadd.f32 %v2240, %v2443
      %v2445 = vpop.f32.mrb[0].mxu0
      %2446 = vmatprep.mubr.bf16.mxu0 0
      %2447 = vmatmul.mubr.bf16.gmra.mrb[0].mxu0 %v2288
      %v2448 = vpop.f32.mrb[0].mxu0
      %v2449 = vadd.f32 %v2240, %v2448
      %v2450 = vpop.f32.mrb[0].mxu0
      %v2451 = vpop.f32.mrb[0].mxu0
      %v2452 = vadd.f32 %v2240, %v2451
      %v2453 = vpop.f32.mrb[0].mxu0
      %2454 = vdwg.mxu0
      %v2455 = vld [vmem:[%s2 + $0x1] sm:$0x1]
      %vm2456 = vcmp.ge.f32.partialorder %v2329, 0.0
      %vm2457 = vcmp.ge.f32.partialorder %v2332, 0.0
      %vm2458 = vcmp.ge.f32.partialorder %v2337, 0.0
      %vm2459 = vcmp.ge.f32.partialorder %v2340, 0.0
      %vm2460 = vcmp.ge.f32.partialorder %v2345, 0.0
      %vm2461 = vcmp.ge.f32.partialorder %v2348, 0.0
      %vm2462 = vcmp.ge.f32.partialorder %v2353, 0.0
      %vm2463 = vcmp.ge.f32.partialorder %v2356, 0.0
      %vm2464 = vcmp.ge.f32.partialorder %v2361, 0.0
      %vm2465 = vcmp.ge.f32.partialorder %v2364, 0.0
      %vm2466 = vcmp.ge.f32.partialorder %v2369, 0.0
      %vm2467 = vcmp.ge.f32.partialorder %v2372, 0.0
      %vm2468 = vcmp.ge.f32.partialorder %v2377, 0.0
      %vm2469 = vcmp.ge.f32.partialorder %v2380, 0.0
      %vm2470 = vcmp.ge.f32.partialorder %v2385, 0.0
      %vm2471 = vcmp.ge.f32.partialorder %v2388, 0.0
      %vm2472 = vcmp.ge.f32.partialorder %v2393, 0.0
      %vm2473 = vcmp.ge.f32.partialorder %v2396, 0.0
      %vm2474 = vcmp.ge.f32.partialorder %v2401, 0.0
      %vm2475 = vcmp.ge.f32.partialorder %v2404, 0.0
      %vm2476 = vcmp.ge.f32.partialorder %v2409, 0.0
      %vm2477 = vcmp.ge.f32.partialorder %v2412, 0.0
      %vm2478 = vcmp.ge.f32.partialorder %v2417, 0.0
      %vm2479 = vcmp.ge.f32.partialorder %v2420, 0.0
      %vm2480 = vcmp.ge.f32.partialorder %v2425, 0.0
      %vm2481 = vcmp.ge.f32.partialorder %v2428, 0.0
      %vm2482 = vcmp.ge.f32.partialorder %v2433, 0.0
      %vm2483 = vcmp.ge.f32.partialorder %v2436, 0.0
      %vm2484 = vcmp.ge.f32.partialorder %v2441, 0.0
      %vm2485 = vcmp.ge.f32.partialorder %v2444, 0.0
      %vm2486 = vcmp.ge.f32.partialorder %v2449, 0.0
      %vm2487 = vcmp.ge.f32.partialorder %v2452, 0.0
      %v2488 = vlaneseq
      %v2489 = vshrl.u32 %v2488, 7
      %v2490 = vsub.s32 0, %v2489
      %v2491 = vrot.slane %v2455, %v2490
      %v2492 = vmul.f32 %v2329, %v2491
      %v2493 = vmul.f32 %v2332, %v2491
      %v2494 = vmul.f32 %v2337, %v2491
      %v2495 = vmul.f32 %v2340, %v2491
      %v2496 = vmul.f32 %v2345, %v2491
      %v2497 = vmul.f32 %v2348, %v2491
      %v2498 = vmul.f32 %v2353, %v2491
      %v2499 = vmul.f32 %v2356, %v2491
      %v2500 = vmul.f32 %v2361, %v2491
      %v2501 = vmul.f32 %v2364, %v2491
      %v2502 = vmul.f32 %v2369, %v2491
      %v2503 = vmul.f32 %v2372, %v2491
      %v2504 = vmul.f32 %v2377, %v2491
      %v2505 = vmul.f32 %v2380, %v2491
      %v2506 = vmul.f32 %v2385, %v2491
      %v2507 = vmul.f32 %v2388, %v2491
      %v2508 = vmul.f32 %v2393, %v2491
      %v2509 = vmul.f32 %v2396, %v2491
      %v2510 = vmul.f32 %v2401, %v2491
      %v2511 = vmul.f32 %v2404, %v2491
      %v2512 = vmul.f32 %v2409, %v2491
      %v2513 = vmul.f32 %v2412, %v2491
      %v2514 = vmul.f32 %v2417, %v2491
      %v2515 = vmul.f32 %v2420, %v2491
      %v2516 = vmul.f32 %v2425, %v2491
      %v2517 = vmul.f32 %v2428, %v2491
      %v2518 = vmul.f32 %v2433, %v2491
      %v2519 = vmul.f32 %v2436, %v2491
      %v2520 = vmul.f32 %v2441, %v2491
      %v2521 = vmul.f32 %v2444, %v2491
      %v2522 = vmul.f32 %v2449, %v2491
      %v2523 = vmul.f32 %v2452, %v2491
      %v2524 = vsel %vm2456, %v2329, %v2492
      %v2525 = vsel %vm2457, %v2332, %v2493
      %v2526 = vsel %vm2458, %v2337, %v2494
      %v2527 = vsel %vm2459, %v2340, %v2495
      %v2528 = vsel %vm2460, %v2345, %v2496
      %v2529 = vsel %vm2461, %v2348, %v2497
      %v2530 = vsel %vm2462, %v2353, %v2498
      %v2531 = vsel %vm2463, %v2356, %v2499
      %v2532 = vsel %vm2464, %v2361, %v2500
      %v2533 = vsel %vm2465, %v2364, %v2501
      %v2534 = vsel %vm2466, %v2369, %v2502
      %v2535 = vsel %vm2467, %v2372, %v2503
      %v2536 = vsel %vm2468, %v2377, %v2504
      %v2537 = vsel %vm2469, %v2380, %v2505
      %v2538 = vsel %vm2470, %v2385, %v2506
      %v2539 = vsel %vm2471, %v2388, %v2507
      %v2540 = vsel %vm2472, %v2393, %v2508
      %v2541 = vsel %vm2473, %v2396, %v2509
      %v2542 = vsel %vm2474, %v2401, %v2510
      %v2543 = vsel %vm2475, %v2404, %v2511
      %v2544 = vsel %vm2476, %v2409, %v2512
      %v2545 = vsel %vm2477, %v2412, %v2513
      %v2546 = vsel %vm2478, %v2417, %v2514
      %v2547 = vsel %vm2479, %v2420, %v2515
      %v2548 = vsel %vm2480, %v2425, %v2516
      %v2549 = vsel %vm2481, %v2428, %v2517
      %v2550 = vsel %vm2482, %v2433, %v2518
      %v2551 = vsel %vm2483, %v2436, %v2519
      %v2552 = vsel %vm2484, %v2441, %v2520
      %v2553 = vsel %vm2485, %v2444, %v2521
      %v2554 = vsel %vm2486, %v2449, %v2522
      %v2555 = vsel %vm2487, %v2452, %v2523
      %2556 = vst.msk [vmem:[%s419 + $0x2] sm:$0xff] %vm404, %v2524
      %2557 = vst.msk [vmem:[%s419 + $0xa] sm:$0xff] %vm404, %v2525
      %2558 = vst.msk [vmem:[%s419 + $0x1a] sm:$0xff] %vm404, %v2526
      %2559 = vst.msk [vmem:[%s419 + $0x22] sm:$0xff] %vm404, %v2527
      %2560 = vst.msk [vmem:[%s419 + $0x32] sm:$0xff] %vm404, %v2528
      %2561 = vst.msk [vmem:[%s419 + $0x3a] sm:$0xff] %vm404, %v2529
      %2562 = vst.msk [vmem:[%s419 + $0x4a] sm:$0xff] %vm404, %v2530
      %2563 = vst.msk [vmem:[%s419 + $0x52] sm:$0xff] %vm404, %v2531
      %2564 = vst.msk [vmem:[%s419 + $0x62] sm:$0xff] %vm404, %v2532
      %2565 = vst.msk [vmem:[%s419 + $0x6a] sm:$0xff] %vm404, %v2533
      %2566 = vst.msk [vmem:[%s419 + $0x7a] sm:$0xff] %vm404, %v2534
      %2567 = vst.msk [vmem:[%s419 + $0x82] sm:$0xff] %vm404, %v2535
      %2568 = vst.msk [vmem:[%s419 + $0x92] sm:$0xff] %vm404, %v2536
      %2569 = vst.msk [vmem:[%s419 + $0x9a] sm:$0xff] %vm404, %v2537
      %2570 = vst.msk [vmem:[%s419 + $0xaa] sm:$0xff] %vm404, %v2538
      %2571 = vst.msk [vmem:[%s419 + $0xb2] sm:$0xff] %vm404, %v2539
      %2572 = vst.msk [vmem:[%s419 + $0xc2] sm:$0xff] %vm404, %v2540
      %2573 = vst.msk [vmem:[%s419 + $0xca] sm:$0xff] %vm404, %v2541
      %2574 = vst.msk [vmem:[%s419 + $0xda] sm:$0xff] %vm404, %v2542
      %2575 = vst.msk [vmem:[%s419 + $0xe2] sm:$0xff] %vm404, %v2543
      %2576 = vst.msk [vmem:[%s419 + $0xf2] sm:$0xff] %vm404, %v2544
      %2577 = vst.msk [vmem:[%s419 + $0xfa] sm:$0xff] %vm404, %v2545
      %2578 = vst.msk [vmem:[%s419 + $0x10a] sm:$0xff] %vm404, %v2546
      %2579 = vst.msk [vmem:[%s419 + $0x112] sm:$0xff] %vm404, %v2547
      %2580 = vst.msk [vmem:[%s419 + $0x122] sm:$0xff] %vm404, %v2548
      %2581 = vst.msk [vmem:[%s419 + $0x12a] sm:$0xff] %vm404, %v2549
      %2582 = vst.msk [vmem:[%s419 + $0x13a] sm:$0xff] %vm404, %v2550
      %2583 = vst.msk [vmem:[%s419 + $0x142] sm:$0xff] %vm404, %v2551
      %2584 = vst.msk [vmem:[%s419 + $0x152] sm:$0xff] %vm404, %v2552
      %2585 = vst.msk [vmem:[%s419 + $0x15a] sm:$0xff] %vm404, %v2553
      %2586 = vst.msk [vmem:[%s419 + $0x16a] sm:$0xff] %vm404, %v2554
      %2587 = vst.msk [vmem:[%s419 + $0x172] sm:$0xff] %vm404, %v2555
      %v2588 = vld [vmem:[%s3] sm:$0xff]
      %v2589 = vld [vmem:[%s3 + $0x8] sm:$0x1]
      %v2590 = vld [vmem:[%s4] sm:$0xff]
      %v2591 = vld [vmem:[%s4 + $0x8] sm:$0x1]
      %s2592 = scalar_lea.vmem [#allocation3], 24
      %v2593 = vld [vmem:[%s2592 + $0x1] sm:$0xff]
      %v2594 = vld [vmem:[%s2592 + $0x9] sm:$0xff]
      %v2595 = vld [vmem:[%s2592 + $0x19] sm:$0xff]
      %v2596 = vld [vmem:[%s2592 + $0x21] sm:$0xff]
      %v2597 = vld [vmem:[%s2592 + $0x31] sm:$0xff]
      %v2598 = vld [vmem:[%s2592 + $0x39] sm:$0xff]
      %v2599 = vld [vmem:[%s2592 + $0x49] sm:$0xff]
      %v2600 = vld [vmem:[%s2592 + $0x51] sm:$0xff]
      %v2601 = vld [vmem:[%s2592 + $0x61] sm:$0xff]
      %v2602 = vld [vmem:[%s2592 + $0x69] sm:$0xff]
      %v2603 = vld [vmem:[%s2592 + $0x79] sm:$0xff]
      %v2604 = vld [vmem:[%s2592 + $0x81] sm:$0xff]
      %v2605 = vld [vmem:[%s2592 + $0x91] sm:$0xff]
      %v2606 = vld [vmem:[%s2592 + $0x99] sm:$0xff]
      %v2607 = vld [vmem:[%s2592 + $0xa9] sm:$0xff]
      %v2608 = vld [vmem:[%s2592 + $0xb1] sm:$0xff]
      %v2609 = vld [vmem:[%s2592 + $0xc1] sm:$0xff]
      %v2610 = vld [vmem:[%s2592 + $0xc9] sm:$0xff]
      %v2611 = vld [vmem:[%s2592 + $0xd9] sm:$0xff]
      %v2612 = vld [vmem:[%s2592 + $0xe1] sm:$0xff]
      %v2613 = vld [vmem:[%s2592 + $0xf1] sm:$0xff]
      %v2614 = vld [vmem:[%s2592 + $0xf9] sm:$0xff]
      %v2615 = vld [vmem:[%s2592 + $0x109] sm:$0xff]
      %v2616 = vld [vmem:[%s2592 + $0x111] sm:$0xff]
      %v2617 = vld [vmem:[%s2592 + $0x121] sm:$0xff]
      %v2618 = vld [vmem:[%s2592 + $0x129] sm:$0xff]
      %v2619 = vld [vmem:[%s2592 + $0x139] sm:$0xff]
      %v2620 = vld [vmem:[%s2592 + $0x141] sm:$0xff]
      %v2621 = vld [vmem:[%s2592 + $0x151] sm:$0xff]
      %v2622 = vld [vmem:[%s2592 + $0x159] sm:$0xff]
      %v2623 = vld [vmem:[%s2592 + $0x169] sm:$0xff]
      %v2624 = vld [vmem:[%s2592 + $0x171] sm:$0xff]
      %v2625 = vld [vmem:[#allocation3] sm:$0xff]
      %v2626 = vld [vmem:[#allocation3 + $0x8] sm:$0xff]
      %v2627 = vld [vmem:[#allocation3 + $0x18] sm:$0xff]
      %v2628 = vld [vmem:[#allocation3 + $0x20] sm:$0xff]
      %v2629 = vld [vmem:[#allocation3 + $0x30] sm:$0xff]
      %v2630 = vld [vmem:[#allocation3 + $0x38] sm:$0xff]
      %v2631 = vld [vmem:[#allocation3 + $0x48] sm:$0xff]
      %v2632 = vld [vmem:[#allocation3 + $0x50] sm:$0xff]
      %v2633 = vld [vmem:[#allocation3 + $0x60] sm:$0xff]
      %v2634 = vld [vmem:[#allocation3 + $0x68] sm:$0xff]
      %v2635 = vld [vmem:[#allocation3 + $0x78] sm:$0xff]
      %v2636 = vld [vmem:[#allocation3 + $0x80] sm:$0xff]
      %v2637 = vld [vmem:[#allocation3 + $0x90] sm:$0xff]
      %v2638 = vld [vmem:[#allocation3 + $0x98] sm:$0xff]
      %v2639 = vld [vmem:[#allocation3 + $0xa8] sm:$0xff]
      %v2640 = vld [vmem:[#allocation3 + $0xb0] sm:$0xff]
      %v2641 = vld [vmem:[#allocation3 + $0xc0] sm:$0xff]
      %v2642 = vld [vmem:[#allocation3 + $0xc8] sm:$0xff]
      %v2643 = vld [vmem:[#allocation3 + $0xd8] sm:$0xff]
      %v2644 = vld [vmem:[#allocation3 + $0xe0] sm:$0xff]
      %v2645 = vld [vmem:[#allocation3 + $0xf0] sm:$0xff]
      %v2646 = vld [vmem:[#allocation3 + $0xf8] sm:$0xff]
      %v2647 = vld [vmem:[#allocation3 + $0x108] sm:$0xff]
      %v2648 = vld [vmem:[#allocation3 + $0x110] sm:$0xff]
      %v2649 = vld [vmem:[#allocation3 + $0x120] sm:$0xff]
      %v2650 = vld [vmem:[#allocation3 + $0x128] sm:$0xff]
      %v2651 = vld [vmem:[#allocation3 + $0x138] sm:$0xff]
      %v2652 = vld [vmem:[#allocation3 + $0x140] sm:$0xff]
      %v2653 = vld [vmem:[#allocation3 + $0x150] sm:$0xff]
      %v2654 = vld [vmem:[#allocation3 + $0x158] sm:$0xff]
      %v2655 = vld [vmem:[#allocation3 + $0x168] sm:$0xff]
      %v2656 = vld [vmem:[#allocation3 + $0x170] sm:$0xff]
      %v2657 = vlaneseq
      %v2658 = vshrl.u32 %v2657, 7
      %v2659 = vsub.s32 0, %v2658
      %v2660 = vrot.slane %v2588, %v2659
      %v2661 = vmul.f32 %v2593, %v2660
      %v2662 = vmul.f32 %v2594, %v2660
      %v2663 = vmul.f32 %v2595, %v2660
      %v2664 = vmul.f32 %v2596, %v2660
      %v2665 = vmul.f32 %v2597, %v2660
      %v2666 = vmul.f32 %v2598, %v2660
      %v2667 = vmul.f32 %v2599, %v2660
      %v2668 = vmul.f32 %v2600, %v2660
      %v2669 = vmul.f32 %v2601, %v2660
      %v2670 = vmul.f32 %v2602, %v2660
      %v2671 = vmul.f32 %v2603, %v2660
      %v2672 = vmul.f32 %v2604, %v2660
      %v2673 = vmul.f32 %v2605, %v2660
      %v2674 = vmul.f32 %v2606, %v2660
      %v2675 = vmul.f32 %v2607, %v2660
      %v2676 = vmul.f32 %v2608, %v2660
      %v2677 = vmul.f32 %v2609, %v2660
      %v2678 = vmul.f32 %v2610, %v2660
      %v2679 = vmul.f32 %v2611, %v2660
      %v2680 = vmul.f32 %v2612, %v2660
      %v2681 = vmul.f32 %v2613, %v2660
      %v2682 = vmul.f32 %v2614, %v2660
      %v2683 = vmul.f32 %v2615, %v2660
      %v2684 = vmul.f32 %v2616, %v2660
      %v2685 = vmul.f32 %v2617, %v2660
      %v2686 = vmul.f32 %v2618, %v2660
      %v2687 = vmul.f32 %v2619, %v2660
      %v2688 = vmul.f32 %v2620, %v2660
      %v2689 = vmul.f32 %v2621, %v2660
      %v2690 = vmul.f32 %v2622, %v2660
      %v2691 = vmul.f32 %v2623, %v2660
      %v2692 = vmul.f32 %v2624, %v2660
      %v2693 = vadd.f32 %v2661, 0.0
      %v2694 = vadd.f32 %v2662, 0.0
      %v2695 = vadd.f32 %v2663, 0.0
      %v2696 = vadd.f32 %v2664, 0.0
      %v2697 = vadd.f32 %v2665, 0.0
      %v2698 = vadd.f32 %v2666, 0.0
      %v2699 = vadd.f32 %v2667, 0.0
      %v2700 = vadd.f32 %v2668, 0.0
      %v2701 = vadd.f32 %v2669, 0.0
      %v2702 = vadd.f32 %v2670, 0.0
      %v2703 = vadd.f32 %v2671, 0.0
      %v2704 = vadd.f32 %v2672, 0.0
      %v2705 = vadd.f32 %v2673, 0.0
      %v2706 = vadd.f32 %v2674, 0.0
      %v2707 = vadd.f32 %v2675, 0.0
      %v2708 = vadd.f32 %v2676, 0.0
      %v2709 = vadd.f32 %v2677, 0.0
      %v2710 = vadd.f32 %v2678, 0.0
      %v2711 = vadd.f32 %v2679, 0.0
      %v2712 = vadd.f32 %v2680, 0.0
      %v2713 = vadd.f32 %v2681, 0.0
      %v2714 = vadd.f32 %v2682, 0.0
      %v2715 = vadd.f32 %v2683, 0.0
      %v2716 = vadd.f32 %v2684, 0.0
      %v2717 = vadd.f32 %v2685, 0.0
      %v2718 = vadd.f32 %v2686, 0.0
      %v2719 = vadd.f32 %v2687, 0.0
      %v2720 = vadd.f32 %v2688, 0.0
      %v2721 = vadd.f32 %v2689, 0.0
      %v2722 = vadd.f32 %v2690, 0.0
      %v2723 = vadd.f32 %v2691, 0.0
      %v2724 = vadd.f32 %v2692, 0.0
      %v2725 = vlaneseq
      %v2726 = vshrl.u32 %v2725, 7
      %v2727 = vsub.s32 0, %v2726
      %v2728 = vrot.slane %v2590, %v2727
      %v2729 = vmul.f32 %v2625, %v2728
      %v2730 = vmul.f32 %v2626, %v2728
      %v2731 = vmul.f32 %v2627, %v2728
      %v2732 = vmul.f32 %v2628, %v2728
      %v2733 = vmul.f32 %v2629, %v2728
      %v2734 = vmul.f32 %v2630, %v2728
      %v2735 = vmul.f32 %v2631, %v2728
      %v2736 = vmul.f32 %v2632, %v2728
      %v2737 = vmul.f32 %v2633, %v2728
      %v2738 = vmul.f32 %v2634, %v2728
      %v2739 = vmul.f32 %v2635, %v2728
      %v2740 = vmul.f32 %v2636, %v2728
      %v2741 = vmul.f32 %v2637, %v2728
      %v2742 = vmul.f32 %v2638, %v2728
      %v2743 = vmul.f32 %v2639, %v2728
      %v2744 = vmul.f32 %v2640, %v2728
      %v2745 = vmul.f32 %v2641, %v2728
      %v2746 = vmul.f32 %v2642, %v2728
      %v2747 = vmul.f32 %v2643, %v2728
      %v2748 = vmul.f32 %v2644, %v2728
      %v2749 = vmul.f32 %v2645, %v2728
      %v2750 = vmul.f32 %v2646, %v2728
      %v2751 = vmul.f32 %v2647, %v2728
      %v2752 = vmul.f32 %v2648, %v2728
      %v2753 = vmul.f32 %v2649, %v2728
      %v2754 = vmul.f32 %v2650, %v2728
      %v2755 = vmul.f32 %v2651, %v2728
      %v2756 = vmul.f32 %v2652, %v2728
      %v2757 = vmul.f32 %v2653, %v2728
      %v2758 = vmul.f32 %v2654, %v2728
      %v2759 = vmul.f32 %v2655, %v2728
      %v2760 = vmul.f32 %v2656, %v2728
      %v2761 = vadd.f32 %v2693, %v2729
      %v2762 = vadd.f32 %v2694, %v2730
      %v2763 = vadd.f32 %v2695, %v2731
      %v2764 = vadd.f32 %v2696, %v2732
      %v2765 = vadd.f32 %v2697, %v2733
      %v2766 = vadd.f32 %v2698, %v2734
      %v2767 = vadd.f32 %v2699, %v2735
      %v2768 = vadd.f32 %v2700, %v2736
      %v2769 = vadd.f32 %v2701, %v2737
      %v2770 = vadd.f32 %v2702, %v2738
      %v2771 = vadd.f32 %v2703, %v2739
      %v2772 = vadd.f32 %v2704, %v2740
      %v2773 = vadd.f32 %v2705, %v2741
      %v2774 = vadd.f32 %v2706, %v2742
      %v2775 = vadd.f32 %v2707, %v2743
      %v2776 = vadd.f32 %v2708, %v2744
      %v2777 = vadd.f32 %v2709, %v2745
      %v2778 = vadd.f32 %v2710, %v2746
      %v2779 = vadd.f32 %v2711, %v2747
      %v2780 = vadd.f32 %v2712, %v2748
      %v2781 = vadd.f32 %v2713, %v2749
      %v2782 = vadd.f32 %v2714, %v2750
      %v2783 = vadd.f32 %v2715, %v2751
      %v2784 = vadd.f32 %v2716, %v2752
      %v2785 = vadd.f32 %v2717, %v2753
      %v2786 = vadd.f32 %v2718, %v2754
      %v2787 = vadd.f32 %v2719, %v2755
      %v2788 = vadd.f32 %v2720, %v2756
      %v2789 = vadd.f32 %v2721, %v2757
      %v2790 = vadd.f32 %v2722, %v2758
      %v2791 = vadd.f32 %v2723, %v2759
      %v2792 = vadd.f32 %v2724, %v2760
      %v2793 = vld [vmem:[%s2592 + $0x2] sm:$0xff]
      %v2794 = vld [vmem:[%s2592 + $0xa] sm:$0xff]
      %v2795 = vld [vmem:[%s2592 + $0x1a] sm:$0xff]
      %v2796 = vld [vmem:[%s2592 + $0x22] sm:$0xff]
      %v2797 = vld [vmem:[%s2592 + $0x32] sm:$0xff]
      %v2798 = vld [vmem:[%s2592 + $0x3a] sm:$0xff]
      %v2799 = vld [vmem:[%s2592 + $0x4a] sm:$0xff]
      %v2800 = vld [vmem:[%s2592 + $0x52] sm:$0xff]
      %v2801 = vld [vmem:[%s2592 + $0x62] sm:$0xff]
      %v2802 = vld [vmem:[%s2592 + $0x6a] sm:$0xff]
      %v2803 = vld [vmem:[%s2592 + $0x7a] sm:$0xff]
      %v2804 = vld [vmem:[%s2592 + $0x82] sm:$0xff]
      %v2805 = vld [vmem:[%s2592 + $0x92] sm:$0xff]
      %v2806 = vld [vmem:[%s2592 + $0x9a] sm:$0xff]
      %v2807 = vld [vmem:[%s2592 + $0xaa] sm:$0xff]
      %v2808 = vld [vmem:[%s2592 + $0xb2] sm:$0xff]
      %v2809 = vld [vmem:[%s2592 + $0xc2] sm:$0xff]
      %v2810 = vld [vmem:[%s2592 + $0xca] sm:$0xff]
      %v2811 = vld [vmem:[%s2592 + $0xda] sm:$0xff]
      %v2812 = vld [vmem:[%s2592 + $0xe2] sm:$0xff]
      %v2813 = vld [vmem:[%s2592 + $0xf2] sm:$0xff]
      %v2814 = vld [vmem:[%s2592 + $0xfa] sm:$0xff]
      %v2815 = vld [vmem:[%s2592 + $0x10a] sm:$0xff]
      %v2816 = vld [vmem:[%s2592 + $0x112] sm:$0xff]
      %v2817 = vld [vmem:[%s2592 + $0x122] sm:$0xff]
      %v2818 = vld [vmem:[%s2592 + $0x12a] sm:$0xff]
      %v2819 = vld [vmem:[%s2592 + $0x13a] sm:$0xff]
      %v2820 = vld [vmem:[%s2592 + $0x142] sm:$0xff]
      %v2821 = vld [vmem:[%s2592 + $0x152] sm:$0xff]
      %v2822 = vld [vmem:[%s2592 + $0x15a] sm:$0xff]
      %v2823 = vld [vmem:[%s2592 + $0x16a] sm:$0xff]
      %v2824 = vld [vmem:[%s2592 + $0x172] sm:$0xff]
      %v2825 = vld [vmem:[#allocation3 + $0x2] sm:$0xff]
      %v2826 = vld [vmem:[#allocation3 + $0xa] sm:$0xff]
      %v2827 = vld [vmem:[#allocation3 + $0x1a] sm:$0xff]
      %v2828 = vld [vmem:[#allocation3 + $0x22] sm:$0xff]
      %v2829 = vld [vmem:[#allocation3 + $0x32] sm:$0xff]
      %v2830 = vld [vmem:[#allocation3 + $0x3a] sm:$0xff]
      %v2831 = vld [vmem:[#allocation3 + $0x4a] sm:$0xff]
      %v2832 = vld [vmem:[#allocation3 + $0x52] sm:$0xff]
      %v2833 = vld [vmem:[#allocation3 + $0x62] sm:$0xff]
      %v2834 = vld [vmem:[#allocation3 + $0x6a] sm:$0xff]
      %v2835 = vld [vmem:[#allocation3 + $0x7a] sm:$0xff]
      %v2836 = vld [vmem:[#allocation3 + $0x82] sm:$0xff]
      %v2837 = vld [vmem:[#allocation3 + $0x92] sm:$0xff]
      %v2838 = vld [vmem:[#allocation3 + $0x9a] sm:$0xff]
      %v2839 = vld [vmem:[#allocation3 + $0xaa] sm:$0xff]
      %v2840 = vld [vmem:[#allocation3 + $0xb2] sm:$0xff]
      %v2841 = vld [vmem:[#allocation3 + $0xc2] sm:$0xff]
      %v2842 = vld [vmem:[#allocation3 + $0xca] sm:$0xff]
      %v2843 = vld [vmem:[#allocation3 + $0xda] sm:$0xff]
      %v2844 = vld [vmem:[#allocation3 + $0xe2] sm:$0xff]
      %v2845 = vld [vmem:[#allocation3 + $0xf2] sm:$0xff]
      %v2846 = vld [vmem:[#allocation3 + $0xfa] sm:$0xff]
      %v2847 = vld [vmem:[#allocation3 + $0x10a] sm:$0xff]
      %v2848 = vld [vmem:[#allocation3 + $0x112] sm:$0xff]
      %v2849 = vld [vmem:[#allocation3 + $0x122] sm:$0xff]
      %v2850 = vld [vmem:[#allocation3 + $0x12a] sm:$0xff]
      %v2851 = vld [vmem:[#allocation3 + $0x13a] sm:$0xff]
      %v2852 = vld [vmem:[#allocation3 + $0x142] sm:$0xff]
      %v2853 = vld [vmem:[#allocation3 + $0x152] sm:$0xff]
      %v2854 = vld [vmem:[#allocation3 + $0x15a] sm:$0xff]
      %v2855 = vld [vmem:[#allocation3 + $0x16a] sm:$0xff]
      %v2856 = vld [vmem:[#allocation3 + $0x172] sm:$0xff]
      %v2857 = vlaneseq
      %v2858 = vshrl.u32 %v2857, 7
      %v2859 = vsub.s32 1, %v2858
      %v2860 = vrot.slane %v2588, %v2859
      %v2861 = vmul.f32 %v2793, %v2860
      %v2862 = vmul.f32 %v2794, %v2860
      %v2863 = vmul.f32 %v2795, %v2860
      %v2864 = vmul.f32 %v2796, %v2860
      %v2865 = vmul.f32 %v2797, %v2860
      %v2866 = vmul.f32 %v2798, %v2860
      %v2867 = vmul.f32 %v2799, %v2860
      %v2868 = vmul.f32 %v2800, %v2860
      %v2869 = vmul.f32 %v2801, %v2860
      %v2870 = vmul.f32 %v2802, %v2860
      %v2871 = vmul.f32 %v2803, %v2860
      %v2872 = vmul.f32 %v2804, %v2860
      %v2873 = vmul.f32 %v2805, %v2860
      %v2874 = vmul.f32 %v2806, %v2860
      %v2875 = vmul.f32 %v2807, %v2860
      %v2876 = vmul.f32 %v2808, %v2860
      %v2877 = vmul.f32 %v2809, %v2860
      %v2878 = vmul.f32 %v2810, %v2860
      %v2879 = vmul.f32 %v2811, %v2860
      %v2880 = vmul.f32 %v2812, %v2860
      %v2881 = vmul.f32 %v2813, %v2860
      %v2882 = vmul.f32 %v2814, %v2860
      %v2883 = vmul.f32 %v2815, %v2860
      %v2884 = vmul.f32 %v2816, %v2860
      %v2885 = vmul.f32 %v2817, %v2860
      %v2886 = vmul.f32 %v2818, %v2860
      %v2887 = vmul.f32 %v2819, %v2860
      %v2888 = vmul.f32 %v2820, %v2860
      %v2889 = vmul.f32 %v2821, %v2860
      %v2890 = vmul.f32 %v2822, %v2860
      %v2891 = vmul.f32 %v2823, %v2860
      %v2892 = vmul.f32 %v2824, %v2860
      %v2893 = vadd.f32 %v2761, %v2861
      %v2894 = vadd.f32 %v2762, %v2862
      %v2895 = vadd.f32 %v2763, %v2863
      %v2896 = vadd.f32 %v2764, %v2864
      %v2897 = vadd.f32 %v2765, %v2865
      %v2898 = vadd.f32 %v2766, %v2866
      %v2899 = vadd.f32 %v2767, %v2867
      %v2900 = vadd.f32 %v2768, %v2868
      %v2901 = vadd.f32 %v2769, %v2869
      %v2902 = vadd.f32 %v2770, %v2870
      %v2903 = vadd.f32 %v2771, %v2871
      %v2904 = vadd.f32 %v2772, %v2872
      %v2905 = vadd.f32 %v2773, %v2873
      %v2906 = vadd.f32 %v2774, %v2874
      %v2907 = vadd.f32 %v2775, %v2875
      %v2908 = vadd.f32 %v2776, %v2876
      %v2909 = vadd.f32 %v2777, %v2877
      %v2910 = vadd.f32 %v2778, %v2878
      %v2911 = vadd.f32 %v2779, %v2879
      %v2912 = vadd.f32 %v2780, %v2880
      %v2913 = vadd.f32 %v2781, %v2881
      %v2914 = vadd.f32 %v2782, %v2882
      %v2915 = vadd.f32 %v2783, %v2883
      %v2916 = vadd.f32 %v2784, %v2884
      %v2917 = vadd.f32 %v2785, %v2885
      %v2918 = vadd.f32 %v2786, %v2886
      %v2919 = vadd.f32 %v2787, %v2887
      %v2920 = vadd.f32 %v2788, %v2888
      %v2921 = vadd.f32 %v2789, %v2889
      %v2922 = vadd.f32 %v2790, %v2890
      %v2923 = vadd.f32 %v2791, %v2891
      %v2924 = vadd.f32 %v2792, %v2892
      %v2925 = vlaneseq
      %v2926 = vshrl.u32 %v2925, 7
      %v2927 = vsub.s32 1, %v2926
      %v2928 = vrot.slane %v2590, %v2927
      %v2929 = vmul.f32 %v2825, %v2928
      %v2930 = vmul.f32 %v2826, %v2928
      %v2931 = vmul.f32 %v2827, %v2928
      %v2932 = vmul.f32 %v2828, %v2928
      %v2933 = vmul.f32 %v2829, %v2928
      %v2934 = vmul.f32 %v2830, %v2928
      %v2935 = vmul.f32 %v2831, %v2928
      %v2936 = vmul.f32 %v2832, %v2928
      %v2937 = vmul.f32 %v2833, %v2928
      %v2938 = vmul.f32 %v2834, %v2928
      %v2939 = vmul.f32 %v2835, %v2928
      %v2940 = vmul.f32 %v2836, %v2928
      %v2941 = vmul.f32 %v2837, %v2928
      %v2942 = vmul.f32 %v2838, %v2928
      %v2943 = vmul.f32 %v2839, %v2928
      %v2944 = vmul.f32 %v2840, %v2928
      %v2945 = vmul.f32 %v2841, %v2928
      %v2946 = vmul.f32 %v2842, %v2928
      %v2947 = vmul.f32 %v2843, %v2928
      %v2948 = vmul.f32 %v2844, %v2928
      %v2949 = vmul.f32 %v2845, %v2928
      %v2950 = vmul.f32 %v2846, %v2928
      %v2951 = vmul.f32 %v2847, %v2928
      %v2952 = vmul.f32 %v2848, %v2928
      %v2953 = vmul.f32 %v2849, %v2928
      %v2954 = vmul.f32 %v2850, %v2928
      %v2955 = vmul.f32 %v2851, %v2928
      %v2956 = vmul.f32 %v2852, %v2928
      %v2957 = vmul.f32 %v2853, %v2928
      %v2958 = vmul.f32 %v2854, %v2928
      %v2959 = vmul.f32 %v2855, %v2928
      %v2960 = vmul.f32 %v2856, %v2928
      %v2961 = vadd.f32 %v2893, %v2929
      %v2962 = vadd.f32 %v2894, %v2930
      %v2963 = vadd.f32 %v2895, %v2931
      %v2964 = vadd.f32 %v2896, %v2932
      %v2965 = vadd.f32 %v2897, %v2933
      %v2966 = vadd.f32 %v2898, %v2934
      %v2967 = vadd.f32 %v2899, %v2935
      %v2968 = vadd.f32 %v2900, %v2936
      %v2969 = vadd.f32 %v2901, %v2937
      %v2970 = vadd.f32 %v2902, %v2938
      %v2971 = vadd.f32 %v2903, %v2939
      %v2972 = vadd.f32 %v2904, %v2940
      %v2973 = vadd.f32 %v2905, %v2941
      %v2974 = vadd.f32 %v2906, %v2942
      %v2975 = vadd.f32 %v2907, %v2943
      %v2976 = vadd.f32 %v2908, %v2944
      %v2977 = vadd.f32 %v2909, %v2945
      %v2978 = vadd.f32 %v2910, %v2946
      %v2979 = vadd.f32 %v2911, %v2947
      %v2980 = vadd.f32 %v2912, %v2948
      %v2981 = vadd.f32 %v2913, %v2949
      %v2982 = vadd.f32 %v2914, %v2950
      %v2983 = vadd.f32 %v2915, %v2951
      %v2984 = vadd.f32 %v2916, %v2952
      %v2985 = vadd.f32 %v2917, %v2953
      %v2986 = vadd.f32 %v2918, %v2954
      %v2987 = vadd.f32 %v2919, %v2955
      %v2988 = vadd.f32 %v2920, %v2956
      %v2989 = vadd.f32 %v2921, %v2957
      %v2990 = vadd.f32 %v2922, %v2958
      %v2991 = vadd.f32 %v2923, %v2959
      %v2992 = vadd.f32 %v2924, %v2960
      %v2993 = vld [vmem:[%s2592 + $0x3] sm:$0xff]
      %v2994 = vld [vmem:[%s2592 + $0xb] sm:$0xff]
      %v2995 = vld [vmem:[%s2592 + $0x1b] sm:$0xff]
      %v2996 = vld [vmem:[%s2592 + $0x23] sm:$0xff]
      %v2997 = vld [vmem:[%s2592 + $0x33] sm:$0xff]
      %v2998 = vld [vmem:[%s2592 + $0x3b] sm:$0xff]
      %v2999 = vld [vmem:[%s2592 + $0x4b] sm:$0xff]
      %v3000 = vld [vmem:[%s2592 + $0x53] sm:$0xff]
      %v3001 = vld [vmem:[%s2592 + $0x63] sm:$0xff]
      %v3002 = vld [vmem:[%s2592 + $0x6b] sm:$0xff]
      %v3003 = vld [vmem:[%s2592 + $0x7b] sm:$0xff]
      %v3004 = vld [vmem:[%s2592 + $0x83] sm:$0xff]
      %v3005 = vld [vmem:[%s2592 + $0x93] sm:$0xff]
      %v3006 = vld [vmem:[%s2592 + $0x9b] sm:$0xff]
      %v3007 = vld [vmem:[%s2592 + $0xab] sm:$0xff]
      %v3008 = vld [vmem:[%s2592 + $0xb3] sm:$0xff]
      %v3009 = vld [vmem:[%s2592 + $0xc3] sm:$0xff]
      %v3010 = vld [vmem:[%s2592 + $0xcb] sm:$0xff]
      %v3011 = vld [vmem:[%s2592 + $0xdb] sm:$0xff]
      %v3012 = vld [vmem:[%s2592 + $0xe3] sm:$0xff]
      %v3013 = vld [vmem:[%s2592 + $0xf3] sm:$0xff]
      %v3014 = vld [vmem:[%s2592 + $0xfb] sm:$0xff]
      %v3015 = vld [vmem:[%s2592 + $0x10b] sm:$0xff]
      %v3016 = vld [vmem:[%s2592 + $0x113] sm:$0xff]
      %v3017 = vld [vmem:[%s2592 + $0x123] sm:$0xff]
      %v3018 = vld [vmem:[%s2592 + $0x12b] sm:$0xff]
      %v3019 = vld [vmem:[%s2592 + $0x13b] sm:$0xff]
      %v3020 = vld [vmem:[%s2592 + $0x143] sm:$0xff]
      %v3021 = vld [vmem:[%s2592 + $0x153] sm:$0xff]
      %v3022 = vld [vmem:[%s2592 + $0x15b] sm:$0xff]
      %v3023 = vld [vmem:[%s2592 + $0x16b] sm:$0xff]
      %v3024 = vld [vmem:[%s2592 + $0x173] sm:$0xff]
      %v3025 = vld [vmem:[#allocation3 + $0x4] sm:$0xff]
      %v3026 = vld [vmem:[#allocation3 + $0xc] sm:$0xff]
      %v3027 = vld [vmem:[#allocation3 + $0x1c] sm:$0xff]
      %v3028 = vld [vmem:[#allocation3 + $0x24] sm:$0xff]
      %v3029 = vld [vmem:[#allocation3 + $0x34] sm:$0xff]
      %v3030 = vld [vmem:[#allocation3 + $0x3c] sm:$0xff]
      %v3031 = vld [vmem:[#allocation3 + $0x4c] sm:$0xff]
      %v3032 = vld [vmem:[#allocation3 + $0x54] sm:$0xff]
      %v3033 = vld [vmem:[#allocation3 + $0x64] sm:$0xff]
      %v3034 = vld [vmem:[#allocation3 + $0x6c] sm:$0xff]
      %v3035 = vld [vmem:[#allocation3 + $0x7c] sm:$0xff]
      %v3036 = vld [vmem:[#allocation3 + $0x84] sm:$0xff]
      %v3037 = vld [vmem:[#allocation3 + $0x94] sm:$0xff]
      %v3038 = vld [vmem:[#allocation3 + $0x9c] sm:$0xff]
      %v3039 = vld [vmem:[#allocation3 + $0xac] sm:$0xff]
      %v3040 = vld [vmem:[#allocation3 + $0xb4] sm:$0xff]
      %v3041 = vld [vmem:[#allocation3 + $0xc4] sm:$0xff]
      %v3042 = vld [vmem:[#allocation3 + $0xcc] sm:$0xff]
      %v3043 = vld [vmem:[#allocation3 + $0xdc] sm:$0xff]
      %v3044 = vld [vmem:[#allocation3 + $0xe4] sm:$0xff]
      %v3045 = vld [vmem:[#allocation3 + $0xf4] sm:$0xff]
      %v3046 = vld [vmem:[#allocation3 + $0xfc] sm:$0xff]
      %v3047 = vld [vmem:[#allocation3 + $0x10c] sm:$0xff]
      %v3048 = vld [vmem:[#allocation3 + $0x114] sm:$0xff]
      %v3049 = vld [vmem:[#allocation3 + $0x124] sm:$0xff]
      %v3050 = vld [vmem:[#allocation3 + $0x12c] sm:$0xff]
      %v3051 = vld [vmem:[#allocation3 + $0x13c] sm:$0xff]
      %v3052 = vld [vmem:[#allocation3 + $0x144] sm:$0xff]
      %v3053 = vld [vmem:[#allocation3 + $0x154] sm:$0xff]
      %v3054 = vld [vmem:[#allocation3 + $0x15c] sm:$0xff]
      %v3055 = vld [vmem:[#allocation3 + $0x16c] sm:$0xff]
      %v3056 = vld [vmem:[#allocation3 + $0x174] sm:$0xff]
      %v3057 = vlaneseq
      %v3058 = vshrl.u32 %v3057, 7
      %v3059 = vsub.s32 2, %v3058
      %v3060 = vrot.slane %v2588, %v3059
      %v3061 = vmul.f32 %v2993, %v3060
      %v3062 = vmul.f32 %v2994, %v3060
      %v3063 = vmul.f32 %v2995, %v3060
      %v3064 = vmul.f32 %v2996, %v3060
      %v3065 = vmul.f32 %v2997, %v3060
      %v3066 = vmul.f32 %v2998, %v3060
      %v3067 = vmul.f32 %v2999, %v3060
      %v3068 = vmul.f32 %v3000, %v3060
      %v3069 = vmul.f32 %v3001, %v3060
      %v3070 = vmul.f32 %v3002, %v3060
      %v3071 = vmul.f32 %v3003, %v3060
      %v3072 = vmul.f32 %v3004, %v3060
      %v3073 = vmul.f32 %v3005, %v3060
      %v3074 = vmul.f32 %v3006, %v3060
      %v3075 = vmul.f32 %v3007, %v3060
      %v3076 = vmul.f32 %v3008, %v3060
      %v3077 = vmul.f32 %v3009, %v3060
      %v3078 = vmul.f32 %v3010, %v3060
      %v3079 = vmul.f32 %v3011, %v3060
      %v3080 = vmul.f32 %v3012, %v3060
      %v3081 = vmul.f32 %v3013, %v3060
      %v3082 = vmul.f32 %v3014, %v3060
      %v3083 = vmul.f32 %v3015, %v3060
      %v3084 = vmul.f32 %v3016, %v3060
      %v3085 = vmul.f32 %v3017, %v3060
      %v3086 = vmul.f32 %v3018, %v3060
      %v3087 = vmul.f32 %v3019, %v3060
      %v3088 = vmul.f32 %v3020, %v3060
      %v3089 = vmul.f32 %v3021, %v3060
      %v3090 = vmul.f32 %v3022, %v3060
      %v3091 = vmul.f32 %v3023, %v3060
      %v3092 = vmul.f32 %v3024, %v3060
      %v3093 = vadd.f32 %v2961, %v3061
      %v3094 = vadd.f32 %v2962, %v3062
      %v3095 = vadd.f32 %v2963, %v3063
      %v3096 = vadd.f32 %v2964, %v3064
      %v3097 = vadd.f32 %v2965, %v3065
      %v3098 = vadd.f32 %v2966, %v3066
      %v3099 = vadd.f32 %v2967, %v3067
      %v3100 = vadd.f32 %v2968, %v3068
      %v3101 = vadd.f32 %v2969, %v3069
      %v3102 = vadd.f32 %v2970, %v3070
      %v3103 = vadd.f32 %v2971, %v3071
      %v3104 = vadd.f32 %v2972, %v3072
      %v3105 = vadd.f32 %v2973, %v3073
      %v3106 = vadd.f32 %v2974, %v3074
      %v3107 = vadd.f32 %v2975, %v3075
      %v3108 = vadd.f32 %v2976, %v3076
      %v3109 = vadd.f32 %v2977, %v3077
      %v3110 = vadd.f32 %v2978, %v3078
      %v3111 = vadd.f32 %v2979, %v3079
      %v3112 = vadd.f32 %v2980, %v3080
      %v3113 = vadd.f32 %v2981, %v3081
      %v3114 = vadd.f32 %v2982, %v3082
      %v3115 = vadd.f32 %v2983, %v3083
      %v3116 = vadd.f32 %v2984, %v3084
      %v3117 = vadd.f32 %v2985, %v3085
      %v3118 = vadd.f32 %v2986, %v3086
      %v3119 = vadd.f32 %v2987, %v3087
      %v3120 = vadd.f32 %v2988, %v3088
      %v3121 = vadd.f32 %v2989, %v3089
      %v3122 = vadd.f32 %v2990, %v3090
      %v3123 = vadd.f32 %v2991, %v3091
      %v3124 = vadd.f32 %v2992, %v3092
      %v3125 = vlaneseq
      %v3126 = vshrl.u32 %v3125, 7
      %v3127 = vsub.s32 2, %v3126
      %v3128 = vrot.slane %v2590, %v3127
      %v3129 = vmul.f32 %v3025, %v3128
      %v3130 = vmul.f32 %v3026, %v3128
      %v3131 = vmul.f32 %v3027, %v3128
      %v3132 = vmul.f32 %v3028, %v3128
      %v3133 = vmul.f32 %v3029, %v3128
      %v3134 = vmul.f32 %v3030, %v3128
      %v3135 = vmul.f32 %v3031, %v3128
      %v3136 = vmul.f32 %v3032, %v3128
      %v3137 = vmul.f32 %v3033, %v3128
      %v3138 = vmul.f32 %v3034, %v3128
      %v3139 = vmul.f32 %v3035, %v3128
      %v3140 = vmul.f32 %v3036, %v3128
      %v3141 = vmul.f32 %v3037, %v3128
      %v3142 = vmul.f32 %v3038, %v3128
      %v3143 = vmul.f32 %v3039, %v3128
      %v3144 = vmul.f32 %v3040, %v3128
      %v3145 = vmul.f32 %v3041, %v3128
      %v3146 = vmul.f32 %v3042, %v3128
      %v3147 = vmul.f32 %v3043, %v3128
      %v3148 = vmul.f32 %v3044, %v3128
      %v3149 = vmul.f32 %v3045, %v3128
      %v3150 = vmul.f32 %v3046, %v3128
      %v3151 = vmul.f32 %v3047, %v3128
      %v3152 = vmul.f32 %v3048, %v3128
      %v3153 = vmul.f32 %v3049, %v3128
      %v3154 = vmul.f32 %v3050, %v3128
      %v3155 = vmul.f32 %v3051, %v3128
      %v3156 = vmul.f32 %v3052, %v3128
      %v3157 = vmul.f32 %v3053, %v3128
      %v3158 = vmul.f32 %v3054, %v3128
      %v3159 = vmul.f32 %v3055, %v3128
      %v3160 = vmul.f32 %v3056, %v3128
      %v3161 = vadd.f32 %v3093, %v3129
      %v3162 = vadd.f32 %v3094, %v3130
      %v3163 = vadd.f32 %v3095, %v3131
      %v3164 = vadd.f32 %v3096, %v3132
      %v3165 = vadd.f32 %v3097, %v3133
      %v3166 = vadd.f32 %v3098, %v3134
      %v3167 = vadd.f32 %v3099, %v3135
      %v3168 = vadd.f32 %v3100, %v3136
      %v3169 = vadd.f32 %v3101, %v3137
      %v3170 = vadd.f32 %v3102, %v3138
      %v3171 = vadd.f32 %v3103, %v3139
      %v3172 = vadd.f32 %v3104, %v3140
      %v3173 = vadd.f32 %v3105, %v3141
      %v3174 = vadd.f32 %v3106, %v3142
      %v3175 = vadd.f32 %v3107, %v3143
      %v3176 = vadd.f32 %v3108, %v3144
      %v3177 = vadd.f32 %v3109, %v3145
      %v3178 = vadd.f32 %v3110, %v3146
      %v3179 = vadd.f32 %v3111, %v3147
      %v3180 = vadd.f32 %v3112, %v3148
      %v3181 = vadd.f32 %v3113, %v3149
      %v3182 = vadd.f32 %v3114, %v3150
      %v3183 = vadd.f32 %v3115, %v3151
      %v3184 = vadd.f32 %v3116, %v3152
      %v3185 = vadd.f32 %v3117, %v3153
      %v3186 = vadd.f32 %v3118, %v3154
      %v3187 = vadd.f32 %v3119, %v3155
      %v3188 = vadd.f32 %v3120, %v3156
      %v3189 = vadd.f32 %v3121, %v3157
      %v3190 = vadd.f32 %v3122, %v3158
      %v3191 = vadd.f32 %v3123, %v3159
      %v3192 = vadd.f32 %v3124, %v3160
      %v3193 = vld [vmem:[%s419 + $0x1] sm:$0xff]
      %v3194 = vld [vmem:[%s419 + $0x9] sm:$0xff]
      %v3195 = vld [vmem:[%s419 + $0x19] sm:$0xff]
      %v3196 = vld [vmem:[%s419 + $0x21] sm:$0xff]
      %v3197 = vld [vmem:[%s419 + $0x31] sm:$0xff]
      %v3198 = vld [vmem:[%s419 + $0x39] sm:$0xff]
      %v3199 = vld [vmem:[%s419 + $0x49] sm:$0xff]
      %v3200 = vld [vmem:[%s419 + $0x51] sm:$0xff]
      %v3201 = vld [vmem:[%s419 + $0x61] sm:$0xff]
      %v3202 = vld [vmem:[%s419 + $0x69] sm:$0xff]
      %v3203 = vld [vmem:[%s419 + $0x79] sm:$0xff]
      %v3204 = vld [vmem:[%s419 + $0x81] sm:$0xff]
      %v3205 = vld [vmem:[%s419 + $0x91] sm:$0xff]
      %v3206 = vld [vmem:[%s419 + $0x99] sm:$0xff]
      %v3207 = vld [vmem:[%s419 + $0xa9] sm:$0xff]
      %v3208 = vld [vmem:[%s419 + $0xb1] sm:$0xff]
      %v3209 = vld [vmem:[%s419 + $0xc1] sm:$0xff]
      %v3210 = vld [vmem:[%s419 + $0xc9] sm:$0xff]
      %v3211 = vld [vmem:[%s419 + $0xd9] sm:$0xff]
      %v3212 = vld [vmem:[%s419 + $0xe1] sm:$0xff]
      %v3213 = vld [vmem:[%s419 + $0xf1] sm:$0xff]
      %v3214 = vld [vmem:[%s419 + $0xf9] sm:$0xff]
      %v3215 = vld [vmem:[%s419 + $0x109] sm:$0xff]
      %v3216 = vld [vmem:[%s419 + $0x111] sm:$0xff]
      %v3217 = vld [vmem:[%s419 + $0x121] sm:$0xff]
      %v3218 = vld [vmem:[%s419 + $0x129] sm:$0xff]
      %v3219 = vld [vmem:[%s419 + $0x139] sm:$0xff]
      %v3220 = vld [vmem:[%s419 + $0x141] sm:$0xff]
      %v3221 = vld [vmem:[%s419 + $0x151] sm:$0xff]
      %v3222 = vld [vmem:[%s419 + $0x159] sm:$0xff]
      %v3223 = vld [vmem:[%s419 + $0x169] sm:$0xff]
      %v3224 = vld [vmem:[%s419 + $0x171] sm:$0xff]
      %v3225 = vld [vmem:[%s419] sm:$0xff]
      %v3226 = vld [vmem:[%s419 + $0x8] sm:$0xff]
      %v3227 = vld [vmem:[%s419 + $0x18] sm:$0xff]
      %v3228 = vld [vmem:[%s419 + $0x20] sm:$0xff]
      %v3229 = vld [vmem:[%s419 + $0x30] sm:$0xff]
      %v3230 = vld [vmem:[%s419 + $0x38] sm:$0xff]
      %v3231 = vld [vmem:[%s419 + $0x48] sm:$0xff]
      %v3232 = vld [vmem:[%s419 + $0x50] sm:$0xff]
      %v3233 = vld [vmem:[%s419 + $0x60] sm:$0xff]
      %v3234 = vld [vmem:[%s419 + $0x68] sm:$0xff]
      %v3235 = vld [vmem:[%s419 + $0x78] sm:$0xff]
      %v3236 = vld [vmem:[%s419 + $0x80] sm:$0xff]
      %v3237 = vld [vmem:[%s419 + $0x90] sm:$0xff]
      %v3238 = vld [vmem:[%s419 + $0x98] sm:$0xff]
      %v3239 = vld [vmem:[%s419 + $0xa8] sm:$0xff]
      %v3240 = vld [vmem:[%s419 + $0xb0] sm:$0xff]
      %v3241 = vld [vmem:[%s419 + $0xc0] sm:$0xff]
      %v3242 = vld [vmem:[%s419 + $0xc8] sm:$0xff]
      %v3243 = vld [vmem:[%s419 + $0xd8] sm:$0xff]
      %v3244 = vld [vmem:[%s419 + $0xe0] sm:$0xff]
      %v3245 = vld [vmem:[%s419 + $0xf0] sm:$0xff]
      %v3246 = vld [vmem:[%s419 + $0xf8] sm:$0xff]
      %v3247 = vld [vmem:[%s419 + $0x108] sm:$0xff]
      %v3248 = vld [vmem:[%s419 + $0x110] sm:$0xff]
      %v3249 = vld [vmem:[%s419 + $0x120] sm:$0xff]
      %v3250 = vld [vmem:[%s419 + $0x128] sm:$0xff]
      %v3251 = vld [vmem:[%s419 + $0x138] sm:$0xff]
      %v3252 = vld [vmem:[%s419 + $0x140] sm:$0xff]
      %v3253 = vld [vmem:[%s419 + $0x150] sm:$0xff]
      %v3254 = vld [vmem:[%s419 + $0x158] sm:$0xff]
      %v3255 = vld [vmem:[%s419 + $0x168] sm:$0xff]
      %v3256 = vld [vmem:[%s419 + $0x170] sm:$0xff]
      %v3257 = vlaneseq
      %v3258 = vshrl.u32 %v3257, 7
      %v3259 = vsub.s32 3, %v3258
      %v3260 = vrot.slane %v2588, %v3259
      %v3261 = vmul.f32 %v3193, %v3260
      %v3262 = vmul.f32 %v3194, %v3260
      %v3263 = vmul.f32 %v3195, %v3260
      %v3264 = vmul.f32 %v3196, %v3260
      %v3265 = vmul.f32 %v3197, %v3260
      %v3266 = vmul.f32 %v3198, %v3260
      %v3267 = vmul.f32 %v3199, %v3260
      %v3268 = vmul.f32 %v3200, %v3260
      %v3269 = vmul.f32 %v3201, %v3260
      %v3270 = vmul.f32 %v3202, %v3260
      %v3271 = vmul.f32 %v3203, %v3260
      %v3272 = vmul.f32 %v3204, %v3260
      %v3273 = vmul.f32 %v3205, %v3260
      %v3274 = vmul.f32 %v3206, %v3260
      %v3275 = vmul.f32 %v3207, %v3260
      %v3276 = vmul.f32 %v3208, %v3260
      %v3277 = vmul.f32 %v3209, %v3260
      %v3278 = vmul.f32 %v3210, %v3260
      %v3279 = vmul.f32 %v3211, %v3260
      %v3280 = vmul.f32 %v3212, %v3260
      %v3281 = vmul.f32 %v3213, %v3260
      %v3282 = vmul.f32 %v3214, %v3260
      %v3283 = vmul.f32 %v3215, %v3260
      %v3284 = vmul.f32 %v3216, %v3260
      %v3285 = vmul.f32 %v3217, %v3260
      %v3286 = vmul.f32 %v3218, %v3260
      %v3287 = vmul.f32 %v3219, %v3260
      %v3288 = vmul.f32 %v3220, %v3260
      %v3289 = vmul.f32 %v3221, %v3260
      %v3290 = vmul.f32 %v3222, %v3260
      %v3291 = vmul.f32 %v3223, %v3260
      %v3292 = vmul.f32 %v3224, %v3260
      %v3293 = vadd.f32 %v3161, %v3261
      %v3294 = vadd.f32 %v3162, %v3262
      %v3295 = vadd.f32 %v3163, %v3263
      %v3296 = vadd.f32 %v3164, %v3264
      %v3297 = vadd.f32 %v3165, %v3265
      %v3298 = vadd.f32 %v3166, %v3266
      %v3299 = vadd.f32 %v3167, %v3267
      %v3300 = vadd.f32 %v3168, %v3268
      %v3301 = vadd.f32 %v3169, %v3269
      %v3302 = vadd.f32 %v3170, %v3270
      %v3303 = vadd.f32 %v3171, %v3271
      %v3304 = vadd.f32 %v3172, %v3272
      %v3305 = vadd.f32 %v3173, %v3273
      %v3306 = vadd.f32 %v3174, %v3274
      %v3307 = vadd.f32 %v3175, %v3275
      %v3308 = vadd.f32 %v3176, %v3276
      %v3309 = vadd.f32 %v3177, %v3277
      %v3310 = vadd.f32 %v3178, %v3278
      %v3311 = vadd.f32 %v3179, %v3279
      %v3312 = vadd.f32 %v3180, %v3280
      %v3313 = vadd.f32 %v3181, %v3281
      %v3314 = vadd.f32 %v3182, %v3282
      %v3315 = vadd.f32 %v3183, %v3283
      %v3316 = vadd.f32 %v3184, %v3284
      %v3317 = vadd.f32 %v3185, %v3285
      %v3318 = vadd.f32 %v3186, %v3286
      %v3319 = vadd.f32 %v3187, %v3287
      %v3320 = vadd.f32 %v3188, %v3288
      %v3321 = vadd.f32 %v3189, %v3289
      %v3322 = vadd.f32 %v3190, %v3290
      %v3323 = vadd.f32 %v3191, %v3291
      %v3324 = vadd.f32 %v3192, %v3292
      %v3325 = vlaneseq
      %v3326 = vshrl.u32 %v3325, 7
      %v3327 = vsub.s32 3, %v3326
      %v3328 = vrot.slane %v2590, %v3327
      %v3329 = vmul.f32 %v3225, %v3328
      %v3330 = vmul.f32 %v3226, %v3328
      %v3331 = vmul.f32 %v3227, %v3328
      %v3332 = vmul.f32 %v3228, %v3328
      %v3333 = vmul.f32 %v3229, %v3328
      %v3334 = vmul.f32 %v3230, %v3328
      %v3335 = vmul.f32 %v3231, %v3328
      %v3336 = vmul.f32 %v3232, %v3328
      %v3337 = vmul.f32 %v3233, %v3328
      %v3338 = vmul.f32 %v3234, %v3328
      %v3339 = vmul.f32 %v3235, %v3328
      %v3340 = vmul.f32 %v3236, %v3328
      %v3341 = vmul.f32 %v3237, %v3328
      %v3342 = vmul.f32 %v3238, %v3328
      %v3343 = vmul.f32 %v3239, %v3328
      %v3344 = vmul.f32 %v3240, %v3328
      %v3345 = vmul.f32 %v3241, %v3328
      %v3346 = vmul.f32 %v3242, %v3328
      %v3347 = vmul.f32 %v3243, %v3328
      %v3348 = vmul.f32 %v3244, %v3328
      %v3349 = vmul.f32 %v3245, %v3328
      %v3350 = vmul.f32 %v3246, %v3328
      %v3351 = vmul.f32 %v3247, %v3328
      %v3352 = vmul.f32 %v3248, %v3328
      %v3353 = vmul.f32 %v3249, %v3328
      %v3354 = vmul.f32 %v3250, %v3328
      %v3355 = vmul.f32 %v3251, %v3328
      %v3356 = vmul.f32 %v3252, %v3328
      %v3357 = vmul.f32 %v3253, %v3328
      %v3358 = vmul.f32 %v3254, %v3328
      %v3359 = vmul.f32 %v3255, %v3328
      %v3360 = vmul.f32 %v3256, %v3328
      %v3361 = vadd.f32 %v3293, %v3329
      %v3362 = vadd.f32 %v3294, %v3330
      %v3363 = vadd.f32 %v3295, %v3331
      %v3364 = vadd.f32 %v3296, %v3332
      %v3365 = vadd.f32 %v3297, %v3333
      %v3366 = vadd.f32 %v3298, %v3334
      %v3367 = vadd.f32 %v3299, %v3335
      %v3368 = vadd.f32 %v3300, %v3336
      %v3369 = vadd.f32 %v3301, %v3337
      %v3370 = vadd.f32 %v3302, %v3338
      %v3371 = vadd.f32 %v3303, %v3339
      %v3372 = vadd.f32 %v3304, %v3340
      %v3373 = vadd.f32 %v3305, %v3341
      %v3374 = vadd.f32 %v3306, %v3342
      %v3375 = vadd.f32 %v3307, %v3343
      %v3376 = vadd.f32 %v3308, %v3344
      %v3377 = vadd.f32 %v3309, %v3345
      %v3378 = vadd.f32 %v3310, %v3346
      %v3379 = vadd.f32 %v3311, %v3347
      %v3380 = vadd.f32 %v3312, %v3348
      %v3381 = vadd.f32 %v3313, %v3349
      %v3382 = vadd.f32 %v3314, %v3350
      %v3383 = vadd.f32 %v3315, %v3351
      %v3384 = vadd.f32 %v3316, %v3352
      %v3385 = vadd.f32 %v3317, %v3353
      %v3386 = vadd.f32 %v3318, %v3354
      %v3387 = vadd.f32 %v3319, %v3355
      %v3388 = vadd.f32 %v3320, %v3356
      %v3389 = vadd.f32 %v3321, %v3357
      %v3390 = vadd.f32 %v3322, %v3358
      %v3391 = vadd.f32 %v3323, %v3359
      %v3392 = vadd.f32 %v3324, %v3360
      %v3393 = vld [vmem:[%s419 + $0x2] sm:$0xff]
      %v3394 = vld [vmem:[%s419 + $0xa] sm:$0xff]
      %v3395 = vld [vmem:[%s419 + $0x1a] sm:$0xff]
      %v3396 = vld [vmem:[%s419 + $0x22] sm:$0xff]
      %v3397 = vld [vmem:[%s419 + $0x32] sm:$0xff]
      %v3398 = vld [vmem:[%s419 + $0x3a] sm:$0xff]
      %v3399 = vld [vmem:[%s419 + $0x4a] sm:$0xff]
      %v3400 = vld [vmem:[%s419 + $0x52] sm:$0xff]
      %v3401 = vld [vmem:[%s419 + $0x62] sm:$0xff]
      %v3402 = vld [vmem:[%s419 + $0x6a] sm:$0xff]
      %v3403 = vld [vmem:[%s419 + $0x7a] sm:$0xff]
      %v3404 = vld [vmem:[%s419 + $0x82] sm:$0xff]
      %v3405 = vld [vmem:[%s419 + $0x92] sm:$0xff]
      %v3406 = vld [vmem:[%s419 + $0x9a] sm:$0xff]
      %v3407 = vld [vmem:[%s419 + $0xaa] sm:$0xff]
      %v3408 = vld [vmem:[%s419 + $0xb2] sm:$0xff]
      %v3409 = vld [vmem:[%s419 + $0xc2] sm:$0xff]
      %v3410 = vld [vmem:[%s419 + $0xca] sm:$0xff]
      %v3411 = vld [vmem:[%s419 + $0xda] sm:$0xff]
      %v3412 = vld [vmem:[%s419 + $0xe2] sm:$0xff]
      %v3413 = vld [vmem:[%s419 + $0xf2] sm:$0xff]
      %v3414 = vld [vmem:[%s419 + $0xfa] sm:$0xff]
      %v3415 = vld [vmem:[%s419 + $0x10a] sm:$0xff]
      %v3416 = vld [vmem:[%s419 + $0x112] sm:$0xff]
      %v3417 = vld [vmem:[%s419 + $0x122] sm:$0xff]
      %v3418 = vld [vmem:[%s419 + $0x12a] sm:$0xff]
      %v3419 = vld [vmem:[%s419 + $0x13a] sm:$0xff]
      %v3420 = vld [vmem:[%s419 + $0x142] sm:$0xff]
      %v3421 = vld [vmem:[%s419 + $0x152] sm:$0xff]
      %v3422 = vld [vmem:[%s419 + $0x15a] sm:$0xff]
      %v3423 = vld [vmem:[%s419 + $0x16a] sm:$0xff]
      %v3424 = vld [vmem:[%s419 + $0x172] sm:$0xff]
      %v3425 = vlaneseq
      %v3426 = vshrl.u32 %v3425, 7
      %v3427 = vsub.s32 4, %v3426
      %v3428 = vrot.slane %v2588, %v3427
      %v3429 = vmul.f32 %v3393, %v3428
      %v3430 = vmul.f32 %v3394, %v3428
      %v3431 = vmul.f32 %v3395, %v3428
      %v3432 = vmul.f32 %v3396, %v3428
      %v3433 = vmul.f32 %v3397, %v3428
      %v3434 = vmul.f32 %v3398, %v3428
      %v3435 = vmul.f32 %v3399, %v3428
      %v3436 = vmul.f32 %v3400, %v3428
      %v3437 = vmul.f32 %v3401, %v3428
      %v3438 = vmul.f32 %v3402, %v3428
      %v3439 = vmul.f32 %v3403, %v3428
      %v3440 = vmul.f32 %v3404, %v3428
      %v3441 = vmul.f32 %v3405, %v3428
      %v3442 = vmul.f32 %v3406, %v3428
      %v3443 = vmul.f32 %v3407, %v3428
      %v3444 = vmul.f32 %v3408, %v3428
      %v3445 = vmul.f32 %v3409, %v3428
      %v3446 = vmul.f32 %v3410, %v3428
      %v3447 = vmul.f32 %v3411, %v3428
      %v3448 = vmul.f32 %v3412, %v3428
      %v3449 = vmul.f32 %v3413, %v3428
      %v3450 = vmul.f32 %v3414, %v3428
      %v3451 = vmul.f32 %v3415, %v3428
      %v3452 = vmul.f32 %v3416, %v3428
      %v3453 = vmul.f32 %v3417, %v3428
      %v3454 = vmul.f32 %v3418, %v3428
      %v3455 = vmul.f32 %v3419, %v3428
      %v3456 = vmul.f32 %v3420, %v3428
      %v3457 = vmul.f32 %v3421, %v3428
      %v3458 = vmul.f32 %v3422, %v3428
      %v3459 = vmul.f32 %v3423, %v3428
      %v3460 = vmul.f32 %v3424, %v3428
      %v3461 = vadd.f32 %v3361, %v3429
      %v3462 = vadd.f32 %v3362, %v3430
      %v3463 = vadd.f32 %v3363, %v3431
      %v3464 = vadd.f32 %v3364, %v3432
      %v3465 = vadd.f32 %v3365, %v3433
      %v3466 = vadd.f32 %v3366, %v3434
      %v3467 = vadd.f32 %v3367, %v3435
      %v3468 = vadd.f32 %v3368, %v3436
      %v3469 = vadd.f32 %v3369, %v3437
      %v3470 = vadd.f32 %v3370, %v3438
      %v3471 = vadd.f32 %v3371, %v3439
      %v3472 = vadd.f32 %v3372, %v3440
      %v3473 = vadd.f32 %v3373, %v3441
      %v3474 = vadd.f32 %v3374, %v3442
      %v3475 = vadd.f32 %v3375, %v3443
      %v3476 = vadd.f32 %v3376, %v3444
      %v3477 = vadd.f32 %v3377, %v3445
      %v3478 = vadd.f32 %v3378, %v3446
      %v3479 = vadd.f32 %v3379, %v3447
      %v3480 = vadd.f32 %v3380, %v3448
      %v3481 = vadd.f32 %v3381, %v3449
      %v3482 = vadd.f32 %v3382, %v3450
      %v3483 = vadd.f32 %v3383, %v3451
      %v3484 = vadd.f32 %v3384, %v3452
      %v3485 = vadd.f32 %v3385, %v3453
      %v3486 = vadd.f32 %v3386, %v3454
      %v3487 = vadd.f32 %v3387, %v3455
      %v3488 = vadd.f32 %v3388, %v3456
      %v3489 = vadd.f32 %v3389, %v3457
      %v3490 = vadd.f32 %v3390, %v3458
      %v3491 = vadd.f32 %v3391, %v3459
      %v3492 = vadd.f32 %v3392, %v3460
      %v3493 = vlaneseq
      %v3494 = vshrl.u32 %v3493, 7
      %v3495 = vsub.s32 4, %v3494
      %v3496 = vrot.slane %v2590, %v3495
      %v3497 = vmul.f32 %v3393, %v3496
      %v3498 = vmul.f32 %v3394, %v3496
      %v3499 = vmul.f32 %v3395, %v3496
      %v3500 = vmul.f32 %v3396, %v3496
      %v3501 = vmul.f32 %v3397, %v3496
      %v3502 = vmul.f32 %v3398, %v3496
      %v3503 = vmul.f32 %v3399, %v3496
      %v3504 = vmul.f32 %v3400, %v3496
      %v3505 = vmul.f32 %v3401, %v3496
      %v3506 = vmul.f32 %v3402, %v3496
      %v3507 = vmul.f32 %v3403, %v3496
      %v3508 = vmul.f32 %v3404, %v3496
      %v3509 = vmul.f32 %v3405, %v3496
      %v3510 = vmul.f32 %v3406, %v3496
      %v3511 = vmul.f32 %v3407, %v3496
      %v3512 = vmul.f32 %v3408, %v3496
      %v3513 = vmul.f32 %v3409, %v3496
      %v3514 = vmul.f32 %v3410, %v3496
      %v3515 = vmul.f32 %v3411, %v3496
      %v3516 = vmul.f32 %v3412, %v3496
      %v3517 = vmul.f32 %v3413, %v3496
      %v3518 = vmul.f32 %v3414, %v3496
      %v3519 = vmul.f32 %v3415, %v3496
      %v3520 = vmul.f32 %v3416, %v3496
      %v3521 = vmul.f32 %v3417, %v3496
      %v3522 = vmul.f32 %v3418, %v3496
      %v3523 = vmul.f32 %v3419, %v3496
      %v3524 = vmul.f32 %v3420, %v3496
      %v3525 = vmul.f32 %v3421, %v3496
      %v3526 = vmul.f32 %v3422, %v3496
      %v3527 = vmul.f32 %v3423, %v3496
      %v3528 = vmul.f32 %v3424, %v3496
      %v3529 = vadd.f32 %v3461, %v3497
      %v3530 = vadd.f32 %v3462, %v3498
      %v3531 = vadd.f32 %v3463, %v3499
      %v3532 = vadd.f32 %v3464, %v3500
      %v3533 = vadd.f32 %v3465, %v3501
      %v3534 = vadd.f32 %v3466, %v3502
      %v3535 = vadd.f32 %v3467, %v3503
      %v3536 = vadd.f32 %v3468, %v3504
      %v3537 = vadd.f32 %v3469, %v3505
      %v3538 = vadd.f32 %v3470, %v3506
      %v3539 = vadd.f32 %v3471, %v3507
      %v3540 = vadd.f32 %v3472, %v3508
      %v3541 = vadd.f32 %v3473, %v3509
      %v3542 = vadd.f32 %v3474, %v3510
      %v3543 = vadd.f32 %v3475, %v3511
      %v3544 = vadd.f32 %v3476, %v3512
      %v3545 = vadd.f32 %v3477, %v3513
      %v3546 = vadd.f32 %v3478, %v3514
      %v3547 = vadd.f32 %v3479, %v3515
      %v3548 = vadd.f32 %v3480, %v3516
      %v3549 = vadd.f32 %v3481, %v3517
      %v3550 = vadd.f32 %v3482, %v3518
      %v3551 = vadd.f32 %v3483, %v3519
      %v3552 = vadd.f32 %v3484, %v3520
      %v3553 = vadd.f32 %v3485, %v3521
      %v3554 = vadd.f32 %v3486, %v3522
      %v3555 = vadd.f32 %v3487, %v3523
      %v3556 = vadd.f32 %v3488, %v3524
      %v3557 = vadd.f32 %v3489, %v3525
      %v3558 = vadd.f32 %v3490, %v3526
      %v3559 = vadd.f32 %v3491, %v3527
      %v3560 = vadd.f32 %v3492, %v3528
      %v3561 = vld [vmem:[%s419 + $0x3] sm:$0xff]
      %v3562 = vld [vmem:[%s419 + $0xb] sm:$0xff]
      %v3563 = vld [vmem:[%s419 + $0x1b] sm:$0xff]
      %v3564 = vld [vmem:[%s419 + $0x23] sm:$0xff]
      %v3565 = vld [vmem:[%s419 + $0x33] sm:$0xff]
      %v3566 = vld [vmem:[%s419 + $0x3b] sm:$0xff]
      %v3567 = vld [vmem:[%s419 + $0x4b] sm:$0xff]
      %v3568 = vld [vmem:[%s419 + $0x53] sm:$0xff]
      %v3569 = vld [vmem:[%s419 + $0x63] sm:$0xff]
      %v3570 = vld [vmem:[%s419 + $0x6b] sm:$0xff]
      %v3571 = vld [vmem:[%s419 + $0x7b] sm:$0xff]
      %v3572 = vld [vmem:[%s419 + $0x83] sm:$0xff]
      %v3573 = vld [vmem:[%s419 + $0x93] sm:$0xff]
      %v3574 = vld [vmem:[%s419 + $0x9b] sm:$0xff]
      %v3575 = vld [vmem:[%s419 + $0xab] sm:$0xff]
      %v3576 = vld [vmem:[%s419 + $0xb3] sm:$0xff]
      %v3577 = vld [vmem:[%s419 + $0xc3] sm:$0xff]
      %v3578 = vld [vmem:[%s419 + $0xcb] sm:$0xff]
      %v3579 = vld [vmem:[%s419 + $0xdb] sm:$0xff]
      %v3580 = vld [vmem:[%s419 + $0xe3] sm:$0xff]
      %v3581 = vld [vmem:[%s419 + $0xf3] sm:$0xff]
      %v3582 = vld [vmem:[%s419 + $0xfb] sm:$0xff]
      %v3583 = vld [vmem:[%s419 + $0x10b] sm:$0xff]
      %v3584 = vld [vmem:[%s419 + $0x113] sm:$0xff]
      %v3585 = vld [vmem:[%s419 + $0x123] sm:$0xff]
      %v3586 = vld [vmem:[%s419 + $0x12b] sm:$0xff]
      %v3587 = vld [vmem:[%s419 + $0x13b] sm:$0xff]
      %v3588 = vld [vmem:[%s419 + $0x143] sm:$0xff]
      %v3589 = vld [vmem:[%s419 + $0x153] sm:$0xff]
      %v3590 = vld [vmem:[%s419 + $0x15b] sm:$0xff]
      %v3591 = vld [vmem:[%s419 + $0x16b] sm:$0xff]
      %v3592 = vld [vmem:[%s419 + $0x173] sm:$0xff]
      %v3593 = vld [vmem:[%s419 + $0x4] sm:$0xff]
      %v3594 = vld [vmem:[%s419 + $0xc] sm:$0xff]
      %v3595 = vld [vmem:[%s419 + $0x1c] sm:$0xff]
      %v3596 = vld [vmem:[%s419 + $0x24] sm:$0xff]
      %v3597 = vld [vmem:[%s419 + $0x34] sm:$0xff]
      %v3598 = vld [vmem:[%s419 + $0x3c] sm:$0xff]
      %v3599 = vld [vmem:[%s419 + $0x4c] sm:$0xff]
      %v3600 = vld [vmem:[%s419 + $0x54] sm:$0xff]
      %v3601 = vld [vmem:[%s419 + $0x64] sm:$0xff]
      %v3602 = vld [vmem:[%s419 + $0x6c] sm:$0xff]
      %v3603 = vld [vmem:[%s419 + $0x7c] sm:$0xff]
      %v3604 = vld [vmem:[%s419 + $0x84] sm:$0xff]
      %v3605 = vld [vmem:[%s419 + $0x94] sm:$0xff]
      %v3606 = vld [vmem:[%s419 + $0x9c] sm:$0xff]
      %v3607 = vld [vmem:[%s419 + $0xac] sm:$0xff]
      %v3608 = vld [vmem:[%s419 + $0xb4] sm:$0xff]
      %v3609 = vld [vmem:[%s419 + $0xc4] sm:$0xff]
      %v3610 = vld [vmem:[%s419 + $0xcc] sm:$0xff]
      %v3611 = vld [vmem:[%s419 + $0xdc] sm:$0xff]
      %v3612 = vld [vmem:[%s419 + $0xe4] sm:$0xff]
      %v3613 = vld [vmem:[%s419 + $0xf4] sm:$0xff]
      %v3614 = vld [vmem:[%s419 + $0xfc] sm:$0xff]
      %v3615 = vld [vmem:[%s419 + $0x10c] sm:$0xff]
      %v3616 = vld [vmem:[%s419 + $0x114] sm:$0xff]
      %v3617 = vld [vmem:[%s419 + $0x124] sm:$0xff]
      %v3618 = vld [vmem:[%s419 + $0x12c] sm:$0xff]
      %v3619 = vld [vmem:[%s419 + $0x13c] sm:$0xff]
      %v3620 = vld [vmem:[%s419 + $0x144] sm:$0xff]
      %v3621 = vld [vmem:[%s419 + $0x154] sm:$0xff]
      %v3622 = vld [vmem:[%s419 + $0x15c] sm:$0xff]
      %v3623 = vld [vmem:[%s419 + $0x16c] sm:$0xff]
      %v3624 = vld [vmem:[%s419 + $0x174] sm:$0xff]
      %v3625 = vlaneseq
      %v3626 = vshrl.u32 %v3625, 7
      %v3627 = vsub.s32 5, %v3626
      %v3628 = vrot.slane %v2588, %v3627
      %v3629 = vmul.f32 %v3561, %v3628
      %v3630 = vmul.f32 %v3562, %v3628
      %v3631 = vmul.f32 %v3563, %v3628
      %v3632 = vmul.f32 %v3564, %v3628
      %v3633 = vmul.f32 %v3565, %v3628
      %v3634 = vmul.f32 %v3566, %v3628
      %v3635 = vmul.f32 %v3567, %v3628
      %v3636 = vmul.f32 %v3568, %v3628
      %v3637 = vmul.f32 %v3569, %v3628
      %v3638 = vmul.f32 %v3570, %v3628
      %v3639 = vmul.f32 %v3571, %v3628
      %v3640 = vmul.f32 %v3572, %v3628
      %v3641 = vmul.f32 %v3573, %v3628
      %v3642 = vmul.f32 %v3574, %v3628
      %v3643 = vmul.f32 %v3575, %v3628
      %v3644 = vmul.f32 %v3576, %v3628
      %v3645 = vmul.f32 %v3577, %v3628
      %v3646 = vmul.f32 %v3578, %v3628
      %v3647 = vmul.f32 %v3579, %v3628
      %v3648 = vmul.f32 %v3580, %v3628
      %v3649 = vmul.f32 %v3581, %v3628
      %v3650 = vmul.f32 %v3582, %v3628
      %v3651 = vmul.f32 %v3583, %v3628
      %v3652 = vmul.f32 %v3584, %v3628
      %v3653 = vmul.f32 %v3585, %v3628
      %v3654 = vmul.f32 %v3586, %v3628
      %v3655 = vmul.f32 %v3587, %v3628
      %v3656 = vmul.f32 %v3588, %v3628
      %v3657 = vmul.f32 %v3589, %v3628
      %v3658 = vmul.f32 %v3590, %v3628
      %v3659 = vmul.f32 %v3591, %v3628
      %v3660 = vmul.f32 %v3592, %v3628
      %v3661 = vadd.f32 %v3529, %v3629
      %v3662 = vadd.f32 %v3530, %v3630
      %v3663 = vadd.f32 %v3531, %v3631
      %v3664 = vadd.f32 %v3532, %v3632
      %v3665 = vadd.f32 %v3533, %v3633
      %v3666 = vadd.f32 %v3534, %v3634
      %v3667 = vadd.f32 %v3535, %v3635
      %v3668 = vadd.f32 %v3536, %v3636
      %v3669 = vadd.f32 %v3537, %v3637
      %v3670 = vadd.f32 %v3538, %v3638
      %v3671 = vadd.f32 %v3539, %v3639
      %v3672 = vadd.f32 %v3540, %v3640
      %v3673 = vadd.f32 %v3541, %v3641
      %v3674 = vadd.f32 %v3542, %v3642
      %v3675 = vadd.f32 %v3543, %v3643
      %v3676 = vadd.f32 %v3544, %v3644
      %v3677 = vadd.f32 %v3545, %v3645
      %v3678 = vadd.f32 %v3546, %v3646
      %v3679 = vadd.f32 %v3547, %v3647
      %v3680 = vadd.f32 %v3548, %v3648
      %v3681 = vadd.f32 %v3549, %v3649
      %v3682 = vadd.f32 %v3550, %v3650
      %v3683 = vadd.f32 %v3551, %v3651
      %v3684 = vadd.f32 %v3552, %v3652
      %v3685 = vadd.f32 %v3553, %v3653
      %v3686 = vadd.f32 %v3554, %v3654
      %v3687 = vadd.f32 %v3555, %v3655
      %v3688 = vadd.f32 %v3556, %v3656
      %v3689 = vadd.f32 %v3557, %v3657
      %v3690 = vadd.f32 %v3558, %v3658
      %v3691 = vadd.f32 %v3559, %v3659
      %v3692 = vadd.f32 %v3560, %v3660
      %v3693 = vlaneseq
      %v3694 = vshrl.u32 %v3693, 7
      %v3695 = vsub.s32 5, %v3694
      %v3696 = vrot.slane %v2590, %v3695
      %v3697 = vmul.f32 %v3593, %v3696
      %v3698 = vmul.f32 %v3594, %v3696
      %v3699 = vmul.f32 %v3595, %v3696
      %v3700 = vmul.f32 %v3596, %v3696
      %v3701 = vmul.f32 %v3597, %v3696
      %v3702 = vmul.f32 %v3598, %v3696
      %v3703 = vmul.f32 %v3599, %v3696
      %v3704 = vmul.f32 %v3600, %v3696
      %v3705 = vmul.f32 %v3601, %v3696
      %v3706 = vmul.f32 %v3602, %v3696
      %v3707 = vmul.f32 %v3603, %v3696
      %v3708 = vmul.f32 %v3604, %v3696
      %v3709 = vmul.f32 %v3605, %v3696
      %v3710 = vmul.f32 %v3606, %v3696
      %v3711 = vmul.f32 %v3607, %v3696
      %v3712 = vmul.f32 %v3608, %v3696
      %v3713 = vmul.f32 %v3609, %v3696
      %v3714 = vmul.f32 %v3610, %v3696
      %v3715 = vmul.f32 %v3611, %v3696
      %v3716 = vmul.f32 %v3612, %v3696
      %v3717 = vmul.f32 %v3613, %v3696
      %v3718 = vmul.f32 %v3614, %v3696
      %v3719 = vmul.f32 %v3615, %v3696
      %v3720 = vmul.f32 %v3616, %v3696
      %v3721 = vmul.f32 %v3617, %v3696
      %v3722 = vmul.f32 %v3618, %v3696
      %v3723 = vmul.f32 %v3619, %v3696
      %v3724 = vmul.f32 %v3620, %v3696
      %v3725 = vmul.f32 %v3621, %v3696
      %v3726 = vmul.f32 %v3622, %v3696
      %v3727 = vmul.f32 %v3623, %v3696
      %v3728 = vmul.f32 %v3624, %v3696
      %v3729 = vadd.f32 %v3661, %v3697
      %v3730 = vadd.f32 %v3662, %v3698
      %v3731 = vadd.f32 %v3663, %v3699
      %v3732 = vadd.f32 %v3664, %v3700
      %v3733 = vadd.f32 %v3665, %v3701
      %v3734 = vadd.f32 %v3666, %v3702
      %v3735 = vadd.f32 %v3667, %v3703
      %v3736 = vadd.f32 %v3668, %v3704
      %v3737 = vadd.f32 %v3669, %v3705
      %v3738 = vadd.f32 %v3670, %v3706
      %v3739 = vadd.f32 %v3671, %v3707
      %v3740 = vadd.f32 %v3672, %v3708
      %v3741 = vadd.f32 %v3673, %v3709
      %v3742 = vadd.f32 %v3674, %v3710
      %v3743 = vadd.f32 %v3675, %v3711
      %v3744 = vadd.f32 %v3676, %v3712
      %v3745 = vadd.f32 %v3677, %v3713
      %v3746 = vadd.f32 %v3678, %v3714
      %v3747 = vadd.f32 %v3679, %v3715
      %v3748 = vadd.f32 %v3680, %v3716
      %v3749 = vadd.f32 %v3681, %v3717
      %v3750 = vadd.f32 %v3682, %v3718
      %v3751 = vadd.f32 %v3683, %v3719
      %v3752 = vadd.f32 %v3684, %v3720
      %v3753 = vadd.f32 %v3685, %v3721
      %v3754 = vadd.f32 %v3686, %v3722
      %v3755 = vadd.f32 %v3687, %v3723
      %v3756 = vadd.f32 %v3688, %v3724
      %v3757 = vadd.f32 %v3689, %v3725
      %v3758 = vadd.f32 %v3690, %v3726
      %v3759 = vadd.f32 %v3691, %v3727
      %v3760 = vadd.f32 %v3692, %v3728
      %s3761 = scalar_lea.vmem [#allocation3], 72
      %v3762 = vld [vmem:[%s3761 + $0x1] sm:$0xff]
      %v3763 = vld [vmem:[%s3761 + $0x9] sm:$0xff]
      %v3764 = vld [vmem:[%s3761 + $0x19] sm:$0xff]
      %v3765 = vld [vmem:[%s3761 + $0x21] sm:$0xff]
      %v3766 = vld [vmem:[%s3761 + $0x31] sm:$0xff]
      %v3767 = vld [vmem:[%s3761 + $0x39] sm:$0xff]
      %v3768 = vld [vmem:[%s3761 + $0x49] sm:$0xff]
      %v3769 = vld [vmem:[%s3761 + $0x51] sm:$0xff]
      %v3770 = vld [vmem:[%s3761 + $0x61] sm:$0xff]
      %v3771 = vld [vmem:[%s3761 + $0x69] sm:$0xff]
      %v3772 = vld [vmem:[%s3761 + $0x79] sm:$0xff]
      %v3773 = vld [vmem:[%s3761 + $0x81] sm:$0xff]
      %v3774 = vld [vmem:[%s3761 + $0x91] sm:$0xff]
      %v3775 = vld [vmem:[%s3761 + $0x99] sm:$0xff]
      %v3776 = vld [vmem:[%s3761 + $0xa9] sm:$0xff]
      %v3777 = vld [vmem:[%s3761 + $0xb1] sm:$0xff]
      %v3778 = vld [vmem:[%s3761 + $0xc1] sm:$0xff]
      %v3779 = vld [vmem:[%s3761 + $0xc9] sm:$0xff]
      %v3780 = vld [vmem:[%s3761 + $0xd9] sm:$0xff]
      %v3781 = vld [vmem:[%s3761 + $0xe1] sm:$0xff]
      %v3782 = vld [vmem:[%s3761 + $0xf1] sm:$0xff]
      %v3783 = vld [vmem:[%s3761 + $0xf9] sm:$0xff]
      %v3784 = vld [vmem:[%s3761 + $0x109] sm:$0xff]
      %v3785 = vld [vmem:[%s3761 + $0x111] sm:$0xff]
      %v3786 = vld [vmem:[%s3761 + $0x121] sm:$0xff]
      %v3787 = vld [vmem:[%s3761 + $0x129] sm:$0xff]
      %v3788 = vld [vmem:[%s3761 + $0x139] sm:$0xff]
      %v3789 = vld [vmem:[%s3761 + $0x141] sm:$0xff]
      %v3790 = vld [vmem:[%s3761 + $0x151] sm:$0xff]
      %v3791 = vld [vmem:[%s3761 + $0x159] sm:$0xff]
      %v3792 = vld [vmem:[%s3761 + $0x169] sm:$0xff]
      %v3793 = vld [vmem:[%s3761 + $0x171] sm:$0xff]
      %s3794 = scalar_lea.vmem [#allocation3], 96
      %v3795 = vld [vmem:[%s3794] sm:$0xff]
      %v3796 = vld [vmem:[%s3794 + $0x8] sm:$0xff]
      %v3797 = vld [vmem:[%s3794 + $0x18] sm:$0xff]
      %v3798 = vld [vmem:[%s3794 + $0x20] sm:$0xff]
      %v3799 = vld [vmem:[%s3794 + $0x30] sm:$0xff]
      %v3800 = vld [vmem:[%s3794 + $0x38] sm:$0xff]
      %v3801 = vld [vmem:[%s3794 + $0x48] sm:$0xff]
      %v3802 = vld [vmem:[%s3794 + $0x50] sm:$0xff]
      %v3803 = vld [vmem:[%s3794 + $0x60] sm:$0xff]
      %v3804 = vld [vmem:[%s3794 + $0x68] sm:$0xff]
      %v3805 = vld [vmem:[%s3794 + $0x78] sm:$0xff]
      %v3806 = vld [vmem:[%s3794 + $0x80] sm:$0xff]
      %v3807 = vld [vmem:[%s3794 + $0x90] sm:$0xff]
      %v3808 = vld [vmem:[%s3794 + $0x98] sm:$0xff]
      %v3809 = vld [vmem:[%s3794 + $0xa8] sm:$0xff]
      %v3810 = vld [vmem:[%s3794 + $0xb0] sm:$0xff]
      %v3811 = vld [vmem:[%s3794 + $0xc0] sm:$0xff]
      %v3812 = vld [vmem:[%s3794 + $0xc8] sm:$0xff]
      %v3813 = vld [vmem:[%s3794 + $0xd8] sm:$0xff]
      %v3814 = vld [vmem:[%s3794 + $0xe0] sm:$0xff]
      %v3815 = vld [vmem:[%s3794 + $0xf0] sm:$0xff]
      %v3816 = vld [vmem:[%s3794 + $0xf8] sm:$0xff]
      %v3817 = vld [vmem:[%s3794 + $0x108] sm:$0xff]
      %v3818 = vld [vmem:[%s3794 + $0x110] sm:$0xff]
      %v3819 = vld [vmem:[%s3794 + $0x120] sm:$0xff]
      %v3820 = vld [vmem:[%s3794 + $0x128] sm:$0xff]
      %v3821 = vld [vmem:[%s3794 + $0x138] sm:$0xff]
      %v3822 = vld [vmem:[%s3794 + $0x140] sm:$0xff]
      %v3823 = vld [vmem:[%s3794 + $0x150] sm:$0xff]
      %v3824 = vld [vmem:[%s3794 + $0x158] sm:$0xff]
      %v3825 = vld [vmem:[%s3794 + $0x168] sm:$0xff]
      %v3826 = vld [vmem:[%s3794 + $0x170] sm:$0xff]
      %v3827 = vlaneseq
      %v3828 = vshrl.u32 %v3827, 7
      %v3829 = vsub.s32 6, %v3828
      %v3830 = vrot.slane %v2588, %v3829
      %v3831 = vmul.f32 %v3762, %v3830
      %v3832 = vmul.f32 %v3763, %v3830
      %v3833 = vmul.f32 %v3764, %v3830
      %v3834 = vmul.f32 %v3765, %v3830
      %v3835 = vmul.f32 %v3766, %v3830
      %v3836 = vmul.f32 %v3767, %v3830
      %v3837 = vmul.f32 %v3768, %v3830
      %v3838 = vmul.f32 %v3769, %v3830
      %v3839 = vmul.f32 %v3770, %v3830
      %v3840 = vmul.f32 %v3771, %v3830
      %v3841 = vmul.f32 %v3772, %v3830
      %v3842 = vmul.f32 %v3773, %v3830
      %v3843 = vmul.f32 %v3774, %v3830
      %v3844 = vmul.f32 %v3775, %v3830
      %v3845 = vmul.f32 %v3776, %v3830
      %v3846 = vmul.f32 %v3777, %v3830
      %v3847 = vmul.f32 %v3778, %v3830
      %v3848 = vmul.f32 %v3779, %v3830
      %v3849 = vmul.f32 %v3780, %v3830
      %v3850 = vmul.f32 %v3781, %v3830
      %v3851 = vmul.f32 %v3782, %v3830
      %v3852 = vmul.f32 %v3783, %v3830
      %v3853 = vmul.f32 %v3784, %v3830
      %v3854 = vmul.f32 %v3785, %v3830
      %v3855 = vmul.f32 %v3786, %v3830
      %v3856 = vmul.f32 %v3787, %v3830
      %v3857 = vmul.f32 %v3788, %v3830
      %v3858 = vmul.f32 %v3789, %v3830
      %v3859 = vmul.f32 %v3790, %v3830
      %v3860 = vmul.f32 %v3791, %v3830
      %v3861 = vmul.f32 %v3792, %v3830
      %v3862 = vmul.f32 %v3793, %v3830
      %v3863 = vadd.f32 %v3729, %v3831
      %v3864 = vadd.f32 %v3730, %v3832
      %v3865 = vadd.f32 %v3731, %v3833
      %v3866 = vadd.f32 %v3732, %v3834
      %v3867 = vadd.f32 %v3733, %v3835
      %v3868 = vadd.f32 %v3734, %v3836
      %v3869 = vadd.f32 %v3735, %v3837
      %v3870 = vadd.f32 %v3736, %v3838
      %v3871 = vadd.f32 %v3737, %v3839
      %v3872 = vadd.f32 %v3738, %v3840
      %v3873 = vadd.f32 %v3739, %v3841
      %v3874 = vadd.f32 %v3740, %v3842
      %v3875 = vadd.f32 %v3741, %v3843
      %v3876 = vadd.f32 %v3742, %v3844
      %v3877 = vadd.f32 %v3743, %v3845
      %v3878 = vadd.f32 %v3744, %v3846
      %v3879 = vadd.f32 %v3745, %v3847
      %v3880 = vadd.f32 %v3746, %v3848
      %v3881 = vadd.f32 %v3747, %v3849
      %v3882 = vadd.f32 %v3748, %v3850
      %v3883 = vadd.f32 %v3749, %v3851
      %v3884 = vadd.f32 %v3750, %v3852
      %v3885 = vadd.f32 %v3751, %v3853
      %v3886 = vadd.f32 %v3752, %v3854
      %v3887 = vadd.f32 %v3753, %v3855
      %v3888 = vadd.f32 %v3754, %v3856
      %v3889 = vadd.f32 %v3755, %v3857
      %v3890 = vadd.f32 %v3756, %v3858
      %v3891 = vadd.f32 %v3757, %v3859
      %v3892 = vadd.f32 %v3758, %v3860
      %v3893 = vadd.f32 %v3759, %v3861
      %v3894 = vadd.f32 %v3760, %v3862
      %v3895 = vlaneseq
      %v3896 = vshrl.u32 %v3895, 7
      %v3897 = vsub.s32 6, %v3896
      %v3898 = vrot.slane %v2590, %v3897
      %v3899 = vmul.f32 %v3795, %v3898
      %v3900 = vmul.f32 %v3796, %v3898
      %v3901 = vmul.f32 %v3797, %v3898
      %v3902 = vmul.f32 %v3798, %v3898
      %v3903 = vmul.f32 %v3799, %v3898
      %v3904 = vmul.f32 %v3800, %v3898
      %v3905 = vmul.f32 %v3801, %v3898
      %v3906 = vmul.f32 %v3802, %v3898
      %v3907 = vmul.f32 %v3803, %v3898
      %v3908 = vmul.f32 %v3804, %v3898
      %v3909 = vmul.f32 %v3805, %v3898
      %v3910 = vmul.f32 %v3806, %v3898
      %v3911 = vmul.f32 %v3807, %v3898
      %v3912 = vmul.f32 %v3808, %v3898
      %v3913 = vmul.f32 %v3809, %v3898
      %v3914 = vmul.f32 %v3810, %v3898
      %v3915 = vmul.f32 %v3811, %v3898
      %v3916 = vmul.f32 %v3812, %v3898
      %v3917 = vmul.f32 %v3813, %v3898
      %v3918 = vmul.f32 %v3814, %v3898
      %v3919 = vmul.f32 %v3815, %v3898
      %v3920 = vmul.f32 %v3816, %v3898
      %v3921 = vmul.f32 %v3817, %v3898
      %v3922 = vmul.f32 %v3818, %v3898
      %v3923 = vmul.f32 %v3819, %v3898
      %v3924 = vmul.f32 %v3820, %v3898
      %v3925 = vmul.f32 %v3821, %v3898
      %v3926 = vmul.f32 %v3822, %v3898
      %v3927 = vmul.f32 %v3823, %v3898
      %v3928 = vmul.f32 %v3824, %v3898
      %v3929 = vmul.f32 %v3825, %v3898
      %v3930 = vmul.f32 %v3826, %v3898
      %v3931 = vadd.f32 %v3863, %v3899
      %v3932 = vadd.f32 %v3864, %v3900
      %v3933 = vadd.f32 %v3865, %v3901
      %v3934 = vadd.f32 %v3866, %v3902
      %v3935 = vadd.f32 %v3867, %v3903
      %v3936 = vadd.f32 %v3868, %v3904
      %v3937 = vadd.f32 %v3869, %v3905
      %v3938 = vadd.f32 %v3870, %v3906
      %v3939 = vadd.f32 %v3871, %v3907
      %v3940 = vadd.f32 %v3872, %v3908
      %v3941 = vadd.f32 %v3873, %v3909
      %v3942 = vadd.f32 %v3874, %v3910
      %v3943 = vadd.f32 %v3875, %v3911
      %v3944 = vadd.f32 %v3876, %v3912
      %v3945 = vadd.f32 %v3877, %v3913
      %v3946 = vadd.f32 %v3878, %v3914
      %v3947 = vadd.f32 %v3879, %v3915
      %v3948 = vadd.f32 %v3880, %v3916
      %v3949 = vadd.f32 %v3881, %v3917
      %v3950 = vadd.f32 %v3882, %v3918
      %v3951 = vadd.f32 %v3883, %v3919
      %v3952 = vadd.f32 %v3884, %v3920
      %v3953 = vadd.f32 %v3885, %v3921
      %v3954 = vadd.f32 %v3886, %v3922
      %v3955 = vadd.f32 %v3887, %v3923
      %v3956 = vadd.f32 %v3888, %v3924
      %v3957 = vadd.f32 %v3889, %v3925
      %v3958 = vadd.f32 %v3890, %v3926
      %v3959 = vadd.f32 %v3891, %v3927
      %v3960 = vadd.f32 %v3892, %v3928
      %v3961 = vadd.f32 %v3893, %v3929
      %v3962 = vadd.f32 %v3894, %v3930
      %v3963 = vld [vmem:[%s3761 + $0x2] sm:$0xff]
      %v3964 = vld [vmem:[%s3761 + $0xa] sm:$0xff]
      %v3965 = vld [vmem:[%s3761 + $0x1a] sm:$0xff]
      %v3966 = vld [vmem:[%s3761 + $0x22] sm:$0xff]
      %v3967 = vld [vmem:[%s3761 + $0x32] sm:$0xff]
      %v3968 = vld [vmem:[%s3761 + $0x3a] sm:$0xff]
      %v3969 = vld [vmem:[%s3761 + $0x4a] sm:$0xff]
      %v3970 = vld [vmem:[%s3761 + $0x52] sm:$0xff]
      %v3971 = vld [vmem:[%s3761 + $0x62] sm:$0xff]
      %v3972 = vld [vmem:[%s3761 + $0x6a] sm:$0xff]
      %v3973 = vld [vmem:[%s3761 + $0x7a] sm:$0xff]
      %v3974 = vld [vmem:[%s3761 + $0x82] sm:$0xff]
      %v3975 = vld [vmem:[%s3761 + $0x92] sm:$0xff]
      %v3976 = vld [vmem:[%s3761 + $0x9a] sm:$0xff]
      %v3977 = vld [vmem:[%s3761 + $0xaa] sm:$0xff]
      %v3978 = vld [vmem:[%s3761 + $0xb2] sm:$0xff]
      %v3979 = vld [vmem:[%s3761 + $0xc2] sm:$0xff]
      %v3980 = vld [vmem:[%s3761 + $0xca] sm:$0xff]
      %v3981 = vld [vmem:[%s3761 + $0xda] sm:$0xff]
      %v3982 = vld [vmem:[%s3761 + $0xe2] sm:$0xff]
      %v3983 = vld [vmem:[%s3761 + $0xf2] sm:$0xff]
      %v3984 = vld [vmem:[%s3761 + $0xfa] sm:$0xff]
      %v3985 = vld [vmem:[%s3761 + $0x10a] sm:$0xff]
      %v3986 = vld [vmem:[%s3761 + $0x112] sm:$0xff]
      %v3987 = vld [vmem:[%s3761 + $0x122] sm:$0xff]
      %v3988 = vld [vmem:[%s3761 + $0x12a] sm:$0xff]
      %v3989 = vld [vmem:[%s3761 + $0x13a] sm:$0xff]
      %v3990 = vld [vmem:[%s3761 + $0x142] sm:$0xff]
      %v3991 = vld [vmem:[%s3761 + $0x152] sm:$0xff]
      %v3992 = vld [vmem:[%s3761 + $0x15a] sm:$0xff]
      %v3993 = vld [vmem:[%s3761 + $0x16a] sm:$0xff]
      %v3994 = vld [vmem:[%s3761 + $0x172] sm:$0xff]
      %v3995 = vld [vmem:[%s3794 + $0x2] sm:$0xff]
      %v3996 = vld [vmem:[%s3794 + $0xa] sm:$0xff]
      %v3997 = vld [vmem:[%s3794 + $0x1a] sm:$0xff]
      %v3998 = vld [vmem:[%s3794 + $0x22] sm:$0xff]
      %v3999 = vld [vmem:[%s3794 + $0x32] sm:$0xff]
      %v4000 = vld [vmem:[%s3794 + $0x3a] sm:$0xff]
      %v4001 = vld [vmem:[%s3794 + $0x4a] sm:$0xff]
      %v4002 = vld [vmem:[%s3794 + $0x52] sm:$0xff]
      %v4003 = vld [vmem:[%s3794 + $0x62] sm:$0xff]
      %v4004 = vld [vmem:[%s3794 + $0x6a] sm:$0xff]
      %v4005 = vld [vmem:[%s3794 + $0x7a] sm:$0xff]
      %v4006 = vld [vmem:[%s3794 + $0x82] sm:$0xff]
      %v4007 = vld [vmem:[%s3794 + $0x92] sm:$0xff]
      %v4008 = vld [vmem:[%s3794 + $0x9a] sm:$0xff]
      %v4009 = vld [vmem:[%s3794 + $0xaa] sm:$0xff]
      %v4010 = vld [vmem:[%s3794 + $0xb2] sm:$0xff]
      %v4011 = vld [vmem:[%s3794 + $0xc2] sm:$0xff]
      %v4012 = vld [vmem:[%s3794 + $0xca] sm:$0xff]
      %v4013 = vld [vmem:[%s3794 + $0xda] sm:$0xff]
      %v4014 = vld [vmem:[%s3794 + $0xe2] sm:$0xff]
      %v4015 = vld [vmem:[%s3794 + $0xf2] sm:$0xff]
      %v4016 = vld [vmem:[%s3794 + $0xfa] sm:$0xff]
      %v4017 = vld [vmem:[%s3794 + $0x10a] sm:$0xff]
      %v4018 = vld [vmem:[%s3794 + $0x112] sm:$0xff]
      %v4019 = vld [vmem:[%s3794 + $0x122] sm:$0xff]
      %v4020 = vld [vmem:[%s3794 + $0x12a] sm:$0xff]
      %v4021 = vld [vmem:[%s3794 + $0x13a] sm:$0xff]
      %v4022 = vld [vmem:[%s3794 + $0x142] sm:$0xff]
      %v4023 = vld [vmem:[%s3794 + $0x152] sm:$0xff]
      %v4024 = vld [vmem:[%s3794 + $0x15a] sm:$0xff]
      %v4025 = vld [vmem:[%s3794 + $0x16a] sm:$0xff]
      %v4026 = vld [vmem:[%s3794 + $0x172] sm:$0xff]
      %v4027 = vlaneseq
      %v4028 = vshrl.u32 %v4027, 7
      %v4029 = vsub.s32 7, %v4028
      %v4030 = vrot.slane %v2588, %v4029
      %v4031 = vmul.f32 %v3963, %v4030
      %v4032 = vmul.f32 %v3964, %v4030
      %v4033 = vmul.f32 %v3965, %v4030
      %v4034 = vmul.f32 %v3966, %v4030
      %v4035 = vmul.f32 %v3967, %v4030
      %v4036 = vmul.f32 %v3968, %v4030
      %v4037 = vmul.f32 %v3969, %v4030
      %v4038 = vmul.f32 %v3970, %v4030
      %v4039 = vmul.f32 %v3971, %v4030
      %v4040 = vmul.f32 %v3972, %v4030
      %v4041 = vmul.f32 %v3973, %v4030
      %v4042 = vmul.f32 %v3974, %v4030
      %v4043 = vmul.f32 %v3975, %v4030
      %v4044 = vmul.f32 %v3976, %v4030
      %v4045 = vmul.f32 %v3977, %v4030
      %v4046 = vmul.f32 %v3978, %v4030
      %v4047 = vmul.f32 %v3979, %v4030
      %v4048 = vmul.f32 %v3980, %v4030
      %v4049 = vmul.f32 %v3981, %v4030
      %v4050 = vmul.f32 %v3982, %v4030
      %v4051 = vmul.f32 %v3983, %v4030
      %v4052 = vmul.f32 %v3984, %v4030
      %v4053 = vmul.f32 %v3985, %v4030
      %v4054 = vmul.f32 %v3986, %v4030
      %v4055 = vmul.f32 %v3987, %v4030
      %v4056 = vmul.f32 %v3988, %v4030
      %v4057 = vmul.f32 %v3989, %v4030
      %v4058 = vmul.f32 %v3990, %v4030
      %v4059 = vmul.f32 %v3991, %v4030
      %v4060 = vmul.f32 %v3992, %v4030
      %v4061 = vmul.f32 %v3993, %v4030
      %v4062 = vmul.f32 %v3994, %v4030
      %v4063 = vadd.f32 %v3931, %v4031
      %v4064 = vadd.f32 %v3932, %v4032
      %v4065 = vadd.f32 %v3933, %v4033
      %v4066 = vadd.f32 %v3934, %v4034
      %v4067 = vadd.f32 %v3935, %v4035
      %v4068 = vadd.f32 %v3936, %v4036
      %v4069 = vadd.f32 %v3937, %v4037
      %v4070 = vadd.f32 %v3938, %v4038
      %v4071 = vadd.f32 %v3939, %v4039
      %v4072 = vadd.f32 %v3940, %v4040
      %v4073 = vadd.f32 %v3941, %v4041
      %v4074 = vadd.f32 %v3942, %v4042
      %v4075 = vadd.f32 %v3943, %v4043
      %v4076 = vadd.f32 %v3944, %v4044
      %v4077 = vadd.f32 %v3945, %v4045
      %v4078 = vadd.f32 %v3946, %v4046
      %v4079 = vadd.f32 %v3947, %v4047
      %v4080 = vadd.f32 %v3948, %v4048
      %v4081 = vadd.f32 %v3949, %v4049
      %v4082 = vadd.f32 %v3950, %v4050
      %v4083 = vadd.f32 %v3951, %v4051
      %v4084 = vadd.f32 %v3952, %v4052
      %v4085 = vadd.f32 %v3953, %v4053
      %v4086 = vadd.f32 %v3954, %v4054
      %v4087 = vadd.f32 %v3955, %v4055
      %v4088 = vadd.f32 %v3956, %v4056
      %v4089 = vadd.f32 %v3957, %v4057
      %v4090 = vadd.f32 %v3958, %v4058
      %v4091 = vadd.f32 %v3959, %v4059
      %v4092 = vadd.f32 %v3960, %v4060
      %v4093 = vadd.f32 %v3961, %v4061
      %v4094 = vadd.f32 %v3962, %v4062
      %v4095 = vlaneseq
      %v4096 = vshrl.u32 %v4095, 7
      %v4097 = vsub.s32 7, %v4096
      %v4098 = vrot.slane %v2590, %v4097
      %v4099 = vmul.f32 %v3995, %v4098
      %v4100 = vmul.f32 %v3996, %v4098
      %v4101 = vmul.f32 %v3997, %v4098
      %v4102 = vmul.f32 %v3998, %v4098
      %v4103 = vmul.f32 %v3999, %v4098
      %v4104 = vmul.f32 %v4000, %v4098
      %v4105 = vmul.f32 %v4001, %v4098
      %v4106 = vmul.f32 %v4002, %v4098
      %v4107 = vmul.f32 %v4003, %v4098
      %v4108 = vmul.f32 %v4004, %v4098
      %v4109 = vmul.f32 %v4005, %v4098
      %v4110 = vmul.f32 %v4006, %v4098
      %v4111 = vmul.f32 %v4007, %v4098
      %v4112 = vmul.f32 %v4008, %v4098
      %v4113 = vmul.f32 %v4009, %v4098
      %v4114 = vmul.f32 %v4010, %v4098
      %v4115 = vmul.f32 %v4011, %v4098
      %v4116 = vmul.f32 %v4012, %v4098
      %v4117 = vmul.f32 %v4013, %v4098
      %v4118 = vmul.f32 %v4014, %v4098
      %v4119 = vmul.f32 %v4015, %v4098
      %v4120 = vmul.f32 %v4016, %v4098
      %v4121 = vmul.f32 %v4017, %v4098
      %v4122 = vmul.f32 %v4018, %v4098
      %v4123 = vmul.f32 %v4019, %v4098
      %v4124 = vmul.f32 %v4020, %v4098
      %v4125 = vmul.f32 %v4021, %v4098
      %v4126 = vmul.f32 %v4022, %v4098
      %v4127 = vmul.f32 %v4023, %v4098
      %v4128 = vmul.f32 %v4024, %v4098
      %v4129 = vmul.f32 %v4025, %v4098
      %v4130 = vmul.f32 %v4026, %v4098
      %v4131 = vadd.f32 %v4063, %v4099
      %v4132 = vadd.f32 %v4064, %v4100
      %v4133 = vadd.f32 %v4065, %v4101
      %v4134 = vadd.f32 %v4066, %v4102
      %v4135 = vadd.f32 %v4067, %v4103
      %v4136 = vadd.f32 %v4068, %v4104
      %v4137 = vadd.f32 %v4069, %v4105
      %v4138 = vadd.f32 %v4070, %v4106
      %v4139 = vadd.f32 %v4071, %v4107
      %v4140 = vadd.f32 %v4072, %v4108
      %v4141 = vadd.f32 %v4073, %v4109
      %v4142 = vadd.f32 %v4074, %v4110
      %v4143 = vadd.f32 %v4075, %v4111
      %v4144 = vadd.f32 %v4076, %v4112
      %v4145 = vadd.f32 %v4077, %v4113
      %v4146 = vadd.f32 %v4078, %v4114
      %v4147 = vadd.f32 %v4079, %v4115
      %v4148 = vadd.f32 %v4080, %v4116
      %v4149 = vadd.f32 %v4081, %v4117
      %v4150 = vadd.f32 %v4082, %v4118
      %v4151 = vadd.f32 %v4083, %v4119
      %v4152 = vadd.f32 %v4084, %v4120
      %v4153 = vadd.f32 %v4085, %v4121
      %v4154 = vadd.f32 %v4086, %v4122
      %v4155 = vadd.f32 %v4087, %v4123
      %v4156 = vadd.f32 %v4088, %v4124
      %v4157 = vadd.f32 %v4089, %v4125
      %v4158 = vadd.f32 %v4090, %v4126
      %v4159 = vadd.f32 %v4091, %v4127
      %v4160 = vadd.f32 %v4092, %v4128
      %v4161 = vadd.f32 %v4093, %v4129
      %v4162 = vadd.f32 %v4094, %v4130
      %v4163 = vld [vmem:[%s3761 + $0x3] sm:$0xff]
      %v4164 = vld [vmem:[%s3761 + $0xb] sm:$0xff]
      %v4165 = vld [vmem:[%s3761 + $0x1b] sm:$0xff]
      %v4166 = vld [vmem:[%s3761 + $0x23] sm:$0xff]
      %v4167 = vld [vmem:[%s3761 + $0x33] sm:$0xff]
      %v4168 = vld [vmem:[%s3761 + $0x3b] sm:$0xff]
      %v4169 = vld [vmem:[%s3761 + $0x4b] sm:$0xff]
      %v4170 = vld [vmem:[%s3761 + $0x53] sm:$0xff]
      %v4171 = vld [vmem:[%s3761 + $0x63] sm:$0xff]
      %v4172 = vld [vmem:[%s3761 + $0x6b] sm:$0xff]
      %v4173 = vld [vmem:[%s3761 + $0x7b] sm:$0xff]
      %v4174 = vld [vmem:[%s3761 + $0x83] sm:$0xff]
      %v4175 = vld [vmem:[%s3761 + $0x93] sm:$0xff]
      %v4176 = vld [vmem:[%s3761 + $0x9b] sm:$0xff]
      %v4177 = vld [vmem:[%s3761 + $0xab] sm:$0xff]
      %v4178 = vld [vmem:[%s3761 + $0xb3] sm:$0xff]
      %v4179 = vld [vmem:[%s3761 + $0xc3] sm:$0xff]
      %v4180 = vld [vmem:[%s3761 + $0xcb] sm:$0xff]
      %v4181 = vld [vmem:[%s3761 + $0xdb] sm:$0xff]
      %v4182 = vld [vmem:[%s3761 + $0xe3] sm:$0xff]
      %v4183 = vld [vmem:[%s3761 + $0xf3] sm:$0xff]
      %v4184 = vld [vmem:[%s3761 + $0xfb] sm:$0xff]
      %v4185 = vld [vmem:[%s3761 + $0x10b] sm:$0xff]
      %v4186 = vld [vmem:[%s3761 + $0x113] sm:$0xff]
      %v4187 = vld [vmem:[%s3761 + $0x123] sm:$0xff]
      %v4188 = vld [vmem:[%s3761 + $0x12b] sm:$0xff]
      %v4189 = vld [vmem:[%s3761 + $0x13b] sm:$0xff]
      %v4190 = vld [vmem:[%s3761 + $0x143] sm:$0xff]
      %v4191 = vld [vmem:[%s3761 + $0x153] sm:$0xff]
      %v4192 = vld [vmem:[%s3761 + $0x15b] sm:$0xff]
      %v4193 = vld [vmem:[%s3761 + $0x16b] sm:$0xff]
      %v4194 = vld [vmem:[%s3761 + $0x173] sm:$0xff]
      %v4195 = vld [vmem:[%s3794 + $0x4] sm:$0xff]
      %v4196 = vld [vmem:[%s3794 + $0xc] sm:$0xff]
      %v4197 = vld [vmem:[%s3794 + $0x1c] sm:$0xff]
      %v4198 = vld [vmem:[%s3794 + $0x24] sm:$0xff]
      %v4199 = vld [vmem:[%s3794 + $0x34] sm:$0xff]
      %v4200 = vld [vmem:[%s3794 + $0x3c] sm:$0xff]
      %v4201 = vld [vmem:[%s3794 + $0x4c] sm:$0xff]
      %v4202 = vld [vmem:[%s3794 + $0x54] sm:$0xff]
      %v4203 = vld [vmem:[%s3794 + $0x64] sm:$0xff]
      %v4204 = vld [vmem:[%s3794 + $0x6c] sm:$0xff]
      %v4205 = vld [vmem:[%s3794 + $0x7c] sm:$0xff]
      %v4206 = vld [vmem:[%s3794 + $0x84] sm:$0xff]
      %v4207 = vld [vmem:[%s3794 + $0x94] sm:$0xff]
      %v4208 = vld [vmem:[%s3794 + $0x9c] sm:$0xff]
      %v4209 = vld [vmem:[%s3794 + $0xac] sm:$0xff]
      %v4210 = vld [vmem:[%s3794 + $0xb4] sm:$0xff]
      %v4211 = vld [vmem:[%s3794 + $0xc4] sm:$0xff]
      %v4212 = vld [vmem:[%s3794 + $0xcc] sm:$0xff]
      %v4213 = vld [vmem:[%s3794 + $0xdc] sm:$0xff]
      %v4214 = vld [vmem:[%s3794 + $0xe4] sm:$0xff]
      %v4215 = vld [vmem:[%s3794 + $0xf4] sm:$0xff]
      %v4216 = vld [vmem:[%s3794 + $0xfc] sm:$0xff]
      %v4217 = vld [vmem:[%s3794 + $0x10c] sm:$0xff]
      %v4218 = vld [vmem:[%s3794 + $0x114] sm:$0xff]
      %v4219 = vld [vmem:[%s3794 + $0x124] sm:$0xff]
      %v4220 = vld [vmem:[%s3794 + $0x12c] sm:$0xff]
      %v4221 = vld [vmem:[%s3794 + $0x13c] sm:$0xff]
      %v4222 = vld [vmem:[%s3794 + $0x144] sm:$0xff]
      %v4223 = vld [vmem:[%s3794 + $0x154] sm:$0xff]
      %v4224 = vld [vmem:[%s3794 + $0x15c] sm:$0xff]
      %v4225 = vld [vmem:[%s3794 + $0x16c] sm:$0xff]
      %v4226 = vld [vmem:[%s3794 + $0x174] sm:$0xff]
      %v4227 = vlaneseq
      %v4228 = vshrl.u32 %v4227, 7
      %v4229 = vsub.s32 0, %v4228
      %v4230 = vrot.slane %v2589, %v4229
      %v4231 = vmul.f32 %v4163, %v4230
      %v4232 = vmul.f32 %v4164, %v4230
      %v4233 = vmul.f32 %v4165, %v4230
      %v4234 = vmul.f32 %v4166, %v4230
      %v4235 = vmul.f32 %v4167, %v4230
      %v4236 = vmul.f32 %v4168, %v4230
      %v4237 = vmul.f32 %v4169, %v4230
      %v4238 = vmul.f32 %v4170, %v4230
      %v4239 = vmul.f32 %v4171, %v4230
      %v4240 = vmul.f32 %v4172, %v4230
      %v4241 = vmul.f32 %v4173, %v4230
      %v4242 = vmul.f32 %v4174, %v4230
      %v4243 = vmul.f32 %v4175, %v4230
      %v4244 = vmul.f32 %v4176, %v4230
      %v4245 = vmul.f32 %v4177, %v4230
      %v4246 = vmul.f32 %v4178, %v4230
      %v4247 = vmul.f32 %v4179, %v4230
      %v4248 = vmul.f32 %v4180, %v4230
      %v4249 = vmul.f32 %v4181, %v4230
      %v4250 = vmul.f32 %v4182, %v4230
      %v4251 = vmul.f32 %v4183, %v4230
      %v4252 = vmul.f32 %v4184, %v4230
      %v4253 = vmul.f32 %v4185, %v4230
      %v4254 = vmul.f32 %v4186, %v4230
      %v4255 = vmul.f32 %v4187, %v4230
      %v4256 = vmul.f32 %v4188, %v4230
      %v4257 = vmul.f32 %v4189, %v4230
      %v4258 = vmul.f32 %v4190, %v4230
      %v4259 = vmul.f32 %v4191, %v4230
      %v4260 = vmul.f32 %v4192, %v4230
      %v4261 = vmul.f32 %v4193, %v4230
      %v4262 = vmul.f32 %v4194, %v4230
      %v4263 = vadd.f32 %v4131, %v4231
      %v4264 = vadd.f32 %v4132, %v4232
      %v4265 = vadd.f32 %v4133, %v4233
      %v4266 = vadd.f32 %v4134, %v4234
      %v4267 = vadd.f32 %v4135, %v4235
      %v4268 = vadd.f32 %v4136, %v4236
      %v4269 = vadd.f32 %v4137, %v4237
      %v4270 = vadd.f32 %v4138, %v4238
      %v4271 = vadd.f32 %v4139, %v4239
      %v4272 = vadd.f32 %v4140, %v4240
      %v4273 = vadd.f32 %v4141, %v4241
      %v4274 = vadd.f32 %v4142, %v4242
      %v4275 = vadd.f32 %v4143, %v4243
      %v4276 = vadd.f32 %v4144, %v4244
      %v4277 = vadd.f32 %v4145, %v4245
      %v4278 = vadd.f32 %v4146, %v4246
      %v4279 = vadd.f32 %v4147, %v4247
      %v4280 = vadd.f32 %v4148, %v4248
      %v4281 = vadd.f32 %v4149, %v4249
      %v4282 = vadd.f32 %v4150, %v4250
      %v4283 = vadd.f32 %v4151, %v4251
      %v4284 = vadd.f32 %v4152, %v4252
      %v4285 = vadd.f32 %v4153, %v4253
      %v4286 = vadd.f32 %v4154, %v4254
      %v4287 = vadd.f32 %v4155, %v4255
      %v4288 = vadd.f32 %v4156, %v4256
      %v4289 = vadd.f32 %v4157, %v4257
      %v4290 = vadd.f32 %v4158, %v4258
      %v4291 = vadd.f32 %v4159, %v4259
      %v4292 = vadd.f32 %v4160, %v4260
      %v4293 = vadd.f32 %v4161, %v4261
      %v4294 = vadd.f32 %v4162, %v4262
      %v4295 = vlaneseq
      %v4296 = vshrl.u32 %v4295, 7
      %v4297 = vsub.s32 0, %v4296
      %v4298 = vrot.slane %v2591, %v4297
      %v4299 = vmul.f32 %v4195, %v4298
      %v4300 = vmul.f32 %v4196, %v4298
      %v4301 = vmul.f32 %v4197, %v4298
      %v4302 = vmul.f32 %v4198, %v4298
      %v4303 = vmul.f32 %v4199, %v4298
      %v4304 = vmul.f32 %v4200, %v4298
      %v4305 = vmul.f32 %v4201, %v4298
      %v4306 = vmul.f32 %v4202, %v4298
      %v4307 = vmul.f32 %v4203, %v4298
      %v4308 = vmul.f32 %v4204, %v4298
      %v4309 = vmul.f32 %v4205, %v4298
      %v4310 = vmul.f32 %v4206, %v4298
      %v4311 = vmul.f32 %v4207, %v4298
      %v4312 = vmul.f32 %v4208, %v4298
      %v4313 = vmul.f32 %v4209, %v4298
      %v4314 = vmul.f32 %v4210, %v4298
      %v4315 = vmul.f32 %v4211, %v4298
      %v4316 = vmul.f32 %v4212, %v4298
      %v4317 = vmul.f32 %v4213, %v4298
      %v4318 = vmul.f32 %v4214, %v4298
      %v4319 = vmul.f32 %v4215, %v4298
      %v4320 = vmul.f32 %v4216, %v4298
      %v4321 = vmul.f32 %v4217, %v4298
      %v4322 = vmul.f32 %v4218, %v4298
      %v4323 = vmul.f32 %v4219, %v4298
      %v4324 = vmul.f32 %v4220, %v4298
      %v4325 = vmul.f32 %v4221, %v4298
      %v4326 = vmul.f32 %v4222, %v4298
      %v4327 = vmul.f32 %v4223, %v4298
      %v4328 = vmul.f32 %v4224, %v4298
      %v4329 = vmul.f32 %v4225, %v4298
      %v4330 = vmul.f32 %v4226, %v4298
      %v4331 = vadd.f32 %v4263, %v4299
      %v4332 = vadd.f32 %v4264, %v4300
      %v4333 = vadd.f32 %v4265, %v4301
      %v4334 = vadd.f32 %v4266, %v4302
      %v4335 = vadd.f32 %v4267, %v4303
      %v4336 = vadd.f32 %v4268, %v4304
      %v4337 = vadd.f32 %v4269, %v4305
      %v4338 = vadd.f32 %v4270, %v4306
      %v4339 = vadd.f32 %v4271, %v4307
      %v4340 = vadd.f32 %v4272, %v4308
      %v4341 = vadd.f32 %v4273, %v4309
      %v4342 = vadd.f32 %v4274, %v4310
      %v4343 = vadd.f32 %v4275, %v4311
      %v4344 = vadd.f32 %v4276, %v4312
      %v4345 = vadd.f32 %v4277, %v4313
      %v4346 = vadd.f32 %v4278, %v4314
      %v4347 = vadd.f32 %v4279, %v4315
      %v4348 = vadd.f32 %v4280, %v4316
      %v4349 = vadd.f32 %v4281, %v4317
      %v4350 = vadd.f32 %v4282, %v4318
      %v4351 = vadd.f32 %v4283, %v4319
      %v4352 = vadd.f32 %v4284, %v4320
      %v4353 = vadd.f32 %v4285, %v4321
      %v4354 = vadd.f32 %v4286, %v4322
      %v4355 = vadd.f32 %v4287, %v4323
      %v4356 = vadd.f32 %v4288, %v4324
      %v4357 = vadd.f32 %v4289, %v4325
      %v4358 = vadd.f32 %v4290, %v4326
      %v4359 = vadd.f32 %v4291, %v4327
      %v4360 = vadd.f32 %v4292, %v4328
      %v4361 = vadd.f32 %v4293, %v4329
      %v4362 = vadd.f32 %v4294, %v4330
      %v4363 = vld [vmem:[%s5] sm:$0x1]
      %v4364 = vlaneseq
      %v4365 = vshrl.u32 %v4364, 7
      %v4366 = vsub.s32 0, %v4365
      %v4367 = vrot.slane %v4363, %v4366
      %v4368 = vadd.f32 %v4331, %v4367
      %v4369 = vadd.f32 %v4332, %v4367
      %v4370 = vadd.f32 %v4333, %v4367
      %v4371 = vadd.f32 %v4334, %v4367
      %v4372 = vadd.f32 %v4335, %v4367
      %v4373 = vadd.f32 %v4336, %v4367
      %v4374 = vadd.f32 %v4337, %v4367
      %v4375 = vadd.f32 %v4338, %v4367
      %v4376 = vadd.f32 %v4339, %v4367
      %v4377 = vadd.f32 %v4340, %v4367
      %v4378 = vadd.f32 %v4341, %v4367
      %v4379 = vadd.f32 %v4342, %v4367
      %v4380 = vadd.f32 %v4343, %v4367
      %v4381 = vadd.f32 %v4344, %v4367
      %v4382 = vadd.f32 %v4345, %v4367
      %v4383 = vadd.f32 %v4346, %v4367
      %v4384 = vadd.f32 %v4347, %v4367
      %v4385 = vadd.f32 %v4348, %v4367
      %v4386 = vadd.f32 %v4349, %v4367
      %v4387 = vadd.f32 %v4350, %v4367
      %v4388 = vadd.f32 %v4351, %v4367
      %v4389 = vadd.f32 %v4352, %v4367
      %v4390 = vadd.f32 %v4353, %v4367
      %v4391 = vadd.f32 %v4354, %v4367
      %v4392 = vadd.f32 %v4355, %v4367
      %v4393 = vadd.f32 %v4356, %v4367
      %v4394 = vadd.f32 %v4357, %v4367
      %v4395 = vadd.f32 %v4358, %v4367
      %v4396 = vadd.f32 %v4359, %v4367
      %v4397 = vadd.f32 %v4360, %v4367
      %v4398 = vadd.f32 %v4361, %v4367
      %v4399 = vadd.f32 %v4362, %v4367
      %v4400 = vld [vmem:[%s5 + $0x1] sm:$0x1]
      %vm4401 = vcmp.ge.f32.partialorder %v4368, 0.0
      %vm4402 = vcmp.ge.f32.partialorder %v4369, 0.0
      %vm4403 = vcmp.ge.f32.partialorder %v4370, 0.0
      %vm4404 = vcmp.ge.f32.partialorder %v4371, 0.0
      %vm4405 = vcmp.ge.f32.partialorder %v4372, 0.0
      %vm4406 = vcmp.ge.f32.partialorder %v4373, 0.0
      %vm4407 = vcmp.ge.f32.partialorder %v4374, 0.0
      %vm4408 = vcmp.ge.f32.partialorder %v4375, 0.0
      %vm4409 = vcmp.ge.f32.partialorder %v4376, 0.0
      %vm4410 = vcmp.ge.f32.partialorder %v4377, 0.0
      %vm4411 = vcmp.ge.f32.partialorder %v4378, 0.0
      %vm4412 = vcmp.ge.f32.partialorder %v4379, 0.0
      %vm4413 = vcmp.ge.f32.partialorder %v4380, 0.0
      %vm4414 = vcmp.ge.f32.partialorder %v4381, 0.0
      %vm4415 = vcmp.ge.f32.partialorder %v4382, 0.0
      %vm4416 = vcmp.ge.f32.partialorder %v4383, 0.0
      %vm4417 = vcmp.ge.f32.partialorder %v4384, 0.0
      %vm4418 = vcmp.ge.f32.partialorder %v4385, 0.0
      %vm4419 = vcmp.ge.f32.partialorder %v4386, 0.0
      %vm4420 = vcmp.ge.f32.partialorder %v4387, 0.0
      %vm4421 = vcmp.ge.f32.partialorder %v4388, 0.0
      %vm4422 = vcmp.ge.f32.partialorder %v4389, 0.0
      %vm4423 = vcmp.ge.f32.partialorder %v4390, 0.0
      %vm4424 = vcmp.ge.f32.partialorder %v4391, 0.0
      %vm4425 = vcmp.ge.f32.partialorder %v4392, 0.0
      %vm4426 = vcmp.ge.f32.partialorder %v4393, 0.0
      %vm4427 = vcmp.ge.f32.partialorder %v4394, 0.0
      %vm4428 = vcmp.ge.f32.partialorder %v4395, 0.0
      %vm4429 = vcmp.ge.f32.partialorder %v4396, 0.0
      %vm4430 = vcmp.ge.f32.partialorder %v4397, 0.0
      %vm4431 = vcmp.ge.f32.partialorder %v4398, 0.0
      %vm4432 = vcmp.ge.f32.partialorder %v4399, 0.0
      %v4433 = vlaneseq
      %v4434 = vshrl.u32 %v4433, 7
      %v4435 = vsub.s32 0, %v4434
      %v4436 = vrot.slane %v4400, %v4435
      %v4437 = vmul.f32 %v4368, %v4436
      %v4438 = vmul.f32 %v4369, %v4436
      %v4439 = vmul.f32 %v4370, %v4436
      %v4440 = vmul.f32 %v4371, %v4436
      %v4441 = vmul.f32 %v4372, %v4436
      %v4442 = vmul.f32 %v4373, %v4436
      %v4443 = vmul.f32 %v4374, %v4436
      %v4444 = vmul.f32 %v4375, %v4436
      %v4445 = vmul.f32 %v4376, %v4436
      %v4446 = vmul.f32 %v4377, %v4436
      %v4447 = vmul.f32 %v4378, %v4436
      %v4448 = vmul.f32 %v4379, %v4436
      %v4449 = vmul.f32 %v4380, %v4436
      %v4450 = vmul.f32 %v4381, %v4436
      %v4451 = vmul.f32 %v4382, %v4436
      %v4452 = vmul.f32 %v4383, %v4436
      %v4453 = vmul.f32 %v4384, %v4436
      %v4454 = vmul.f32 %v4385, %v4436
      %v4455 = vmul.f32 %v4386, %v4436
      %v4456 = vmul.f32 %v4387, %v4436
      %v4457 = vmul.f32 %v4388, %v4436
      %v4458 = vmul.f32 %v4389, %v4436
      %v4459 = vmul.f32 %v4390, %v4436
      %v4460 = vmul.f32 %v4391, %v4436
      %v4461 = vmul.f32 %v4392, %v4436
      %v4462 = vmul.f32 %v4393, %v4436
      %v4463 = vmul.f32 %v4394, %v4436
      %v4464 = vmul.f32 %v4395, %v4436
      %v4465 = vmul.f32 %v4396, %v4436
      %v4466 = vmul.f32 %v4397, %v4436
      %v4467 = vmul.f32 %v4398, %v4436
      %v4468 = vmul.f32 %v4399, %v4436
      %v4469 = vsel %vm4401, %v4368, %v4437
      %v4470 = vsel %vm4402, %v4369, %v4438
      %v4471 = vsel %vm4403, %v4370, %v4439
      %v4472 = vsel %vm4404, %v4371, %v4440
      %v4473 = vsel %vm4405, %v4372, %v4441
      %v4474 = vsel %vm4406, %v4373, %v4442
      %v4475 = vsel %vm4407, %v4374, %v4443
      %v4476 = vsel %vm4408, %v4375, %v4444
      %v4477 = vsel %vm4409, %v4376, %v4445
      %v4478 = vsel %vm4410, %v4377, %v4446
      %v4479 = vsel %vm4411, %v4378, %v4447
      %v4480 = vsel %vm4412, %v4379, %v4448
      %v4481 = vsel %vm4413, %v4380, %v4449
      %v4482 = vsel %vm4414, %v4381, %v4450
      %v4483 = vsel %vm4415, %v4382, %v4451
      %v4484 = vsel %vm4416, %v4383, %v4452
      %v4485 = vsel %vm4417, %v4384, %v4453
      %v4486 = vsel %vm4418, %v4385, %v4454
      %v4487 = vsel %vm4419, %v4386, %v4455
      %v4488 = vsel %vm4420, %v4387, %v4456
      %v4489 = vsel %vm4421, %v4388, %v4457
      %v4490 = vsel %vm4422, %v4389, %v4458
      %v4491 = vsel %vm4423, %v4390, %v4459
      %v4492 = vsel %vm4424, %v4391, %v4460
      %v4493 = vsel %vm4425, %v4392, %v4461
      %v4494 = vsel %vm4426, %v4393, %v4462
      %v4495 = vsel %vm4427, %v4394, %v4463
      %v4496 = vsel %vm4428, %v4395, %v4464
      %v4497 = vsel %vm4429, %v4396, %v4465
      %v4498 = vsel %vm4430, %v4397, %v4466
      %v4499 = vsel %vm4431, %v4398, %v4467
      %v4500 = vsel %vm4432, %v4399, %v4468
      %4501 = vst.msk [vmem:[%s460 + $0x1] sm:$0xff] %vm404, %v4469
      %4502 = vst.msk [vmem:[%s460 + $0x9] sm:$0xff] %vm404, %v4470
      %4503 = vst.msk [vmem:[%s460 + $0x19] sm:$0xff] %vm404, %v4471
      %4504 = vst.msk [vmem:[%s460 + $0x21] sm:$0xff] %vm404, %v4472
      %4505 = vst.msk [vmem:[%s460 + $0x31] sm:$0xff] %vm404, %v4473
      %4506 = vst.msk [vmem:[%s460 + $0x39] sm:$0xff] %vm404, %v4474
      %4507 = vst.msk [vmem:[%s460 + $0x49] sm:$0xff] %vm404, %v4475
      %4508 = vst.msk [vmem:[%s460 + $0x51] sm:$0xff] %vm404, %v4476
      %4509 = vst.msk [vmem:[%s460 + $0x61] sm:$0xff] %vm404, %v4477
      %4510 = vst.msk [vmem:[%s460 + $0x69] sm:$0xff] %vm404, %v4478
      %4511 = vst.msk [vmem:[%s460 + $0x79] sm:$0xff] %vm404, %v4479
      %4512 = vst.msk [vmem:[%s460 + $0x81] sm:$0xff] %vm404, %v4480
      %4513 = vst.msk [vmem:[%s460 + $0x91] sm:$0xff] %vm404, %v4481
      %4514 = vst.msk [vmem:[%s460 + $0x99] sm:$0xff] %vm404, %v4482
      %4515 = vst.msk [vmem:[%s460 + $0xa9] sm:$0xff] %vm404, %v4483
      %4516 = vst.msk [vmem:[%s460 + $0xb1] sm:$0xff] %vm404, %v4484
      %4517 = vst.msk [vmem:[%s460 + $0xc1] sm:$0xff] %vm404, %v4485
      %4518 = vst.msk [vmem:[%s460 + $0xc9] sm:$0xff] %vm404, %v4486
      %4519 = vst.msk [vmem:[%s460 + $0xd9] sm:$0xff] %vm404, %v4487
      %4520 = vst.msk [vmem:[%s460 + $0xe1] sm:$0xff] %vm404, %v4488
      %4521 = vst.msk [vmem:[%s460 + $0xf1] sm:$0xff] %vm404, %v4489
      %4522 = vst.msk [vmem:[%s460 + $0xf9] sm:$0xff] %vm404, %v4490
      %4523 = vst.msk [vmem:[%s460 + $0x109] sm:$0xff] %vm404, %v4491
      %4524 = vst.msk [vmem:[%s460 + $0x111] sm:$0xff] %vm404, %v4492
      %4525 = vst.msk [vmem:[%s460 + $0x121] sm:$0xff] %vm404, %v4493
      %4526 = vst.msk [vmem:[%s460 + $0x129] sm:$0xff] %vm404, %v4494
      %4527 = vst.msk [vmem:[%s460 + $0x139] sm:$0xff] %vm404, %v4495
      %4528 = vst.msk [vmem:[%s460 + $0x141] sm:$0xff] %vm404, %v4496
      %4529 = vst.msk [vmem:[%s460 + $0x151] sm:$0xff] %vm404, %v4497
      %4530 = vst.msk [vmem:[%s460 + $0x159] sm:$0xff] %vm404, %v4498
      %4531 = vst.msk [vmem:[%s460 + $0x169] sm:$0xff] %vm404, %v4499
      %4532 = vst.msk [vmem:[%s460 + $0x171] sm:$0xff] %vm404, %v4500
      %v4533 = vld [vmem:[#allocation4] sm:$0xff]
      %v4534 = vld [vmem:[#allocation4 + $0x8] sm:$0xff]
      %v4535 = vld [vmem:[#allocation4 + $0x18] sm:$0xff]
      %v4536 = vld [vmem:[#allocation4 + $0x20] sm:$0xff]
      %v4537 = vld [vmem:[#allocation4 + $0x30] sm:$0xff]
      %v4538 = vld [vmem:[#allocation4 + $0x38] sm:$0xff]
      %v4539 = vld [vmem:[#allocation4 + $0x48] sm:$0xff]
      %v4540 = vld [vmem:[#allocation4 + $0x50] sm:$0xff]
      %v4541 = vld [vmem:[#allocation4 + $0x60] sm:$0xff]
      %v4542 = vld [vmem:[#allocation4 + $0x68] sm:$0xff]
      %v4543 = vld [vmem:[#allocation4 + $0x78] sm:$0xff]
      %v4544 = vld [vmem:[#allocation4 + $0x80] sm:$0xff]
      %v4545 = vld [vmem:[#allocation4 + $0x90] sm:$0xff]
      %v4546 = vld [vmem:[#allocation4 + $0x98] sm:$0xff]
      %v4547 = vld [vmem:[#allocation4 + $0xa8] sm:$0xff]
      %v4548 = vld [vmem:[#allocation4 + $0xb0] sm:$0xff]
      %v4549 = vld [vmem:[#allocation4 + $0xc0] sm:$0xff]
      %v4550 = vld [vmem:[#allocation4 + $0xc8] sm:$0xff]
      %v4551 = vld [vmem:[#allocation4 + $0xd8] sm:$0xff]
      %v4552 = vld [vmem:[#allocation4 + $0xe0] sm:$0xff]
      %v4553 = vld [vmem:[#allocation4 + $0xf0] sm:$0xff]
      %v4554 = vld [vmem:[#allocation4 + $0xf8] sm:$0xff]
      %v4555 = vld [vmem:[#allocation4 + $0x108] sm:$0xff]
      %v4556 = vld [vmem:[#allocation4 + $0x110] sm:$0xff]
      %v4557 = vld [vmem:[#allocation4 + $0x120] sm:$0xff]
      %v4558 = vld [vmem:[#allocation4 + $0x128] sm:$0xff]
      %v4559 = vld [vmem:[#allocation4 + $0x138] sm:$0xff]
      %v4560 = vld [vmem:[#allocation4 + $0x140] sm:$0xff]
      %v4561 = vld [vmem:[#allocation4 + $0x150] sm:$0xff]
      %v4562 = vld [vmem:[#allocation4 + $0x158] sm:$0xff]
      %v4563 = vld [vmem:[#allocation4 + $0x168] sm:$0xff]
      %v4564 = vld [vmem:[#allocation4 + $0x170] sm:$0xff]
      %4565 = vst.msk [vmem:[#allocation6] sm:$0xff] %vm404, %v4533
      %4566 = vst.msk [vmem:[#allocation6 + $0x8] sm:$0xff] %vm404, %v4534
      %4567 = vst.msk [vmem:[#allocation6 + $0x10] sm:$0xff] %vm404, %v4535
      %4568 = vst.msk [vmem:[#allocation6 + $0x18] sm:$0xff] %vm404, %v4536
      %4569 = vst.msk [vmem:[#allocation6 + $0x20] sm:$0xff] %vm404, %v4537
      %4570 = vst.msk [vmem:[#allocation6 + $0x28] sm:$0xff] %vm404, %v4538
      %4571 = vst.msk [vmem:[#allocation6 + $0x30] sm:$0xff] %vm404, %v4539
      %4572 = vst.msk [vmem:[#allocation6 + $0x38] sm:$0xff] %vm404, %v4540
      %4573 = vst.msk [vmem:[#allocation6 + $0x40] sm:$0xff] %vm404, %v4541
      %4574 = vst.msk [vmem:[#allocation6 + $0x48] sm:$0xff] %vm404, %v4542
      %4575 = vst.msk [vmem:[#allocation6 + $0x50] sm:$0xff] %vm404, %v4543
      %4576 = vst.msk [vmem:[#allocation6 + $0x58] sm:$0xff] %vm404, %v4544
      %4577 = vst.msk [vmem:[#allocation6 + $0x60] sm:$0xff] %vm404, %v4545
      %4578 = vst.msk [vmem:[#allocation6 + $0x68] sm:$0xff] %vm404, %v4546
      %4579 = vst.msk [vmem:[#allocation6 + $0x70] sm:$0xff] %vm404, %v4547
      %4580 = vst.msk [vmem:[#allocation6 + $0x78] sm:$0xff] %vm404, %v4548
      %4581 = vst.msk [vmem:[#allocation6 + $0x80] sm:$0xff] %vm404, %v4549
      %4582 = vst.msk [vmem:[#allocation6 + $0x88] sm:$0xff] %vm404, %v4550
      %4583 = vst.msk [vmem:[#allocation6 + $0x90] sm:$0xff] %vm404, %v4551
      %4584 = vst.msk [vmem:[#allocation6 + $0x98] sm:$0xff] %vm404, %v4552
      %4585 = vst.msk [vmem:[#allocation6 + $0xa0] sm:$0xff] %vm404, %v4553
      %4586 = vst.msk [vmem:[#allocation6 + $0xa8] sm:$0xff] %vm404, %v4554
      %4587 = vst.msk [vmem:[#allocation6 + $0xb0] sm:$0xff] %vm404, %v4555
      %4588 = vst.msk [vmem:[#allocation6 + $0xb8] sm:$0xff] %vm404, %v4556
      %4589 = vst.msk [vmem:[#allocation6 + $0xc0] sm:$0xff] %vm404, %v4557
      %4590 = vst.msk [vmem:[#allocation6 + $0xc8] sm:$0xff] %vm404, %v4558
      %4591 = vst.msk [vmem:[#allocation6 + $0xd0] sm:$0xff] %vm404, %v4559
      %4592 = vst.msk [vmem:[#allocation6 + $0xd8] sm:$0xff] %vm404, %v4560
      %4593 = vst.msk [vmem:[#allocation6 + $0xe0] sm:$0xff] %vm404, %v4561
      %4594 = vst.msk [vmem:[#allocation6 + $0xe8] sm:$0xff] %vm404, %v4562
      %4595 = vst.msk [vmem:[#allocation6 + $0xf0] sm:$0xff] %vm404, %v4563
      %4596 = vst.msk [vmem:[#allocation6 + $0xf8] sm:$0xff] %vm404, %v4564
      %v4597 = vld [vmem:[#allocation4 + $0x1] sm:$0xff]
      %v4598 = vld [vmem:[#allocation4 + $0x9] sm:$0xff]
      %v4599 = vld [vmem:[#allocation4 + $0x19] sm:$0xff]
      %v4600 = vld [vmem:[#allocation4 + $0x21] sm:$0xff]
      %v4601 = vld [vmem:[#allocation4 + $0x31] sm:$0xff]
      %v4602 = vld [vmem:[#allocation4 + $0x39] sm:$0xff]
      %v4603 = vld [vmem:[#allocation4 + $0x49] sm:$0xff]
      %v4604 = vld [vmem:[#allocation4 + $0x51] sm:$0xff]
      %v4605 = vld [vmem:[#allocation4 + $0x61] sm:$0xff]
      %v4606 = vld [vmem:[#allocation4 + $0x69] sm:$0xff]
      %v4607 = vld [vmem:[#allocation4 + $0x79] sm:$0xff]
      %v4608 = vld [vmem:[#allocation4 + $0x81] sm:$0xff]
      %v4609 = vld [vmem:[#allocation4 + $0x91] sm:$0xff]
      %v4610 = vld [vmem:[#allocation4 + $0x99] sm:$0xff]
      %v4611 = vld [vmem:[#allocation4 + $0xa9] sm:$0xff]
      %v4612 = vld [vmem:[#allocation4 + $0xb1] sm:$0xff]
      %v4613 = vld [vmem:[#allocation4 + $0xc1] sm:$0xff]
      %v4614 = vld [vmem:[#allocation4 + $0xc9] sm:$0xff]
      %v4615 = vld [vmem:[#allocation4 + $0xd9] sm:$0xff]
      %v4616 = vld [vmem:[#allocation4 + $0xe1] sm:$0xff]
      %v4617 = vld [vmem:[#allocation4 + $0xf1] sm:$0xff]
      %v4618 = vld [vmem:[#allocation4 + $0xf9] sm:$0xff]
      %v4619 = vld [vmem:[#allocation4 + $0x109] sm:$0xff]
      %v4620 = vld [vmem:[#allocation4 + $0x111] sm:$0xff]
      %v4621 = vld [vmem:[#allocation4 + $0x121] sm:$0xff]
      %v4622 = vld [vmem:[#allocation4 + $0x129] sm:$0xff]
      %v4623 = vld [vmem:[#allocation4 + $0x139] sm:$0xff]
      %v4624 = vld [vmem:[#allocation4 + $0x141] sm:$0xff]
      %v4625 = vld [vmem:[#allocation4 + $0x151] sm:$0xff]
      %v4626 = vld [vmem:[#allocation4 + $0x159] sm:$0xff]
      %v4627 = vld [vmem:[#allocation4 + $0x169] sm:$0xff]
      %v4628 = vld [vmem:[#allocation4 + $0x171] sm:$0xff]
      %4661 = vrot.lane.b32.xlu0 %v4597, 6
      %v4662 = vpop.permute.xlu0 %4661
      %4663 = vrot.lane.b32.xlu0 %v4598, 6
      %v4664 = vpop.permute.xlu0 %4663
      %4665 = vrot.lane.b32.xlu0 %v4599, 6
      %v4666 = vpop.permute.xlu0 %4665
      %4667 = vrot.lane.b32.xlu0 %v4600, 6
      %v4668 = vpop.permute.xlu0 %4667
      %4669 = vrot.lane.b32.xlu0 %v4601, 6
      %v4670 = vpop.permute.xlu0 %4669
      %4671 = vrot.lane.b32.xlu0 %v4602, 6
      %v4672 = vpop.permute.xlu0 %4671
      %4673 = vrot.lane.b32.xlu0 %v4603, 6
      %v4674 = vpop.permute.xlu0 %4673
      %4675 = vrot.lane.b32.xlu0 %v4604, 6
      %v4676 = vpop.permute.xlu0 %4675
      %4677 = vrot.lane.b32.xlu0 %v4605, 6
      %v4678 = vpop.permute.xlu0 %4677
      %4679 = vrot.lane.b32.xlu0 %v4606, 6
      %v4680 = vpop.permute.xlu0 %4679
      %4681 = vrot.lane.b32.xlu0 %v4607, 6
      %v4682 = vpop.permute.xlu0 %4681
      %4683 = vrot.lane.b32.xlu0 %v4608, 6
      %v4684 = vpop.permute.xlu0 %4683
      %4685 = vrot.lane.b32.xlu0 %v4609, 6
      %v4686 = vpop.permute.xlu0 %4685
      %4687 = vrot.lane.b32.xlu0 %v4610, 6
      %v4688 = vpop.permute.xlu0 %4687
      %4689 = vrot.lane.b32.xlu0 %v4611, 6
      %v4690 = vpop.permute.xlu0 %4689
      %4691 = vrot.lane.b32.xlu0 %v4612, 6
      %v4692 = vpop.permute.xlu0 %4691
      %4693 = vrot.lane.b32.xlu0 %v4613, 6
      %v4694 = vpop.permute.xlu0 %4693
      %4695 = vrot.lane.b32.xlu0 %v4614, 6
      %v4696 = vpop.permute.xlu0 %4695
      %4697 = vrot.lane.b32.xlu0 %v4615, 6
      %v4698 = vpop.permute.xlu0 %4697
      %4699 = vrot.lane.b32.xlu0 %v4616, 6
      %v4700 = vpop.permute.xlu0 %4699
      %4701 = vrot.lane.b32.xlu0 %v4617, 6
      %v4702 = vpop.permute.xlu0 %4701
      %4703 = vrot.lane.b32.xlu0 %v4618, 6
      %v4704 = vpop.permute.xlu0 %4703
      %4705 = vrot.lane.b32.xlu0 %v4619, 6
      %v4706 = vpop.permute.xlu0 %4705
      %4707 = vrot.lane.b32.xlu0 %v4620, 6
      %v4708 = vpop.permute.xlu0 %4707
      %4709 = vrot.lane.b32.xlu0 %v4621, 6
      %v4710 = vpop.permute.xlu0 %4709
      %4711 = vrot.lane.b32.xlu0 %v4622, 6
      %v4712 = vpop.permute.xlu0 %4711
      %4713 = vrot.lane.b32.xlu0 %v4623, 6
      %v4714 = vpop.permute.xlu0 %4713
      %4715 = vrot.lane.b32.xlu0 %v4624, 6
      %v4716 = vpop.permute.xlu0 %4715
      %4717 = vrot.lane.b32.xlu0 %v4625, 6
      %v4718 = vpop.permute.xlu0 %4717
      %4719 = vrot.lane.b32.xlu0 %v4626, 6
      %v4720 = vpop.permute.xlu0 %4719
      %4721 = vrot.lane.b32.xlu0 %v4627, 6
      %v4722 = vpop.permute.xlu0 %4721
      %4723 = vrot.lane.b32.xlu0 %v4628, 6
      %v4724 = vpop.permute.xlu0 %4723
      %vm4757 = vcmask 97328
      %4758 = vst.msk [vmem:[#allocation6] sm:$0xff] %vm4757, %v4662
      %4759 = vst.msk [vmem:[#allocation6 + $0x8] sm:$0xff] %vm4757, %v4664
      %4760 = vst.msk [vmem:[#allocation6 + $0x10] sm:$0xff] %vm4757, %v4666
      %4761 = vst.msk [vmem:[#allocation6 + $0x18] sm:$0xff] %vm4757, %v4668
      %4762 = vst.msk [vmem:[#allocation6 + $0x20] sm:$0xff] %vm4757, %v4670
      %4763 = vst.msk [vmem:[#allocation6 + $0x28] sm:$0xff] %vm4757, %v4672
      %4764 = vst.msk [vmem:[#allocation6 + $0x30] sm:$0xff] %vm4757, %v4674
      %4765 = vst.msk [vmem:[#allocation6 + $0x38] sm:$0xff] %vm4757, %v4676
      %4766 = vst.msk [vmem:[#allocation6 + $0x40] sm:$0xff] %vm4757, %v4678
      %4767 = vst.msk [vmem:[#allocation6 + $0x48] sm:$0xff] %vm4757, %v4680
      %4768 = vst.msk [vmem:[#allocation6 + $0x50] sm:$0xff] %vm4757, %v4682
      %4769 = vst.msk [vmem:[#allocation6 + $0x58] sm:$0xff] %vm4757, %v4684
      %4770 = vst.msk [vmem:[#allocation6 + $0x60] sm:$0xff] %vm4757, %v4686
      %4771 = vst.msk [vmem:[#allocation6 + $0x68] sm:$0xff] %vm4757, %v4688
      %4772 = vst.msk [vmem:[#allocation6 + $0x70] sm:$0xff] %vm4757, %v4690
      %4773 = vst.msk [vmem:[#allocation6 + $0x78] sm:$0xff] %vm4757, %v4692
      %4774 = vst.msk [vmem:[#allocation6 + $0x80] sm:$0xff] %vm4757, %v4694
      %4775 = vst.msk [vmem:[#allocation6 + $0x88] sm:$0xff] %vm4757, %v4696
      %4776 = vst.msk [vmem:[#allocation6 + $0x90] sm:$0xff] %vm4757, %v4698
      %4777 = vst.msk [vmem:[#allocation6 + $0x98] sm:$0xff] %vm4757, %v4700
      %4778 = vst.msk [vmem:[#allocation6 + $0xa0] sm:$0xff] %vm4757, %v4702
      %4779 = vst.msk [vmem:[#allocation6 + $0xa8] sm:$0xff] %vm4757, %v4704
      %4780 = vst.msk [vmem:[#allocation6 + $0xb0] sm:$0xff] %vm4757, %v4706
      %4781 = vst.msk [vmem:[#allocation6 + $0xb8] sm:$0xff] %vm4757, %v4708
      %4782 = vst.msk [vmem:[#allocation6 + $0xc0] sm:$0xff] %vm4757, %v4710
      %4783 = vst.msk [vmem:[#allocation6 + $0xc8] sm:$0xff] %vm4757, %v4712
      %4784 = vst.msk [vmem:[#allocation6 + $0xd0] sm:$0xff] %vm4757, %v4714
      %4785 = vst.msk [vmem:[#allocation6 + $0xd8] sm:$0xff] %vm4757, %v4716
      %4786 = vst.msk [vmem:[#allocation6 + $0xe0] sm:$0xff] %vm4757, %v4718
      %4787 = vst.msk [vmem:[#allocation6 + $0xe8] sm:$0xff] %vm4757, %v4720
      %4788 = vst.msk [vmem:[#allocation6 + $0xf0] sm:$0xff] %vm4757, %v4722
      %4789 = vst.msk [vmem:[#allocation6 + $0xf8] sm:$0xff] %vm4757, %v4724
      %v4790 = vld [vmem:[#allocation4 + $0x2] sm:$0xff]
      %v4791 = vld [vmem:[#allocation4 + $0xa] sm:$0xff]
      %v4792 = vld [vmem:[#allocation4 + $0x1a] sm:$0xff]
      %v4793 = vld [vmem:[#allocation4 + $0x22] sm:$0xff]
      %v4794 = vld [vmem:[#allocation4 + $0x32] sm:$0xff]
      %v4795 = vld [vmem:[#allocation4 + $0x3a] sm:$0xff]
      %v4796 = vld [vmem:[#allocation4 + $0x4a] sm:$0xff]
      %v4797 = vld [vmem:[#allocation4 + $0x52] sm:$0xff]
      %v4798 = vld [vmem:[#allocation4 + $0x62] sm:$0xff]
      %v4799 = vld [vmem:[#allocation4 + $0x6a] sm:$0xff]
      %v4800 = vld [vmem:[#allocation4 + $0x7a] sm:$0xff]
      %v4801 = vld [vmem:[#allocation4 + $0x82] sm:$0xff]
      %v4802 = vld [vmem:[#allocation4 + $0x92] sm:$0xff]
      %v4803 = vld [vmem:[#allocation4 + $0x9a] sm:$0xff]
      %v4804 = vld [vmem:[#allocation4 + $0xaa] sm:$0xff]
      %v4805 = vld [vmem:[#allocation4 + $0xb2] sm:$0xff]
      %v4806 = vld [vmem:[#allocation4 + $0xc2] sm:$0xff]
      %v4807 = vld [vmem:[#allocation4 + $0xca] sm:$0xff]
      %v4808 = vld [vmem:[#allocation4 + $0xda] sm:$0xff]
      %v4809 = vld [vmem:[#allocation4 + $0xe2] sm:$0xff]
      %v4810 = vld [vmem:[#allocation4 + $0xf2] sm:$0xff]
      %v4811 = vld [vmem:[#allocation4 + $0xfa] sm:$0xff]
      %v4812 = vld [vmem:[#allocation4 + $0x10a] sm:$0xff]
      %v4813 = vld [vmem:[#allocation4 + $0x112] sm:$0xff]
      %v4814 = vld [vmem:[#allocation4 + $0x122] sm:$0xff]
      %v4815 = vld [vmem:[#allocation4 + $0x12a] sm:$0xff]
      %v4816 = vld [vmem:[#allocation4 + $0x13a] sm:$0xff]
      %v4817 = vld [vmem:[#allocation4 + $0x142] sm:$0xff]
      %v4818 = vld [vmem:[#allocation4 + $0x152] sm:$0xff]
      %v4819 = vld [vmem:[#allocation4 + $0x15a] sm:$0xff]
      %v4820 = vld [vmem:[#allocation4 + $0x16a] sm:$0xff]
      %v4821 = vld [vmem:[#allocation4 + $0x172] sm:$0xff]
      %4854 = vrot.lane.b32.xlu0 %v4790, 12
      %v4855 = vpop.permute.xlu0 %4854
      %4856 = vrot.lane.b32.xlu0 %v4791, 12
      %v4857 = vpop.permute.xlu0 %4856
      %4858 = vrot.lane.b32.xlu0 %v4792, 12
      %v4859 = vpop.permute.xlu0 %4858
      %4860 = vrot.lane.b32.xlu0 %v4793, 12
      %v4861 = vpop.permute.xlu0 %4860
      %4862 = vrot.lane.b32.xlu0 %v4794, 12
      %v4863 = vpop.permute.xlu0 %4862
      %4864 = vrot.lane.b32.xlu0 %v4795, 12
      %v4865 = vpop.permute.xlu0 %4864
      %4866 = vrot.lane.b32.xlu0 %v4796, 12
      %v4867 = vpop.permute.xlu0 %4866
      %4868 = vrot.lane.b32.xlu0 %v4797, 12
      %v4869 = vpop.permute.xlu0 %4868
      %4870 = vrot.lane.b32.xlu0 %v4798, 12
      %v4871 = vpop.permute.xlu0 %4870
      %4872 = vrot.lane.b32.xlu0 %v4799, 12
      %v4873 = vpop.permute.xlu0 %4872
      %4874 = vrot.lane.b32.xlu0 %v4800, 12
      %v4875 = vpop.permute.xlu0 %4874
      %4876 = vrot.lane.b32.xlu0 %v4801, 12
      %v4877 = vpop.permute.xlu0 %4876
      %4878 = vrot.lane.b32.xlu0 %v4802, 12
      %v4879 = vpop.permute.xlu0 %4878
      %4880 = vrot.lane.b32.xlu0 %v4803, 12
      %v4881 = vpop.permute.xlu0 %4880
      %4882 = vrot.lane.b32.xlu0 %v4804, 12
      %v4883 = vpop.permute.xlu0 %4882
      %4884 = vrot.lane.b32.xlu0 %v4805, 12
      %v4885 = vpop.permute.xlu0 %4884
      %4886 = vrot.lane.b32.xlu0 %v4806, 12
      %v4887 = vpop.permute.xlu0 %4886
      %4888 = vrot.lane.b32.xlu0 %v4807, 12
      %v4889 = vpop.permute.xlu0 %4888
      %4890 = vrot.lane.b32.xlu0 %v4808, 12
      %v4891 = vpop.permute.xlu0 %4890
      %4892 = vrot.lane.b32.xlu0 %v4809, 12
      %v4893 = vpop.permute.xlu0 %4892
      %4894 = vrot.lane.b32.xlu0 %v4810, 12
      %v4895 = vpop.permute.xlu0 %4894
      %4896 = vrot.lane.b32.xlu0 %v4811, 12
      %v4897 = vpop.permute.xlu0 %4896
      %4898 = vrot.lane.b32.xlu0 %v4812, 12
      %v4899 = vpop.permute.xlu0 %4898
      %4900 = vrot.lane.b32.xlu0 %v4813, 12
      %v4901 = vpop.permute.xlu0 %4900
      %4902 = vrot.lane.b32.xlu0 %v4814, 12
      %v4903 = vpop.permute.xlu0 %4902
      %4904 = vrot.lane.b32.xlu0 %v4815, 12
      %v4905 = vpop.permute.xlu0 %4904
      %4906 = vrot.lane.b32.xlu0 %v4816, 12
      %v4907 = vpop.permute.xlu0 %4906
      %4908 = vrot.lane.b32.xlu0 %v4817, 12
      %v4909 = vpop.permute.xlu0 %4908
      %4910 = vrot.lane.b32.xlu0 %v4818, 12
      %v4911 = vpop.permute.xlu0 %4910
      %4912 = vrot.lane.b32.xlu0 %v4819, 12
      %v4913 = vpop.permute.xlu0 %4912
      %4914 = vrot.lane.b32.xlu0 %v4820, 12
      %v4915 = vpop.permute.xlu0 %4914
      %4916 = vrot.lane.b32.xlu0 %v4821, 12
      %v4917 = vpop.permute.xlu0 %4916
      %vm4950 = vcmask 146528
      %4951 = vst.msk [vmem:[#allocation6] sm:$0xff] %vm4950, %v4855
      %4952 = vst.msk [vmem:[#allocation6 + $0x8] sm:$0xff] %vm4950, %v4857
      %4953 = vst.msk [vmem:[#allocation6 + $0x10] sm:$0xff] %vm4950, %v4859
      %4954 = vst.msk [vmem:[#allocation6 + $0x18] sm:$0xff] %vm4950, %v4861
      %4955 = vst.msk [vmem:[#allocation6 + $0x20] sm:$0xff] %vm4950, %v4863
      %4956 = vst.msk [vmem:[#allocation6 + $0x28] sm:$0xff] %vm4950, %v4865
      %4957 = vst.msk [vmem:[#allocation6 + $0x30] sm:$0xff] %vm4950, %v4867
      %4958 = vst.msk [vmem:[#allocation6 + $0x38] sm:$0xff] %vm4950, %v4869
      %4959 = vst.msk [vmem:[#allocation6 + $0x40] sm:$0xff] %vm4950, %v4871
      %4960 = vst.msk [vmem:[#allocation6 + $0x48] sm:$0xff] %vm4950, %v4873
      %4961 = vst.msk [vmem:[#allocation6 + $0x50] sm:$0xff] %vm4950, %v4875
      %4962 = vst.msk [vmem:[#allocation6 + $0x58] sm:$0xff] %vm4950, %v4877
      %4963 = vst.msk [vmem:[#allocation6 + $0x60] sm:$0xff] %vm4950, %v4879
      %4964 = vst.msk [vmem:[#allocation6 + $0x68] sm:$0xff] %vm4950, %v4881
      %4965 = vst.msk [vmem:[#allocation6 + $0x70] sm:$0xff] %vm4950, %v4883
      %4966 = vst.msk [vmem:[#allocation6 + $0x78] sm:$0xff] %vm4950, %v4885
      %4967 = vst.msk [vmem:[#allocation6 + $0x80] sm:$0xff] %vm4950, %v4887
      %4968 = vst.msk [vmem:[#allocation6 + $0x88] sm:$0xff] %vm4950, %v4889
      %4969 = vst.msk [vmem:[#allocation6 + $0x90] sm:$0xff] %vm4950, %v4891
      %4970 = vst.msk [vmem:[#allocation6 + $0x98] sm:$0xff] %vm4950, %v4893
      %4971 = vst.msk [vmem:[#allocation6 + $0xa0] sm:$0xff] %vm4950, %v4895
      %4972 = vst.msk [vmem:[#allocation6 + $0xa8] sm:$0xff] %vm4950, %v4897
      %4973 = vst.msk [vmem:[#allocation6 + $0xb0] sm:$0xff] %vm4950, %v4899
      %4974 = vst.msk [vmem:[#allocation6 + $0xb8] sm:$0xff] %vm4950, %v4901
      %4975 = vst.msk [vmem:[#allocation6 + $0xc0] sm:$0xff] %vm4950, %v4903
      %4976 = vst.msk [vmem:[#allocation6 + $0xc8] sm:$0xff] %vm4950, %v4905
      %4977 = vst.msk [vmem:[#allocation6 + $0xd0] sm:$0xff] %vm4950, %v4907
      %4978 = vst.msk [vmem:[#allocation6 + $0xd8] sm:$0xff] %vm4950, %v4909
      %4979 = vst.msk [vmem:[#allocation6 + $0xe0] sm:$0xff] %vm4950, %v4911
      %4980 = vst.msk [vmem:[#allocation6 + $0xe8] sm:$0xff] %vm4950, %v4913
      %4981 = vst.msk [vmem:[#allocation6 + $0xf0] sm:$0xff] %vm4950, %v4915
      %4982 = vst.msk [vmem:[#allocation6 + $0xf8] sm:$0xff] %vm4950, %v4917
      %v4983 = vld [vmem:[%s460] sm:$0xff]
      %v4984 = vld [vmem:[%s460 + $0x8] sm:$0xff]
      %v4985 = vld [vmem:[%s460 + $0x18] sm:$0xff]
      %v4986 = vld [vmem:[%s460 + $0x20] sm:$0xff]
      %v4987 = vld [vmem:[%s460 + $0x30] sm:$0xff]
      %v4988 = vld [vmem:[%s460 + $0x38] sm:$0xff]
      %v4989 = vld [vmem:[%s460 + $0x48] sm:$0xff]
      %v4990 = vld [vmem:[%s460 + $0x50] sm:$0xff]
      %v4991 = vld [vmem:[%s460 + $0x60] sm:$0xff]
      %v4992 = vld [vmem:[%s460 + $0x68] sm:$0xff]
      %v4993 = vld [vmem:[%s460 + $0x78] sm:$0xff]
      %v4994 = vld [vmem:[%s460 + $0x80] sm:$0xff]
      %v4995 = vld [vmem:[%s460 + $0x90] sm:$0xff]
      %v4996 = vld [vmem:[%s460 + $0x98] sm:$0xff]
      %v4997 = vld [vmem:[%s460 + $0xa8] sm:$0xff]
      %v4998 = vld [vmem:[%s460 + $0xb0] sm:$0xff]
      %v4999 = vld [vmem:[%s460 + $0xc0] sm:$0xff]
      %v5000 = vld [vmem:[%s460 + $0xc8] sm:$0xff]
      %v5001 = vld [vmem:[%s460 + $0xd8] sm:$0xff]
      %v5002 = vld [vmem:[%s460 + $0xe0] sm:$0xff]
      %v5003 = vld [vmem:[%s460 + $0xf0] sm:$0xff]
      %v5004 = vld [vmem:[%s460 + $0xf8] sm:$0xff]
      %v5005 = vld [vmem:[%s460 + $0x108] sm:$0xff]
      %v5006 = vld [vmem:[%s460 + $0x110] sm:$0xff]
      %v5007 = vld [vmem:[%s460 + $0x120] sm:$0xff]
      %v5008 = vld [vmem:[%s460 + $0x128] sm:$0xff]
      %v5009 = vld [vmem:[%s460 + $0x138] sm:$0xff]
      %v5010 = vld [vmem:[%s460 + $0x140] sm:$0xff]
      %v5011 = vld [vmem:[%s460 + $0x150] sm:$0xff]
      %v5012 = vld [vmem:[%s460 + $0x158] sm:$0xff]
      %v5013 = vld [vmem:[%s460 + $0x168] sm:$0xff]
      %v5014 = vld [vmem:[%s460 + $0x170] sm:$0xff]
      %5047 = vrot.lane.b32.xlu0 %v4983, 18
      %v5048 = vpop.permute.xlu0 %5047
      %5049 = vrot.lane.b32.xlu0 %v4984, 18
      %v5050 = vpop.permute.xlu0 %5049
      %5051 = vrot.lane.b32.xlu0 %v4985, 18
      %v5052 = vpop.permute.xlu0 %5051
      %5053 = vrot.lane.b32.xlu0 %v4986, 18
      %v5054 = vpop.permute.xlu0 %5053
      %5055 = vrot.lane.b32.xlu0 %v4987, 18
      %v5056 = vpop.permute.xlu0 %5055
      %5057 = vrot.lane.b32.xlu0 %v4988, 18
      %v5058 = vpop.permute.xlu0 %5057
      %5059 = vrot.lane.b32.xlu0 %v4989, 18
      %v5060 = vpop.permute.xlu0 %5059
      %5061 = vrot.lane.b32.xlu0 %v4990, 18
      %v5062 = vpop.permute.xlu0 %5061
      %5063 = vrot.lane.b32.xlu0 %v4991, 18
      %v5064 = vpop.permute.xlu0 %5063
      %5065 = vrot.lane.b32.xlu0 %v4992, 18
      %v5066 = vpop.permute.xlu0 %5065
      %5067 = vrot.lane.b32.xlu0 %v4993, 18
      %v5068 = vpop.permute.xlu0 %5067
      %5069 = vrot.lane.b32.xlu0 %v4994, 18
      %v5070 = vpop.permute.xlu0 %5069
      %5071 = vrot.lane.b32.xlu0 %v4995, 18
      %v5072 = vpop.permute.xlu0 %5071
      %5073 = vrot.lane.b32.xlu0 %v4996, 18
      %v5074 = vpop.permute.xlu0 %5073
      %5075 = vrot.lane.b32.xlu0 %v4997, 18
      %v5076 = vpop.permute.xlu0 %5075
      %5077 = vrot.lane.b32.xlu0 %v4998, 18
      %v5078 = vpop.permute.xlu0 %5077
      %5079 = vrot.lane.b32.xlu0 %v4999, 18
      %v5080 = vpop.permute.xlu0 %5079
      %5081 = vrot.lane.b32.xlu0 %v5000, 18
      %v5082 = vpop.permute.xlu0 %5081
      %5083 = vrot.lane.b32.xlu0 %v5001, 18
      %v5084 = vpop.permute.xlu0 %5083
      %5085 = vrot.lane.b32.xlu0 %v5002, 18
      %v5086 = vpop.permute.xlu0 %5085
      %5087 = vrot.lane.b32.xlu0 %v5003, 18
      %v5088 = vpop.permute.xlu0 %5087
      %5089 = vrot.lane.b32.xlu0 %v5004, 18
      %v5090 = vpop.permute.xlu0 %5089
      %5091 = vrot.lane.b32.xlu0 %v5005, 18
      %v5092 = vpop.permute.xlu0 %5091
      %5093 = vrot.lane.b32.xlu0 %v5006, 18
      %v5094 = vpop.permute.xlu0 %5093
      %5095 = vrot.lane.b32.xlu0 %v5007, 18
      %v5096 = vpop.permute.xlu0 %5095
      %5097 = vrot.lane.b32.xlu0 %v5008, 18
      %v5098 = vpop.permute.xlu0 %5097
      %5099 = vrot.lane.b32.xlu0 %v5009, 18
      %v5100 = vpop.permute.xlu0 %5099
      %5101 = vrot.lane.b32.xlu0 %v5010, 18
      %v5102 = vpop.permute.xlu0 %5101
      %5103 = vrot.lane.b32.xlu0 %v5011, 18
      %v5104 = vpop.permute.xlu0 %5103
      %5105 = vrot.lane.b32.xlu0 %v5012, 18
      %v5106 = vpop.permute.xlu0 %5105
      %5107 = vrot.lane.b32.xlu0 %v5013, 18
      %v5108 = vpop.permute.xlu0 %5107
      %5109 = vrot.lane.b32.xlu0 %v5014, 18
      %v5110 = vpop.permute.xlu0 %5109
      %vm5143 = vcmask 195728
      %5144 = vst.msk [vmem:[#allocation6] sm:$0xff] %vm5143, %v5048
      %5145 = vst.msk [vmem:[#allocation6 + $0x8] sm:$0xff] %vm5143, %v5050
      %5146 = vst.msk [vmem:[#allocation6 + $0x10] sm:$0xff] %vm5143, %v5052
      %5147 = vst.msk [vmem:[#allocation6 + $0x18] sm:$0xff] %vm5143, %v5054
      %5148 = vst.msk [vmem:[#allocation6 + $0x20] sm:$0xff] %vm5143, %v5056
      %5149 = vst.msk [vmem:[#allocation6 + $0x28] sm:$0xff] %vm5143, %v5058
      %5150 = vst.msk [vmem:[#allocation6 + $0x30] sm:$0xff] %vm5143, %v5060
      %5151 = vst.msk [vmem:[#allocation6 + $0x38] sm:$0xff] %vm5143, %v5062
      %5152 = vst.msk [vmem:[#allocation6 + $0x40] sm:$0xff] %vm5143, %v5064
      %5153 = vst.msk [vmem:[#allocation6 + $0x48] sm:$0xff] %vm5143, %v5066
      %5154 = vst.msk [vmem:[#allocation6 + $0x50] sm:$0xff] %vm5143, %v5068
      %5155 = vst.msk [vmem:[#allocation6 + $0x58] sm:$0xff] %vm5143, %v5070
      %5156 = vst.msk [vmem:[#allocation6 + $0x60] sm:$0xff] %vm5143, %v5072
      %5157 = vst.msk [vmem:[#allocation6 + $0x68] sm:$0xff] %vm5143, %v5074
      %5158 = vst.msk [vmem:[#allocation6 + $0x70] sm:$0xff] %vm5143, %v5076
      %5159 = vst.msk [vmem:[#allocation6 + $0x78] sm:$0xff] %vm5143, %v5078
      %5160 = vst.msk [vmem:[#allocation6 + $0x80] sm:$0xff] %vm5143, %v5080
      %5161 = vst.msk [vmem:[#allocation6 + $0x88] sm:$0xff] %vm5143, %v5082
      %5162 = vst.msk [vmem:[#allocation6 + $0x90] sm:$0xff] %vm5143, %v5084
      %5163 = vst.msk [vmem:[#allocation6 + $0x98] sm:$0xff] %vm5143, %v5086
      %5164 = vst.msk [vmem:[#allocation6 + $0xa0] sm:$0xff] %vm5143, %v5088
      %5165 = vst.msk [vmem:[#allocation6 + $0xa8] sm:$0xff] %vm5143, %v5090
      %5166 = vst.msk [vmem:[#allocation6 + $0xb0] sm:$0xff] %vm5143, %v5092
      %5167 = vst.msk [vmem:[#allocation6 + $0xb8] sm:$0xff] %vm5143, %v5094
      %5168 = vst.msk [vmem:[#allocation6 + $0xc0] sm:$0xff] %vm5143, %v5096
      %5169 = vst.msk [vmem:[#allocation6 + $0xc8] sm:$0xff] %vm5143, %v5098
      %5170 = vst.msk [vmem:[#allocation6 + $0xd0] sm:$0xff] %vm5143, %v5100
      %5171 = vst.msk [vmem:[#allocation6 + $0xd8] sm:$0xff] %vm5143, %v5102
      %5172 = vst.msk [vmem:[#allocation6 + $0xe0] sm:$0xff] %vm5143, %v5104
      %5173 = vst.msk [vmem:[#allocation6 + $0xe8] sm:$0xff] %vm5143, %v5106
      %5174 = vst.msk [vmem:[#allocation6 + $0xf0] sm:$0xff] %vm5143, %v5108
      %5175 = vst.msk [vmem:[#allocation6 + $0xf8] sm:$0xff] %vm5143, %v5110
      %v5176 = vld [vmem:[%s460 + $0x1] sm:$0xff]
      %v5177 = vld [vmem:[%s460 + $0x9] sm:$0xff]
      %v5178 = vld [vmem:[%s460 + $0x19] sm:$0xff]
      %v5179 = vld [vmem:[%s460 + $0x21] sm:$0xff]
      %v5180 = vld [vmem:[%s460 + $0x31] sm:$0xff]
      %v5181 = vld [vmem:[%s460 + $0x39] sm:$0xff]
      %v5182 = vld [vmem:[%s460 + $0x49] sm:$0xff]
      %v5183 = vld [vmem:[%s460 + $0x51] sm:$0xff]
      %v5184 = vld [vmem:[%s460 + $0x61] sm:$0xff]
      %v5185 = vld [vmem:[%s460 + $0x69] sm:$0xff]
      %v5186 = vld [vmem:[%s460 + $0x79] sm:$0xff]
      %v5187 = vld [vmem:[%s460 + $0x81] sm:$0xff]
      %v5188 = vld [vmem:[%s460 + $0x91] sm:$0xff]
      %v5189 = vld [vmem:[%s460 + $0x99] sm:$0xff]
      %v5190 = vld [vmem:[%s460 + $0xa9] sm:$0xff]
      %v5191 = vld [vmem:[%s460 + $0xb1] sm:$0xff]
      %v5192 = vld [vmem:[%s460 + $0xc1] sm:$0xff]
      %v5193 = vld [vmem:[%s460 + $0xc9] sm:$0xff]
      %v5194 = vld [vmem:[%s460 + $0xd9] sm:$0xff]
      %v5195 = vld [vmem:[%s460 + $0xe1] sm:$0xff]
      %v5196 = vld [vmem:[%s460 + $0xf1] sm:$0xff]
      %v5197 = vld [vmem:[%s460 + $0xf9] sm:$0xff]
      %v5198 = vld [vmem:[%s460 + $0x109] sm:$0xff]
      %v5199 = vld [vmem:[%s460 + $0x111] sm:$0xff]
      %v5200 = vld [vmem:[%s460 + $0x121] sm:$0xff]
      %v5201 = vld [vmem:[%s460 + $0x129] sm:$0xff]
      %v5202 = vld [vmem:[%s460 + $0x139] sm:$0xff]
      %v5203 = vld [vmem:[%s460 + $0x141] sm:$0xff]
      %v5204 = vld [vmem:[%s460 + $0x151] sm:$0xff]
      %v5205 = vld [vmem:[%s460 + $0x159] sm:$0xff]
      %v5206 = vld [vmem:[%s460 + $0x169] sm:$0xff]
      %v5207 = vld [vmem:[%s460 + $0x171] sm:$0xff]
      %5240 = vrot.lane.b32.xlu0 %v5176, 24
      %v5241 = vpop.permute.xlu0 %5240
      %5242 = vrot.lane.b32.xlu0 %v5177, 24
      %v5243 = vpop.permute.xlu0 %5242
      %5244 = vrot.lane.b32.xlu0 %v5178, 24
      %v5245 = vpop.permute.xlu0 %5244
      %5246 = vrot.lane.b32.xlu0 %v5179, 24
      %v5247 = vpop.permute.xlu0 %5246
      %5248 = vrot.lane.b32.xlu0 %v5180, 24
      %v5249 = vpop.permute.xlu0 %5248
      %5250 = vrot.lane.b32.xlu0 %v5181, 24
      %v5251 = vpop.permute.xlu0 %5250
      %5252 = vrot.lane.b32.xlu0 %v5182, 24
      %v5253 = vpop.permute.xlu0 %5252
      %5254 = vrot.lane.b32.xlu0 %v5183, 24
      %v5255 = vpop.permute.xlu0 %5254
      %5256 = vrot.lane.b32.xlu0 %v5184, 24
      %v5257 = vpop.permute.xlu0 %5256
      %5258 = vrot.lane.b32.xlu0 %v5185, 24
      %v5259 = vpop.permute.xlu0 %5258
      %5260 = vrot.lane.b32.xlu0 %v5186, 24
      %v5261 = vpop.permute.xlu0 %5260
      %5262 = vrot.lane.b32.xlu0 %v5187, 24
      %v5263 = vpop.permute.xlu0 %5262
      %5264 = vrot.lane.b32.xlu0 %v5188, 24
      %v5265 = vpop.permute.xlu0 %5264
      %5266 = vrot.lane.b32.xlu0 %v5189, 24
      %v5267 = vpop.permute.xlu0 %5266
      %5268 = vrot.lane.b32.xlu0 %v5190, 24
      %v5269 = vpop.permute.xlu0 %5268
      %5270 = vrot.lane.b32.xlu0 %v5191, 24
      %v5271 = vpop.permute.xlu0 %5270
      %5272 = vrot.lane.b32.xlu0 %v5192, 24
      %v5273 = vpop.permute.xlu0 %5272
      %5274 = vrot.lane.b32.xlu0 %v5193, 24
      %v5275 = vpop.permute.xlu0 %5274
      %5276 = vrot.lane.b32.xlu0 %v5194, 24
      %v5277 = vpop.permute.xlu0 %5276
      %5278 = vrot.lane.b32.xlu0 %v5195, 24
      %v5279 = vpop.permute.xlu0 %5278
      %5280 = vrot.lane.b32.xlu0 %v5196, 24
      %v5281 = vpop.permute.xlu0 %5280
      %5282 = vrot.lane.b32.xlu0 %v5197, 24
      %v5283 = vpop.permute.xlu0 %5282
      %5284 = vrot.lane.b32.xlu0 %v5198, 24
      %v5285 = vpop.permute.xlu0 %5284
      %5286 = vrot.lane.b32.xlu0 %v5199, 24
      %v5287 = vpop.permute.xlu0 %5286
      %5288 = vrot.lane.b32.xlu0 %v5200, 24
      %v5289 = vpop.permute.xlu0 %5288
      %5290 = vrot.lane.b32.xlu0 %v5201, 24
      %v5291 = vpop.permute.xlu0 %5290
      %5292 = vrot.lane.b32.xlu0 %v5202, 24
      %v5293 = vpop.permute.xlu0 %5292
      %5294 = vrot.lane.b32.xlu0 %v5203, 24
      %v5295 = vpop.permute.xlu0 %5294
      %5296 = vrot.lane.b32.xlu0 %v5204, 24
      %v5297 = vpop.permute.xlu0 %5296
      %5298 = vrot.lane.b32.xlu0 %v5205, 24
      %v5299 = vpop.permute.xlu0 %5298
      %5300 = vrot.lane.b32.xlu0 %v5206, 24
      %v5301 = vpop.permute.xlu0 %5300
      %5302 = vrot.lane.b32.xlu0 %v5207, 24
      %v5303 = vpop.permute.xlu0 %5302
      %vm5336 = vcmask 244928
      %5337 = vst.msk [vmem:[#allocation6] sm:$0xff] %vm5336, %v5241
      %5338 = vst.msk [vmem:[#allocation6 + $0x8] sm:$0xff] %vm5336, %v5243
      %5339 = vst.msk [vmem:[#allocation6 + $0x10] sm:$0xff] %vm5336, %v5245
      %5340 = vst.msk [vmem:[#allocation6 + $0x18] sm:$0xff] %vm5336, %v5247
      %5341 = vst.msk [vmem:[#allocation6 + $0x20] sm:$0xff] %vm5336, %v5249
      %5342 = vst.msk [vmem:[#allocation6 + $0x28] sm:$0xff] %vm5336, %v5251
      %5343 = vst.msk [vmem:[#allocation6 + $0x30] sm:$0xff] %vm5336, %v5253
      %5344 = vst.msk [vmem:[#allocation6 + $0x38] sm:$0xff] %vm5336, %v5255
      %5345 = vst.msk [vmem:[#allocation6 + $0x40] sm:$0xff] %vm5336, %v5257
      %5346 = vst.msk [vmem:[#allocation6 + $0x48] sm:$0xff] %vm5336, %v5259
      %5347 = vst.msk [vmem:[#allocation6 + $0x50] sm:$0xff] %vm5336, %v5261
      %5348 = vst.msk [vmem:[#allocation6 + $0x58] sm:$0xff] %vm5336, %v5263
      %5349 = vst.msk [vmem:[#allocation6 + $0x60] sm:$0xff] %vm5336, %v5265
      %5350 = vst.msk [vmem:[#allocation6 + $0x68] sm:$0xff] %vm5336, %v5267
      %5351 = vst.msk [vmem:[#allocation6 + $0x70] sm:$0xff] %vm5336, %v5269
      %5352 = vst.msk [vmem:[#allocation6 + $0x78] sm:$0xff] %vm5336, %v5271
      %5353 = vst.msk [vmem:[#allocation6 + $0x80] sm:$0xff] %vm5336, %v5273
      %5354 = vst.msk [vmem:[#allocation6 + $0x88] sm:$0xff] %vm5336, %v5275
      %5355 = vst.msk [vmem:[#allocation6 + $0x90] sm:$0xff] %vm5336, %v5277
      %5356 = vst.msk [vmem:[#allocation6 + $0x98] sm:$0xff] %vm5336, %v5279
      %5357 = vst.msk [vmem:[#allocation6 + $0xa0] sm:$0xff] %vm5336, %v5281
      %5358 = vst.msk [vmem:[#allocation6 + $0xa8] sm:$0xff] %vm5336, %v5283
      %5359 = vst.msk [vmem:[#allocation6 + $0xb0] sm:$0xff] %vm5336, %v5285
      %5360 = vst.msk [vmem:[#allocation6 + $0xb8] sm:$0xff] %vm5336, %v5287
      %5361 = vst.msk [vmem:[#allocation6 + $0xc0] sm:$0xff] %vm5336, %v5289
      %5362 = vst.msk [vmem:[#allocation6 + $0xc8] sm:$0xff] %vm5336, %v5291
      %5363 = vst.msk [vmem:[#allocation6 + $0xd0] sm:$0xff] %vm5336, %v5293
      %5364 = vst.msk [vmem:[#allocation6 + $0xd8] sm:$0xff] %vm5336, %v5295
      %5365 = vst.msk [vmem:[#allocation6 + $0xe0] sm:$0xff] %vm5336, %v5297
      %5366 = vst.msk [vmem:[#allocation6 + $0xe8] sm:$0xff] %vm5336, %v5299
      %5367 = vst.msk [vmem:[#allocation6 + $0xf0] sm:$0xff] %vm5336, %v5301
      %5368 = vst.msk [vmem:[#allocation6 + $0xf8] sm:$0xff] %vm5336, %v5303
      %v5369 = vld [vmem:[%s460 + $0x2] sm:$0xff]
      %v5370 = vld [vmem:[%s460 + $0xa] sm:$0xff]
      %v5371 = vld [vmem:[%s460 + $0x1a] sm:$0xff]
      %v5372 = vld [vmem:[%s460 + $0x22] sm:$0xff]
      %v5373 = vld [vmem:[%s460 + $0x32] sm:$0xff]
      %v5374 = vld [vmem:[%s460 + $0x3a] sm:$0xff]
      %v5375 = vld [vmem:[%s460 + $0x4a] sm:$0xff]
      %v5376 = vld [vmem:[%s460 + $0x52] sm:$0xff]
      %v5377 = vld [vmem:[%s460 + $0x62] sm:$0xff]
      %v5378 = vld [vmem:[%s460 + $0x6a] sm:$0xff]
      %v5379 = vld [vmem:[%s460 + $0x7a] sm:$0xff]
      %v5380 = vld [vmem:[%s460 + $0x82] sm:$0xff]
      %v5381 = vld [vmem:[%s460 + $0x92] sm:$0xff]
      %v5382 = vld [vmem:[%s460 + $0x9a] sm:$0xff]
      %v5383 = vld [vmem:[%s460 + $0xaa] sm:$0xff]
      %v5384 = vld [vmem:[%s460 + $0xb2] sm:$0xff]
      %v5385 = vld [vmem:[%s460 + $0xc2] sm:$0xff]
      %v5386 = vld [vmem:[%s460 + $0xca] sm:$0xff]
      %v5387 = vld [vmem:[%s460 + $0xda] sm:$0xff]
      %v5388 = vld [vmem:[%s460 + $0xe2] sm:$0xff]
      %v5389 = vld [vmem:[%s460 + $0xf2] sm:$0xff]
      %v5390 = vld [vmem:[%s460 + $0xfa] sm:$0xff]
      %v5391 = vld [vmem:[%s460 + $0x10a] sm:$0xff]
      %v5392 = vld [vmem:[%s460 + $0x112] sm:$0xff]
      %v5393 = vld [vmem:[%s460 + $0x122] sm:$0xff]
      %v5394 = vld [vmem:[%s460 + $0x12a] sm:$0xff]
      %v5395 = vld [vmem:[%s460 + $0x13a] sm:$0xff]
      %v5396 = vld [vmem:[%s460 + $0x142] sm:$0xff]
      %v5397 = vld [vmem:[%s460 + $0x152] sm:$0xff]
      %v5398 = vld [vmem:[%s460 + $0x15a] sm:$0xff]
      %v5399 = vld [vmem:[%s460 + $0x16a] sm:$0xff]
      %v5400 = vld [vmem:[%s460 + $0x172] sm:$0xff]
      %5433 = vrot.lane.b32.xlu0 %v5369, 30
      %v5434 = vpop.permute.xlu0 %5433
      %5435 = vrot.lane.b32.xlu0 %v5370, 30
      %v5436 = vpop.permute.xlu0 %5435
      %5437 = vrot.lane.b32.xlu0 %v5371, 30
      %v5438 = vpop.permute.xlu0 %5437
      %5439 = vrot.lane.b32.xlu0 %v5372, 30
      %v5440 = vpop.permute.xlu0 %5439
      %5441 = vrot.lane.b32.xlu0 %v5373, 30
      %v5442 = vpop.permute.xlu0 %5441
      %5443 = vrot.lane.b32.xlu0 %v5374, 30
      %v5444 = vpop.permute.xlu0 %5443
      %5445 = vrot.lane.b32.xlu0 %v5375, 30
      %v5446 = vpop.permute.xlu0 %5445
      %5447 = vrot.lane.b32.xlu0 %v5376, 30
      %v5448 = vpop.permute.xlu0 %5447
      %5449 = vrot.lane.b32.xlu0 %v5377, 30
      %v5450 = vpop.permute.xlu0 %5449
      %5451 = vrot.lane.b32.xlu0 %v5378, 30
      %v5452 = vpop.permute.xlu0 %5451
      %5453 = vrot.lane.b32.xlu0 %v5379, 30
      %v5454 = vpop.permute.xlu0 %5453
      %5455 = vrot.lane.b32.xlu0 %v5380, 30
      %v5456 = vpop.permute.xlu0 %5455
      %5457 = vrot.lane.b32.xlu0 %v5381, 30
      %v5458 = vpop.permute.xlu0 %5457
      %5459 = vrot.lane.b32.xlu0 %v5382, 30
      %v5460 = vpop.permute.xlu0 %5459
      %5461 = vrot.lane.b32.xlu0 %v5383, 30
      %v5462 = vpop.permute.xlu0 %5461
      %5463 = vrot.lane.b32.xlu0 %v5384, 30
      %v5464 = vpop.permute.xlu0 %5463
      %5465 = vrot.lane.b32.xlu0 %v5385, 30
      %v5466 = vpop.permute.xlu0 %5465
      %5467 = vrot.lane.b32.xlu0 %v5386, 30
      %v5468 = vpop.permute.xlu0 %5467
      %5469 = vrot.lane.b32.xlu0 %v5387, 30
      %v5470 = vpop.permute.xlu0 %5469
      %5471 = vrot.lane.b32.xlu0 %v5388, 30
      %v5472 = vpop.permute.xlu0 %5471
      %5473 = vrot.lane.b32.xlu0 %v5389, 30
      %v5474 = vpop.permute.xlu0 %5473
      %5475 = vrot.lane.b32.xlu0 %v5390, 30
      %v5476 = vpop.permute.xlu0 %5475
      %5477 = vrot.lane.b32.xlu0 %v5391, 30
      %v5478 = vpop.permute.xlu0 %5477
      %5479 = vrot.lane.b32.xlu0 %v5392, 30
      %v5480 = vpop.permute.xlu0 %5479
      %5481 = vrot.lane.b32.xlu0 %v5393, 30
      %v5482 = vpop.permute.xlu0 %5481
      %5483 = vrot.lane.b32.xlu0 %v5394, 30
      %v5484 = vpop.permute.xlu0 %5483
      %5485 = vrot.lane.b32.xlu0 %v5395, 30
      %v5486 = vpop.permute.xlu0 %5485
      %5487 = vrot.lane.b32.xlu0 %v5396, 30
      %v5488 = vpop.permute.xlu0 %5487
      %5489 = vrot.lane.b32.xlu0 %v5397, 30
      %v5490 = vpop.permute.xlu0 %5489
      %5491 = vrot.lane.b32.xlu0 %v5398, 30
      %v5492 = vpop.permute.xlu0 %5491
      %5493 = vrot.lane.b32.xlu0 %v5399, 30
      %v5494 = vpop.permute.xlu0 %5493
      %5495 = vrot.lane.b32.xlu0 %v5400, 30
      %v5496 = vpop.permute.xlu0 %5495
      %vm5529 = vcmask 294128
      %5530 = vst.msk [vmem:[#allocation6] sm:$0xff] %vm5529, %v5434
      %5531 = vst.msk [vmem:[#allocation6 + $0x8] sm:$0xff] %vm5529, %v5436
      %5532 = vst.msk [vmem:[#allocation6 + $0x10] sm:$0xff] %vm5529, %v5438
      %5533 = vst.msk [vmem:[#allocation6 + $0x18] sm:$0xff] %vm5529, %v5440
      %5534 = vst.msk [vmem:[#allocation6 + $0x20] sm:$0xff] %vm5529, %v5442
      %5535 = vst.msk [vmem:[#allocation6 + $0x28] sm:$0xff] %vm5529, %v5444
      %5536 = vst.msk [vmem:[#allocation6 + $0x30] sm:$0xff] %vm5529, %v5446
      %5537 = vst.msk [vmem:[#allocation6 + $0x38] sm:$0xff] %vm5529, %v5448
      %5538 = vst.msk [vmem:[#allocation6 + $0x40] sm:$0xff] %vm5529, %v5450
      %5539 = vst.msk [vmem:[#allocation6 + $0x48] sm:$0xff] %vm5529, %v5452
      %5540 = vst.msk [vmem:[#allocation6 + $0x50] sm:$0xff] %vm5529, %v5454
      %5541 = vst.msk [vmem:[#allocation6 + $0x58] sm:$0xff] %vm5529, %v5456
      %5542 = vst.msk [vmem:[#allocation6 + $0x60] sm:$0xff] %vm5529, %v5458
      %5543 = vst.msk [vmem:[#allocation6 + $0x68] sm:$0xff] %vm5529, %v5460
      %5544 = vst.msk [vmem:[#allocation6 + $0x70] sm:$0xff] %vm5529, %v5462
      %5545 = vst.msk [vmem:[#allocation6 + $0x78] sm:$0xff] %vm5529, %v5464
      %5546 = vst.msk [vmem:[#allocation6 + $0x80] sm:$0xff] %vm5529, %v5466
      %5547 = vst.msk [vmem:[#allocation6 + $0x88] sm:$0xff] %vm5529, %v5468
      %5548 = vst.msk [vmem:[#allocation6 + $0x90] sm:$0xff] %vm5529, %v5470
      %5549 = vst.msk [vmem:[#allocation6 + $0x98] sm:$0xff] %vm5529, %v5472
      %5550 = vst.msk [vmem:[#allocation6 + $0xa0] sm:$0xff] %vm5529, %v5474
      %5551 = vst.msk [vmem:[#allocation6 + $0xa8] sm:$0xff] %vm5529, %v5476
      %5552 = vst.msk [vmem:[#allocation6 + $0xb0] sm:$0xff] %vm5529, %v5478
      %5553 = vst.msk [vmem:[#allocation6 + $0xb8] sm:$0xff] %vm5529, %v5480
      %5554 = vst.msk [vmem:[#allocation6 + $0xc0] sm:$0xff] %vm5529, %v5482
      %5555 = vst.msk [vmem:[#allocation6 + $0xc8] sm:$0xff] %vm5529, %v5484
      %5556 = vst.msk [vmem:[#allocation6 + $0xd0] sm:$0xff] %vm5529, %v5486
      %5557 = vst.msk [vmem:[#allocation6 + $0xd8] sm:$0xff] %vm5529, %v5488
      %5558 = vst.msk [vmem:[#allocation6 + $0xe0] sm:$0xff] %vm5529, %v5490
      %5559 = vst.msk [vmem:[#allocation6 + $0xe8] sm:$0xff] %vm5529, %v5492
      %5560 = vst.msk [vmem:[#allocation6 + $0xf0] sm:$0xff] %vm5529, %v5494
      %5561 = vst.msk [vmem:[#allocation6 + $0xf8] sm:$0xff] %vm5529, %v5496
      %s5562 = scalar_lea.vmem [#allocation4], 48
      %v5563 = vld [vmem:[%s5562] sm:$0xff]
      %v5564 = vld [vmem:[%s5562 + $0x8] sm:$0xff]
      %v5565 = vld [vmem:[%s5562 + $0x18] sm:$0xff]
      %v5566 = vld [vmem:[%s5562 + $0x20] sm:$0xff]
      %v5567 = vld [vmem:[%s5562 + $0x30] sm:$0xff]
      %v5568 = vld [vmem:[%s5562 + $0x38] sm:$0xff]
      %v5569 = vld [vmem:[%s5562 + $0x48] sm:$0xff]
      %v5570 = vld [vmem:[%s5562 + $0x50] sm:$0xff]
      %v5571 = vld [vmem:[%s5562 + $0x60] sm:$0xff]
      %v5572 = vld [vmem:[%s5562 + $0x68] sm:$0xff]
      %v5573 = vld [vmem:[%s5562 + $0x78] sm:$0xff]
      %v5574 = vld [vmem:[%s5562 + $0x80] sm:$0xff]
      %v5575 = vld [vmem:[%s5562 + $0x90] sm:$0xff]
      %v5576 = vld [vmem:[%s5562 + $0x98] sm:$0xff]
      %v5577 = vld [vmem:[%s5562 + $0xa8] sm:$0xff]
      %v5578 = vld [vmem:[%s5562 + $0xb0] sm:$0xff]
      %v5579 = vld [vmem:[%s5562 + $0xc0] sm:$0xff]
      %v5580 = vld [vmem:[%s5562 + $0xc8] sm:$0xff]
      %v5581 = vld [vmem:[%s5562 + $0xd8] sm:$0xff]
      %v5582 = vld [vmem:[%s5562 + $0xe0] sm:$0xff]
      %v5583 = vld [vmem:[%s5562 + $0xf0] sm:$0xff]
      %v5584 = vld [vmem:[%s5562 + $0xf8] sm:$0xff]
      %v5585 = vld [vmem:[%s5562 + $0x108] sm:$0xff]
      %v5586 = vld [vmem:[%s5562 + $0x110] sm:$0xff]
      %v5587 = vld [vmem:[%s5562 + $0x120] sm:$0xff]
      %v5588 = vld [vmem:[%s5562 + $0x128] sm:$0xff]
      %v5589 = vld [vmem:[%s5562 + $0x138] sm:$0xff]
      %v5590 = vld [vmem:[%s5562 + $0x140] sm:$0xff]
      %v5591 = vld [vmem:[%s5562 + $0x150] sm:$0xff]
      %v5592 = vld [vmem:[%s5562 + $0x158] sm:$0xff]
      %v5593 = vld [vmem:[%s5562 + $0x168] sm:$0xff]
      %v5594 = vld [vmem:[%s5562 + $0x170] sm:$0xff]
      %5627 = vrot.lane.b32.xlu0 %v5563, 36
      %v5628 = vpop.permute.xlu0 %5627
      %5629 = vrot.lane.b32.xlu0 %v5564, 36
      %v5630 = vpop.permute.xlu0 %5629
      %5631 = vrot.lane.b32.xlu0 %v5565, 36
      %v5632 = vpop.permute.xlu0 %5631
      %5633 = vrot.lane.b32.xlu0 %v5566, 36
      %v5634 = vpop.permute.xlu0 %5633
      %5635 = vrot.lane.b32.xlu0 %v5567, 36
      %v5636 = vpop.permute.xlu0 %5635
      %5637 = vrot.lane.b32.xlu0 %v5568, 36
      %v5638 = vpop.permute.xlu0 %5637
      %5639 = vrot.lane.b32.xlu0 %v5569, 36
      %v5640 = vpop.permute.xlu0 %5639
      %5641 = vrot.lane.b32.xlu0 %v5570, 36
      %v5642 = vpop.permute.xlu0 %5641
      %5643 = vrot.lane.b32.xlu0 %v5571, 36
      %v5644 = vpop.permute.xlu0 %5643
      %5645 = vrot.lane.b32.xlu0 %v5572, 36
      %v5646 = vpop.permute.xlu0 %5645
      %5647 = vrot.lane.b32.xlu0 %v5573, 36
      %v5648 = vpop.permute.xlu0 %5647
      %5649 = vrot.lane.b32.xlu0 %v5574, 36
      %v5650 = vpop.permute.xlu0 %5649
      %5651 = vrot.lane.b32.xlu0 %v5575, 36
      %v5652 = vpop.permute.xlu0 %5651
      %5653 = vrot.lane.b32.xlu0 %v5576, 36
      %v5654 = vpop.permute.xlu0 %5653
      %5655 = vrot.lane.b32.xlu0 %v5577, 36
      %v5656 = vpop.permute.xlu0 %5655
      %5657 = vrot.lane.b32.xlu0 %v5578, 36
      %v5658 = vpop.permute.xlu0 %5657
      %5659 = vrot.lane.b32.xlu0 %v5579, 36
      %v5660 = vpop.permute.xlu0 %5659
      %5661 = vrot.lane.b32.xlu0 %v5580, 36
      %v5662 = vpop.permute.xlu0 %5661
      %5663 = vrot.lane.b32.xlu0 %v5581, 36
      %v5664 = vpop.permute.xlu0 %5663
      %5665 = vrot.lane.b32.xlu0 %v5582, 36
      %v5666 = vpop.permute.xlu0 %5665
      %5667 = vrot.lane.b32.xlu0 %v5583, 36
      %v5668 = vpop.permute.xlu0 %5667
      %5669 = vrot.lane.b32.xlu0 %v5584, 36
      %v5670 = vpop.permute.xlu0 %5669
      %5671 = vrot.lane.b32.xlu0 %v5585, 36
      %v5672 = vpop.permute.xlu0 %5671
      %5673 = vrot.lane.b32.xlu0 %v5586, 36
      %v5674 = vpop.permute.xlu0 %5673
      %5675 = vrot.lane.b32.xlu0 %v5587, 36
      %v5676 = vpop.permute.xlu0 %5675
      %5677 = vrot.lane.b32.xlu0 %v5588, 36
      %v5678 = vpop.permute.xlu0 %5677
      %5679 = vrot.lane.b32.xlu0 %v5589, 36
      %v5680 = vpop.permute.xlu0 %5679
      %5681 = vrot.lane.b32.xlu0 %v5590, 36
      %v5682 = vpop.permute.xlu0 %5681
      %5683 = vrot.lane.b32.xlu0 %v5591, 36
      %v5684 = vpop.permute.xlu0 %5683
      %5685 = vrot.lane.b32.xlu0 %v5592, 36
      %v5686 = vpop.permute.xlu0 %5685
      %5687 = vrot.lane.b32.xlu0 %v5593, 36
      %v5688 = vpop.permute.xlu0 %5687
      %5689 = vrot.lane.b32.xlu0 %v5594, 36
      %v5690 = vpop.permute.xlu0 %5689
      %vm5723 = vcmask 343328
      %5724 = vst.msk [vmem:[#allocation6] sm:$0xff] %vm5723, %v5628
      %5725 = vst.msk [vmem:[#allocation6 + $0x8] sm:$0xff] %vm5723, %v5630
      %5726 = vst.msk [vmem:[#allocation6 + $0x10] sm:$0xff] %vm5723, %v5632
      %5727 = vst.msk [vmem:[#allocation6 + $0x18] sm:$0xff] %vm5723, %v5634
      %5728 = vst.msk [vmem:[#allocation6 + $0x20] sm:$0xff] %vm5723, %v5636
      %5729 = vst.msk [vmem:[#allocation6 + $0x28] sm:$0xff] %vm5723, %v5638
      %5730 = vst.msk [vmem:[#allocation6 + $0x30] sm:$0xff] %vm5723, %v5640
      %5731 = vst.msk [vmem:[#allocation6 + $0x38] sm:$0xff] %vm5723, %v5642
      %5732 = vst.msk [vmem:[#allocation6 + $0x40] sm:$0xff] %vm5723, %v5644
      %5733 = vst.msk [vmem:[#allocation6 + $0x48] sm:$0xff] %vm5723, %v5646
      %5734 = vst.msk [vmem:[#allocation6 + $0x50] sm:$0xff] %vm5723, %v5648
      %5735 = vst.msk [vmem:[#allocation6 + $0x58] sm:$0xff] %vm5723, %v5650
      %5736 = vst.msk [vmem:[#allocation6 + $0x60] sm:$0xff] %vm5723, %v5652
      %5737 = vst.msk [vmem:[#allocation6 + $0x68] sm:$0xff] %vm5723, %v5654
      %5738 = vst.msk [vmem:[#allocation6 + $0x70] sm:$0xff] %vm5723, %v5656
      %5739 = vst.msk [vmem:[#allocation6 + $0x78] sm:$0xff] %vm5723, %v5658
      %5740 = vst.msk [vmem:[#allocation6 + $0x80] sm:$0xff] %vm5723, %v5660
      %5741 = vst.msk [vmem:[#allocation6 + $0x88] sm:$0xff] %vm5723, %v5662
      %5742 = vst.msk [vmem:[#allocation6 + $0x90] sm:$0xff] %vm5723, %v5664
      %5743 = vst.msk [vmem:[#allocation6 + $0x98] sm:$0xff] %vm5723, %v5666
      %5744 = vst.msk [vmem:[#allocation6 + $0xa0] sm:$0xff] %vm5723, %v5668
      %5745 = vst.msk [vmem:[#allocation6 + $0xa8] sm:$0xff] %vm5723, %v5670
      %5746 = vst.msk [vmem:[#allocation6 + $0xb0] sm:$0xff] %vm5723, %v5672
      %5747 = vst.msk [vmem:[#allocation6 + $0xb8] sm:$0xff] %vm5723, %v5674
      %5748 = vst.msk [vmem:[#allocation6 + $0xc0] sm:$0xff] %vm5723, %v5676
      %5749 = vst.msk [vmem:[#allocation6 + $0xc8] sm:$0xff] %vm5723, %v5678
      %5750 = vst.msk [vmem:[#allocation6 + $0xd0] sm:$0xff] %vm5723, %v5680
      %5751 = vst.msk [vmem:[#allocation6 + $0xd8] sm:$0xff] %vm5723, %v5682
      %5752 = vst.msk [vmem:[#allocation6 + $0xe0] sm:$0xff] %vm5723, %v5684
      %5753 = vst.msk [vmem:[#allocation6 + $0xe8] sm:$0xff] %vm5723, %v5686
      %5754 = vst.msk [vmem:[#allocation6 + $0xf0] sm:$0xff] %vm5723, %v5688
      %5755 = vst.msk [vmem:[#allocation6 + $0xf8] sm:$0xff] %vm5723, %v5690
      %v5756 = vld [vmem:[%s5562 + $0x1] sm:$0xff]
      %v5757 = vld [vmem:[%s5562 + $0x9] sm:$0xff]
      %v5758 = vld [vmem:[%s5562 + $0x19] sm:$0xff]
      %v5759 = vld [vmem:[%s5562 + $0x21] sm:$0xff]
      %v5760 = vld [vmem:[%s5562 + $0x31] sm:$0xff]
      %v5761 = vld [vmem:[%s5562 + $0x39] sm:$0xff]
      %v5762 = vld [vmem:[%s5562 + $0x49] sm:$0xff]
      %v5763 = vld [vmem:[%s5562 + $0x51] sm:$0xff]
      %v5764 = vld [vmem:[%s5562 + $0x61] sm:$0xff]
      %v5765 = vld [vmem:[%s5562 + $0x69] sm:$0xff]
      %v5766 = vld [vmem:[%s5562 + $0x79] sm:$0xff]
      %v5767 = vld [vmem:[%s5562 + $0x81] sm:$0xff]
      %v5768 = vld [vmem:[%s5562 + $0x91] sm:$0xff]
      %v5769 = vld [vmem:[%s5562 + $0x99] sm:$0xff]
      %v5770 = vld [vmem:[%s5562 + $0xa9] sm:$0xff]
      %v5771 = vld [vmem:[%s5562 + $0xb1] sm:$0xff]
      %v5772 = vld [vmem:[%s5562 + $0xc1] sm:$0xff]
      %v5773 = vld [vmem:[%s5562 + $0xc9] sm:$0xff]
      %v5774 = vld [vmem:[%s5562 + $0xd9] sm:$0xff]
      %v5775 = vld [vmem:[%s5562 + $0xe1] sm:$0xff]
      %v5776 = vld [vmem:[%s5562 + $0xf1] sm:$0xff]
      %v5777 = vld [vmem:[%s5562 + $0xf9] sm:$0xff]
      %v5778 = vld [vmem:[%s5562 + $0x109] sm:$0xff]
      %v5779 = vld [vmem:[%s5562 + $0x111] sm:$0xff]
      %v5780 = vld [vmem:[%s5562 + $0x121] sm:$0xff]
      %v5781 = vld [vmem:[%s5562 + $0x129] sm:$0xff]
      %v5782 = vld [vmem:[%s5562 + $0x139] sm:$0xff]
      %v5783 = vld [vmem:[%s5562 + $0x141] sm:$0xff]
      %v5784 = vld [vmem:[%s5562 + $0x151] sm:$0xff]
      %v5785 = vld [vmem:[%s5562 + $0x159] sm:$0xff]
      %v5786 = vld [vmem:[%s5562 + $0x169] sm:$0xff]
      %v5787 = vld [vmem:[%s5562 + $0x171] sm:$0xff]
      %5820 = vrot.lane.b32.xlu0 %v5756, 42
      %v5821 = vpop.permute.xlu0 %5820
      %5822 = vrot.lane.b32.xlu0 %v5757, 42
      %v5823 = vpop.permute.xlu0 %5822
      %5824 = vrot.lane.b32.xlu0 %v5758, 42
      %v5825 = vpop.permute.xlu0 %5824
      %5826 = vrot.lane.b32.xlu0 %v5759, 42
      %v5827 = vpop.permute.xlu0 %5826
      %5828 = vrot.lane.b32.xlu0 %v5760, 42
      %v5829 = vpop.permute.xlu0 %5828
      %5830 = vrot.lane.b32.xlu0 %v5761, 42
      %v5831 = vpop.permute.xlu0 %5830
      %5832 = vrot.lane.b32.xlu0 %v5762, 42
      %v5833 = vpop.permute.xlu0 %5832
      %5834 = vrot.lane.b32.xlu0 %v5763, 42
      %v5835 = vpop.permute.xlu0 %5834
      %5836 = vrot.lane.b32.xlu0 %v5764, 42
      %v5837 = vpop.permute.xlu0 %5836
      %5838 = vrot.lane.b32.xlu0 %v5765, 42
      %v5839 = vpop.permute.xlu0 %5838
      %5840 = vrot.lane.b32.xlu0 %v5766, 42
      %v5841 = vpop.permute.xlu0 %5840
      %5842 = vrot.lane.b32.xlu0 %v5767, 42
      %v5843 = vpop.permute.xlu0 %5842
      %5844 = vrot.lane.b32.xlu0 %v5768, 42
      %v5845 = vpop.permute.xlu0 %5844
      %5846 = vrot.lane.b32.xlu0 %v5769, 42
      %v5847 = vpop.permute.xlu0 %5846
      %5848 = vrot.lane.b32.xlu0 %v5770, 42
      %v5849 = vpop.permute.xlu0 %5848
      %5850 = vrot.lane.b32.xlu0 %v5771, 42
      %v5851 = vpop.permute.xlu0 %5850
      %5852 = vrot.lane.b32.xlu0 %v5772, 42
      %v5853 = vpop.permute.xlu0 %5852
      %5854 = vrot.lane.b32.xlu0 %v5773, 42
      %v5855 = vpop.permute.xlu0 %5854
      %5856 = vrot.lane.b32.xlu0 %v5774, 42
      %v5857 = vpop.permute.xlu0 %5856
      %5858 = vrot.lane.b32.xlu0 %v5775, 42
      %v5859 = vpop.permute.xlu0 %5858
      %5860 = vrot.lane.b32.xlu0 %v5776, 42
      %v5861 = vpop.permute.xlu0 %5860
      %5862 = vrot.lane.b32.xlu0 %v5777, 42
      %v5863 = vpop.permute.xlu0 %5862
      %5864 = vrot.lane.b32.xlu0 %v5778, 42
      %v5865 = vpop.permute.xlu0 %5864
      %5866 = vrot.lane.b32.xlu0 %v5779, 42
      %v5867 = vpop.permute.xlu0 %5866
      %5868 = vrot.lane.b32.xlu0 %v5780, 42
      %v5869 = vpop.permute.xlu0 %5868
      %5870 = vrot.lane.b32.xlu0 %v5781, 42
      %v5871 = vpop.permute.xlu0 %5870
      %5872 = vrot.lane.b32.xlu0 %v5782, 42
      %v5873 = vpop.permute.xlu0 %5872
      %5874 = vrot.lane.b32.xlu0 %v5783, 42
      %v5875 = vpop.permute.xlu0 %5874
      %5876 = vrot.lane.b32.xlu0 %v5784, 42
      %v5877 = vpop.permute.xlu0 %5876
      %5878 = vrot.lane.b32.xlu0 %v5785, 42
      %v5879 = vpop.permute.xlu0 %5878
      %5880 = vrot.lane.b32.xlu0 %v5786, 42
      %v5881 = vpop.permute.xlu0 %5880
      %5882 = vrot.lane.b32.xlu0 %v5787, 42
      %v5883 = vpop.permute.xlu0 %5882
      %vm5916 = vcmask 392528
      %5917 = vst.msk [vmem:[#allocation6] sm:$0xff] %vm5916, %v5821
      %5918 = vst.msk [vmem:[#allocation6 + $0x8] sm:$0xff] %vm5916, %v5823
      %5919 = vst.msk [vmem:[#allocation6 + $0x10] sm:$0xff] %vm5916, %v5825
      %5920 = vst.msk [vmem:[#allocation6 + $0x18] sm:$0xff] %vm5916, %v5827
      %5921 = vst.msk [vmem:[#allocation6 + $0x20] sm:$0xff] %vm5916, %v5829
      %5922 = vst.msk [vmem:[#allocation6 + $0x28] sm:$0xff] %vm5916, %v5831
      %5923 = vst.msk [vmem:[#allocation6 + $0x30] sm:$0xff] %vm5916, %v5833
      %5924 = vst.msk [vmem:[#allocation6 + $0x38] sm:$0xff] %vm5916, %v5835
      %5925 = vst.msk [vmem:[#allocation6 + $0x40] sm:$0xff] %vm5916, %v5837
      %5926 = vst.msk [vmem:[#allocation6 + $0x48] sm:$0xff] %vm5916, %v5839
      %5927 = vst.msk [vmem:[#allocation6 + $0x50] sm:$0xff] %vm5916, %v5841
      %5928 = vst.msk [vmem:[#allocation6 + $0x58] sm:$0xff] %vm5916, %v5843
      %5929 = vst.msk [vmem:[#allocation6 + $0x60] sm:$0xff] %vm5916, %v5845
      %5930 = vst.msk [vmem:[#allocation6 + $0x68] sm:$0xff] %vm5916, %v5847
      %5931 = vst.msk [vmem:[#allocation6 + $0x70] sm:$0xff] %vm5916, %v5849
      %5932 = vst.msk [vmem:[#allocation6 + $0x78] sm:$0xff] %vm5916, %v5851
      %5933 = vst.msk [vmem:[#allocation6 + $0x80] sm:$0xff] %vm5916, %v5853
      %5934 = vst.msk [vmem:[#allocation6 + $0x88] sm:$0xff] %vm5916, %v5855
      %5935 = vst.msk [vmem:[#allocation6 + $0x90] sm:$0xff] %vm5916, %v5857
      %5936 = vst.msk [vmem:[#allocation6 + $0x98] sm:$0xff] %vm5916, %v5859
      %5937 = vst.msk [vmem:[#allocation6 + $0xa0] sm:$0xff] %vm5916, %v5861
      %5938 = vst.msk [vmem:[#allocation6 + $0xa8] sm:$0xff] %vm5916, %v5863
      %5939 = vst.msk [vmem:[#allocation6 + $0xb0] sm:$0xff] %vm5916, %v5865
      %5940 = vst.msk [vmem:[#allocation6 + $0xb8] sm:$0xff] %vm5916, %v5867
      %5941 = vst.msk [vmem:[#allocation6 + $0xc0] sm:$0xff] %vm5916, %v5869
      %5942 = vst.msk [vmem:[#allocation6 + $0xc8] sm:$0xff] %vm5916, %v5871
      %5943 = vst.msk [vmem:[#allocation6 + $0xd0] sm:$0xff] %vm5916, %v5873
      %5944 = vst.msk [vmem:[#allocation6 + $0xd8] sm:$0xff] %vm5916, %v5875
      %5945 = vst.msk [vmem:[#allocation6 + $0xe0] sm:$0xff] %vm5916, %v5877
      %5946 = vst.msk [vmem:[#allocation6 + $0xe8] sm:$0xff] %vm5916, %v5879
      %5947 = vst.msk [vmem:[#allocation6 + $0xf0] sm:$0xff] %vm5916, %v5881
      %5948 = vst.msk [vmem:[#allocation6 + $0xf8] sm:$0xff] %vm5916, %v5883
      %v5949 = vld [vmem:[%s5562 + $0x2] sm:$0xff]
      %v5950 = vld [vmem:[%s5562 + $0xa] sm:$0xff]
      %v5951 = vld [vmem:[%s5562 + $0x1a] sm:$0xff]
      %v5952 = vld [vmem:[%s5562 + $0x22] sm:$0xff]
      %v5953 = vld [vmem:[%s5562 + $0x32] sm:$0xff]
      %v5954 = vld [vmem:[%s5562 + $0x3a] sm:$0xff]
      %v5955 = vld [vmem:[%s5562 + $0x4a] sm:$0xff]
      %v5956 = vld [vmem:[%s5562 + $0x52] sm:$0xff]
      %v5957 = vld [vmem:[%s5562 + $0x62] sm:$0xff]
      %v5958 = vld [vmem:[%s5562 + $0x6a] sm:$0xff]
      %v5959 = vld [vmem:[%s5562 + $0x7a] sm:$0xff]
      %v5960 = vld [vmem:[%s5562 + $0x82] sm:$0xff]
      %v5961 = vld [vmem:[%s5562 + $0x92] sm:$0xff]
      %v5962 = vld [vmem:[%s5562 + $0x9a] sm:$0xff]
      %v5963 = vld [vmem:[%s5562 + $0xaa] sm:$0xff]
      %v5964 = vld [vmem:[%s5562 + $0xb2] sm:$0xff]
      %v5965 = vld [vmem:[%s5562 + $0xc2] sm:$0xff]
      %v5966 = vld [vmem:[%s5562 + $0xca] sm:$0xff]
      %v5967 = vld [vmem:[%s5562 + $0xda] sm:$0xff]
      %v5968 = vld [vmem:[%s5562 + $0xe2] sm:$0xff]
      %v5969 = vld [vmem:[%s5562 + $0xf2] sm:$0xff]
      %v5970 = vld [vmem:[%s5562 + $0xfa] sm:$0xff]
      %v5971 = vld [vmem:[%s5562 + $0x10a] sm:$0xff]
      %v5972 = vld [vmem:[%s5562 + $0x112] sm:$0xff]
      %v5973 = vld [vmem:[%s5562 + $0x122] sm:$0xff]
      %v5974 = vld [vmem:[%s5562 + $0x12a] sm:$0xff]
      %v5975 = vld [vmem:[%s5562 + $0x13a] sm:$0xff]
      %v5976 = vld [vmem:[%s5562 + $0x142] sm:$0xff]
      %v5977 = vld [vmem:[%s5562 + $0x152] sm:$0xff]
      %v5978 = vld [vmem:[%s5562 + $0x15a] sm:$0xff]
      %v5979 = vld [vmem:[%s5562 + $0x16a] sm:$0xff]
      %v5980 = vld [vmem:[%s5562 + $0x172] sm:$0xff]
      %6013 = vrot.lane.b32.xlu0 %v5949, 48
      %v6014 = vpop.permute.xlu0 %6013
      %6015 = vrot.lane.b32.xlu0 %v5950, 48
      %v6016 = vpop.permute.xlu0 %6015
      %6017 = vrot.lane.b32.xlu0 %v5951, 48
      %v6018 = vpop.permute.xlu0 %6017
      %6019 = vrot.lane.b32.xlu0 %v5952, 48
      %v6020 = vpop.permute.xlu0 %6019
      %6021 = vrot.lane.b32.xlu0 %v5953, 48
      %v6022 = vpop.permute.xlu0 %6021
      %6023 = vrot.lane.b32.xlu0 %v5954, 48
      %v6024 = vpop.permute.xlu0 %6023
      %6025 = vrot.lane.b32.xlu0 %v5955, 48
      %v6026 = vpop.permute.xlu0 %6025
      %6027 = vrot.lane.b32.xlu0 %v5956, 48
      %v6028 = vpop.permute.xlu0 %6027
      %6029 = vrot.lane.b32.xlu0 %v5957, 48
      %v6030 = vpop.permute.xlu0 %6029
      %6031 = vrot.lane.b32.xlu0 %v5958, 48
      %v6032 = vpop.permute.xlu0 %6031
      %6033 = vrot.lane.b32.xlu0 %v5959, 48
      %v6034 = vpop.permute.xlu0 %6033
      %6035 = vrot.lane.b32.xlu0 %v5960, 48
      %v6036 = vpop.permute.xlu0 %6035
      %6037 = vrot.lane.b32.xlu0 %v5961, 48
      %v6038 = vpop.permute.xlu0 %6037
      %6039 = vrot.lane.b32.xlu0 %v5962, 48
      %v6040 = vpop.permute.xlu0 %6039
      %6041 = vrot.lane.b32.xlu0 %v5963, 48
      %v6042 = vpop.permute.xlu0 %6041
      %6043 = vrot.lane.b32.xlu0 %v5964, 48
      %v6044 = vpop.permute.xlu0 %6043
      %6045 = vrot.lane.b32.xlu0 %v5965, 48
      %v6046 = vpop.permute.xlu0 %6045
      %6047 = vrot.lane.b32.xlu0 %v5966, 48
      %v6048 = vpop.permute.xlu0 %6047
      %6049 = vrot.lane.b32.xlu0 %v5967, 48
      %v6050 = vpop.permute.xlu0 %6049
      %6051 = vrot.lane.b32.xlu0 %v5968, 48
      %v6052 = vpop.permute.xlu0 %6051
      %6053 = vrot.lane.b32.xlu0 %v5969, 48
      %v6054 = vpop.permute.xlu0 %6053
      %6055 = vrot.lane.b32.xlu0 %v5970, 48
      %v6056 = vpop.permute.xlu0 %6055
      %6057 = vrot.lane.b32.xlu0 %v5971, 48
      %v6058 = vpop.permute.xlu0 %6057
      %6059 = vrot.lane.b32.xlu0 %v5972, 48
      %v6060 = vpop.permute.xlu0 %6059
      %6061 = vrot.lane.b32.xlu0 %v5973, 48
      %v6062 = vpop.permute.xlu0 %6061
      %6063 = vrot.lane.b32.xlu0 %v5974, 48
      %v6064 = vpop.permute.xlu0 %6063
      %6065 = vrot.lane.b32.xlu0 %v5975, 48
      %v6066 = vpop.permute.xlu0 %6065
      %6067 = vrot.lane.b32.xlu0 %v5976, 48
      %v6068 = vpop.permute.xlu0 %6067
      %6069 = vrot.lane.b32.xlu0 %v5977, 48
      %v6070 = vpop.permute.xlu0 %6069
      %6071 = vrot.lane.b32.xlu0 %v5978, 48
      %v6072 = vpop.permute.xlu0 %6071
      %6073 = vrot.lane.b32.xlu0 %v5979, 48
      %v6074 = vpop.permute.xlu0 %6073
      %6075 = vrot.lane.b32.xlu0 %v5980, 48
      %v6076 = vpop.permute.xlu0 %6075
      %vm6109 = vcmask 441728
      %6110 = vst.msk [vmem:[#allocation6] sm:$0xff] %vm6109, %v6014
      %6111 = vst.msk [vmem:[#allocation6 + $0x8] sm:$0xff] %vm6109, %v6016
      %6112 = vst.msk [vmem:[#allocation6 + $0x10] sm:$0xff] %vm6109, %v6018
      %6113 = vst.msk [vmem:[#allocation6 + $0x18] sm:$0xff] %vm6109, %v6020
      %6114 = vst.msk [vmem:[#allocation6 + $0x20] sm:$0xff] %vm6109, %v6022
      %6115 = vst.msk [vmem:[#allocation6 + $0x28] sm:$0xff] %vm6109, %v6024
      %6116 = vst.msk [vmem:[#allocation6 + $0x30] sm:$0xff] %vm6109, %v6026
      %6117 = vst.msk [vmem:[#allocation6 + $0x38] sm:$0xff] %vm6109, %v6028
      %6118 = vst.msk [vmem:[#allocation6 + $0x40] sm:$0xff] %vm6109, %v6030
      %6119 = vst.msk [vmem:[#allocation6 + $0x48] sm:$0xff] %vm6109, %v6032
      %6120 = vst.msk [vmem:[#allocation6 + $0x50] sm:$0xff] %vm6109, %v6034
      %6121 = vst.msk [vmem:[#allocation6 + $0x58] sm:$0xff] %vm6109, %v6036
      %6122 = vst.msk [vmem:[#allocation6 + $0x60] sm:$0xff] %vm6109, %v6038
      %6123 = vst.msk [vmem:[#allocation6 + $0x68] sm:$0xff] %vm6109, %v6040
      %6124 = vst.msk [vmem:[#allocation6 + $0x70] sm:$0xff] %vm6109, %v6042
      %6125 = vst.msk [vmem:[#allocation6 + $0x78] sm:$0xff] %vm6109, %v6044
      %6126 = vst.msk [vmem:[#allocation6 + $0x80] sm:$0xff] %vm6109, %v6046
      %6127 = vst.msk [vmem:[#allocation6 + $0x88] sm:$0xff] %vm6109, %v6048
      %6128 = vst.msk [vmem:[#allocation6 + $0x90] sm:$0xff] %vm6109, %v6050
      %6129 = vst.msk [vmem:[#allocation6 + $0x98] sm:$0xff] %vm6109, %v6052
      %6130 = vst.msk [vmem:[#allocation6 + $0xa0] sm:$0xff] %vm6109, %v6054
      %6131 = vst.msk [vmem:[#allocation6 + $0xa8] sm:$0xff] %vm6109, %v6056
      %6132 = vst.msk [vmem:[#allocation6 + $0xb0] sm:$0xff] %vm6109, %v6058
      %6133 = vst.msk [vmem:[#allocation6 + $0xb8] sm:$0xff] %vm6109, %v6060
      %6134 = vst.msk [vmem:[#allocation6 + $0xc0] sm:$0xff] %vm6109, %v6062
      %6135 = vst.msk [vmem:[#allocation6 + $0xc8] sm:$0xff] %vm6109, %v6064
      %6136 = vst.msk [vmem:[#allocation6 + $0xd0] sm:$0xff] %vm6109, %v6066
      %6137 = vst.msk [vmem:[#allocation6 + $0xd8] sm:$0xff] %vm6109, %v6068
      %6138 = vst.msk [vmem:[#allocation6 + $0xe0] sm:$0xff] %vm6109, %v6070
      %6139 = vst.msk [vmem:[#allocation6 + $0xe8] sm:$0xff] %vm6109, %v6072
      %6140 = vst.msk [vmem:[#allocation6 + $0xf0] sm:$0xff] %vm6109, %v6074
      %6141 = vst.msk [vmem:[#allocation6 + $0xf8] sm:$0xff] %vm6109, %v6076
      %v6142 = vld [vmem:[#allocation6] sm:$0xff]
      %v6143 = vld [vmem:[#allocation6 + $0x8] sm:$0xff]
      %v6144 = vld [vmem:[#allocation6 + $0x10] sm:$0xff]
      %v6145 = vld [vmem:[#allocation6 + $0x18] sm:$0xff]
      %v6146 = vld [vmem:[#allocation6 + $0x20] sm:$0xff]
      %v6147 = vld [vmem:[#allocation6 + $0x28] sm:$0xff]
      %v6148 = vld [vmem:[#allocation6 + $0x30] sm:$0xff]
      %v6149 = vld [vmem:[#allocation6 + $0x38] sm:$0xff]
      %v6150 = vld [vmem:[#allocation6 + $0x40] sm:$0xff]
      %v6151 = vld [vmem:[#allocation6 + $0x48] sm:$0xff]
      %v6152 = vld [vmem:[#allocation6 + $0x50] sm:$0xff]
      %v6153 = vld [vmem:[#allocation6 + $0x58] sm:$0xff]
      %v6154 = vld [vmem:[#allocation6 + $0x60] sm:$0xff]
      %v6155 = vld [vmem:[#allocation6 + $0x68] sm:$0xff]
      %v6156 = vld [vmem:[#allocation6 + $0x70] sm:$0xff]
      %v6157 = vld [vmem:[#allocation6 + $0x78] sm:$0xff]
      %v6158 = vld [vmem:[#allocation6 + $0x80] sm:$0xff]
      %v6159 = vld [vmem:[#allocation6 + $0x88] sm:$0xff]
      %v6160 = vld [vmem:[#allocation6 + $0x90] sm:$0xff]
      %v6161 = vld [vmem:[#allocation6 + $0x98] sm:$0xff]
      %v6162 = vld [vmem:[#allocation6 + $0xa0] sm:$0xff]
      %v6163 = vld [vmem:[#allocation6 + $0xa8] sm:$0xff]
      %v6164 = vld [vmem:[#allocation6 + $0xb0] sm:$0xff]
      %v6165 = vld [vmem:[#allocation6 + $0xb8] sm:$0xff]
      %v6166 = vld [vmem:[#allocation6 + $0xc0] sm:$0xff]
      %v6167 = vld [vmem:[#allocation6 + $0xc8] sm:$0xff]
      %v6168 = vld [vmem:[#allocation6 + $0xd0] sm:$0xff]
      %v6169 = vld [vmem:[#allocation6 + $0xd8] sm:$0xff]
      %v6170 = vld [vmem:[#allocation6 + $0xe0] sm:$0xff]
      %v6171 = vld [vmem:[#allocation6 + $0xe8] sm:$0xff]
      %v6172 = vld [vmem:[#allocation6 + $0xf0] sm:$0xff]
      %v6173 = vld [vmem:[#allocation6 + $0xf8] sm:$0xff]
      %v6174 = vpack.c.bf16 %v6143, %v6142
      %v6175 = vpack.c.bf16 %v6145, %v6144
      %v6176 = vpack.c.bf16 %v6147, %v6146
      %v6177 = vpack.c.bf16 %v6149, %v6148
      %v6178 = vpack.c.bf16 %v6151, %v6150
      %v6179 = vpack.c.bf16 %v6153, %v6152
      %v6180 = vpack.c.bf16 %v6155, %v6154
      %v6181 = vpack.c.bf16 %v6157, %v6156
      %v6182 = vpack.c.bf16 %v6159, %v6158
      %v6183 = vpack.c.bf16 %v6161, %v6160
      %v6184 = vpack.c.bf16 %v6163, %v6162
      %v6185 = vpack.c.bf16 %v6165, %v6164
      %v6186 = vpack.c.bf16 %v6167, %v6166
      %v6187 = vpack.c.bf16 %v6169, %v6168
      %v6188 = vpack.c.bf16 %v6171, %v6170
      %v6189 = vpack.c.bf16 %v6173, %v6172
      %v6190 = vld [vmem:[%s6] sm:$0xff]
      %v6191 = vld [vmem:[%s6 + $0x8] sm:$0xff]
      %v6192 = vld [vmem:[%s6 + $0x10] sm:$0xff]
      %v6193 = vld [vmem:[%s6 + $0x18] sm:$0xff]
      %v6194 = vld [vmem:[%s6 + $0x20] sm:$0xff]
      %v6195 = vld [vmem:[%s6 + $0x28] sm:$0xff]
      %v6196 = vld [vmem:[%s6 + $0x30] sm:$0x3f]
      %v6197 = vpack.c.bf16 %v6191, %v6190
      %v6198 = vpack.c.bf16 %v6193, %v6192
      %v6199 = vpack.c.bf16 %v6195, %v6194
      %v6200 = vpack.c.bf16 %v6196, %v6196
      %v6201 = vld [vmem:[%s7] sm:$0x1]
      %v6202 = vlaneseq
      %v6203 = vshrl.u32 %v6202, 7
      %v6204 = vsub.s32 0, %v6203
      %v6205 = vrot.slane %v6201, %v6204
      %vm6206 = vcmask 441344
      %v6208 = vsel %vm6206, %v6174, 0
      %v6211 = vsel %vm6206, %v6175, 0
      %v6214 = vsel %vm6206, %v6176, 0
      %v6217 = vsel %vm6206, %v6177, 0
      %v6220 = vsel %vm6206, %v6178, 0
      %v6223 = vsel %vm6206, %v6179, 0
      %v6226 = vsel %vm6206, %v6180, 0
      %v6229 = vsel %vm6206, %v6181, 0
      %v6232 = vsel %vm6206, %v6182, 0
      %v6235 = vsel %vm6206, %v6183, 0
      %v6238 = vsel %vm6206, %v6184, 0
      %v6241 = vsel %vm6206, %v6185, 0
      %v6244 = vsel %vm6206, %v6186, 0
      %v6247 = vsel %vm6206, %v6187, 0
      %v6250 = vsel %vm6206, %v6188, 0
      %v6253 = vsel %vm6206, %v6189, 0
      %vm6255 = vcmask 1042432
      %v6257 = vsel %vm6255, %v6200, 0
      %6259 = vmatprep.subr.bf16.mxu0 0
      %6260 = vmatpush1.bf16.msra.mxu0 %v6197
      %6261 = vmatprep.subr.bf16.mxu0 0
      %6262 = vmatpush1.bf16.msra.mxu0 %v6198
      %6263 = vmatprep.subr.bf16.mxu0 0
      %6264 = vmatpush1.bf16.msra.mxu0 %v6199
      %6265 = vmatprep.subr.bf16.mxu0 0
      %6266 = vmatpush1.bf16.msra.mxu0 %v6257
      %6267 = vmatprep.subr.bf16.mxu0 0
      %6268 = vmatpush1.bf16.msra.mxu0 0
      %6269 = vmatprep.subr.bf16.mxu0 0
      %6270 = vmatpush1.bf16.msra.mxu0 0
      %6271 = vmatprep.subr.bf16.mxu0 0
      %6272 = vmatpush1.bf16.msra.mxu0 0
      %6273 = vmatprep.subr.bf16.mxu0 0
      %6274 = vmatpush1.bf16.msra.mxu0 0
      %6275 = vmatprep.subr.bf16.mxu0 0
      %6276 = vmatpush1.bf16.msra.mxu0 0
      %6277 = vmatprep.subr.bf16.mxu0 0
      %6278 = vmatpush1.bf16.msra.mxu0 0
      %6279 = vmatprep.subr.bf16.mxu0 0
      %6280 = vmatpush1.bf16.msra.mxu0 0
      %6281 = vmatprep.subr.bf16.mxu0 0
      %6282 = vmatpush1.bf16.msra.mxu0 0
      %6283 = vmatprep.subr.bf16.mxu0 0
      %6284 = vmatpush1.bf16.msra.mxu0 0
      %6285 = vmatprep.subr.bf16.mxu0 0
      %6286 = vmatpush1.bf16.msra.mxu0 0
      %6287 = vmatprep.subr.bf16.mxu0 0
      %6288 = vmatpush1.bf16.msra.mxu0 0
      %6289 = vmatprep.subr.bf16.mxu0 0
      %6290 = vmatpush1.bf16.msra.mxu0 0
      %6291 = vmatprep.mubr.bf16.mxu0 0
      %6292 = vmatmul.mubr.bf16.gmra.mrb[0].mxu0 %v6208
      %v6293 = vpop.f32.mrb[0].mxu0
      %v6294 = vadd.f32 %v6205, %v6293
      %v6295 = vpop.f32.mrb[0].mxu0
      %v6296 = vpop.f32.mrb[0].mxu0
      %v6297 = vadd.f32 %v6205, %v6296
      %v6298 = vpop.f32.mrb[0].mxu0
      %6299 = vmatprep.mubr.bf16.mxu0 0
      %6300 = vmatmul.mubr.bf16.gmra.mrb[0].mxu0 %v6211
      %v6301 = vpop.f32.mrb[0].mxu0
      %v6302 = vadd.f32 %v6205, %v6301
      %v6303 = vpop.f32.mrb[0].mxu0
      %v6304 = vpop.f32.mrb[0].mxu0
      %v6305 = vadd.f32 %v6205, %v6304
      %v6306 = vpop.f32.mrb[0].mxu0
      %6307 = vmatprep.mubr.bf16.mxu0 0
      %6308 = vmatmul.mubr.bf16.gmra.mrb[0].mxu0 %v6214
      %v6309 = vpop.f32.mrb[0].mxu0
      %v6310 = vadd.f32 %v6205, %v6309
      %v6311 = vpop.f32.mrb[0].mxu0
      %v6312 = vpop.f32.mrb[0].mxu0
      %v6313 = vadd.f32 %v6205, %v6312
      %v6314 = vpop.f32.mrb[0].mxu0
      %6315 = vmatprep.mubr.bf16.mxu0 0
      %6316 = vmatmul.mubr.bf16.gmra.mrb[0].mxu0 %v6217
      %v6317 = vpop.f32.mrb[0].mxu0
      %v6318 = vadd.f32 %v6205, %v6317
      %v6319 = vpop.f32.mrb[0].mxu0
      %v6320 = vpop.f32.mrb[0].mxu0
      %v6321 = vadd.f32 %v6205, %v6320
      %v6322 = vpop.f32.mrb[0].mxu0
      %6323 = vmatprep.mubr.bf16.mxu0 0
      %6324 = vmatmul.mubr.bf16.gmra.mrb[0].mxu0 %v6220
      %v6325 = vpop.f32.mrb[0].mxu0
      %v6326 = vadd.f32 %v6205, %v6325
      %v6327 = vpop.f32.mrb[0].mxu0
      %v6328 = vpop.f32.mrb[0].mxu0
      %v6329 = vadd.f32 %v6205, %v6328
      %v6330 = vpop.f32.mrb[0].mxu0
      %6331 = vmatprep.mubr.bf16.mxu0 0
      %6332 = vmatmul.mubr.bf16.gmra.mrb[0].mxu0 %v6223
      %v6333 = vpop.f32.mrb[0].mxu0
      %v6334 = vadd.f32 %v6205, %v6333
      %v6335 = vpop.f32.mrb[0].mxu0
      %v6336 = vpop.f32.mrb[0].mxu0
      %v6337 = vadd.f32 %v6205, %v6336
      %v6338 = vpop.f32.mrb[0].mxu0
      %6339 = vmatprep.mubr.bf16.mxu0 0
      %6340 = vmatmul.mubr.bf16.gmra.mrb[0].mxu0 %v6226
      %v6341 = vpop.f32.mrb[0].mxu0
      %v6342 = vadd.f32 %v6205, %v6341
      %v6343 = vpop.f32.mrb[0].mxu0
      %v6344 = vpop.f32.mrb[0].mxu0
      %v6345 = vadd.f32 %v6205, %v6344
      %v6346 = vpop.f32.mrb[0].mxu0
      %6347 = vmatprep.mubr.bf16.mxu0 0
      %6348 = vmatmul.mubr.bf16.gmra.mrb[0].mxu0 %v6229
      %v6349 = vpop.f32.mrb[0].mxu0
      %v6350 = vadd.f32 %v6205, %v6349
      %v6351 = vpop.f32.mrb[0].mxu0
      %v6352 = vpop.f32.mrb[0].mxu0
      %v6353 = vadd.f32 %v6205, %v6352
      %v6354 = vpop.f32.mrb[0].mxu0
      %6355 = vmatprep.mubr.bf16.mxu0 0
      %6356 = vmatmul.mubr.bf16.gmra.mrb[0].mxu0 %v6232
      %v6357 = vpop.f32.mrb[0].mxu0
      %v6358 = vadd.f32 %v6205, %v6357
      %v6359 = vpop.f32.mrb[0].mxu0
      %v6360 = vpop.f32.mrb[0].mxu0
      %v6361 = vadd.f32 %v6205, %v6360
      %v6362 = vpop.f32.mrb[0].mxu0
      %6363 = vmatprep.mubr.bf16.mxu0 0
      %6364 = vmatmul.mubr.bf16.gmra.mrb[0].mxu0 %v6235
      %v6365 = vpop.f32.mrb[0].mxu0
      %v6366 = vadd.f32 %v6205, %v6365
      %v6367 = vpop.f32.mrb[0].mxu0
      %v6368 = vpop.f32.mrb[0].mxu0
      %v6369 = vadd.f32 %v6205, %v6368
      %v6370 = vpop.f32.mrb[0].mxu0
      %6371 = vmatprep.mubr.bf16.mxu0 0
      %6372 = vmatmul.mubr.bf16.gmra.mrb[0].mxu0 %v6238
      %v6373 = vpop.f32.mrb[0].mxu0
      %v6374 = vadd.f32 %v6205, %v6373
      %v6375 = vpop.f32.mrb[0].mxu0
      %v6376 = vpop.f32.mrb[0].mxu0
      %v6377 = vadd.f32 %v6205, %v6376
      %v6378 = vpop.f32.mrb[0].mxu0
      %6379 = vmatprep.mubr.bf16.mxu0 0
      %6380 = vmatmul.mubr.bf16.gmra.mrb[0].mxu0 %v6241
      %v6381 = vpop.f32.mrb[0].mxu0
      %v6382 = vadd.f32 %v6205, %v6381
      %v6383 = vpop.f32.mrb[0].mxu0
      %v6384 = vpop.f32.mrb[0].mxu0
      %v6385 = vadd.f32 %v6205, %v6384
      %v6386 = vpop.f32.mrb[0].mxu0
      %6387 = vmatprep.mubr.bf16.mxu0 0
      %6388 = vmatmul.mubr.bf16.gmra.mrb[0].mxu0 %v6244
      %v6389 = vpop.f32.mrb[0].mxu0
      %v6390 = vadd.f32 %v6205, %v6389
      %v6391 = vpop.f32.mrb[0].mxu0
      %v6392 = vpop.f32.mrb[0].mxu0
      %v6393 = vadd.f32 %v6205, %v6392
      %v6394 = vpop.f32.mrb[0].mxu0
      %6395 = vmatprep.mubr.bf16.mxu0 0
      %6396 = vmatmul.mubr.bf16.gmra.mrb[0].mxu0 %v6247
      %v6397 = vpop.f32.mrb[0].mxu0
      %v6398 = vadd.f32 %v6205, %v6397
      %v6399 = vpop.f32.mrb[0].mxu0
      %v6400 = vpop.f32.mrb[0].mxu0
      %v6401 = vadd.f32 %v6205, %v6400
      %v6402 = vpop.f32.mrb[0].mxu0
      %6403 = vmatprep.mubr.bf16.mxu0 0
      %6404 = vmatmul.mubr.bf16.gmra.mrb[0].mxu0 %v6250
      %v6405 = vpop.f32.mrb[0].mxu0
      %v6406 = vadd.f32 %v6205, %v6405
      %v6407 = vpop.f32.mrb[0].mxu0
      %v6408 = vpop.f32.mrb[0].mxu0
      %v6409 = vadd.f32 %v6205, %v6408
      %v6410 = vpop.f32.mrb[0].mxu0
      %6411 = vmatprep.mubr.bf16.mxu0 0
      %6412 = vmatmul.mubr.bf16.gmra.mrb[0].mxu0 %v6253
      %v6413 = vpop.f32.mrb[0].mxu0
      %v6414 = vadd.f32 %v6205, %v6413
      %v6415 = vpop.f32.mrb[0].mxu0
      %v6416 = vpop.f32.mrb[0].mxu0
      %v6417 = vadd.f32 %v6205, %v6416
      %v6418 = vpop.f32.mrb[0].mxu0
      %6419 = vdwg.mxu0
      %v6420 = vld [vmem:[%s7 + $0x1] sm:$0x1]
      %vm6421 = vcmp.ge.f32.partialorder %v6294, 0.0
      %vm6422 = vcmp.ge.f32.partialorder %v6297, 0.0
      %vm6423 = vcmp.ge.f32.partialorder %v6302, 0.0
      %vm6424 = vcmp.ge.f32.partialorder %v6305, 0.0
      %vm6425 = vcmp.ge.f32.partialorder %v6310, 0.0
      %vm6426 = vcmp.ge.f32.partialorder %v6313, 0.0
      %vm6427 = vcmp.ge.f32.partialorder %v6318, 0.0
      %vm6428 = vcmp.ge.f32.partialorder %v6321, 0.0
      %vm6429 = vcmp.ge.f32.partialorder %v6326, 0.0
      %vm6430 = vcmp.ge.f32.partialorder %v6329, 0.0
      %vm6431 = vcmp.ge.f32.partialorder %v6334, 0.0
      %vm6432 = vcmp.ge.f32.partialorder %v6337, 0.0
      %vm6433 = vcmp.ge.f32.partialorder %v6342, 0.0
      %vm6434 = vcmp.ge.f32.partialorder %v6345, 0.0
      %vm6435 = vcmp.ge.f32.partialorder %v6350, 0.0
      %vm6436 = vcmp.ge.f32.partialorder %v6353, 0.0
      %vm6437 = vcmp.ge.f32.partialorder %v6358, 0.0
      %vm6438 = vcmp.ge.f32.partialorder %v6361, 0.0
      %vm6439 = vcmp.ge.f32.partialorder %v6366, 0.0
      %vm6440 = vcmp.ge.f32.partialorder %v6369, 0.0
      %vm6441 = vcmp.ge.f32.partialorder %v6374, 0.0
      %vm6442 = vcmp.ge.f32.partialorder %v6377, 0.0
      %vm6443 = vcmp.ge.f32.partialorder %v6382, 0.0
      %vm6444 = vcmp.ge.f32.partialorder %v6385, 0.0
      %vm6445 = vcmp.ge.f32.partialorder %v6390, 0.0
      %vm6446 = vcmp.ge.f32.partialorder %v6393, 0.0
      %vm6447 = vcmp.ge.f32.partialorder %v6398, 0.0
      %vm6448 = vcmp.ge.f32.partialorder %v6401, 0.0
      %vm6449 = vcmp.ge.f32.partialorder %v6406, 0.0
      %vm6450 = vcmp.ge.f32.partialorder %v6409, 0.0
      %vm6451 = vcmp.ge.f32.partialorder %v6414, 0.0
      %vm6452 = vcmp.ge.f32.partialorder %v6417, 0.0
      %v6453 = vlaneseq
      %v6454 = vshrl.u32 %v6453, 7
      %v6455 = vsub.s32 0, %v6454
      %v6456 = vrot.slane %v6420, %v6455
      %v6457 = vmul.f32 %v6294, %v6456
      %v6458 = vmul.f32 %v6297, %v6456
      %v6459 = vmul.f32 %v6302, %v6456
      %v6460 = vmul.f32 %v6305, %v6456
      %v6461 = vmul.f32 %v6310, %v6456
      %v6462 = vmul.f32 %v6313, %v6456
      %v6463 = vmul.f32 %v6318, %v6456
      %v6464 = vmul.f32 %v6321, %v6456
      %v6465 = vmul.f32 %v6326, %v6456
      %v6466 = vmul.f32 %v6329, %v6456
      %v6467 = vmul.f32 %v6334, %v6456
      %v6468 = vmul.f32 %v6337, %v6456
      %v6469 = vmul.f32 %v6342, %v6456
      %v6470 = vmul.f32 %v6345, %v6456
      %v6471 = vmul.f32 %v6350, %v6456
      %v6472 = vmul.f32 %v6353, %v6456
      %v6473 = vmul.f32 %v6358, %v6456
      %v6474 = vmul.f32 %v6361, %v6456
      %v6475 = vmul.f32 %v6366, %v6456
      %v6476 = vmul.f32 %v6369, %v6456
      %v6477 = vmul.f32 %v6374, %v6456
      %v6478 = vmul.f32 %v6377, %v6456
      %v6479 = vmul.f32 %v6382, %v6456
      %v6480 = vmul.f32 %v6385, %v6456
      %v6481 = vmul.f32 %v6390, %v6456
      %v6482 = vmul.f32 %v6393, %v6456
      %v6483 = vmul.f32 %v6398, %v6456
      %v6484 = vmul.f32 %v6401, %v6456
      %v6485 = vmul.f32 %v6406, %v6456
      %v6486 = vmul.f32 %v6409, %v6456
      %v6487 = vmul.f32 %v6414, %v6456
      %v6488 = vmul.f32 %v6417, %v6456
      %v6489 = vsel %vm6421, %v6294, %v6457
      %v6490 = vsel %vm6422, %v6297, %v6458
      %v6491 = vsel %vm6423, %v6302, %v6459
      %v6492 = vsel %vm6424, %v6305, %v6460
      %v6493 = vsel %vm6425, %v6310, %v6461
      %v6494 = vsel %vm6426, %v6313, %v6462
      %v6495 = vsel %vm6427, %v6318, %v6463
      %v6496 = vsel %vm6428, %v6321, %v6464
      %v6497 = vsel %vm6429, %v6326, %v6465
      %v6498 = vsel %vm6430, %v6329, %v6466
      %v6499 = vsel %vm6431, %v6334, %v6467
      %v6500 = vsel %vm6432, %v6337, %v6468
      %v6501 = vsel %vm6433, %v6342, %v6469
      %v6502 = vsel %vm6434, %v6345, %v6470
      %v6503 = vsel %vm6435, %v6350, %v6471
      %v6504 = vsel %vm6436, %v6353, %v6472
      %v6505 = vsel %vm6437, %v6358, %v6473
      %v6506 = vsel %vm6438, %v6361, %v6474
      %v6507 = vsel %vm6439, %v6366, %v6475
      %v6508 = vsel %vm6440, %v6369, %v6476
      %v6509 = vsel %vm6441, %v6374, %v6477
      %v6510 = vsel %vm6442, %v6377, %v6478
      %v6511 = vsel %vm6443, %v6382, %v6479
      %v6512 = vsel %vm6444, %v6385, %v6480
      %v6513 = vsel %vm6445, %v6390, %v6481
      %v6514 = vsel %vm6446, %v6393, %v6482
      %v6515 = vsel %vm6447, %v6398, %v6483
      %v6516 = vsel %vm6448, %v6401, %v6484
      %v6517 = vsel %vm6449, %v6406, %v6485
      %v6518 = vsel %vm6450, %v6409, %v6486
      %v6519 = vsel %vm6451, %v6414, %v6487
      %v6520 = vsel %vm6452, %v6417, %v6488
      %v6521 = vpack.c.bf16 %v6490, %v6489
      %v6522 = vpack.c.bf16 %v6492, %v6491
      %v6523 = vpack.c.bf16 %v6494, %v6493
      %v6524 = vpack.c.bf16 %v6496, %v6495
      %v6525 = vpack.c.bf16 %v6498, %v6497
      %v6526 = vpack.c.bf16 %v6500, %v6499
      %v6527 = vpack.c.bf16 %v6502, %v6501
      %v6528 = vpack.c.bf16 %v6504, %v6503
      %v6529 = vpack.c.bf16 %v6506, %v6505
      %v6530 = vpack.c.bf16 %v6508, %v6507
      %v6531 = vpack.c.bf16 %v6510, %v6509
      %v6532 = vpack.c.bf16 %v6512, %v6511
      %v6533 = vpack.c.bf16 %v6514, %v6513
      %v6534 = vpack.c.bf16 %v6516, %v6515
      %v6535 = vpack.c.bf16 %v6518, %v6517
      %v6536 = vpack.c.bf16 %v6520, %v6519
      %v6537 = vld [vmem:[%s8] sm:$0x3f]
      %v6538 = vpack.c.bf16 %v6537, %v6537
      %v6540 = vsel %vm404, %v6521, 0
      %v6543 = vsel %vm404, %v6522, 0
      %v6546 = vsel %vm404, %v6523, 0
      %v6549 = vsel %vm404, %v6524, 0
      %v6552 = vsel %vm404, %v6525, 0
      %v6555 = vsel %vm404, %v6526, 0
      %v6558 = vsel %vm404, %v6527, 0
      %v6561 = vsel %vm404, %v6528, 0
      %v6564 = vsel %vm404, %v6529, 0
      %v6567 = vsel %vm404, %v6530, 0
      %v6570 = vsel %vm404, %v6531, 0
      %v6573 = vsel %vm404, %v6532, 0
      %v6576 = vsel %vm404, %v6533, 0
      %v6579 = vsel %vm404, %v6534, 0
      %v6582 = vsel %vm404, %v6535, 0
      %v6585 = vsel %vm404, %v6536, 0
      %v6588 = vsel %vm6255, %v6538, 0
      %6590 = vmatprep.subr.bf16.mxu0 0
      %6591 = vmatpush1.bf16.msra.mxu0 %v6588
      %6592 = vmatprep.subr.bf16.mxu0 0
      %6593 = vmatpush1.bf16.msra.mxu0 0
      %6594 = vmatprep.subr.bf16.mxu0 0
      %6595 = vmatpush1.bf16.msra.mxu0 0
      %6596 = vmatprep.subr.bf16.mxu0 0
      %6597 = vmatpush1.bf16.msra.mxu0 0
      %6598 = vmatprep.subr.bf16.mxu0 0
      %6599 = vmatpush1.bf16.msra.mxu0 0
      %6600 = vmatprep.subr.bf16.mxu0 0
      %6601 = vmatpush1.bf16.msra.mxu0 0
      %6602 = vmatprep.subr.bf16.mxu0 0
      %6603 = vmatpush1.bf16.msra.mxu0 0
      %6604 = vmatprep.subr.bf16.mxu0 0
      %6605 = vmatpush1.bf16.msra.mxu0 0
      %6606 = vmatprep.subr.bf16.mxu0 0
      %6607 = vmatpush1.bf16.msra.mxu0 0
      %6608 = vmatprep.subr.bf16.mxu0 0
      %6609 = vmatpush1.bf16.msra.mxu0 0
      %6610 = vmatprep.subr.bf16.mxu0 0
      %6611 = vmatpush1.bf16.msra.mxu0 0
      %6612 = vmatprep.subr.bf16.mxu0 0
      %6613 = vmatpush1.bf16.msra.mxu0 0
      %6614 = vmatprep.subr.bf16.mxu0 0
      %6615 = vmatpush1.bf16.msra.mxu0 0
      %6616 = vmatprep.subr.bf16.mxu0 0
      %6617 = vmatpush1.bf16.msra.mxu0 0
      %6618 = vmatprep.subr.bf16.mxu0 0
      %6619 = vmatpush1.bf16.msra.mxu0 0
      %6620 = vmatprep.subr.bf16.mxu0 0
      %6621 = vmatpush1.bf16.msra.mxu0 0
      %6622 = vmatprep.mubr.bf16.mxu0 0
      %6623 = vmatmul.mubr.bf16.gmra.mrb[0].mxu0 %v6540
      %v6624 = vpop.f32.mrb[0].mxu0
      %v6625 = vadd.f32 %v494, %v6624
      %v6626 = vpop.f32.mrb[0].mxu0
      %v6627 = vpop.f32.mrb[0].mxu0
      %v6628 = vadd.f32 %v495, %v6627
      %v6629 = vpop.f32.mrb[0].mxu0
      %6630 = vmatprep.mubr.bf16.mxu0 0
      %6631 = vmatmul.mubr.bf16.gmra.mrb[0].mxu0 %v6543
      %v6632 = vpop.f32.mrb[0].mxu0
      %v6633 = vadd.f32 %v496, %v6632
      %v6634 = vpop.f32.mrb[0].mxu0
      %v6635 = vpop.f32.mrb[0].mxu0
      %v6636 = vadd.f32 %v497, %v6635
      %v6637 = vpop.f32.mrb[0].mxu0
      %6638 = vmatprep.mubr.bf16.mxu0 0
      %6639 = vmatmul.mubr.bf16.gmra.mrb[0].mxu0 %v6546
      %v6640 = vpop.f32.mrb[0].mxu0
      %v6641 = vadd.f32 %v498, %v6640
      %v6642 = vpop.f32.mrb[0].mxu0
      %v6643 = vpop.f32.mrb[0].mxu0
      %v6644 = vadd.f32 %v499, %v6643
      %v6645 = vpop.f32.mrb[0].mxu0
      %6646 = vmatprep.mubr.bf16.mxu0 0
      %6647 = vmatmul.mubr.bf16.gmra.mrb[0].mxu0 %v6549
      %v6648 = vpop.f32.mrb[0].mxu0
      %v6649 = vadd.f32 %v500, %v6648
      %v6650 = vpop.f32.mrb[0].mxu0
      %v6651 = vpop.f32.mrb[0].mxu0
      %v6652 = vadd.f32 %v501, %v6651
      %v6653 = vpop.f32.mrb[0].mxu0
      %6654 = vmatprep.mubr.bf16.mxu0 0
      %6655 = vmatmul.mubr.bf16.gmra.mrb[0].mxu0 %v6552
      %v6656 = vpop.f32.mrb[0].mxu0
      %v6657 = vadd.f32 %v502, %v6656
      %v6658 = vpop.f32.mrb[0].mxu0
      %v6659 = vpop.f32.mrb[0].mxu0
      %v6660 = vadd.f32 %v503, %v6659
      %v6661 = vpop.f32.mrb[0].mxu0
      %6662 = vmatprep.mubr.bf16.mxu0 0
      %6663 = vmatmul.mubr.bf16.gmra.mrb[0].mxu0 %v6555
      %v6664 = vpop.f32.mrb[0].mxu0
      %v6665 = vadd.f32 %v504, %v6664
      %v6666 = vpop.f32.mrb[0].mxu0
      %v6667 = vpop.f32.mrb[0].mxu0
      %v6668 = vadd.f32 %v505, %v6667
      %v6669 = vpop.f32.mrb[0].mxu0
      %6670 = vmatprep.mubr.bf16.mxu0 0
      %6671 = vmatmul.mubr.bf16.gmra.mrb[0].mxu0 %v6558
      %v6672 = vpop.f32.mrb[0].mxu0
      %v6673 = vadd.f32 %v506, %v6672
      %v6674 = vpop.f32.mrb[0].mxu0
      %v6675 = vpop.f32.mrb[0].mxu0
      %v6676 = vadd.f32 %v507, %v6675
      %v6677 = vpop.f32.mrb[0].mxu0
      %6678 = vmatprep.mubr.bf16.mxu0 0
      %6679 = vmatmul.mubr.bf16.gmra.mrb[0].mxu0 %v6561
      %v6680 = vpop.f32.mrb[0].mxu0
      %v6681 = vadd.f32 %v508, %v6680
      %v6682 = vpop.f32.mrb[0].mxu0
      %v6683 = vpop.f32.mrb[0].mxu0
      %v6684 = vadd.f32 %v509, %v6683
      %v6685 = vpop.f32.mrb[0].mxu0
      %6686 = vmatprep.mubr.bf16.mxu0 0
      %6687 = vmatmul.mubr.bf16.gmra.mrb[0].mxu0 %v6564
      %v6688 = vpop.f32.mrb[0].mxu0
      %v6689 = vadd.f32 %v510, %v6688
      %v6690 = vpop.f32.mrb[0].mxu0
      %v6691 = vpop.f32.mrb[0].mxu0
      %v6692 = vadd.f32 %v511, %v6691
      %v6693 = vpop.f32.mrb[0].mxu0
      %6694 = vmatprep.mubr.bf16.mxu0 0
      %6695 = vmatmul.mubr.bf16.gmra.mrb[0].mxu0 %v6567
      %v6696 = vpop.f32.mrb[0].mxu0
      %v6697 = vadd.f32 %v512, %v6696
      %v6698 = vpop.f32.mrb[0].mxu0
      %v6699 = vpop.f32.mrb[0].mxu0
      %v6700 = vadd.f32 %v513, %v6699
      %v6701 = vpop.f32.mrb[0].mxu0
      %6702 = vmatprep.mubr.bf16.mxu0 0
      %6703 = vmatmul.mubr.bf16.gmra.mrb[0].mxu0 %v6570
      %v6704 = vpop.f32.mrb[0].mxu0
      %v6705 = vadd.f32 %v514, %v6704
      %v6706 = vpop.f32.mrb[0].mxu0
      %v6707 = vpop.f32.mrb[0].mxu0
      %v6708 = vadd.f32 %v515, %v6707
      %v6709 = vpop.f32.mrb[0].mxu0
      %6710 = vmatprep.mubr.bf16.mxu0 0
      %6711 = vmatmul.mubr.bf16.gmra.mrb[0].mxu0 %v6573
      %v6712 = vpop.f32.mrb[0].mxu0
      %v6713 = vadd.f32 %v516, %v6712
      %v6714 = vpop.f32.mrb[0].mxu0
      %v6715 = vpop.f32.mrb[0].mxu0
      %v6716 = vadd.f32 %v517, %v6715
      %v6717 = vpop.f32.mrb[0].mxu0
      %6718 = vmatprep.mubr.bf16.mxu0 0
      %6719 = vmatmul.mubr.bf16.gmra.mrb[0].mxu0 %v6576
      %v6720 = vpop.f32.mrb[0].mxu0
      %v6721 = vadd.f32 %v518, %v6720
      %v6722 = vpop.f32.mrb[0].mxu0
      %v6723 = vpop.f32.mrb[0].mxu0
      %v6724 = vadd.f32 %v519, %v6723
      %v6725 = vpop.f32.mrb[0].mxu0
      %6726 = vmatprep.mubr.bf16.mxu0 0
      %6727 = vmatmul.mubr.bf16.gmra.mrb[0].mxu0 %v6579
      %v6728 = vpop.f32.mrb[0].mxu0
      %v6729 = vadd.f32 %v520, %v6728
      %v6730 = vpop.f32.mrb[0].mxu0
      %v6731 = vpop.f32.mrb[0].mxu0
      %v6732 = vadd.f32 %v521, %v6731
      %v6733 = vpop.f32.mrb[0].mxu0
      %6734 = vmatprep.mubr.bf16.mxu0 0
      %6735 = vmatmul.mubr.bf16.gmra.mrb[0].mxu0 %v6582
      %v6736 = vpop.f32.mrb[0].mxu0
      %v6737 = vadd.f32 %v522, %v6736
      %v6738 = vpop.f32.mrb[0].mxu0
      %v6739 = vpop.f32.mrb[0].mxu0
      %v6740 = vadd.f32 %v523, %v6739
      %v6741 = vpop.f32.mrb[0].mxu0
      %6742 = vmatprep.mubr.bf16.mxu0 0
      %6743 = vmatmul.mubr.bf16.gmra.mrb[0].mxu0 %v6585
      %v6744 = vpop.f32.mrb[0].mxu0
      %v6745 = vadd.f32 %v524, %v6744
      %v6746 = vpop.f32.mrb[0].mxu0
      %v6747 = vpop.f32.mrb[0].mxu0
      %v6748 = vadd.f32 %v525, %v6747
      %v6749 = vpop.f32.mrb[0].mxu0
      %6750 = vdwg.mxu0
      %v6751 = vld [vmem:[%s9] sm:$0x1]
      %v6752 = vlaneseq
      %v6753 = vshrl.u32 %v6752, 7
      %v6754 = vsub.s32 0, %v6753
      %v6755 = vrot.slane %v6751, %v6754
      %v6756 = vmul.f32 %v6625, %v6755
      %v6757 = vmul.f32 %v6628, %v6755
      %v6758 = vmul.f32 %v6633, %v6755
      %v6759 = vmul.f32 %v6636, %v6755
      %v6760 = vmul.f32 %v6641, %v6755
      %v6761 = vmul.f32 %v6644, %v6755
      %v6762 = vmul.f32 %v6649, %v6755
      %v6763 = vmul.f32 %v6652, %v6755
      %v6764 = vmul.f32 %v6657, %v6755
      %v6765 = vmul.f32 %v6660, %v6755
      %v6766 = vmul.f32 %v6665, %v6755
      %v6767 = vmul.f32 %v6668, %v6755
      %v6768 = vmul.f32 %v6673, %v6755
      %v6769 = vmul.f32 %v6676, %v6755
      %v6770 = vmul.f32 %v6681, %v6755
      %v6771 = vmul.f32 %v6684, %v6755
      %v6772 = vmul.f32 %v6689, %v6755
      %v6773 = vmul.f32 %v6692, %v6755
      %v6774 = vmul.f32 %v6697, %v6755
      %v6775 = vmul.f32 %v6700, %v6755
      %v6776 = vmul.f32 %v6705, %v6755
      %v6777 = vmul.f32 %v6708, %v6755
      %v6778 = vmul.f32 %v6713, %v6755
      %v6779 = vmul.f32 %v6716, %v6755
      %v6780 = vmul.f32 %v6721, %v6755
      %v6781 = vmul.f32 %v6724, %v6755
      %v6782 = vmul.f32 %v6729, %v6755
      %v6783 = vmul.f32 %v6732, %v6755
      %v6784 = vmul.f32 %v6737, %v6755
      %v6785 = vmul.f32 %v6740, %v6755
      %v6786 = vmul.f32 %v6745, %v6755
      %v6787 = vmul.f32 %v6748, %v6755
      %v6788 = vld [vmem:[%s9 + $0x1] sm:$0x1]
      %v6789 = vlaneseq
      %v6790 = vshrl.u32 %v6789, 7
      %v6791 = vsub.s32 0, %v6790
      %v6792 = vrot.slane %v6788, %v6791
      %v6793 = vadd.f32 %v6756, %v6792
      %v6794 = vadd.f32 %v6757, %v6792
      %v6795 = vadd.f32 %v6758, %v6792
      %v6796 = vadd.f32 %v6759, %v6792
      %v6797 = vadd.f32 %v6760, %v6792
      %v6798 = vadd.f32 %v6761, %v6792
      %v6799 = vadd.f32 %v6762, %v6792
      %v6800 = vadd.f32 %v6763, %v6792
      %v6801 = vadd.f32 %v6764, %v6792
      %v6802 = vadd.f32 %v6765, %v6792
      %v6803 = vadd.f32 %v6766, %v6792
      %v6804 = vadd.f32 %v6767, %v6792
      %v6805 = vadd.f32 %v6768, %v6792
      %v6806 = vadd.f32 %v6769, %v6792
      %v6807 = vadd.f32 %v6770, %v6792
      %v6808 = vadd.f32 %v6771, %v6792
      %v6809 = vadd.f32 %v6772, %v6792
      %v6810 = vadd.f32 %v6773, %v6792
      %v6811 = vadd.f32 %v6774, %v6792
      %v6812 = vadd.f32 %v6775, %v6792
      %v6813 = vadd.f32 %v6776, %v6792
      %v6814 = vadd.f32 %v6777, %v6792
      %v6815 = vadd.f32 %v6778, %v6792
      %v6816 = vadd.f32 %v6779, %v6792
      %v6817 = vadd.f32 %v6780, %v6792
      %v6818 = vadd.f32 %v6781, %v6792
      %v6819 = vadd.f32 %v6782, %v6792
      %v6820 = vadd.f32 %v6783, %v6792
      %v6821 = vadd.f32 %v6784, %v6792
      %v6822 = vadd.f32 %v6785, %v6792
      %v6823 = vadd.f32 %v6786, %v6792
      %v6824 = vadd.f32 %v6787, %v6792
      %v6825 = vld [vmem:[%s9 + $0x2] sm:$0x1]
      %vm6826 = vcmp.ge.f32.partialorder %v6793, 0.0
      %vm6827 = vcmp.ge.f32.partialorder %v6794, 0.0
      %vm6828 = vcmp.ge.f32.partialorder %v6795, 0.0
      %vm6829 = vcmp.ge.f32.partialorder %v6796, 0.0
      %vm6830 = vcmp.ge.f32.partialorder %v6797, 0.0
      %vm6831 = vcmp.ge.f32.partialorder %v6798, 0.0
      %vm6832 = vcmp.ge.f32.partialorder %v6799, 0.0
      %vm6833 = vcmp.ge.f32.partialorder %v6800, 0.0
      %vm6834 = vcmp.ge.f32.partialorder %v6801, 0.0
      %vm6835 = vcmp.ge.f32.partialorder %v6802, 0.0
      %vm6836 = vcmp.ge.f32.partialorder %v6803, 0.0
      %vm6837 = vcmp.ge.f32.partialorder %v6804, 0.0
      %vm6838 = vcmp.ge.f32.partialorder %v6805, 0.0
      %vm6839 = vcmp.ge.f32.partialorder %v6806, 0.0
      %vm6840 = vcmp.ge.f32.partialorder %v6807, 0.0
      %vm6841 = vcmp.ge.f32.partialorder %v6808, 0.0
      %vm6842 = vcmp.ge.f32.partialorder %v6809, 0.0
      %vm6843 = vcmp.ge.f32.partialorder %v6810, 0.0
      %vm6844 = vcmp.ge.f32.partialorder %v6811, 0.0
      %vm6845 = vcmp.ge.f32.partialorder %v6812, 0.0
      %vm6846 = vcmp.ge.f32.partialorder %v6813, 0.0
      %vm6847 = vcmp.ge.f32.partialorder %v6814, 0.0
      %vm6848 = vcmp.ge.f32.partialorder %v6815, 0.0
      %vm6849 = vcmp.ge.f32.partialorder %v6816, 0.0
      %vm6850 = vcmp.ge.f32.partialorder %v6817, 0.0
      %vm6851 = vcmp.ge.f32.partialorder %v6818, 0.0
      %vm6852 = vcmp.ge.f32.partialorder %v6819, 0.0
      %vm6853 = vcmp.ge.f32.partialorder %v6820, 0.0
      %vm6854 = vcmp.ge.f32.partialorder %v6821, 0.0
      %vm6855 = vcmp.ge.f32.partialorder %v6822, 0.0
      %vm6856 = vcmp.ge.f32.partialorder %v6823, 0.0
      %vm6857 = vcmp.ge.f32.partialorder %v6824, 0.0
      %v6858 = vlaneseq
      %v6859 = vshrl.u32 %v6858, 7
      %v6860 = vsub.s32 0, %v6859
      %v6861 = vrot.slane %v6825, %v6860
      %v6862 = vmul.f32 %v6793, %v6861
      %v6863 = vmul.f32 %v6794, %v6861
      %v6864 = vmul.f32 %v6795, %v6861
      %v6865 = vmul.f32 %v6796, %v6861
      %v6866 = vmul.f32 %v6797, %v6861
      %v6867 = vmul.f32 %v6798, %v6861
      %v6868 = vmul.f32 %v6799, %v6861
      %v6869 = vmul.f32 %v6800, %v6861
      %v6870 = vmul.f32 %v6801, %v6861
      %v6871 = vmul.f32 %v6802, %v6861
      %v6872 = vmul.f32 %v6803, %v6861
      %v6873 = vmul.f32 %v6804, %v6861
      %v6874 = vmul.f32 %v6805, %v6861
      %v6875 = vmul.f32 %v6806, %v6861
      %v6876 = vmul.f32 %v6807, %v6861
      %v6877 = vmul.f32 %v6808, %v6861
      %v6878 = vmul.f32 %v6809, %v6861
      %v6879 = vmul.f32 %v6810, %v6861
      %v6880 = vmul.f32 %v6811, %v6861
      %v6881 = vmul.f32 %v6812, %v6861
      %v6882 = vmul.f32 %v6813, %v6861
      %v6883 = vmul.f32 %v6814, %v6861
      %v6884 = vmul.f32 %v6815, %v6861
      %v6885 = vmul.f32 %v6816, %v6861
      %v6886 = vmul.f32 %v6817, %v6861
      %v6887 = vmul.f32 %v6818, %v6861
      %v6888 = vmul.f32 %v6819, %v6861
      %v6889 = vmul.f32 %v6820, %v6861
      %v6890 = vmul.f32 %v6821, %v6861
      %v6891 = vmul.f32 %v6822, %v6861
      %v6892 = vmul.f32 %v6823, %v6861
      %v6893 = vmul.f32 %v6824, %v6861
      %v6894 = vsel %vm6826, %v6793, %v6862
      %v6895 = vsel %vm6827, %v6794, %v6863
      %v6896 = vsel %vm6828, %v6795, %v6864
      %v6897 = vsel %vm6829, %v6796, %v6865
      %v6898 = vsel %vm6830, %v6797, %v6866
      %v6899 = vsel %vm6831, %v6798, %v6867
      %v6900 = vsel %vm6832, %v6799, %v6868
      %v6901 = vsel %vm6833, %v6800, %v6869
      %v6902 = vsel %vm6834, %v6801, %v6870
      %v6903 = vsel %vm6835, %v6802, %v6871
      %v6904 = vsel %vm6836, %v6803, %v6872
      %v6905 = vsel %vm6837, %v6804, %v6873
      %v6906 = vsel %vm6838, %v6805, %v6874
      %v6907 = vsel %vm6839, %v6806, %v6875
      %v6908 = vsel %vm6840, %v6807, %v6876
      %v6909 = vsel %vm6841, %v6808, %v6877
      %v6910 = vsel %vm6842, %v6809, %v6878
      %v6911 = vsel %vm6843, %v6810, %v6879
      %v6912 = vsel %vm6844, %v6811, %v6880
      %v6913 = vsel %vm6845, %v6812, %v6881
      %v6914 = vsel %vm6846, %v6813, %v6882
      %v6915 = vsel %vm6847, %v6814, %v6883
      %v6916 = vsel %vm6848, %v6815, %v6884
      %v6917 = vsel %vm6849, %v6816, %v6885
      %v6918 = vsel %vm6850, %v6817, %v6886
      %v6919 = vsel %vm6851, %v6818, %v6887
      %v6920 = vsel %vm6852, %v6819, %v6888
      %v6921 = vsel %vm6853, %v6820, %v6889
      %v6922 = vsel %vm6854, %v6821, %v6890
      %v6923 = vsel %vm6855, %v6822, %v6891
      %v6924 = vsel %vm6856, %v6823, %v6892
      %v6925 = vsel %vm6857, %v6824, %v6893
      %6926 = vst.msk [vmem:[%s359] sm:$0xff] %vm361, %v6894
      %6927 = vst.msk [vmem:[%s359 + $0x8] sm:$0xff] %vm361, %v6895
      %6928 = vst.msk [vmem:[%s359 + $0x10] sm:$0xff] %vm361, %v6896
      %6929 = vst.msk [vmem:[%s359 + $0x18] sm:$0xff] %vm361, %v6897
      %6930 = vst.msk [vmem:[%s359 + $0x20] sm:$0xff] %vm361, %v6898
      %6931 = vst.msk [vmem:[%s359 + $0x28] sm:$0xff] %vm361, %v6899
      %6932 = vst.msk [vmem:[%s359 + $0x30] sm:$0xff] %vm361, %v6900
      %6933 = vst.msk [vmem:[%s359 + $0x38] sm:$0xff] %vm361, %v6901
      %6934 = vst.msk [vmem:[%s359 + $0x40] sm:$0xff] %vm361, %v6902
      %6935 = vst.msk [vmem:[%s359 + $0x48] sm:$0xff] %vm361, %v6903
      %6936 = vst.msk [vmem:[%s359 + $0x50] sm:$0xff] %vm361, %v6904
      %6937 = vst.msk [vmem:[%s359 + $0x58] sm:$0xff] %vm361, %v6905
      %6938 = vst.msk [vmem:[%s359 + $0x60] sm:$0xff] %vm361, %v6906
      %6939 = vst.msk [vmem:[%s359 + $0x68] sm:$0xff] %vm361, %v6907
      %6940 = vst.msk [vmem:[%s359 + $0x70] sm:$0xff] %vm361, %v6908
      %6941 = vst.msk [vmem:[%s359 + $0x78] sm:$0xff] %vm361, %v6909
      %6942 = vst.msk [vmem:[%s359 + $0x80] sm:$0xff] %vm361, %v6910
      %6943 = vst.msk [vmem:[%s359 + $0x88] sm:$0xff] %vm361, %v6911
      %6944 = vst.msk [vmem:[%s359 + $0x90] sm:$0xff] %vm361, %v6912
      %6945 = vst.msk [vmem:[%s359 + $0x98] sm:$0xff] %vm361, %v6913
      %6946 = vst.msk [vmem:[%s359 + $0xa0] sm:$0xff] %vm361, %v6914
      %6947 = vst.msk [vmem:[%s359 + $0xa8] sm:$0xff] %vm361, %v6915
      %6948 = vst.msk [vmem:[%s359 + $0xb0] sm:$0xff] %vm361, %v6916
      %6949 = vst.msk [vmem:[%s359 + $0xb8] sm:$0xff] %vm361, %v6917
      %6950 = vst.msk [vmem:[%s359 + $0xc0] sm:$0xff] %vm361, %v6918
      %6951 = vst.msk [vmem:[%s359 + $0xc8] sm:$0xff] %vm361, %v6919
      %6952 = vst.msk [vmem:[%s359 + $0xd0] sm:$0xff] %vm361, %v6920
      %6953 = vst.msk [vmem:[%s359 + $0xd8] sm:$0xff] %vm361, %v6921
      %6954 = vst.msk [vmem:[%s359 + $0xe0] sm:$0xff] %vm361, %v6922
      %6955 = vst.msk [vmem:[%s359 + $0xe8] sm:$0xff] %vm361, %v6923
      %6956 = vst.msk [vmem:[%s359 + $0xf0] sm:$0xff] %vm361, %v6924
      %6957 = vst.msk [vmem:[%s359 + $0xf8] sm:$0xff] %vm361, %v6925
      %p6958 = scmp.lt.s32.totalorder %s21, 1
      %s6959 = scalar_select %p6958, %s21, 1
      %s6960 = smul.addr %s6959, 32
      %s6961 = smul.addr %s6960, 8
      %s6962 = scalar_lea.vmem %s10, %s6961
      // Predicated region
      $region61: #{tpu_custom_call.1} parent=59 // pred_check
        %p6963 = pneg %p254
      $region62: #{tpu_custom_call.1} parent=59 // pred_check_branch
        %6965 = sbr.rel (%p6963) target = $region64
      $region63: #{tpu_custom_call.1} parent=59 // pred_region
        _
      $region64: #{tpu_custom_call.1} parent=59 // pred_fallthru
        _
    $region60: #{tpu_custom_call.1} parent=5 // pred_fallthru
      _
    %p6966 = scmp.le.s32.totalorder 2, %s16
    // Predicated region
    $region65: #{tpu_custom_call.1} parent=5 // pred_check
      %p6967 = pneg %p6966
    $region66: #{tpu_custom_call.1} parent=5 // pred_check_branch
      %6969 = sbr.rel (%p6967) target = $region68
    $region67: #{tpu_custom_call.1} parent=5 // pred_region
      %s6970 = ssub.s32 %s16, 2
      // Predicated region
      $region69: #{tpu_custom_call.1} parent=67 // pred_check
        %p6971 = pneg %p260
      $region70: #{tpu_custom_call.1} parent=67 // pred_check_branch
        %6973 = sbr.rel (%p6971) target = $region72
      $region71: #{tpu_custom_call.1} parent=67 // pred_region
        %p6974 = scmp.lt.s32.totalorder %s22, 1
        %s6975 = scalar_select %p6974, %s22, 1
        %s6976 = smul.addr %s6975, 32
        %s6977 = smul.addr %s6976, 8
        %s6978 = scalar_lea.vmem %s10, %s6977
      $region72: #{tpu_custom_call.1} parent=67 // pred_fallthru
        _
    $region68: #{tpu_custom_call.1} parent=5 // pred_fallthru
      _
  $region6: #{tpu_custom_call.1} parent=0 // loop_footer
    %s20 = sadd.s32 1, %s16
  $region7: #{tpu_custom_call.1} parent=0 // loop_footer_branch
    %15 = sbr.rel target = $region3
  $region8: #{tpu_custom_call.1} parent=0 // loop_exit
    _

</llo_original>
